<compile_context>
chip_gen: v7x
topology: tpu7x:2x2x1
jax: 0.10.0
libtpu: 0.0.40
codegen_flags: <defaults>
</compile_context>

<pallas_src>
import functools
import math

import jax
import jax.numpy as jnp
from jax import lax
from jax.experimental import pallas as pl
from jax.experimental.pallas import tpu as pltpu

# ----------------------------- configuration --------------------------------
HIDDEN = 16                     # hidden_size
NUM_HEADS = 4                   # num_att_heads
XY_INDX = (0, 1)                # which Scene features are embedded
POS_EMB_DIM = (HIDDEN, HIDDEN)  # sums to 2*hidden_size (DAAG in_features)
POS_DICT_SIZE = (50, 50)
NNODES = 4
SL = 8
B = 2
FEAT = 4                        # Scene feature dim (>= max(XY_INDX)+1)
D2 = 2 * HIDDEN                 # 32
D3 = 3 * HIDDEN                 # 48
CONV_K = 3                      # TemporalConv kernel size (same padding)
DH_PAD = 16                     # MHA head dim (48/4 = 12) zero-padded to 16 lanes
SLAB_W = 3 * NUM_HEADS * DH_PAD  # 192 — width of the packed parameter slab (= wqkv)


# --------------------- packed parameter slab layout (static) -----------------
def _round8(x):
    return (x + 7) & ~7


_SLAB_SHAPES = [
    ("emb",     (sum(POS_DICT_SIZE), D2)),        # block-diag embedding tables
    ("daag_w",  (D2, D2)),
    ("daag_b",  (1, D2)),
    ("asrc",    (D2, NUM_HEADS)),                 # block-diag a_src
    ("adst",    (D2, NUM_HEADS)),                 # block-diag a_dst
    ("tconv_w", (CONV_K * D2, HIDDEN)),
    ("tconv_b", (1, HIDDEN)),
    ("pe",      (SL, D3)),
    ("wqkv",    (D3, 3 * NUM_HEADS * DH_PAD)),    # head-major, dh padded 12->16
    ("bqkv",    (1, 3 * NUM_HEADS * DH_PAD)),
    ("wo",      (NUM_HEADS * DH_PAD, D3)),        # padded rows are zero
    ("bo",      (1, D3)),
    ("rezero",  (1, D3)),
]


def _slab_layout():
    offs, r = {}, 0
    for name, (nr, _) in _SLAB_SHAPES:
        offs[name] = r
        r = _round8(r + nr)          # 8-row alignment keeps in-kernel slices cheap
    return offs, r


SLAB_OFFS, SLAB_ROWS = _slab_layout()


# ----------------------------- fused Pallas kernel ---------------------------
def fused_pe_kernel(ids_ref, adj_ref, mask_ref, slab_ref, out_ref, leaky_ref, *,
                    offs, sl, n_nodes, n_heads, hidden, dict0, dict1, conv_k, dh_pad):
    """One batch element: emb-gather -> DAAG -> node-major -> TemporalConv -> PE+MHA+ReZero."""
    f32, bf16 = jnp.float32, jnp.bfloat16
    d2, d3 = 2 * hidden, 3 * hidden
    dh_g = d2 // n_heads                      # DAAG head dim (8)
    rows = sl * n_nodes                       # 32

    def piece(name, r, c):                    # static slice of the packed slab
        o = offs[name]
        return slab_ref[o:o + r, 0:c]

    # ---- positional-embedding lookup as one-hot matmul (padding_idx row is zero) ----
    ids = ids_ref[0]                                               # (rows, 2) time-major
    iota = lax.broadcasted_iota(jnp.int32, (rows, dict0 + dict1), 1)
    onehot = ((ids[:, 0:1] == iota).astype(bf16) +
              ((ids[:, 1:2] + dict0) == iota).astype(bf16))
    emb_tab = piece("emb", dict0 + dict1, d2).astype(bf16)         # block-diag tables
    x2d = jnp.dot(onehot, emb_tab, preferred_element_type=f32)     # (rows, d2)

    # ---- DAAG graph attention over nodes; heads & timesteps batched ----
    h = jnp.dot(x2d.astype(bf16), piece("daag_w", d2, d2).astype(bf16),
                preferred_element_type=f32) + piece("daag_b", 1, d2)
    hb = h.astype(bf16)
    es = jnp.dot(hb, piece("asrc", d2, n_heads).astype(bf16),      # (rows, nh) on MXU
                 preferred_element_type=f32)
    ed = jnp.dot(hb, piece("adst", d2, n_heads).astype(bf16),
                 preferred_element_type=f32)
    es_t = jnp.transpose(es.reshape(sl, n_nodes, n_heads), (0, 2, 1))   # (sl, nh, N)
    ed_t = jnp.transpose(ed.reshape(sl, n_nodes, n_heads), (0, 2, 1))
    e = es_t[:, :, :, None] + ed_t[:, :, None, :]                  # (sl, nh, N, N)
    e = jnp.where(e > 0, e, 0.2 * e)                               # LeakyReLU(0.2)
    e = e + adj_ref[0][None, None, :, :]                           # -1e9 on non-edges
    e = e.reshape(sl * n_heads, n_nodes, n_nodes)
    e = e - jnp.max(e, axis=-1, keepdims=True)
    p = jnp.exp(e)
    p = p * pl.reciprocal(jnp.sum(p, axis=-1, keepdims=True), approx=True)
    hv = jnp.transpose(h.reshape(sl, n_nodes, n_heads, dh_g), (0, 2, 1, 3))
    hv = hv.reshape(sl * n_heads, n_nodes, dh_g)
    g = jnp.einsum('bij,bjd->bid', p.astype(bf16), hv.astype(bf16),
                   preferred_element_type=f32)                     # (sl*nh, N, dh_g)
    # single transpose folds head-restore AND time->node permute
    g_nm = jnp.transpose(g.reshape(sl, n_heads, n_nodes, dh_g),
                         (2, 0, 1, 3)).reshape(n_nodes, sl, d2)    # (N, sl, d2)
    g_nm = jnp.where(g_nm > 0, g_nm, jnp.exp(jnp.minimum(g_nm, 0.0)) - 1.0)   # ELU

    # ---- TemporalConv: Conv1d(d2 -> hidden, k=3, same pad) as ONE matmul ----
    zpad = jnp.zeros((n_nodes, 1, d2), f32)
    gp = jnp.concatenate([zpad, g_nm, zpad], axis=1)               # (N, sl+2, d2)
    xcat = jnp.concatenate([gp[:, kk:kk + sl, :] for kk in range(conv_k)],
                           axis=-1).reshape(rows, conv_k * d2)     # node-major rows
    y = jnp.dot(xcat.astype(bf16), piece("tconv_w", conv_k * d2, hidden).astype(bf16),
                preferred_element_type=f32) + piece("tconv_b", 1, hidden)
    y = jnp.where(y > 0, y, 0.2 * y)                               # LeakyReLU
    leaky3 = y.reshape(n_nodes, sl, hidden)

    # ---- concat -> 3H, sinusoidal PE, fused-QKV MHA (dh padded 12->16), ReZero ----
    z3 = jnp.concatenate([g_nm, leaky3], axis=-1) + piece("pe", sl, d3)[None, :, :]
    z2d = z3.reshape(rows, d3)
    hd_tot = n_heads * dh_pad                                      # 64
    qkv = jnp.dot(z2d.astype(bf16), piece("wqkv", d3, 3 * hd_tot).astype(bf16),
                  preferred_element_type=f32) + piece("bqkv", 1, 3 * hd_tot)

    def split_heads(block):        # (rows, nh*dh_pad) -> (N*nh, sl, dh_pad)
        t = block.reshape(n_nodes, sl, n_heads, dh_pad)
        return jnp.transpose(t, (0, 2, 1, 3)).reshape(n_nodes * n_heads, sl, dh_pad)

    q = split_heads(qkv[:, 0:hd_tot])
    k = split_heads(qkv[:, hd_tot:2 * hd_tot])
    v = split_heads(qkv[:, 2 * hd_tot:3 * hd_tot])
    scale = 1.0 / math.sqrt(d3 // n_heads)                         # true head dim = 12
    sc = jnp.einsum('bqd,bkd->bqk', q.astype(bf16), k.astype(bf16),
                    preferred_element_type=f32) * scale            # (N*nh, sl, sl)
    kmask = jnp.broadcast_to(mask_ref[0][:, None, :],
                             (n_nodes, n_heads, sl)).reshape(n_nodes * n_heads, 1, sl)
    sc = sc + kmask                                                # key-padding bias
    sc = sc - jnp.max(sc, axis=-1, keepdims=True)
    pa = jnp.exp(sc)
    pa = pa * pl.reciprocal(jnp.sum(pa, axis=-1, keepdims=True), approx=True)
    att = jnp.einsum('bqk,bkd->bqd', pa.astype(bf16), v.astype(bf16),
                     preferred_element_type=f32)                   # (N*nh, sl, dh_pad)
    att = jnp.transpose(att.reshape(n_nodes, n_heads, sl, dh_pad),
                        (0, 2, 1, 3)).reshape(rows, hd_tot)        # (rows, 64)
    proj = jnp.dot(att.astype(bf16), piece("wo", hd_tot, d3).astype(bf16),
                   preferred_element_type=f32) + piece("bo", 1, d3)
    out2d = piece("rezero", 1, d3) * proj + z2d                    # ReZero residual

    out_ref[0] = out2d                                             # (rows, d3) node-major
    leaky_ref[0] = y                                               # (rows, hidden)


# ----------------------------- pallas_call wrapper ----------------------------
def fused_positional_encoding(ids, adj_bias, mask_bias, slab):
    Bb = ids.shape[0]
    rows = SL * NNODES
    kernel = functools.partial(
        fused_pe_kernel, offs=SLAB_OFFS, sl=SL, n_nodes=NNODES, n_heads=NUM_HEADS,
        hidden=HIDDEN, dict0=POS_DICT_SIZE[0], dict1=POS_DICT_SIZE[1],
        conv_k=CONV_K, dh_pad=DH_PAD)
    # grid=(B,)=(2,) "parallel": keeps both v7x TensorCores busy; on single-TC
    # v5e/v6e it is a 2-step serial loop (~0.35 us extra fixed cost, accepted).
    out_flat, leaky_flat = pl.pallas_call(
        kernel,
        out_shape=(
            jax.ShapeDtypeStruct((Bb, rows, D3), jnp.float32),
            jax.ShapeDtypeStruct((Bb, rows, HIDDEN), jnp.float32),
        ),
        grid=(Bb,),
        in_specs=[
            pl.BlockSpec((1, rows, 2), lambda b: (b, 0, 0)),              # int coords
            pl.BlockSpec((1, NNODES, NNODES), lambda b: (b, 0, 0)),       # adj bias
            pl.BlockSpec((1, NNODES, SL), lambda b: (b, 0, 0)),           # key-pad bias
            pl.BlockSpec((SLAB_ROWS, SLAB_W), lambda b: (0, 0)),          # packed params
        ],
        out_specs=[
            pl.BlockSpec((1, rows, D3), lambda b: (b, 0, 0)),
            pl.BlockSpec((1, rows, HIDDEN), lambda b: (b, 0, 0)),
        ],
        compiler_params=pltpu.CompilerParams(
            dimension_semantics=("parallel",)),
    )(ids, adj_bias, mask_bias, slab)
    out = out_flat.reshape(Bb * NNODES, SL, D3)          # contiguous reshape (free)
    leaky = leaky_flat.reshape(Bb * NNODES, SL, HIDDEN)
    return out, leaky


# ----------------------------- parameter handling ------------------------------
def positional_encoding_table(sl, d_model):
    pos = jnp.arange(sl, dtype=jnp.float32)[:, None]
    i = jnp.arange(d_model)[None, :]
    angle = pos / jnp.power(10000.0, (2.0 * (i // 2).astype(jnp.float32)) / d_model)
    pe = jnp.where(i % 2 == 0, jnp.sin(angle), jnp.cos(angle))
    return pe.astype(jnp.float32)


def init_params(key):
    ks = jax.random.split(key, 16)

    def init(k, shape, scale=0.1):
        return (scale * jax.random.normal(k, shape)).astype(jnp.float32)

    params = {}
    # positional embedding tables (padding_idx=0 -> row 0 zeroed)
    embs = []
    for n, (dsz, dim) in enumerate(zip(POS_DICT_SIZE, POS_EMB_DIM)):
        t = init(ks[n], (dsz, dim))
        embs.append(t.at[0].set(0.0))
    params["emb"] = embs
    # DAAG layer (2H -> 2H, multi-head, concat)
    params["daag_w"] = init(ks[2], (D2, D2))
    params["daag_b"] = init(ks[3], (1, D2))
    params["daag_asrc"] = init(ks[4], (NUM_HEADS, D2 // NUM_HEADS))
    params["daag_adst"] = init(ks[5], (NUM_HEADS, D2 // NUM_HEADS))
    # TemporalConv: Conv1d(2H -> H, k=3, same pad), one (D2, H) slab per tap
    params["tconv_w"] = init(ks[6], (CONV_K, D2, HIDDEN))
    params["tconv_b"] = init(ks[7], (1, HIDDEN))
    # MultiheadAttention(3H, num_heads) with packed QKV projection
    params["wqkv"] = init(ks[8], (D3, 3 * D3))
    params["bqkv"] = init(ks[9], (1, 3 * D3))
    params["wo"] = init(ks[10], (D3, D3))
    params["bo"] = init(ks[11], (1, D3))
    # ReZero parameter: torch.zeros(3*hidden_size) -> per-channel zero vector
    params["rezero"] = jnp.zeros((1, D3), dtype=jnp.float32)
    return params


def prepare_fused_params(params):
    """Pack all small tensors into one (SLAB_ROWS, SLAB_W) fp32 slab (one DMA)."""
    dh_g = D2 // NUM_HEADS
    dh_a = D3 // NUM_HEADS
    pieces = {}
    # block-diagonal embedding table: rows [0:50]=tab_x | cols 0:16, [50:100]=tab_y | 16:32
    emb = jnp.zeros((sum(POS_DICT_SIZE), D2), jnp.float32)
    emb = emb.at[:POS_DICT_SIZE[0], :POS_EMB_DIM[0]].set(params["emb"][0])
    emb = emb.at[POS_DICT_SIZE[0]:, POS_EMB_DIM[0]:].set(params["emb"][1])
    pieces["emb"] = emb
    pieces["daag_w"] = params["daag_w"]
    pieces["daag_b"] = params["daag_b"]
    # block-diagonal a_src / a_dst: (D2, nh) so es/ed become single matmuls
    asrc = jnp.zeros((D2, NUM_HEADS), jnp.float32)
    adst = jnp.zeros((D2, NUM_HEADS), jnp.float32)
    for hd in range(NUM_HEADS):
        asrc = asrc.at[hd * dh_g:(hd + 1) * dh_g, hd].set(params["daag_asrc"][hd])
        adst = adst.at[hd * dh_g:(hd + 1) * dh_g, hd].set(params["daag_adst"][hd])
    pieces["asrc"], pieces["adst"] = asrc, adst
    pieces["tconv_w"] = params["tconv_w"].reshape(CONV_K * D2, HIDDEN)
    pieces["tconv_b"] = params["tconv_b"]
    pieces["pe"] = positional_encoding_table(SL, D3)
    # head-major, zero-padded (12 -> 16) fused-QKV and output projections
    wqkv_p = jnp.zeros((D3, 3 * NUM_HEADS * DH_PAD), jnp.float32)
    bqkv_p = jnp.zeros((1, 3 * NUM_HEADS * DH_PAD), jnp.float32)
    wo_p = jnp.zeros((NUM_HEADS * DH_PAD, D3), jnp.float32)
    for part in range(3):
        for hd in range(NUM_HEADS):
            src = part * D3 + hd * dh_a
            dst = part * NUM_HEADS * DH_PAD + hd * DH_PAD
            wqkv_p = wqkv_p.at[:, dst:dst + dh_a].set(params["wqkv"][:, src:src + dh_a])
            bqkv_p = bqkv_p.at[:, dst:dst + dh_a].set(params["bqkv"][:, src:src + dh_a])
    for hd in range(NUM_HEADS):
        wo_p = wo_p.at[hd * DH_PAD:hd * DH_PAD + dh_a, :].set(
            params["wo"][hd * dh_a:(hd + 1) * dh_a, :])
    pieces["wqkv"], pieces["bqkv"], pieces["wo"] = wqkv_p, bqkv_p, wo_p
    pieces["bo"] = params["bo"]
    pieces["rezero"] = params["rezero"]

    slab = jnp.zeros((SLAB_ROWS, SLAB_W), jnp.float32)
    for name, (nr, nc) in _SLAB_SHAPES:
        o = SLAB_OFFS[name]
        slab = slab.at[o:o + nr, :nc].set(pieces[name])
    return slab


# ----------------------------- forward (glue is tiny) --------------------------
def positional_encoding_layer_forward(slab, scene, scene_mask, adj):
    """Faithful forward of Positional_Encoding_Layer (eval mode, dropout = identity)."""
    Bb, sl, n, _ = scene.shape
    assert scene_mask.shape == (Bb * n, sl)          # batch-major node ordering

    # integer coordinates, time-major rows (s*N + n); gather itself runs in-kernel
    ids = jnp.stack([scene[..., i] for i in XY_INDX], axis=-1)
    ids = ids.astype(jnp.int32).reshape(Bb, sl * n, 2)

    adj_bias = jnp.where(adj > 0, 0.0, -1e9).astype(jnp.float32)              # (B, N, N)
    mask_bias = jnp.where(scene_mask, -1e9, 0.0).astype(jnp.float32).reshape(Bb, n, sl)

    out, leaky = fused_positional_encoding(ids, adj_bias, mask_bias, slab)
    # dropout -> identity in eval mode
    return out, leaky


# ----------------------------- main -------------------------------------------
if __name__ == "__main__":
    key = jax.random.PRNGKey(0)
    k_param, k_scene, k_adj, k_len = jax.random.split(key, 4)

    params = init_params(k_param)
    slab = prepare_fused_params(params)              # one-time packing (setup cost)

    # Scene: (B, SL, Nnodes, F) with integer-valued coordinates for embedding lookup
    scene = jax.random.randint(
        k_scene, (B, SL, NNODES, FEAT), 0, min(POS_DICT_SIZE)).astype(jnp.float32)

    # adjacency: (B, Nnodes, Nnodes) binary with self-loops
    adj = (jax.random.uniform(k_adj, (B, NNODES, NNODES)) > 0.3).astype(jnp.float32)
    adj = jnp.maximum(adj, jnp.eye(NNODES, dtype=jnp.float32)[None])

    # key padding mask: (B*Nnodes, SL), True = padded position (never fully masked)
    lens = jax.random.randint(k_len, (B * NNODES,), 4, SL + 1)
    scene_mask = jnp.arange(SL)[None, :] >= lens[:, None]

    fwd = jax.jit(positional_encoding_layer_forward)
    out, leaky = fwd(slab, scene, scene_mask, adj)
    jax.block_until_ready(out)
    jax.block_until_ready(leaky)

    assert out.shape == (B * NNODES, SL, D3)
    assert leaky.shape == (B * NNODES, SL, HIDDEN)
    assert jnp.all(jnp.isfinite(out)) and jnp.all(jnp.isfinite(leaky))
    print("KERNEL_OK")
</pallas_src>

<mosaic_0001>
module attributes {stable_mosaic.version = 11 : i64} {
  func.func @fused_pe_kernel(%arg0: i32, %arg1: memref<1x32x2xi32, #tpu.memory_space<vmem>>, %arg2: memref<1x4x4xf32, #tpu.memory_space<vmem>>, %arg3: memref<1x4x8xf32, #tpu.memory_space<vmem>>, %arg4: memref<456x192xf32, #tpu.memory_space<vmem>>, %arg5: memref<1x32x48xf32, #tpu.memory_space<vmem>>, %arg6: memref<1x32x16xf32, #tpu.memory_space<vmem>>) attributes {dimension_semantics = [#tpu.dimension_semantics<parallel>], iteration_bounds = array<i64: 2>, scalar_prefetch = 0 : i64, scratch_operands = 0 : i64, tpu.core_type = #tpu.core_type<tc>, window_params = [{transform_indices = @transform_0, window_bounds = array<i64: 1, 32, 2>}, {transform_indices = @transform_1, window_bounds = array<i64: 1, 4, 4>}, {transform_indices = @transform_2, window_bounds = array<i64: 1, 4, 8>}, {pipeline_mode = #tpu.pipeline_mode<synchronous>, transform_indices = @transform_3, window_bounds = array<i64: 456, 192>}, {transform_indices = @transform_4, window_bounds = array<i64: 1, 32, 48>}, {transform_indices = @transform_5, window_bounds = array<i64: 1, 32, 16>}]} {
    %c0 = arith.constant 0 : index
    %c0_0 = arith.constant 0 : index
    %c0_1 = arith.constant 0 : index
    %0 = vector.load %arg1[%c0, %c0_0, %c0_1] : memref<1x32x2xi32, #tpu.memory_space<vmem>>, vector<1x32x2xi32>
    %1 = vector.shape_cast %0 : vector<1x32x2xi32> to vector<32x2xi32>
    %2 = tpu.iota {dimensions = array<i32: 1>} : vector<32x100xi32>
    %3 = vector.extract_strided_slice %1 {offsets = [0, 0], sizes = [32, 1], strides = [1, 1]} : vector<32x2xi32> to vector<32x1xi32>
    %4 = vector.broadcast %3 : vector<32x1xi32> to vector<32x100xi32>
    %5 = arith.cmpi eq, %4, %2 : vector<32x100xi32>
    %6 = arith.extui %5 : vector<32x100xi1> to vector<32x100xi32>
    %7 = arith.sitofp %6 : vector<32x100xi32> to vector<32x100xf32>
    %8 = arith.truncf %7 : vector<32x100xf32> to vector<32x100xbf16>
    %9 = vector.extract_strided_slice %1 {offsets = [0, 1], sizes = [32, 1], strides = [1, 1]} : vector<32x2xi32> to vector<32x1xi32>
    %c50_i32 = arith.constant 50 : i32
    %10 = vector.broadcast %c50_i32 : i32 to vector<32x1xi32>
    %11 = arith.addi %9, %10 : vector<32x1xi32>
    %12 = vector.broadcast %11 : vector<32x1xi32> to vector<32x100xi32>
    %13 = arith.cmpi eq, %12, %2 : vector<32x100xi32>
    %14 = arith.extui %13 : vector<32x100xi1> to vector<32x100xi32>
    %15 = arith.sitofp %14 : vector<32x100xi32> to vector<32x100xf32>
    %16 = arith.truncf %15 : vector<32x100xf32> to vector<32x100xbf16>
    %17 = arith.addf %8, %16 : vector<32x100xbf16>
    %c0_2 = arith.constant 0 : index
    %c0_3 = arith.constant 0 : index
    %18 = vector.load %arg4[%c0_2, %c0_3] : memref<456x192xf32, #tpu.memory_space<vmem>>, vector<100x32xf32>
    %19 = arith.truncf %18 : vector<100x32xf32> to vector<100x32xbf16>
    %cst = arith.constant dense<0.000000e+00> : vector<32x32xf32>
    %20 = tpu.matmul %17, %19, %cst {dimension_numbers = #tpu.dot_dimension_numbers<[1], [0], [0], [1], [0, 0, 1, 1], [], []>} : vector<32x100xbf16>, vector<100x32xbf16>, vector<32x32xf32> -> vector<32x32xf32>
    %21 = arith.truncf %20 : vector<32x32xf32> to vector<32x32xbf16>
    %c104 = arith.constant 104 : index
    %c0_4 = arith.constant 0 : index
    %22 = vector.load %arg4[%c104, %c0_4] : memref<456x192xf32, #tpu.memory_space<vmem>>, vector<32x32xf32>
    %23 = arith.truncf %22 : vector<32x32xf32> to vector<32x32xbf16>
    %cst_5 = arith.constant dense<0.000000e+00> : vector<32x32xf32>
    %24 = tpu.matmul %21, %23, %cst_5 {dimension_numbers = #tpu.dot_dimension_numbers<[1], [0], [0], [1], [0, 0, 1, 1], [], []>} : vector<32x32xbf16>, vector<32x32xbf16>, vector<32x32xf32> -> vector<32x32xf32>
    %c136 = arith.constant 136 : index
    %c0_6 = arith.constant 0 : index
    %25 = vector.load %arg4[%c136, %c0_6] : memref<456x192xf32, #tpu.memory_space<vmem>>, vector<1x32xf32>
    %26 = vector.broadcast %25 : vector<1x32xf32> to vector<32x32xf32>
    %27 = arith.addf %24, %26 : vector<32x32xf32>
    %28 = arith.truncf %27 : vector<32x32xf32> to vector<32x32xbf16>
    %c144 = arith.constant 144 : index
    %c0_7 = arith.constant 0 : index
    %29 = vector.load %arg4[%c144, %c0_7] : memref<456x192xf32, #tpu.memory_space<vmem>>, vector<32x4xf32>
    %30 = arith.truncf %29 : vector<32x4xf32> to vector<32x4xbf16>
    %cst_8 = arith.constant dense<0.000000e+00> : vector<32x4xf32>
    %31 = tpu.matmul %28, %30, %cst_8 {dimension_numbers = #tpu.dot_dimension_numbers<[1], [0], [0], [1], [0, 0, 1, 1], [], []>} : vector<32x32xbf16>, vector<32x4xbf16>, vector<32x4xf32> -> vector<32x4xf32>
    %c176 = arith.constant 176 : index
    %c0_9 = arith.constant 0 : index
    %32 = vector.load %arg4[%c176, %c0_9] : memref<456x192xf32, #tpu.memory_space<vmem>>, vector<32x4xf32>
    %33 = arith.truncf %32 : vector<32x4xf32> to vector<32x4xbf16>
    %cst_10 = arith.constant dense<0.000000e+00> : vector<32x4xf32>
    %34 = tpu.matmul %28, %33, %cst_10 {dimension_numbers = #tpu.dot_dimension_numbers<[1], [0], [0], [1], [0, 0, 1, 1], [], []>} : vector<32x32xbf16>, vector<32x4xbf16>, vector<32x4xf32> -> vector<32x4xf32>
    %35 = vector.shape_cast %31 : vector<32x4xf32> to vector<8x4x4xf32>
    %36 = tpu.transpose %35, [0, 2, 1] : vector<8x4x4xf32> -> vector<8x4x4xf32>
    %37 = vector.shape_cast %34 : vector<32x4xf32> to vector<8x4x4xf32>
    %38 = tpu.transpose %37, [0, 2, 1] : vector<8x4x4xf32> -> vector<8x4x4xf32>
    %39 = vector.shape_cast %36 : vector<8x4x4xf32> to vector<8x4x4x1xf32>
    %40 = vector.shape_cast %38 : vector<8x4x4xf32> to vector<8x4x1x4xf32>
    %41 = vector.broadcast %39 : vector<8x4x4x1xf32> to vector<8x4x4x4xf32>
    %42 = vector.broadcast %40 : vector<8x4x1x4xf32> to vector<8x4x4x4xf32>
    %43 = arith.addf %41, %42 : vector<8x4x4x4xf32>
    %cst_11 = arith.constant 0.000000e+00 : f32
    %44 = vector.broadcast %cst_11 : f32 to vector<8x4x4x4xf32>
    %45 = arith.cmpf ogt, %43, %44 : vector<8x4x4x4xf32>
    %cst_12 = arith.constant 2.000000e-01 : f32
    %46 = vector.broadcast %cst_12 : f32 to vector<8x4x4x4xf32>
    %47 = arith.mulf %46, %43 : vector<8x4x4x4xf32>
    %48 = arith.select %45, %43, %47 : vector<8x4x4x4xi1>, vector<8x4x4x4xf32>
    %c0_13 = arith.constant 0 : index
    %c0_14 = arith.constant 0 : index
    %c0_15 = arith.constant 0 : index
    %49 = vector.load %arg2[%c0_13, %c0_14, %c0_15] : memref<1x4x4xf32, #tpu.memory_space<vmem>>, vector<1x4x4xf32>
    %50 = vector.shape_cast %49 : vector<1x4x4xf32> to vector<4x4xf32>
    %51 = vector.shape_cast %50 : vector<4x4xf32> to vector<1x1x4x4xf32>
    %52 = vector.broadcast %51 : vector<1x1x4x4xf32> to vector<8x4x4x4xf32>
    %53 = arith.addf %48, %52 : vector<8x4x4x4xf32>
    %54 = vector.shape_cast %53 : vector<8x4x4x4xf32> to vector<32x4x4xf32>
    %cst_16 = arith.constant dense<0xFF800000> : vector<32x4xf32>
    %55 = vector.multi_reduction <maximumf>, %54, %cst_16 [2] : vector<32x4x4xf32> to vector<32x4xf32>
    %56 = vector.shape_cast %55 : vector<32x4xf32> to vector<32x4x1xf32>
    %57 = vector.broadcast %56 : vector<32x4x1xf32> to vector<32x4x4xf32>
    %58 = arith.subf %54, %57 : vector<32x4x4xf32>
    %59 = math.exp %58 : vector<32x4x4xf32>
    %cst_17 = arith.constant dense<0.000000e+00> : vector<32x4xf32>
    %60 = vector.multi_reduction <add>, %59, %cst_17 [2] : vector<32x4x4xf32> to vector<32x4xf32>
    %61 = vector.shape_cast %60 : vector<32x4xf32> to vector<32x4x1xf32>
    %62 = tpu.reciprocal %61 {approx = true} : vector<32x4x1xf32> -> vector<32x4x1xf32>
    %63 = vector.broadcast %62 : vector<32x4x1xf32> to vector<32x4x4xf32>
    %64 = arith.mulf %59, %63 : vector<32x4x4xf32>
    %65 = vector.shape_cast %27 : vector<32x32xf32> to vector<8x4x4x8xf32>
    %66 = tpu.transpose %65, [0, 2, 1, 3] : vector<8x4x4x8xf32> -> vector<8x4x4x8xf32>
    %67 = vector.shape_cast %66 : vector<8x4x4x8xf32> to vector<32x4x8xf32>
    %68 = arith.truncf %64 : vector<32x4x4xf32> to vector<32x4x4xbf16>
    %69 = arith.truncf %67 : vector<32x4x8xf32> to vector<32x4x8xbf16>
    "tpu.trace_start"() <{level = 10 : i32, message = "bij,bjd->bid"}> : () -> ()
    %cst_18 = arith.constant dense<0.000000e+00> : vector<32x4x8xf32>
    %70 = tpu.matmul %68, %69, %cst_18 {dimension_numbers = #tpu.dot_dimension_numbers<[2], [1], [1], [2], [0, 0, 0, 1, 1, 2], [0], [0]>} : vector<32x4x4xbf16>, vector<32x4x8xbf16>, vector<32x4x8xf32> -> vector<32x4x8xf32>
    "tpu.trace_stop"() : () -> ()
    %71 = vector.shape_cast %70 : vector<32x4x8xf32> to vector<8x4x4x8xf32>
    %72 = tpu.transpose %71, [2, 0, 1, 3] : vector<8x4x4x8xf32> -> vector<4x8x4x8xf32>
    %73 = vector.shape_cast %72 : vector<4x8x4x8xf32> to vector<4x8x32xf32>
    %cst_19 = arith.constant 0.000000e+00 : f32
    %74 = vector.broadcast %cst_19 : f32 to vector<4x8x32xf32>
    %75 = arith.cmpf ogt, %73, %74 : vector<4x8x32xf32>
    %cst_20 = arith.constant 0.000000e+00 : f32
    %76 = vector.broadcast %cst_20 : f32 to vector<4x8x32xf32>
    %77 = arith.minimumf %73, %76 : vector<4x8x32xf32>
    %78 = math.exp %77 : vector<4x8x32xf32>
    %cst_21 = arith.constant 1.000000e+00 : f32
    %79 = vector.broadcast %cst_21 : f32 to vector<4x8x32xf32>
    %80 = arith.subf %78, %79 : vector<4x8x32xf32>
    %81 = arith.select %75, %73, %80 : vector<4x8x32xi1>, vector<4x8x32xf32>
    %cst_22 = arith.constant 0.000000e+00 : f32
    %82 = vector.broadcast %cst_22 : f32 to vector<4x1x32xf32>
    %83 = tpu.concatenate %82, %81, %82 in 1 : vector<4x1x32xf32>, vector<4x8x32xf32>, vector<4x1x32xf32> -> vector<4x10x32xf32>
    %84 = vector.extract_strided_slice %83 {offsets = [0, 0, 0], sizes = [4, 8, 32], strides = [1, 1, 1]} : vector<4x10x32xf32> to vector<4x8x32xf32>
    %85 = vector.extract_strided_slice %83 {offsets = [0, 1, 0], sizes = [4, 8, 32], strides = [1, 1, 1]} : vector<4x10x32xf32> to vector<4x8x32xf32>
    %86 = vector.extract_strided_slice %83 {offsets = [0, 2, 0], sizes = [4, 8, 32], strides = [1, 1, 1]} : vector<4x10x32xf32> to vector<4x8x32xf32>
    %87 = tpu.concatenate %84, %85, %86 in 2 : vector<4x8x32xf32>, vector<4x8x32xf32>, vector<4x8x32xf32> -> vector<4x8x96xf32>
    %88 = vector.shape_cast %87 : vector<4x8x96xf32> to vector<32x96xf32>
    %89 = arith.truncf %88 : vector<32x96xf32> to vector<32x96xbf16>
    %c208 = arith.constant 208 : index
    %c0_23 = arith.constant 0 : index
    %90 = vector.load %arg4[%c208, %c0_23] : memref<456x192xf32, #tpu.memory_space<vmem>>, vector<96x16xf32>
    %91 = arith.truncf %90 : vector<96x16xf32> to vector<96x16xbf16>
    %cst_24 = arith.constant dense<0.000000e+00> : vector<32x16xf32>
    %92 = tpu.matmul %89, %91, %cst_24 {dimension_numbers = #tpu.dot_dimension_numbers<[1], [0], [0], [1], [0, 0, 1, 1], [], []>} : vector<32x96xbf16>, vector<96x16xbf16>, vector<32x16xf32> -> vector<32x16xf32>
    %c304 = arith.constant 304 : index
    %c0_25 = arith.constant 0 : index
    %93 = vector.load %arg4[%c304, %c0_25] : memref<456x192xf32, #tpu.memory_space<vmem>>, vector<1x16xf32>
    %94 = vector.broadcast %93 : vector<1x16xf32> to vector<32x16xf32>
    %95 = arith.addf %92, %94 : vector<32x16xf32>
    %cst_26 = arith.constant 0.000000e+00 : f32
    %96 = vector.broadcast %cst_26 : f32 to vector<32x16xf32>
    %97 = arith.cmpf ogt, %95, %96 : vector<32x16xf32>
    %cst_27 = arith.constant 2.000000e-01 : f32
    %98 = vector.broadcast %cst_27 : f32 to vector<32x16xf32>
    %99 = arith.mulf %98, %95 : vector<32x16xf32>
    %100 = arith.select %97, %95, %99 : vector<32x16xi1>, vector<32x16xf32>
    %101 = vector.shape_cast %100 : vector<32x16xf32> to vector<4x8x16xf32>
    %102 = tpu.concatenate %81, %101 in 2 : vector<4x8x32xf32>, vector<4x8x16xf32> -> vector<4x8x48xf32>
    %c312 = arith.constant 312 : index
    %c0_28 = arith.constant 0 : index
    %103 = vector.load %arg4[%c312, %c0_28] : memref<456x192xf32, #tpu.memory_space<vmem>>, vector<8x48xf32>
    %104 = vector.shape_cast %103 : vector<8x48xf32> to vector<1x8x48xf32>
    %105 = vector.broadcast %104 : vector<1x8x48xf32> to vector<4x8x48xf32>
    %106 = arith.addf %102, %105 : vector<4x8x48xf32>
    %107 = vector.shape_cast %106 : vector<4x8x48xf32> to vector<32x48xf32>
    %108 = arith.truncf %107 : vector<32x48xf32> to vector<32x48xbf16>
    %c320 = arith.constant 320 : index
    %c0_29 = arith.constant 0 : index
    %109 = vector.load %arg4[%c320, %c0_29] : memref<456x192xf32, #tpu.memory_space<vmem>>, vector<48x192xf32>
    %110 = arith.truncf %109 : vector<48x192xf32> to vector<48x192xbf16>
    %cst_30 = arith.constant dense<0.000000e+00> : vector<32x192xf32>
    %111 = tpu.matmul %108, %110, %cst_30 {dimension_numbers = #tpu.dot_dimension_numbers<[1], [0], [0], [1], [0, 0, 1, 1], [], []>} : vector<32x48xbf16>, vector<48x192xbf16>, vector<32x192xf32> -> vector<32x192xf32>
    %c368 = arith.constant 368 : index
    %c0_31 = arith.constant 0 : index
    %112 = vector.load %arg4[%c368, %c0_31] : memref<456x192xf32, #tpu.memory_space<vmem>>, vector<1x192xf32>
    %113 = vector.broadcast %112 : vector<1x192xf32> to vector<32x192xf32>
    %114 = arith.addf %111, %113 : vector<32x192xf32>
    %115 = vector.extract_strided_slice %114 {offsets = [0, 0], sizes = [32, 64], strides = [1, 1]} : vector<32x192xf32> to vector<32x64xf32>
    %116 = vector.shape_cast %115 : vector<32x64xf32> to vector<4x8x4x16xf32>
    %117 = tpu.transpose %116, [0, 2, 1, 3] : vector<4x8x4x16xf32> -> vector<4x4x8x16xf32>
    %118 = vector.shape_cast %117 : vector<4x4x8x16xf32> to vector<16x8x16xf32>
    %119 = vector.extract_strided_slice %114 {offsets = [0, 64], sizes = [32, 64], strides = [1, 1]} : vector<32x192xf32> to vector<32x64xf32>
    %120 = vector.shape_cast %119 : vector<32x64xf32> to vector<4x8x4x16xf32>
    %121 = tpu.transpose %120, [0, 2, 1, 3] : vector<4x8x4x16xf32> -> vector<4x4x8x16xf32>
    %122 = vector.shape_cast %121 : vector<4x4x8x16xf32> to vector<16x8x16xf32>
    %123 = vector.extract_strided_slice %114 {offsets = [0, 128], sizes = [32, 64], strides = [1, 1]} : vector<32x192xf32> to vector<32x64xf32>
    %124 = vector.shape_cast %123 : vector<32x64xf32> to vector<4x8x4x16xf32>
    %125 = tpu.transpose %124, [0, 2, 1, 3] : vector<4x8x4x16xf32> -> vector<4x4x8x16xf32>
    %126 = vector.shape_cast %125 : vector<4x4x8x16xf32> to vector<16x8x16xf32>
    %127 = arith.truncf %118 : vector<16x8x16xf32> to vector<16x8x16xbf16>
    %128 = arith.truncf %122 : vector<16x8x16xf32> to vector<16x8x16xbf16>
    "tpu.trace_start"() <{level = 10 : i32, message = "bqd,bkd->bqk"}> : () -> ()
    %cst_32 = arith.constant dense<0.000000e+00> : vector<16x8x8xf32>
    %129 = tpu.matmul %127, %128, %cst_32 {dimension_numbers = #tpu.dot_dimension_numbers<[2], [2], [1], [1], [0, 0, 0, 1, 1, 1], [0], [0]>} : vector<16x8x16xbf16>, vector<16x8x16xbf16>, vector<16x8x8xf32> -> vector<16x8x8xf32>
    "tpu.trace_stop"() : () -> ()
    %cst_33 = arith.constant 0.288675129 : f32
    %130 = vector.broadcast %cst_33 : f32 to vector<16x8x8xf32>
    %131 = arith.mulf %129, %130 : vector<16x8x8xf32>
    %c0_34 = arith.constant 0 : index
    %c0_35 = arith.constant 0 : index
    %c0_36 = arith.constant 0 : index
    %132 = vector.load %arg3[%c0_34, %c0_35, %c0_36] : memref<1x4x8xf32, #tpu.memory_space<vmem>>, vector<1x4x8xf32>
    %133 = vector.shape_cast %132 : vector<1x4x8xf32> to vector<4x8xf32>
    %134 = vector.shape_cast %133 : vector<4x8xf32> to vector<4x1x8xf32>
    %135 = vector.shape_cast %134 : vector<4x1x8xf32> to vector<4x1x8xf32>
    %136 = vector.broadcast %135 : vector<4x1x8xf32> to vector<4x4x8xf32>
    %137 = vector.shape_cast %136 : vector<4x4x8xf32> to vector<16x1x8xf32>
    %138 = vector.broadcast %137 : vector<16x1x8xf32> to vector<16x8x8xf32>
    %139 = arith.addf %131, %138 : vector<16x8x8xf32>
    %cst_37 = arith.constant dense<0xFF800000> : vector<16x8xf32>
    %140 = vector.multi_reduction <maximumf>, %139, %cst_37 [2] : vector<16x8x8xf32> to vector<16x8xf32>
    %141 = vector.shape_cast %140 : vector<16x8xf32> to vector<16x8x1xf32>
    %142 = vector.broadcast %141 : vector<16x8x1xf32> to vector<16x8x8xf32>
    %143 = arith.subf %139, %142 : vector<16x8x8xf32>
    %144 = math.exp %143 : vector<16x8x8xf32>
    %cst_38 = arith.constant dense<0.000000e+00> : vector<16x8xf32>
    %145 = vector.multi_reduction <add>, %144, %cst_38 [2] : vector<16x8x8xf32> to vector<16x8xf32>
    %146 = vector.shape_cast %145 : vector<16x8xf32> to vector<16x8x1xf32>
    %147 = tpu.reciprocal %146 {approx = true} : vector<16x8x1xf32> -> vector<16x8x1xf32>
    %148 = vector.broadcast %147 : vector<16x8x1xf32> to vector<16x8x8xf32>
    %149 = arith.mulf %144, %148 : vector<16x8x8xf32>
    %150 = arith.truncf %149 : vector<16x8x8xf32> to vector<16x8x8xbf16>
    %151 = arith.truncf %126 : vector<16x8x16xf32> to vector<16x8x16xbf16>
    "tpu.trace_start"() <{level = 10 : i32, message = "bqk,bkd->bqd"}> : () -> ()
    %cst_39 = arith.constant dense<0.000000e+00> : vector<16x8x16xf32>
    %152 = tpu.matmul %150, %151, %cst_39 {dimension_numbers = #tpu.dot_dimension_numbers<[2], [1], [1], [2], [0, 0, 0, 1, 1, 2], [0], [0]>} : vector<16x8x8xbf16>, vector<16x8x16xbf16>, vector<16x8x16xf32> -> vector<16x8x16xf32>
    "tpu.trace_stop"() : () -> ()
    %153 = vector.shape_cast %152 : vector<16x8x16xf32> to vector<4x4x8x16xf32>
    %154 = tpu.transpose %153, [0, 2, 1, 3] : vector<4x4x8x16xf32> -> vector<4x8x4x16xf32>
    %155 = vector.shape_cast %154 : vector<4x8x4x16xf32> to vector<32x64xf32>
    %156 = arith.truncf %155 : vector<32x64xf32> to vector<32x64xbf16>
    %c376 = arith.constant 376 : index
    %c0_40 = arith.constant 0 : index
    %157 = vector.load %arg4[%c376, %c0_40] : memref<456x192xf32, #tpu.memory_space<vmem>>, vector<64x48xf32>
    %158 = arith.truncf %157 : vector<64x48xf32> to vector<64x48xbf16>
    %cst_41 = arith.constant dense<0.000000e+00> : vector<32x48xf32>
    %159 = tpu.matmul %156, %158, %cst_41 {dimension_numbers = #tpu.dot_dimension_numbers<[1], [0], [0], [1], [0, 0, 1, 1], [], []>} : vector<32x64xbf16>, vector<64x48xbf16>, vector<32x48xf32> -> vector<32x48xf32>
    %c440 = arith.constant 440 : index
    %c0_42 = arith.constant 0 : index
    %160 = vector.load %arg4[%c440, %c0_42] : memref<456x192xf32, #tpu.memory_space<vmem>>, vector<1x48xf32>
    %161 = vector.broadcast %160 : vector<1x48xf32> to vector<32x48xf32>
    %162 = arith.addf %159, %161 : vector<32x48xf32>
    %c448 = arith.constant 448 : index
    %c0_43 = arith.constant 0 : index
    %163 = vector.load %arg4[%c448, %c0_43] : memref<456x192xf32, #tpu.memory_space<vmem>>, vector<1x48xf32>
    %164 = vector.broadcast %163 : vector<1x48xf32> to vector<32x48xf32>
    %165 = arith.mulf %164, %162 : vector<32x48xf32>
    %166 = arith.addf %165, %107 : vector<32x48xf32>
    %c0_44 = arith.constant 0 : index
    %c0_45 = arith.constant 0 : index
    %c0_46 = arith.constant 0 : index
    %167 = vector.load %arg5[%c0_44, %c0_45, %c0_46] : memref<1x32x48xf32, #tpu.memory_space<vmem>>, vector<1x32x48xf32>
    %168 = vector.shape_cast %167 : vector<1x32x48xf32> to vector<32x48xf32>
    %169 = vector.shape_cast %166 : vector<32x48xf32> to vector<1x32x48xf32>
    tpu.vector_store %arg5[%c0_44, %c0_45, %c0_46], %169 {strides = array<i32>} : memref<1x32x48xf32, #tpu.memory_space<vmem>>, vector<1x32x48xf32>,
    %c0_47 = arith.constant 0 : index
    %c0_48 = arith.constant 0 : index
    %c0_49 = arith.constant 0 : index
    %170 = vector.load %arg6[%c0_47, %c0_48, %c0_49] : memref<1x32x16xf32, #tpu.memory_space<vmem>>, vector<1x32x16xf32>
    %171 = vector.shape_cast %170 : vector<1x32x16xf32> to vector<32x16xf32>
    %172 = vector.shape_cast %100 : vector<32x16xf32> to vector<1x32x16xf32>
    tpu.vector_store %arg6[%c0_47, %c0_48, %c0_49], %172 {strides = array<i32>} : memref<1x32x16xf32, #tpu.memory_space<vmem>>, vector<1x32x16xf32>,
    return
  }
  func.func @transform_0(%arg0: i32) -> (i32, i32, i32) {
    %c0_i32 = arith.constant 0 : i32
    %c0_i32_0 = arith.constant 0 : i32
    %c0_i32_1 = arith.constant 0 : i32
    return %arg0, %c0_i32, %c0_i32_0 : i32, i32, i32
  }
  func.func @transform_1(%arg0: i32) -> (i32, i32, i32) {
    %c0_i32 = arith.constant 0 : i32
    %c0_i32_0 = arith.constant 0 : i32
    %c0_i32_1 = arith.constant 0 : i32
    return %arg0, %c0_i32, %c0_i32_0 : i32, i32, i32
  }
  func.func @transform_2(%arg0: i32) -> (i32, i32, i32) {
    %c0_i32 = arith.constant 0 : i32
    %c0_i32_0 = arith.constant 0 : i32
    %c0_i32_1 = arith.constant 0 : i32
    return %arg0, %c0_i32, %c0_i32_0 : i32, i32, i32
  }
  func.func @transform_3(%arg0: i32) -> (i32, i32) {
    %c0_i32 = arith.constant 0 : i32
    %c0_i32_0 = arith.constant 0 : i32
    %c0_i32_1 = arith.constant 0 : i32
    return %c0_i32, %c0_i32_0 : i32, i32
  }
  func.func @transform_4(%arg0: i32) -> (i32, i32, i32) {
    %c0_i32 = arith.constant 0 : i32
    %c0_i32_0 = arith.constant 0 : i32
    %c0_i32_1 = arith.constant 0 : i32
    return %arg0, %c0_i32, %c0_i32_0 : i32, i32, i32
  }
  func.func @transform_5(%arg0: i32) -> (i32, i32, i32) {
    %c0_i32 = arith.constant 0 : i32
    %c0_i32_0 = arith.constant 0 : i32
    %c0_i32_1 = arith.constant 0 : i32
    return %arg0, %c0_i32, %c0_i32_0 : i32, i32, i32
  }
}

</mosaic_0001>

<llo_original>
// kernel: positional_encoding_layer_forward.1
$region0: #{positional_encoding_layer_forward.1}
  #allocation0 [shape = 'u32[]', space=smem, size = 0x4, offset = 0x4, fixed_abs, tag = 'smem constant byte address 0x4 - core index']
  #allocation1 [shape = 'u32[144,128]{1,0:T(1,128)}', space=vmem, size = 0x12000, scoped, tag = 'internal scratch']
  %s0 = inlined_call_operand.vmem [shape: s32[2,32,2], index: 0, kind: input, shape index: {}]
  %s1 = inlined_call_operand.vmem [shape: f32[2,4,4], index: 1, kind: input, shape index: {}]
  %s2 = inlined_call_operand.vmem [shape: f32[2,4,8], index: 2, kind: input, shape index: {}]
  %s3 = inlined_call_operand.vmem [shape: f32[456,192], index: 3, kind: input, shape index: {}]
  %s4 = inlined_call_operand.hbm [shape: f32[2,32,48], index: 4, kind: output, shape index: {0}]
  %s5 = inlined_call_operand.hbm [shape: f32[2,32,16], index: 5, kind: output, shape index: {1}]
  %6 = xla_tuple %s4, %s5
  %s7 = sld [smem:[#allocation0]]
  $region57: #{positional_encoding_layer_forward.1} parent=0
    _
  %s9 = ssub.s32 1, %s7
  %s10 = scalar_select 0, %s9, %s7
  $region1: #{positional_encoding_layer_forward.1} parent=0
    #allocation2 [shape = 'u8[32768]{0}', space=vmem, size = 0x8000, scoped, tag = 'output window, operand 0']
    #allocation3 [shape = 's32[2]{0}', space=sflag, size = 0x8, scoped, tag = 'scoped memory for positional_encoding_layer_forward.1']
    #allocation4 [shape = 'u8[32768]{0}', space=vmem, size = 0x8000, scoped, tag = 'output window, operand 1']
    #allocation5 [shape = 's32[2]{0}', space=sflag, size = 0x8, scoped, tag = 'scoped memory for positional_encoding_layer_forward.1']
    %11 = vsyncpa [#allocation3], 0
    %s12 = scalar_lea.sflag [#allocation3], 1
    %13 = vsyncpa %s12, 0
    %14 = vsyncpa [#allocation5], 0
    %s15 = scalar_lea.sflag [#allocation5], 1
    %16 = vsyncpa %s15, 0
    loop: start=0, step=1, limit=4
    $region2: #{positional_encoding_layer_forward.1} parent=1 // loop_pre_header
      _
    $region3: #{positional_encoding_layer_forward.1} parent=1 // loop_header
      %s18 = sphi 0, %s22
      %p19 = scmp.ge.s32.totalorder %s18, 4
      %s28 = sphi 0, %s30
      %s31 = sphi 0, %s28
      %s32 = sphi 0, %s31
      %s48 = sphi 0, %s32
      %s54 = sphi 0, %s56
      %s57 = sphi 0, %s54
      %s58 = sphi 0, %s57
      %s74 = sphi 0, %s58
      %s80 = sphi 0, %s82
      %s83 = sphi 0, %s80
      %s84 = sphi 0, %s83
      %s100 = sphi 0, %s84
      %s104 = sphi 0, %s104
      %s106 = sphi 0, %s104
      %s107 = sphi 0, %s106
      %s121 = sphi 0, %s107
      %s127 = sphi 0, %s129
      %s130 = sphi 0, %s127
      %s131 = sphi 0, %s130
      %s147 = sphi 0, %s131
      %s153 = sphi 0, %s155
      %s156 = sphi 0, %s153
      %s157 = sphi 0, %s156
      %s173 = sphi 0, %s157
    $region4: #{positional_encoding_layer_forward.1} parent=1 // loop_header_branch
      %21 = sbr.rel (%p19) target = $region8
    $region5: #{positional_encoding_layer_forward.1} parent=1 // loop_body
      %s23 = ssub.s32 %s18, 1
      %s24 = ssub.s32 %s18, 2
      %s25 = sadd.s32 %s18, 1
      %s26 = ssub.s32 %s18, %s25
      %p27 = scmp.eq.s32.totalorder %s26, 0
      %s29 = sadd.s32 %s28, 1
      %s30 = scalar_select %p27, %s28, %s29
      %p33 = pneg %p27
      %p34 = scmp.eq.s32.totalorder %s18, 1
      %p35 = por %p33, %p34
      %p36 = scmp.ne.s32.totalorder %s28, %s31
      %p37 = scmp.eq.s32.totalorder %s18, 0
      %p38 = por %p36, %p37
      %p39 = scmp.ne.s32.totalorder %s28, %s31
      %p40 = scmp.eq.s32.totalorder %s23, 1
      %p41 = por %p39, %p40
      %p42 = scmp.ne.s32.totalorder %s31, %s32
      %p43 = scmp.eq.s32.totalorder %s23, 0
      %p44 = por %p42, %p43
      %p45 = scmp.ne.s32.totalorder %s31, %s32
      %p46 = scmp.eq.s32.totalorder %s24, 1
      %p47 = por %p45, %p46
      %p49 = scmp.ne.s32.totalorder %s32, %s48
      %p50 = scmp.eq.s32.totalorder %s24, 0
      %p51 = por %p49, %p50
      %s52 = ssub.s32 %s18, %s25
      %p53 = scmp.eq.s32.totalorder %s52, 0
      %s55 = sadd.s32 %s54, 1
      %s56 = scalar_select %p53, %s54, %s55
      %p59 = pneg %p53
      %p60 = scmp.eq.s32.totalorder %s18, 1
      %p61 = por %p59, %p60
      %p62 = scmp.ne.s32.totalorder %s54, %s57
      %p63 = scmp.eq.s32.totalorder %s18, 0
      %p64 = por %p62, %p63
      %p65 = scmp.ne.s32.totalorder %s54, %s57
      %p66 = scmp.eq.s32.totalorder %s23, 1
      %p67 = por %p65, %p66
      %p68 = scmp.ne.s32.totalorder %s57, %s58
      %p69 = scmp.eq.s32.totalorder %s23, 0
      %p70 = por %p68, %p69
      %p71 = scmp.ne.s32.totalorder %s57, %s58
      %p72 = scmp.eq.s32.totalorder %s24, 1
      %p73 = por %p71, %p72
      %p75 = scmp.ne.s32.totalorder %s58, %s74
      %p76 = scmp.eq.s32.totalorder %s24, 0
      %p77 = por %p75, %p76
      %s78 = ssub.s32 %s18, %s25
      %p79 = scmp.eq.s32.totalorder %s78, 0
      %s81 = sadd.s32 %s80, 1
      %s82 = scalar_select %p79, %s80, %s81
      %p85 = pneg %p79
      %p86 = scmp.eq.s32.totalorder %s18, 1
      %p87 = por %p85, %p86
      %p88 = scmp.ne.s32.totalorder %s80, %s83
      %p89 = scmp.eq.s32.totalorder %s18, 0
      %p90 = por %p88, %p89
      %p91 = scmp.ne.s32.totalorder %s80, %s83
      %p92 = scmp.eq.s32.totalorder %s23, 1
      %p93 = por %p91, %p92
      %p94 = scmp.ne.s32.totalorder %s83, %s84
      %p95 = scmp.eq.s32.totalorder %s23, 0
      %p96 = por %p94, %p95
      %p97 = scmp.ne.s32.totalorder %s83, %s84
      %p98 = scmp.eq.s32.totalorder %s24, 1
      %p99 = por %p97, %p98
      %p101 = scmp.ne.s32.totalorder %s84, %s100
      %p102 = scmp.eq.s32.totalorder %s24, 0
      %p103 = por %p101, %p102
      %s105 = sadd.s32 %s104, 1
      %p108 = scmp.eq.s32.totalorder %s18, 1
      %p109 = scmp.ne.s32.totalorder %s104, %s106
      %p110 = scmp.eq.s32.totalorder %s18, 0
      %p111 = por %p109, %p110
      %p112 = scmp.ne.s32.totalorder %s104, %s106
      %p113 = scmp.eq.s32.totalorder %s23, 1
      %p114 = por %p112, %p113
      %p115 = scmp.ne.s32.totalorder %s106, %s107
      %p116 = scmp.eq.s32.totalorder %s23, 0
      %p117 = por %p115, %p116
      %p118 = scmp.ne.s32.totalorder %s106, %s107
      %p119 = scmp.eq.s32.totalorder %s24, 1
      %p120 = por %p118, %p119
      %p122 = scmp.ne.s32.totalorder %s107, %s121
      %p123 = scmp.eq.s32.totalorder %s24, 0
      %p124 = por %p122, %p123
      %s125 = ssub.s32 %s18, %s25
      %p126 = scmp.eq.s32.totalorder %s125, 0
      %s128 = sadd.s32 %s127, 1
      %s129 = scalar_select %p126, %s127, %s128
      %p132 = pneg %p126
      %p133 = scmp.eq.s32.totalorder %s18, 1
      %p134 = por %p132, %p133
      %p135 = scmp.ne.s32.totalorder %s127, %s130
      %p136 = scmp.eq.s32.totalorder %s18, 0
      %p137 = por %p135, %p136
      %p138 = scmp.ne.s32.totalorder %s127, %s130
      %p139 = scmp.eq.s32.totalorder %s23, 1
      %p140 = por %p138, %p139
      %p141 = scmp.ne.s32.totalorder %s130, %s131
      %p142 = scmp.eq.s32.totalorder %s23, 0
      %p143 = por %p141, %p142
      %p144 = scmp.ne.s32.totalorder %s130, %s131
      %p145 = scmp.eq.s32.totalorder %s24, 1
      %p146 = por %p144, %p145
      %p148 = scmp.ne.s32.totalorder %s131, %s147
      %p149 = scmp.eq.s32.totalorder %s24, 0
      %p150 = por %p148, %p149
      %s151 = ssub.s32 %s18, %s25
      %p152 = scmp.eq.s32.totalorder %s151, 0
      %s154 = sadd.s32 %s153, 1
      %s155 = scalar_select %p152, %s153, %s154
      %p158 = pneg %p152
      %p159 = scmp.eq.s32.totalorder %s18, 1
      %p160 = por %p158, %p159
      %p161 = scmp.ne.s32.totalorder %s153, %s156
      %p162 = scmp.eq.s32.totalorder %s18, 0
      %p163 = por %p161, %p162
      %p164 = scmp.ne.s32.totalorder %s153, %s156
      %p165 = scmp.eq.s32.totalorder %s23, 1
      %p166 = por %p164, %p165
      %p167 = scmp.ne.s32.totalorder %s156, %s157
      %p168 = scmp.eq.s32.totalorder %s23, 0
      %p169 = por %p167, %p168
      %p170 = scmp.ne.s32.totalorder %s156, %s157
      %p171 = scmp.eq.s32.totalorder %s24, 1
      %p172 = por %p170, %p171
      %p174 = scmp.ne.s32.totalorder %s157, %s173
      %p175 = scmp.eq.s32.totalorder %s24, 0
      %p176 = por %p174, %p175
      %p177 = scmp.le.s32.totalorder 1, %s18
      %p178 = scmp.lt.s32.totalorder %s18, 3
      %p179 = pnand %p177, %p178
      %p180 = pneg %p179
      // Predicated region
      $region9: #{positional_encoding_layer_forward.1} parent=5 // pred_check
        _
      $region10: #{positional_encoding_layer_forward.1} parent=5 // pred_check_branch
        %182 = sbr.rel (%p179) target = $region12
      $region11: #{positional_encoding_layer_forward.1} parent=5 // pred_region
        %s183 = ssub.s32 %s18, 1
        // Predicated region
        $region13: #{positional_encoding_layer_forward.1} parent=11 // pred_check
          %p184 = pneg %p117
        $region14: #{positional_encoding_layer_forward.1} parent=11 // pred_check_branch
          %186 = sbr.rel (%p184) target = $region16
        $region15: #{positional_encoding_layer_forward.1} parent=11 // pred_region
          _
        $region16: #{positional_encoding_layer_forward.1} parent=11 // pred_fallthru
          _
      $region12: #{positional_encoding_layer_forward.1} parent=5 // pred_fallthru
        _
      %p187 = scmp.lt.s32.totalorder %s18, 2
      // Predicated region
      $region17: #{positional_encoding_layer_forward.1} parent=5 // pred_check
        %p188 = pneg %p187
      $region18: #{positional_encoding_layer_forward.1} parent=5 // pred_check_branch
        %190 = sbr.rel (%p188) target = $region20
      $region19: #{positional_encoding_layer_forward.1} parent=5 // pred_region
        // Predicated region
        $region21: #{positional_encoding_layer_forward.1} parent=19 // pred_check
          %p191 = pneg %p38
        $region22: #{positional_encoding_layer_forward.1} parent=19 // pred_check_branch
          %193 = sbr.rel (%p191) target = $region24
        $region23: #{positional_encoding_layer_forward.1} parent=19 // pred_region
          %p194 = scmp.lt.s32.totalorder %s18, 1
          %s195 = scalar_select %p194, %s18, 1
          %s196 = smul.addr %s195, 4
          %s197 = smul.addr %s196, 8
          %s198 = scalar_lea.vmem %s0, %s197
        $region24: #{positional_encoding_layer_forward.1} parent=19 // pred_fallthru
          _
        // Predicated region
        $region25: #{positional_encoding_layer_forward.1} parent=19 // pred_check
          %p199 = pneg %p64
        $region26: #{positional_encoding_layer_forward.1} parent=19 // pred_check_branch
          %201 = sbr.rel (%p199) target = $region28
        $region27: #{positional_encoding_layer_forward.1} parent=19 // pred_region
          %p202 = scmp.lt.s32.totalorder %s18, 1
          %s203 = scalar_select %p202, %s18, 1
          %s204 = smul.addr %s203, 4
          %s205 = scalar_lea.vmem %s1, %s204
        $region28: #{positional_encoding_layer_forward.1} parent=19 // pred_fallthru
          _
        // Predicated region
        $region29: #{positional_encoding_layer_forward.1} parent=19 // pred_check
          %p206 = pneg %p90
        $region30: #{positional_encoding_layer_forward.1} parent=19 // pred_check_branch
          %208 = sbr.rel (%p206) target = $region32
        $region31: #{positional_encoding_layer_forward.1} parent=19 // pred_region
          %p209 = scmp.lt.s32.totalorder %s18, 1
          %s210 = scalar_select %p209, %s18, 1
          %s211 = smul.addr %s210, 4
          %s212 = scalar_lea.vmem %s2, %s211
        $region32: #{positional_encoding_layer_forward.1} parent=19 // pred_fallthru
          _
      $region20: #{positional_encoding_layer_forward.1} parent=5 // pred_fallthru
        _
      %p213 = scmp.le.s32.totalorder 1, %s18
      %p214 = scmp.lt.s32.totalorder %s18, 3
      %p215 = pnand %p213, %p214
      %p216 = pneg %p215
      // Predicated region
      $region33: #{positional_encoding_layer_forward.1} parent=5 // pred_check
        _
      $region34: #{positional_encoding_layer_forward.1} parent=5 // pred_check_branch
        %218 = sbr.rel (%p215) target = $region36
      $region35: #{positional_encoding_layer_forward.1} parent=5 // pred_region
        %s219 = ssub.s32 %s18, 1
        %p220 = scmp.lt.s32.totalorder %s23, 1
        %s221 = scalar_select %p220, %s23, 1
        %s222 = smul.addr %s221, 4
        %s223 = smul.addr %s222, 8
        %s224 = scalar_lea.vmem %s0, %s223
        %p225 = pneg %p44
        %p226 = pneg %p41
        %p227 = scmp.lt.s32.totalorder %s23, 1
        %s228 = scalar_select %p227, %s23, 1
        %s229 = smul.addr %s228, 4
        %s230 = scalar_lea.vmem %s1, %s229
        %p231 = pneg %p70
        %p232 = pneg %p67
        %p233 = scmp.lt.s32.totalorder %s23, 1
        %s234 = scalar_select %p233, %s23, 1
        %s235 = smul.addr %s234, 4
        %s236 = scalar_lea.vmem %s2, %s235
        %p237 = pneg %p96
        %p238 = pneg %p93
        %p239 = pneg %p117
        %p240 = pneg %p114
        %p241 = pneg %p143
        %p242 = pneg %p140
        %s243 = sand.u32 %s130, 1
        %s244 = scalar_lea.sflag [#allocation3], %s243
        %s245 = sand.u32 %s130, 1
        %s246 = smul.addr %s245, 32
        %s247 = scalar_lea.vmem [#allocation2], %s246
        %p248 = pneg %p169
        %p249 = pneg %p166
        %s250 = sand.u32 %s156, 1
        %s251 = scalar_lea.sflag [#allocation5], %s250
        %s252 = sand.u32 %s156, 1
        %s253 = smul.addr %s252, 32
        %s254 = scalar_lea.vmem [#allocation4], %s253
        %p255 = scmp.lt.s32.totalorder %s23, 1
        %s256 = scalar_select %p255, %s23, 1
        %s257 = smul.addr %s256, 4
        %s258 = smul.addr %s257, 8
        %s259 = scalar_lea.vmem %s0, %s258
        %p260 = scmp.lt.s32.totalorder %s23, 1
        %s261 = scalar_select %p260, %s23, 1
        %s262 = smul.addr %s261, 4
        %s263 = scalar_lea.vmem %s1, %s262
        %p264 = scmp.lt.s32.totalorder %s23, 1
        %s265 = scalar_select %p264, %s23, 1
        %s266 = smul.addr %s265, 4
        %s267 = scalar_lea.vmem %s2, %s266
        %v269 = vld [vmem:[%s259] sm:$0xff]
        %v270 = vld [vmem:[%s259 + $0x8] sm:$0xff]
        %v271 = vld [vmem:[%s259 + $0x10] sm:$0xff]
        %v272 = vld [vmem:[%s259 + $0x18] sm:$0xff]
        %v273 = vlaneseq
        %v274 = vand.u32 %v273, 127
        %275 = vset.pattern.permute.xlu0 0
        %276 = vperm.xlu0 %275, %v269
        %v277 = vpop.permute.xlu0 %276
        %278 = vset.pattern.permute.xlu0 0
        %279 = vperm.xlu0 %278, %v270
        %v280 = vpop.permute.xlu0 %279
        %281 = vset.pattern.permute.xlu0 0
        %282 = vperm.xlu0 %281, %v271
        %v283 = vpop.permute.xlu0 %282
        %284 = vset.pattern.permute.xlu0 0
        %285 = vperm.xlu0 %284, %v272
        %v286 = vpop.permute.xlu0 %285
        %vm287 = vcmp.eq.s32.totalorder %v277, %v274
        %vm288 = vcmp.eq.s32.totalorder %v280, %v274
        %vm289 = vcmp.eq.s32.totalorder %v283, %v274
        %vm290 = vcmp.eq.s32.totalorder %v286, %v274
        %v291 = vsel %vm287, 1, 0
        %v292 = vsel %vm288, 1, 0
        %v293 = vsel %vm289, 1, 0
        %v294 = vsel %vm290, 1, 0
        %v295 = vcvt.s32.f32 %v291
        %v296 = vcvt.s32.f32 %v292
        %v297 = vcvt.s32.f32 %v293
        %v298 = vcvt.s32.f32 %v294
        %v299 = vpack.c.bf16 %v296, %v295
        %v300 = vpack.c.bf16 %v298, %v297
        %v301 = vadd.s32 %v269, 50
        %v302 = vadd.s32 %v270, 50
        %v303 = vadd.s32 %v271, 50
        %v304 = vadd.s32 %v272, 50
        %305 = vset.pattern.permute.xlu0 1
        %306 = vperm.xlu0 %305, %v301
        %v307 = vpop.permute.xlu0 %306
        %308 = vset.pattern.permute.xlu0 1
        %309 = vperm.xlu0 %308, %v302
        %v310 = vpop.permute.xlu0 %309
        %311 = vset.pattern.permute.xlu0 1
        %312 = vperm.xlu0 %311, %v303
        %v313 = vpop.permute.xlu0 %312
        %314 = vset.pattern.permute.xlu0 1
        %315 = vperm.xlu0 %314, %v304
        %v316 = vpop.permute.xlu0 %315
        %vm317 = vcmp.eq.s32.totalorder %v307, %v274
        %vm318 = vcmp.eq.s32.totalorder %v310, %v274
        %vm319 = vcmp.eq.s32.totalorder %v313, %v274
        %vm320 = vcmp.eq.s32.totalorder %v316, %v274
        %v321 = vsel %vm317, 1, 0
        %v322 = vsel %vm318, 1, 0
        %v323 = vsel %vm319, 1, 0
        %v324 = vsel %vm320, 1, 0
        %v325 = vcvt.s32.f32 %v321
        %v326 = vcvt.s32.f32 %v322
        %v327 = vcvt.s32.f32 %v323
        %v328 = vcvt.s32.f32 %v324
        %v329 = vpack.c.bf16 %v326, %v325
        %v330 = vpack.c.bf16 %v328, %v327
        %v331 = vadd.bf16 %v299, %v329
        %v332 = vadd.bf16 %v300, %v330
        %v333 = vld [vmem:[%s3] sm:$0xff]
        %v334 = vld [vmem:[%s3 + $0x10] sm:$0xff]
        %v335 = vld [vmem:[%s3 + $0x20] sm:$0xff]
        %v336 = vld [vmem:[%s3 + $0x30] sm:$0xff]
        %v337 = vld [vmem:[%s3 + $0x40] sm:$0xff]
        %v338 = vld [vmem:[%s3 + $0x50] sm:$0xff]
        %v339 = vld [vmem:[%s3 + $0x60] sm:$0xff]
        %v340 = vld [vmem:[%s3 + $0x70] sm:$0xff]
        %v341 = vld [vmem:[%s3 + $0x80] sm:$0xff]
        %v342 = vld [vmem:[%s3 + $0x90] sm:$0xff]
        %v343 = vld [vmem:[%s3 + $0xa0] sm:$0xff]
        %v344 = vld [vmem:[%s3 + $0xb0] sm:$0xff]
        %v345 = vld [vmem:[%s3 + $0xc0] sm:$0xf]
        %v346 = vpack.c.bf16 %v334, %v333
        %v347 = vpack.c.bf16 %v336, %v335
        %v348 = vpack.c.bf16 %v338, %v337
        %v349 = vpack.c.bf16 %v340, %v339
        %v350 = vpack.c.bf16 %v342, %v341
        %v351 = vpack.c.bf16 %v344, %v343
        %v352 = vpack.c.bf16 %v345, %v345
        %vm353 = vcmask 818176
        %v355 = vsel %vm353, %v331, 0
        %v358 = vsel %vm353, %v332, 0
        %vm360 = vcmask 1041408
        %v362 = vsel %vm360, %v352, 0
        %364 = vmatprep.subr.bf16.mxu0 0
        %365 = vmatpush1.bf16.msra.mxu0 %v346
        %366 = vmatprep.subr.bf16.mxu0 0
        %367 = vmatpush1.bf16.msra.mxu0 %v347
        %368 = vmatprep.subr.bf16.mxu0 0
        %369 = vmatpush1.bf16.msra.mxu0 %v348
        %370 = vmatprep.subr.bf16.mxu0 0
        %371 = vmatpush1.bf16.msra.mxu0 %v349
        %372 = vmatprep.subr.bf16.mxu0 0
        %373 = vmatpush1.bf16.msra.mxu0 %v350
        %374 = vmatprep.subr.bf16.mxu0 0
        %375 = vmatpush1.bf16.msra.mxu0 %v351
        %376 = vmatprep.subr.bf16.mxu0 0
        %377 = vmatpush1.bf16.msra.mxu0 %v362
        %378 = vmatprep.subr.bf16.mxu0 0
        %379 = vmatpush1.bf16.msra.mxu0 0
        %380 = vmatprep.subr.bf16.mxu0 0
        %381 = vmatpush1.bf16.msra.mxu0 0
        %382 = vmatprep.subr.bf16.mxu0 0
        %383 = vmatpush1.bf16.msra.mxu0 0
        %384 = vmatprep.subr.bf16.mxu0 0
        %385 = vmatpush1.bf16.msra.mxu0 0
        %386 = vmatprep.subr.bf16.mxu0 0
        %387 = vmatpush1.bf16.msra.mxu0 0
        %388 = vmatprep.subr.bf16.mxu0 0
        %389 = vmatpush1.bf16.msra.mxu0 0
        %390 = vmatprep.subr.bf16.mxu0 0
        %391 = vmatpush1.bf16.msra.mxu0 0
        %392 = vmatprep.subr.bf16.mxu0 0
        %393 = vmatpush1.bf16.msra.mxu0 0
        %394 = vmatprep.subr.bf16.mxu0 0
        %395 = vmatpush1.bf16.msra.mxu0 0
        %396 = vmatprep.mubr.bf16.mxu0 0
        %397 = vmatmul.mubr.bf16.gmra.mrb[0].mxu0 %v355
        %v398 = vpop.f32.mrb[0].mxu0
        %v399 = vadd.f32 0.0, %v398
        %v400 = vpop.f32.mrb[0].mxu0
        %v401 = vpop.f32.mrb[0].mxu0
        %v402 = vadd.f32 0.0, %v401
        %v403 = vpop.f32.mrb[0].mxu0
        %404 = vmatprep.mubr.bf16.mxu0 0
        %405 = vmatmul.mubr.bf16.gmra.mrb[0].mxu0 %v358
        %v406 = vpop.f32.mrb[0].mxu0
        %v407 = vadd.f32 0.0, %v406
        %v408 = vpop.f32.mrb[0].mxu0
        %v409 = vpop.f32.mrb[0].mxu0
        %v410 = vadd.f32 0.0, %v409
        %v411 = vpop.f32.mrb[0].mxu0
        %412 = vdwg.mxu0
        %v413 = vpack.c.bf16 %v402, %v399
        %v414 = vpack.c.bf16 %v410, %v407
        %v415 = vld [vmem:[%s3 + $0xd0] sm:$0xff]
        %v416 = vld [vmem:[%s3 + $0xe0] sm:$0xff]
        %v417 = vld [vmem:[%s3 + $0xf0] sm:$0xff]
        %v418 = vld [vmem:[%s3 + $0x100] sm:$0xff]
        %v419 = vpack.c.bf16 %v416, %v415
        %v420 = vpack.c.bf16 %v418, %v417
        %v421 = vld [vmem:[%s3 + $0x110] ss:$0 sm:$0xff]
        %vm422 = vcmask 261120
        %v424 = vsel %vm422, %v413, 0
        %v427 = vsel %vm422, %v414, 0
        %429 = vmatprep.subr.bf16.mxu0 0
        %430 = vmatpush1.bf16.msra.mxu0 %v419
        %431 = vmatprep.subr.bf16.mxu0 0
        %432 = vmatpush1.bf16.msra.mxu0 %v420
        %433 = vmatprep.subr.bf16.mxu0 0
        %434 = vmatpush1.bf16.msra.mxu0 0
        %435 = vmatprep.subr.bf16.mxu0 0
        %436 = vmatpush1.bf16.msra.mxu0 0
        %437 = vmatprep.subr.bf16.mxu0 0
        %438 = vmatpush1.bf16.msra.mxu0 0
        %439 = vmatprep.subr.bf16.mxu0 0
        %440 = vmatpush1.bf16.msra.mxu0 0
        %441 = vmatprep.subr.bf16.mxu0 0
        %442 = vmatpush1.bf16.msra.mxu0 0
        %443 = vmatprep.subr.bf16.mxu0 0
        %444 = vmatpush1.bf16.msra.mxu0 0
        %445 = vmatprep.subr.bf16.mxu0 0
        %446 = vmatpush1.bf16.msra.mxu0 0
        %447 = vmatprep.subr.bf16.mxu0 0
        %448 = vmatpush1.bf16.msra.mxu0 0
        %449 = vmatprep.subr.bf16.mxu0 0
        %450 = vmatpush1.bf16.msra.mxu0 0
        %451 = vmatprep.subr.bf16.mxu0 0
        %452 = vmatpush1.bf16.msra.mxu0 0
        %453 = vmatprep.subr.bf16.mxu0 0
        %454 = vmatpush1.bf16.msra.mxu0 0
        %455 = vmatprep.subr.bf16.mxu0 0
        %456 = vmatpush1.bf16.msra.mxu0 0
        %457 = vmatprep.subr.bf16.mxu0 0
        %458 = vmatpush1.bf16.msra.mxu0 0
        %459 = vmatprep.subr.bf16.mxu0 0
        %460 = vmatpush1.bf16.msra.mxu0 0
        %461 = vmatprep.mubr.bf16.mxu0 0
        %462 = vmatmul.mubr.bf16.gmra.mrb[0].mxu0 %v424
        %v463 = vpop.f32.mrb[0].mxu0
        %v464 = vadd.f32 %v421, %v463
        %v465 = vpop.f32.mrb[0].mxu0
        %v466 = vpop.f32.mrb[0].mxu0
        %v467 = vadd.f32 %v421, %v466
        %v468 = vpop.f32.mrb[0].mxu0
        %469 = vmatprep.mubr.bf16.mxu0 0
        %470 = vmatmul.mubr.bf16.gmra.mrb[0].mxu0 %v427
        %v471 = vpop.f32.mrb[0].mxu0
        %v472 = vadd.f32 %v421, %v471
        %v473 = vpop.f32.mrb[0].mxu0
        %v474 = vpop.f32.mrb[0].mxu0
        %v475 = vadd.f32 %v421, %v474
        %v476 = vpop.f32.mrb[0].mxu0
        %477 = vdwg.mxu0
        %v478 = vpack.c.bf16 %v467, %v464
        %v479 = vpack.c.bf16 %v475, %v472
        %v480 = vld [vmem:[%s3 + $0x120] sm:$0xff]
        %v481 = vld [vmem:[%s3 + $0x130] sm:$0xff]
        %v482 = vld [vmem:[%s3 + $0x140] sm:$0xff]
        %v483 = vld [vmem:[%s3 + $0x150] sm:$0xff]
        %v484 = vpack.c.bf16 %v481, %v480
        %v485 = vpack.c.bf16 %v483, %v482
        %v487 = vsel %vm422, %v478, 0
        %v490 = vsel %vm422, %v479, 0
        %492 = vmatprep.subr.bf16.mxu0 0
        %493 = vmatpush1.bf16.msra.mxu0 %v484
        %494 = vmatprep.subr.bf16.mxu0 0
        %495 = vmatpush1.bf16.msra.mxu0 %v485
        %496 = vmatprep.subr.bf16.mxu0 0
        %497 = vmatpush1.bf16.msra.mxu0 0
        %498 = vmatprep.subr.bf16.mxu0 0
        %499 = vmatpush1.bf16.msra.mxu0 0
        %500 = vmatprep.subr.bf16.mxu0 0
        %501 = vmatpush1.bf16.msra.mxu0 0
        %502 = vmatprep.subr.bf16.mxu0 0
        %503 = vmatpush1.bf16.msra.mxu0 0
        %504 = vmatprep.subr.bf16.mxu0 0
        %505 = vmatpush1.bf16.msra.mxu0 0
        %506 = vmatprep.subr.bf16.mxu0 0
        %507 = vmatpush1.bf16.msra.mxu0 0
        %508 = vmatprep.subr.bf16.mxu0 0
        %509 = vmatpush1.bf16.msra.mxu0 0
        %510 = vmatprep.subr.bf16.mxu0 0
        %511 = vmatpush1.bf16.msra.mxu0 0
        %512 = vmatprep.subr.bf16.mxu0 0
        %513 = vmatpush1.bf16.msra.mxu0 0
        %514 = vmatprep.subr.bf16.mxu0 0
        %515 = vmatpush1.bf16.msra.mxu0 0
        %516 = vmatprep.subr.bf16.mxu0 0
        %517 = vmatpush1.bf16.msra.mxu0 0
        %518 = vmatprep.subr.bf16.mxu0 0
        %519 = vmatpush1.bf16.msra.mxu0 0
        %520 = vmatprep.subr.bf16.mxu0 0
        %521 = vmatpush1.bf16.msra.mxu0 0
        %522 = vmatprep.subr.bf16.mxu0 0
        %523 = vmatpush1.bf16.msra.mxu0 0
        %524 = vmatprep.mubr.bf16.mxu0 0
        %525 = vmatmul.mubr.bf16.gmra.mrb[0].mxu0 %v487
        %v526 = vpop.f32.mrb[0].mxu0
        %v527 = vadd.f32 0.0, %v526
        %v528 = vpop.f32.mrb[0].mxu0
        %v529 = vpop.f32.mrb[0].mxu0
        %v530 = vadd.f32 0.0, %v529
        %v531 = vpop.f32.mrb[0].mxu0
        %532 = vmatprep.mubr.bf16.mxu0 0
        %533 = vmatmul.mubr.bf16.gmra.mrb[0].mxu0 %v490
        %v534 = vpop.f32.mrb[0].mxu0
        %v535 = vadd.f32 0.0, %v534
        %v536 = vpop.f32.mrb[0].mxu0
        %v537 = vpop.f32.mrb[0].mxu0
        %v538 = vadd.f32 0.0, %v537
        %v539 = vpop.f32.mrb[0].mxu0
        %540 = vdwg.mxu0
        %v541 = vld [vmem:[%s3 + $0x160] sm:$0xff]
        %v542 = vld [vmem:[%s3 + $0x170] sm:$0xff]
        %v543 = vld [vmem:[%s3 + $0x180] sm:$0xff]
        %v544 = vld [vmem:[%s3 + $0x190] sm:$0xff]
        %v545 = vpack.c.bf16 %v542, %v541
        %v546 = vpack.c.bf16 %v544, %v543
        %547 = vmatprep.subr.bf16.mxu0 0
        %548 = vmatpush1.bf16.msra.mxu0 %v545
        %549 = vmatprep.subr.bf16.mxu0 0
        %550 = vmatpush1.bf16.msra.mxu0 %v546
        %551 = vmatprep.subr.bf16.mxu0 0
        %552 = vmatpush1.bf16.msra.mxu0 0
        %553 = vmatprep.subr.bf16.mxu0 0
        %554 = vmatpush1.bf16.msra.mxu0 0
        %555 = vmatprep.subr.bf16.mxu0 0
        %556 = vmatpush1.bf16.msra.mxu0 0
        %557 = vmatprep.subr.bf16.mxu0 0
        %558 = vmatpush1.bf16.msra.mxu0 0
        %559 = vmatprep.subr.bf16.mxu0 0
        %560 = vmatpush1.bf16.msra.mxu0 0
        %561 = vmatprep.subr.bf16.mxu0 0
        %562 = vmatpush1.bf16.msra.mxu0 0
        %563 = vmatprep.subr.bf16.mxu0 0
        %564 = vmatpush1.bf16.msra.mxu0 0
        %565 = vmatprep.subr.bf16.mxu0 0
        %566 = vmatpush1.bf16.msra.mxu0 0
        %567 = vmatprep.subr.bf16.mxu0 0
        %568 = vmatpush1.bf16.msra.mxu0 0
        %569 = vmatprep.subr.bf16.mxu0 0
        %570 = vmatpush1.bf16.msra.mxu0 0
        %571 = vmatprep.subr.bf16.mxu0 0
        %572 = vmatpush1.bf16.msra.mxu0 0
        %573 = vmatprep.subr.bf16.mxu0 0
        %574 = vmatpush1.bf16.msra.mxu0 0
        %575 = vmatprep.subr.bf16.mxu0 0
        %576 = vmatpush1.bf16.msra.mxu0 0
        %577 = vmatprep.subr.bf16.mxu0 0
        %578 = vmatpush1.bf16.msra.mxu0 0
        %579 = vmatprep.mubr.bf16.mxu0 0
        %580 = vmatmul.mubr.bf16.gmra.mrb[0].mxu0 %v487
        %v581 = vpop.f32.mrb[0].mxu0
        %v582 = vadd.f32 0.0, %v581
        %v583 = vpop.f32.mrb[0].mxu0
        %v584 = vpop.f32.mrb[0].mxu0
        %v585 = vadd.f32 0.0, %v584
        %v586 = vpop.f32.mrb[0].mxu0
        %587 = vmatprep.mubr.bf16.mxu0 0
        %588 = vmatmul.mubr.bf16.gmra.mrb[0].mxu0 %v490
        %v589 = vpop.f32.mrb[0].mxu0
        %v590 = vadd.f32 0.0, %v589
        %v591 = vpop.f32.mrb[0].mxu0
        %v592 = vpop.f32.mrb[0].mxu0
        %v593 = vadd.f32 0.0, %v592
        %v594 = vpop.f32.mrb[0].mxu0
        %595 = vdwg.mxu0
        %v600 = vcombine.high %v527, %v527
        %v601 = vcombine.high %v530, %v530
        %v602 = vcombine.high %v535, %v535
        %v603 = vcombine.high %v538, %v538
        %608 = vxpose.xlu0.b32.start [1/16] %v527, 128
        %609 = vxpose.xlu0.b32.cont [2/16] 0.0, 128
        %610 = vxpose.xlu0.b32.cont [3/16] 0.0, 128
        %611 = vxpose.xlu0.b32.cont [4/16] 0.0, 128
        %612 = vxpose.xlu0.b32.cont [5/16] 0.0, 128
        %613 = vxpose.xlu0.b32.cont [6/16] 0.0, 128
        %614 = vxpose.xlu0.b32.cont [7/16] 0.0, 128
        %615 = vxpose.xlu0.b32.cont [8/16] 0.0, 128
        %616 = vxpose.xlu0.b32.cont [9/16] 0.0, 128
        %617 = vxpose.xlu0.b32.cont [10/16] 0.0, 128
        %618 = vxpose.xlu0.b32.cont [11/16] 0.0, 128
        %619 = vxpose.xlu0.b32.cont [12/16] 0.0, 128
        %620 = vxpose.xlu0.b32.cont [13/16] 0.0, 128
        %621 = vxpose.xlu0.b32.cont [14/16] 0.0, 128
        %622 = vxpose.xlu0.b32.cont [15/16] 0.0, 128
        %623 = vxpose.xlu0.b32.end [16/16] 0.0, 128
        %v624 = vpop.trf.xlu0
        %v625 = vpop.trf.xlu0
        %v626 = vpop.trf.xlu0
        %v627 = vpop.trf.xlu0
        %v628 = vpop.trf.xlu0
        %v629 = vpop.trf.xlu0
        %v630 = vpop.trf.xlu0
        %v631 = vpop.trf.xlu0
        %v632 = vpop.trf.xlu0
        %v633 = vpop.trf.xlu0
        %v634 = vpop.trf.xlu0
        %v635 = vpop.trf.xlu0
        %v636 = vpop.trf.xlu0
        %v637 = vpop.trf.xlu0
        %v638 = vpop.trf.xlu0
        %v639 = vpop.trf.xlu0
        %640 = vxpose.xlu0.b32.start [1/16] %v600, 128
        %641 = vxpose.xlu0.b32.cont [2/16] 0.0, 128
        %642 = vxpose.xlu0.b32.cont [3/16] 0.0, 128
        %643 = vxpose.xlu0.b32.cont [4/16] 0.0, 128
        %644 = vxpose.xlu0.b32.cont [5/16] 0.0, 128
        %645 = vxpose.xlu0.b32.cont [6/16] 0.0, 128
        %646 = vxpose.xlu0.b32.cont [7/16] 0.0, 128
        %647 = vxpose.xlu0.b32.cont [8/16] 0.0, 128
        %648 = vxpose.xlu0.b32.cont [9/16] 0.0, 128
        %649 = vxpose.xlu0.b32.cont [10/16] 0.0, 128
        %650 = vxpose.xlu0.b32.cont [11/16] 0.0, 128
        %651 = vxpose.xlu0.b32.cont [12/16] 0.0, 128
        %652 = vxpose.xlu0.b32.cont [13/16] 0.0, 128
        %653 = vxpose.xlu0.b32.cont [14/16] 0.0, 128
        %654 = vxpose.xlu0.b32.cont [15/16] 0.0, 128
        %655 = vxpose.xlu0.b32.end [16/16] 0.0, 128
        %v656 = vpop.trf.xlu0
        %v657 = vpop.trf.xlu0
        %v658 = vpop.trf.xlu0
        %v659 = vpop.trf.xlu0
        %v660 = vpop.trf.xlu0
        %v661 = vpop.trf.xlu0
        %v662 = vpop.trf.xlu0
        %v663 = vpop.trf.xlu0
        %v664 = vpop.trf.xlu0
        %v665 = vpop.trf.xlu0
        %v666 = vpop.trf.xlu0
        %v667 = vpop.trf.xlu0
        %v668 = vpop.trf.xlu0
        %v669 = vpop.trf.xlu0
        %v670 = vpop.trf.xlu0
        %v671 = vpop.trf.xlu0
        %672 = vxpose.xlu0.b32.start [1/16] %v530, 128
        %673 = vxpose.xlu0.b32.cont [2/16] 0.0, 128
        %674 = vxpose.xlu0.b32.cont [3/16] 0.0, 128
        %675 = vxpose.xlu0.b32.cont [4/16] 0.0, 128
        %676 = vxpose.xlu0.b32.cont [5/16] 0.0, 128
        %677 = vxpose.xlu0.b32.cont [6/16] 0.0, 128
        %678 = vxpose.xlu0.b32.cont [7/16] 0.0, 128
        %679 = vxpose.xlu0.b32.cont [8/16] 0.0, 128
        %680 = vxpose.xlu0.b32.cont [9/16] 0.0, 128
        %681 = vxpose.xlu0.b32.cont [10/16] 0.0, 128
        %682 = vxpose.xlu0.b32.cont [11/16] 0.0, 128
        %683 = vxpose.xlu0.b32.cont [12/16] 0.0, 128
        %684 = vxpose.xlu0.b32.cont [13/16] 0.0, 128
        %685 = vxpose.xlu0.b32.cont [14/16] 0.0, 128
        %686 = vxpose.xlu0.b32.cont [15/16] 0.0, 128
        %687 = vxpose.xlu0.b32.end [16/16] 0.0, 128
        %v688 = vpop.trf.xlu0
        %v689 = vpop.trf.xlu0
        %v690 = vpop.trf.xlu0
        %v691 = vpop.trf.xlu0
        %v692 = vpop.trf.xlu0
        %v693 = vpop.trf.xlu0
        %v694 = vpop.trf.xlu0
        %v695 = vpop.trf.xlu0
        %v696 = vpop.trf.xlu0
        %v697 = vpop.trf.xlu0
        %v698 = vpop.trf.xlu0
        %v699 = vpop.trf.xlu0
        %v700 = vpop.trf.xlu0
        %v701 = vpop.trf.xlu0
        %v702 = vpop.trf.xlu0
        %v703 = vpop.trf.xlu0
        %704 = vxpose.xlu0.b32.start [1/16] %v601, 128
        %705 = vxpose.xlu0.b32.cont [2/16] 0.0, 128
        %706 = vxpose.xlu0.b32.cont [3/16] 0.0, 128
        %707 = vxpose.xlu0.b32.cont [4/16] 0.0, 128
        %708 = vxpose.xlu0.b32.cont [5/16] 0.0, 128
        %709 = vxpose.xlu0.b32.cont [6/16] 0.0, 128
        %710 = vxpose.xlu0.b32.cont [7/16] 0.0, 128
        %711 = vxpose.xlu0.b32.cont [8/16] 0.0, 128
        %712 = vxpose.xlu0.b32.cont [9/16] 0.0, 128
        %713 = vxpose.xlu0.b32.cont [10/16] 0.0, 128
        %714 = vxpose.xlu0.b32.cont [11/16] 0.0, 128
        %715 = vxpose.xlu0.b32.cont [12/16] 0.0, 128
        %716 = vxpose.xlu0.b32.cont [13/16] 0.0, 128
        %717 = vxpose.xlu0.b32.cont [14/16] 0.0, 128
        %718 = vxpose.xlu0.b32.cont [15/16] 0.0, 128
        %719 = vxpose.xlu0.b32.end [16/16] 0.0, 128
        %v720 = vpop.trf.xlu0
        %v721 = vpop.trf.xlu0
        %v722 = vpop.trf.xlu0
        %v723 = vpop.trf.xlu0
        %v724 = vpop.trf.xlu0
        %v725 = vpop.trf.xlu0
        %v726 = vpop.trf.xlu0
        %v727 = vpop.trf.xlu0
        %v728 = vpop.trf.xlu0
        %v729 = vpop.trf.xlu0
        %v730 = vpop.trf.xlu0
        %v731 = vpop.trf.xlu0
        %v732 = vpop.trf.xlu0
        %v733 = vpop.trf.xlu0
        %v734 = vpop.trf.xlu0
        %v735 = vpop.trf.xlu0
        %736 = vxpose.xlu0.b32.start [1/16] %v535, 128
        %737 = vxpose.xlu0.b32.cont [2/16] 0.0, 128
        %738 = vxpose.xlu0.b32.cont [3/16] 0.0, 128
        %739 = vxpose.xlu0.b32.cont [4/16] 0.0, 128
        %740 = vxpose.xlu0.b32.cont [5/16] 0.0, 128
        %741 = vxpose.xlu0.b32.cont [6/16] 0.0, 128
        %742 = vxpose.xlu0.b32.cont [7/16] 0.0, 128
        %743 = vxpose.xlu0.b32.cont [8/16] 0.0, 128
        %744 = vxpose.xlu0.b32.cont [9/16] 0.0, 128
        %745 = vxpose.xlu0.b32.cont [10/16] 0.0, 128
        %746 = vxpose.xlu0.b32.cont [11/16] 0.0, 128
        %747 = vxpose.xlu0.b32.cont [12/16] 0.0, 128
        %748 = vxpose.xlu0.b32.cont [13/16] 0.0, 128
        %749 = vxpose.xlu0.b32.cont [14/16] 0.0, 128
        %750 = vxpose.xlu0.b32.cont [15/16] 0.0, 128
        %751 = vxpose.xlu0.b32.end [16/16] 0.0, 128
        %v752 = vpop.trf.xlu0
        %v753 = vpop.trf.xlu0
        %v754 = vpop.trf.xlu0
        %v755 = vpop.trf.xlu0
        %v756 = vpop.trf.xlu0
        %v757 = vpop.trf.xlu0
        %v758 = vpop.trf.xlu0
        %v759 = vpop.trf.xlu0
        %v760 = vpop.trf.xlu0
        %v761 = vpop.trf.xlu0
        %v762 = vpop.trf.xlu0
        %v763 = vpop.trf.xlu0
        %v764 = vpop.trf.xlu0
        %v765 = vpop.trf.xlu0
        %v766 = vpop.trf.xlu0
        %v767 = vpop.trf.xlu0
        %768 = vxpose.xlu0.b32.start [1/16] %v602, 128
        %769 = vxpose.xlu0.b32.cont [2/16] 0.0, 128
        %770 = vxpose.xlu0.b32.cont [3/16] 0.0, 128
        %771 = vxpose.xlu0.b32.cont [4/16] 0.0, 128
        %772 = vxpose.xlu0.b32.cont [5/16] 0.0, 128
        %773 = vxpose.xlu0.b32.cont [6/16] 0.0, 128
        %774 = vxpose.xlu0.b32.cont [7/16] 0.0, 128
        %775 = vxpose.xlu0.b32.cont [8/16] 0.0, 128
        %776 = vxpose.xlu0.b32.cont [9/16] 0.0, 128
        %777 = vxpose.xlu0.b32.cont [10/16] 0.0, 128
        %778 = vxpose.xlu0.b32.cont [11/16] 0.0, 128
        %779 = vxpose.xlu0.b32.cont [12/16] 0.0, 128
        %780 = vxpose.xlu0.b32.cont [13/16] 0.0, 128
        %781 = vxpose.xlu0.b32.cont [14/16] 0.0, 128
        %782 = vxpose.xlu0.b32.cont [15/16] 0.0, 128
        %783 = vxpose.xlu0.b32.end [16/16] 0.0, 128
        %v784 = vpop.trf.xlu0
        %v785 = vpop.trf.xlu0
        %v786 = vpop.trf.xlu0
        %v787 = vpop.trf.xlu0
        %v788 = vpop.trf.xlu0
        %v789 = vpop.trf.xlu0
        %v790 = vpop.trf.xlu0
        %v791 = vpop.trf.xlu0
        %v792 = vpop.trf.xlu0
        %v793 = vpop.trf.xlu0
        %v794 = vpop.trf.xlu0
        %v795 = vpop.trf.xlu0
        %v796 = vpop.trf.xlu0
        %v797 = vpop.trf.xlu0
        %v798 = vpop.trf.xlu0
        %v799 = vpop.trf.xlu0
        %800 = vxpose.xlu0.b32.start [1/16] %v538, 128
        %801 = vxpose.xlu0.b32.cont [2/16] 0.0, 128
        %802 = vxpose.xlu0.b32.cont [3/16] 0.0, 128
        %803 = vxpose.xlu0.b32.cont [4/16] 0.0, 128
        %804 = vxpose.xlu0.b32.cont [5/16] 0.0, 128
        %805 = vxpose.xlu0.b32.cont [6/16] 0.0, 128
        %806 = vxpose.xlu0.b32.cont [7/16] 0.0, 128
        %807 = vxpose.xlu0.b32.cont [8/16] 0.0, 128
        %808 = vxpose.xlu0.b32.cont [9/16] 0.0, 128
        %809 = vxpose.xlu0.b32.cont [10/16] 0.0, 128
        %810 = vxpose.xlu0.b32.cont [11/16] 0.0, 128
        %811 = vxpose.xlu0.b32.cont [12/16] 0.0, 128
        %812 = vxpose.xlu0.b32.cont [13/16] 0.0, 128
        %813 = vxpose.xlu0.b32.cont [14/16] 0.0, 128
        %814 = vxpose.xlu0.b32.cont [15/16] 0.0, 128
        %815 = vxpose.xlu0.b32.end [16/16] 0.0, 128
        %v816 = vpop.trf.xlu0
        %v817 = vpop.trf.xlu0
        %v818 = vpop.trf.xlu0
        %v819 = vpop.trf.xlu0
        %v820 = vpop.trf.xlu0
        %v821 = vpop.trf.xlu0
        %v822 = vpop.trf.xlu0
        %v823 = vpop.trf.xlu0
        %v824 = vpop.trf.xlu0
        %v825 = vpop.trf.xlu0
        %v826 = vpop.trf.xlu0
        %v827 = vpop.trf.xlu0
        %v828 = vpop.trf.xlu0
        %v829 = vpop.trf.xlu0
        %v830 = vpop.trf.xlu0
        %v831 = vpop.trf.xlu0
        %832 = vxpose.xlu0.b32.start [1/16] %v603, 128
        %833 = vxpose.xlu0.b32.cont [2/16] 0.0, 128
        %834 = vxpose.xlu0.b32.cont [3/16] 0.0, 128
        %835 = vxpose.xlu0.b32.cont [4/16] 0.0, 128
        %836 = vxpose.xlu0.b32.cont [5/16] 0.0, 128
        %837 = vxpose.xlu0.b32.cont [6/16] 0.0, 128
        %838 = vxpose.xlu0.b32.cont [7/16] 0.0, 128
        %839 = vxpose.xlu0.b32.cont [8/16] 0.0, 128
        %840 = vxpose.xlu0.b32.cont [9/16] 0.0, 128
        %841 = vxpose.xlu0.b32.cont [10/16] 0.0, 128
        %842 = vxpose.xlu0.b32.cont [11/16] 0.0, 128
        %843 = vxpose.xlu0.b32.cont [12/16] 0.0, 128
        %844 = vxpose.xlu0.b32.cont [13/16] 0.0, 128
        %845 = vxpose.xlu0.b32.cont [14/16] 0.0, 128
        %846 = vxpose.xlu0.b32.cont [15/16] 0.0, 128
        %847 = vxpose.xlu0.b32.end [16/16] 0.0, 128
        %v848 = vpop.trf.xlu0
        %v849 = vpop.trf.xlu0
        %v850 = vpop.trf.xlu0
        %v851 = vpop.trf.xlu0
        %v852 = vpop.trf.xlu0
        %v853 = vpop.trf.xlu0
        %v854 = vpop.trf.xlu0
        %v855 = vpop.trf.xlu0
        %v856 = vpop.trf.xlu0
        %v857 = vpop.trf.xlu0
        %v858 = vpop.trf.xlu0
        %v859 = vpop.trf.xlu0
        %v860 = vpop.trf.xlu0
        %v861 = vpop.trf.xlu0
        %v862 = vpop.trf.xlu0
        %v863 = vpop.trf.xlu0
        %v868 = vcombine.high %v582, %v582
        %v869 = vcombine.high %v585, %v585
        %v870 = vcombine.high %v590, %v590
        %v871 = vcombine.high %v593, %v593
        %876 = vxpose.xlu0.b32.start [1/16] %v582, 128
        %877 = vxpose.xlu0.b32.cont [2/16] 0.0, 128
        %878 = vxpose.xlu0.b32.cont [3/16] 0.0, 128
        %879 = vxpose.xlu0.b32.cont [4/16] 0.0, 128
        %880 = vxpose.xlu0.b32.cont [5/16] 0.0, 128
        %881 = vxpose.xlu0.b32.cont [6/16] 0.0, 128
        %882 = vxpose.xlu0.b32.cont [7/16] 0.0, 128
        %883 = vxpose.xlu0.b32.cont [8/16] 0.0, 128
        %884 = vxpose.xlu0.b32.cont [9/16] 0.0, 128
        %885 = vxpose.xlu0.b32.cont [10/16] 0.0, 128
        %886 = vxpose.xlu0.b32.cont [11/16] 0.0, 128
        %887 = vxpose.xlu0.b32.cont [12/16] 0.0, 128
        %888 = vxpose.xlu0.b32.cont [13/16] 0.0, 128
        %889 = vxpose.xlu0.b32.cont [14/16] 0.0, 128
        %890 = vxpose.xlu0.b32.cont [15/16] 0.0, 128
        %891 = vxpose.xlu0.b32.end [16/16] 0.0, 128
        %v892 = vpop.trf.xlu0
        %v893 = vpop.trf.xlu0
        %v894 = vpop.trf.xlu0
        %v895 = vpop.trf.xlu0
        %v896 = vpop.trf.xlu0
        %v897 = vpop.trf.xlu0
        %v898 = vpop.trf.xlu0
        %v899 = vpop.trf.xlu0
        %v900 = vpop.trf.xlu0
        %v901 = vpop.trf.xlu0
        %v902 = vpop.trf.xlu0
        %v903 = vpop.trf.xlu0
        %v904 = vpop.trf.xlu0
        %v905 = vpop.trf.xlu0
        %v906 = vpop.trf.xlu0
        %v907 = vpop.trf.xlu0
        %908 = vxpose.xlu0.b32.start [1/16] %v868, 128
        %909 = vxpose.xlu0.b32.cont [2/16] 0.0, 128
        %910 = vxpose.xlu0.b32.cont [3/16] 0.0, 128
        %911 = vxpose.xlu0.b32.cont [4/16] 0.0, 128
        %912 = vxpose.xlu0.b32.cont [5/16] 0.0, 128
        %913 = vxpose.xlu0.b32.cont [6/16] 0.0, 128
        %914 = vxpose.xlu0.b32.cont [7/16] 0.0, 128
        %915 = vxpose.xlu0.b32.cont [8/16] 0.0, 128
        %916 = vxpose.xlu0.b32.cont [9/16] 0.0, 128
        %917 = vxpose.xlu0.b32.cont [10/16] 0.0, 128
        %918 = vxpose.xlu0.b32.cont [11/16] 0.0, 128
        %919 = vxpose.xlu0.b32.cont [12/16] 0.0, 128
        %920 = vxpose.xlu0.b32.cont [13/16] 0.0, 128
        %921 = vxpose.xlu0.b32.cont [14/16] 0.0, 128
        %922 = vxpose.xlu0.b32.cont [15/16] 0.0, 128
        %923 = vxpose.xlu0.b32.end [16/16] 0.0, 128
        %v924 = vpop.trf.xlu0
        %v925 = vpop.trf.xlu0
        %v926 = vpop.trf.xlu0
        %v927 = vpop.trf.xlu0
        %v928 = vpop.trf.xlu0
        %v929 = vpop.trf.xlu0
        %v930 = vpop.trf.xlu0
        %v931 = vpop.trf.xlu0
        %v932 = vpop.trf.xlu0
        %v933 = vpop.trf.xlu0
        %v934 = vpop.trf.xlu0
        %v935 = vpop.trf.xlu0
        %v936 = vpop.trf.xlu0
        %v937 = vpop.trf.xlu0
        %v938 = vpop.trf.xlu0
        %v939 = vpop.trf.xlu0
        %940 = vxpose.xlu0.b32.start [1/16] %v585, 128
        %941 = vxpose.xlu0.b32.cont [2/16] 0.0, 128
        %942 = vxpose.xlu0.b32.cont [3/16] 0.0, 128
        %943 = vxpose.xlu0.b32.cont [4/16] 0.0, 128
        %944 = vxpose.xlu0.b32.cont [5/16] 0.0, 128
        %945 = vxpose.xlu0.b32.cont [6/16] 0.0, 128
        %946 = vxpose.xlu0.b32.cont [7/16] 0.0, 128
        %947 = vxpose.xlu0.b32.cont [8/16] 0.0, 128
        %948 = vxpose.xlu0.b32.cont [9/16] 0.0, 128
        %949 = vxpose.xlu0.b32.cont [10/16] 0.0, 128
        %950 = vxpose.xlu0.b32.cont [11/16] 0.0, 128
        %951 = vxpose.xlu0.b32.cont [12/16] 0.0, 128
        %952 = vxpose.xlu0.b32.cont [13/16] 0.0, 128
        %953 = vxpose.xlu0.b32.cont [14/16] 0.0, 128
        %954 = vxpose.xlu0.b32.cont [15/16] 0.0, 128
        %955 = vxpose.xlu0.b32.end [16/16] 0.0, 128
        %v956 = vpop.trf.xlu0
        %v957 = vpop.trf.xlu0
        %v958 = vpop.trf.xlu0
        %v959 = vpop.trf.xlu0
        %v960 = vpop.trf.xlu0
        %v961 = vpop.trf.xlu0
        %v962 = vpop.trf.xlu0
        %v963 = vpop.trf.xlu0
        %v964 = vpop.trf.xlu0
        %v965 = vpop.trf.xlu0
        %v966 = vpop.trf.xlu0
        %v967 = vpop.trf.xlu0
        %v968 = vpop.trf.xlu0
        %v969 = vpop.trf.xlu0
        %v970 = vpop.trf.xlu0
        %v971 = vpop.trf.xlu0
        %972 = vxpose.xlu0.b32.start [1/16] %v869, 128
        %973 = vxpose.xlu0.b32.cont [2/16] 0.0, 128
        %974 = vxpose.xlu0.b32.cont [3/16] 0.0, 128
        %975 = vxpose.xlu0.b32.cont [4/16] 0.0, 128
        %976 = vxpose.xlu0.b32.cont [5/16] 0.0, 128
        %977 = vxpose.xlu0.b32.cont [6/16] 0.0, 128
        %978 = vxpose.xlu0.b32.cont [7/16] 0.0, 128
        %979 = vxpose.xlu0.b32.cont [8/16] 0.0, 128
        %980 = vxpose.xlu0.b32.cont [9/16] 0.0, 128
        %981 = vxpose.xlu0.b32.cont [10/16] 0.0, 128
        %982 = vxpose.xlu0.b32.cont [11/16] 0.0, 128
        %983 = vxpose.xlu0.b32.cont [12/16] 0.0, 128
        %984 = vxpose.xlu0.b32.cont [13/16] 0.0, 128
        %985 = vxpose.xlu0.b32.cont [14/16] 0.0, 128
        %986 = vxpose.xlu0.b32.cont [15/16] 0.0, 128
        %987 = vxpose.xlu0.b32.end [16/16] 0.0, 128
        %v988 = vpop.trf.xlu0
        %v989 = vpop.trf.xlu0
        %v990 = vpop.trf.xlu0
        %v991 = vpop.trf.xlu0
        %v992 = vpop.trf.xlu0
        %v993 = vpop.trf.xlu0
        %v994 = vpop.trf.xlu0
        %v995 = vpop.trf.xlu0
        %v996 = vpop.trf.xlu0
        %v997 = vpop.trf.xlu0
        %v998 = vpop.trf.xlu0
        %v999 = vpop.trf.xlu0
        %v1000 = vpop.trf.xlu0
        %v1001 = vpop.trf.xlu0
        %v1002 = vpop.trf.xlu0
        %v1003 = vpop.trf.xlu0
        %1004 = vxpose.xlu0.b32.start [1/16] %v590, 128
        %1005 = vxpose.xlu0.b32.cont [2/16] 0.0, 128
        %1006 = vxpose.xlu0.b32.cont [3/16] 0.0, 128
        %1007 = vxpose.xlu0.b32.cont [4/16] 0.0, 128
        %1008 = vxpose.xlu0.b32.cont [5/16] 0.0, 128
        %1009 = vxpose.xlu0.b32.cont [6/16] 0.0, 128
        %1010 = vxpose.xlu0.b32.cont [7/16] 0.0, 128
        %1011 = vxpose.xlu0.b32.cont [8/16] 0.0, 128
        %1012 = vxpose.xlu0.b32.cont [9/16] 0.0, 128
        %1013 = vxpose.xlu0.b32.cont [10/16] 0.0, 128
        %1014 = vxpose.xlu0.b32.cont [11/16] 0.0, 128
        %1015 = vxpose.xlu0.b32.cont [12/16] 0.0, 128
        %1016 = vxpose.xlu0.b32.cont [13/16] 0.0, 128
        %1017 = vxpose.xlu0.b32.cont [14/16] 0.0, 128
        %1018 = vxpose.xlu0.b32.cont [15/16] 0.0, 128
        %1019 = vxpose.xlu0.b32.end [16/16] 0.0, 128
        %v1020 = vpop.trf.xlu0
        %v1021 = vpop.trf.xlu0
        %v1022 = vpop.trf.xlu0
        %v1023 = vpop.trf.xlu0
        %v1024 = vpop.trf.xlu0
        %v1025 = vpop.trf.xlu0
        %v1026 = vpop.trf.xlu0
        %v1027 = vpop.trf.xlu0
        %v1028 = vpop.trf.xlu0
        %v1029 = vpop.trf.xlu0
        %v1030 = vpop.trf.xlu0
        %v1031 = vpop.trf.xlu0
        %v1032 = vpop.trf.xlu0
        %v1033 = vpop.trf.xlu0
        %v1034 = vpop.trf.xlu0
        %v1035 = vpop.trf.xlu0
        %1036 = vxpose.xlu0.b32.start [1/16] %v870, 128
        %1037 = vxpose.xlu0.b32.cont [2/16] 0.0, 128
        %1038 = vxpose.xlu0.b32.cont [3/16] 0.0, 128
        %1039 = vxpose.xlu0.b32.cont [4/16] 0.0, 128
        %1040 = vxpose.xlu0.b32.cont [5/16] 0.0, 128
        %1041 = vxpose.xlu0.b32.cont [6/16] 0.0, 128
        %1042 = vxpose.xlu0.b32.cont [7/16] 0.0, 128
        %1043 = vxpose.xlu0.b32.cont [8/16] 0.0, 128
        %1044 = vxpose.xlu0.b32.cont [9/16] 0.0, 128
        %1045 = vxpose.xlu0.b32.cont [10/16] 0.0, 128
        %1046 = vxpose.xlu0.b32.cont [11/16] 0.0, 128
        %1047 = vxpose.xlu0.b32.cont [12/16] 0.0, 128
        %1048 = vxpose.xlu0.b32.cont [13/16] 0.0, 128
        %1049 = vxpose.xlu0.b32.cont [14/16] 0.0, 128
        %1050 = vxpose.xlu0.b32.cont [15/16] 0.0, 128
        %1051 = vxpose.xlu0.b32.end [16/16] 0.0, 128
        %v1052 = vpop.trf.xlu0
        %v1053 = vpop.trf.xlu0
        %v1054 = vpop.trf.xlu0
        %v1055 = vpop.trf.xlu0
        %v1056 = vpop.trf.xlu0
        %v1057 = vpop.trf.xlu0
        %v1058 = vpop.trf.xlu0
        %v1059 = vpop.trf.xlu0
        %v1060 = vpop.trf.xlu0
        %v1061 = vpop.trf.xlu0
        %v1062 = vpop.trf.xlu0
        %v1063 = vpop.trf.xlu0
        %v1064 = vpop.trf.xlu0
        %v1065 = vpop.trf.xlu0
        %v1066 = vpop.trf.xlu0
        %v1067 = vpop.trf.xlu0
        %1068 = vxpose.xlu0.b32.start [1/16] %v593, 128
        %1069 = vxpose.xlu0.b32.cont [2/16] 0.0, 128
        %1070 = vxpose.xlu0.b32.cont [3/16] 0.0, 128
        %1071 = vxpose.xlu0.b32.cont [4/16] 0.0, 128
        %1072 = vxpose.xlu0.b32.cont [5/16] 0.0, 128
        %1073 = vxpose.xlu0.b32.cont [6/16] 0.0, 128
        %1074 = vxpose.xlu0.b32.cont [7/16] 0.0, 128
        %1075 = vxpose.xlu0.b32.cont [8/16] 0.0, 128
        %1076 = vxpose.xlu0.b32.cont [9/16] 0.0, 128
        %1077 = vxpose.xlu0.b32.cont [10/16] 0.0, 128
        %1078 = vxpose.xlu0.b32.cont [11/16] 0.0, 128
        %1079 = vxpose.xlu0.b32.cont [12/16] 0.0, 128
        %1080 = vxpose.xlu0.b32.cont [13/16] 0.0, 128
        %1081 = vxpose.xlu0.b32.cont [14/16] 0.0, 128
        %1082 = vxpose.xlu0.b32.cont [15/16] 0.0, 128
        %1083 = vxpose.xlu0.b32.end [16/16] 0.0, 128
        %v1084 = vpop.trf.xlu0
        %v1085 = vpop.trf.xlu0
        %v1086 = vpop.trf.xlu0
        %v1087 = vpop.trf.xlu0
        %v1088 = vpop.trf.xlu0
        %v1089 = vpop.trf.xlu0
        %v1090 = vpop.trf.xlu0
        %v1091 = vpop.trf.xlu0
        %v1092 = vpop.trf.xlu0
        %v1093 = vpop.trf.xlu0
        %v1094 = vpop.trf.xlu0
        %v1095 = vpop.trf.xlu0
        %v1096 = vpop.trf.xlu0
        %v1097 = vpop.trf.xlu0
        %v1098 = vpop.trf.xlu0
        %v1099 = vpop.trf.xlu0
        %1100 = vxpose.xlu0.b32.start [1/16] %v871, 128
        %1101 = vxpose.xlu0.b32.cont [2/16] 0.0, 128
        %1102 = vxpose.xlu0.b32.cont [3/16] 0.0, 128
        %1103 = vxpose.xlu0.b32.cont [4/16] 0.0, 128
        %1104 = vxpose.xlu0.b32.cont [5/16] 0.0, 128
        %1105 = vxpose.xlu0.b32.cont [6/16] 0.0, 128
        %1106 = vxpose.xlu0.b32.cont [7/16] 0.0, 128
        %1107 = vxpose.xlu0.b32.cont [8/16] 0.0, 128
        %1108 = vxpose.xlu0.b32.cont [9/16] 0.0, 128
        %1109 = vxpose.xlu0.b32.cont [10/16] 0.0, 128
        %1110 = vxpose.xlu0.b32.cont [11/16] 0.0, 128
        %1111 = vxpose.xlu0.b32.cont [12/16] 0.0, 128
        %1112 = vxpose.xlu0.b32.cont [13/16] 0.0, 128
        %1113 = vxpose.xlu0.b32.cont [14/16] 0.0, 128
        %1114 = vxpose.xlu0.b32.cont [15/16] 0.0, 128
        %1115 = vxpose.xlu0.b32.end [16/16] 0.0, 128
        %v1116 = vpop.trf.xlu0
        %v1117 = vpop.trf.xlu0
        %v1118 = vpop.trf.xlu0
        %v1119 = vpop.trf.xlu0
        %v1120 = vpop.trf.xlu0
        %v1121 = vpop.trf.xlu0
        %v1122 = vpop.trf.xlu0
        %v1123 = vpop.trf.xlu0
        %v1124 = vpop.trf.xlu0
        %v1125 = vpop.trf.xlu0
        %v1126 = vpop.trf.xlu0
        %v1127 = vpop.trf.xlu0
        %v1128 = vpop.trf.xlu0
        %v1129 = vpop.trf.xlu0
        %v1130 = vpop.trf.xlu0
        %v1131 = vpop.trf.xlu0
        %v1132 = vlaneseq
        %v1133 = vshrl.u32 %v1132, 7
        %v1134 = vsub.s32 0, %v1133
        %v1135 = vrot.slane %v624, %v1134
        %1137 = vbcast.lane.b32.xlu0 %v1135, 256
        %v1138 = vpop.permute.xlu0 %1137
        %v1139 = vlaneseq
        %v1140 = vshrl.u32 %v1139, 7
        %v1141 = vsub.s32 1, %v1140
        %v1142 = vrot.slane %v624, %v1141
        %1144 = vbcast.lane.b32.xlu0 %v1142, 256
        %v1145 = vpop.permute.xlu0 %1144
        %v1146 = vlaneseq
        %v1147 = vshrl.u32 %v1146, 7
        %v1148 = vsub.s32 2, %v1147
        %v1149 = vrot.slane %v624, %v1148
        %1151 = vbcast.lane.b32.xlu0 %v1149, 256
        %v1152 = vpop.permute.xlu0 %1151
        %v1153 = vlaneseq
        %v1154 = vshrl.u32 %v1153, 7
        %v1155 = vsub.s32 3, %v1154
        %v1156 = vrot.slane %v624, %v1155
        %1158 = vbcast.lane.b32.xlu0 %v1156, 256
        %v1159 = vpop.permute.xlu0 %1158
        %v1160 = vlaneseq
        %v1161 = vshrl.u32 %v1160, 7
        %v1162 = vsub.s32 0, %v1161
        %v1163 = vrot.slane %v656, %v1162
        %1165 = vbcast.lane.b32.xlu0 %v1163, 256
        %v1166 = vpop.permute.xlu0 %1165
        %v1167 = vlaneseq
        %v1168 = vshrl.u32 %v1167, 7
        %v1169 = vsub.s32 1, %v1168
        %v1170 = vrot.slane %v656, %v1169
        %1172 = vbcast.lane.b32.xlu0 %v1170, 256
        %v1173 = vpop.permute.xlu0 %1172
        %v1174 = vlaneseq
        %v1175 = vshrl.u32 %v1174, 7
        %v1176 = vsub.s32 2, %v1175
        %v1177 = vrot.slane %v656, %v1176
        %1179 = vbcast.lane.b32.xlu0 %v1177, 256
        %v1180 = vpop.permute.xlu0 %1179
        %v1181 = vlaneseq
        %v1182 = vshrl.u32 %v1181, 7
        %v1183 = vsub.s32 3, %v1182
        %v1184 = vrot.slane %v656, %v1183
        %1186 = vbcast.lane.b32.xlu0 %v1184, 256
        %v1187 = vpop.permute.xlu0 %1186
        %v1188 = vlaneseq
        %v1189 = vshrl.u32 %v1188, 7
        %v1190 = vsub.s32 0, %v1189
        %v1191 = vrot.slane %v688, %v1190
        %1193 = vbcast.lane.b32.xlu0 %v1191, 256
        %v1194 = vpop.permute.xlu0 %1193
        %v1195 = vlaneseq
        %v1196 = vshrl.u32 %v1195, 7
        %v1197 = vsub.s32 1, %v1196
        %v1198 = vrot.slane %v688, %v1197
        %1200 = vbcast.lane.b32.xlu0 %v1198, 256
        %v1201 = vpop.permute.xlu0 %1200
        %v1202 = vlaneseq
        %v1203 = vshrl.u32 %v1202, 7
        %v1204 = vsub.s32 2, %v1203
        %v1205 = vrot.slane %v688, %v1204
        %1207 = vbcast.lane.b32.xlu0 %v1205, 256
        %v1208 = vpop.permute.xlu0 %1207
        %v1209 = vlaneseq
        %v1210 = vshrl.u32 %v1209, 7
        %v1211 = vsub.s32 3, %v1210
        %v1212 = vrot.slane %v688, %v1211
        %1214 = vbcast.lane.b32.xlu0 %v1212, 256
        %v1215 = vpop.permute.xlu0 %1214
        %v1216 = vlaneseq
        %v1217 = vshrl.u32 %v1216, 7
        %v1218 = vsub.s32 0, %v1217
        %v1219 = vrot.slane %v720, %v1218
        %1221 = vbcast.lane.b32.xlu0 %v1219, 256
        %v1222 = vpop.permute.xlu0 %1221
        %v1223 = vlaneseq
        %v1224 = vshrl.u32 %v1223, 7
        %v1225 = vsub.s32 1, %v1224
        %v1226 = vrot.slane %v720, %v1225
        %1228 = vbcast.lane.b32.xlu0 %v1226, 256
        %v1229 = vpop.permute.xlu0 %1228
        %v1230 = vlaneseq
        %v1231 = vshrl.u32 %v1230, 7
        %v1232 = vsub.s32 2, %v1231
        %v1233 = vrot.slane %v720, %v1232
        %1235 = vbcast.lane.b32.xlu0 %v1233, 256
        %v1236 = vpop.permute.xlu0 %1235
        %v1237 = vlaneseq
        %v1238 = vshrl.u32 %v1237, 7
        %v1239 = vsub.s32 3, %v1238
        %v1240 = vrot.slane %v720, %v1239
        %1242 = vbcast.lane.b32.xlu0 %v1240, 256
        %v1243 = vpop.permute.xlu0 %1242
        %v1244 = vlaneseq
        %v1245 = vshrl.u32 %v1244, 7
        %v1246 = vsub.s32 0, %v1245
        %v1247 = vrot.slane %v752, %v1246
        %1249 = vbcast.lane.b32.xlu0 %v1247, 256
        %v1250 = vpop.permute.xlu0 %1249
        %v1251 = vlaneseq
        %v1252 = vshrl.u32 %v1251, 7
        %v1253 = vsub.s32 1, %v1252
        %v1254 = vrot.slane %v752, %v1253
        %1256 = vbcast.lane.b32.xlu0 %v1254, 256
        %v1257 = vpop.permute.xlu0 %1256
        %v1258 = vlaneseq
        %v1259 = vshrl.u32 %v1258, 7
        %v1260 = vsub.s32 2, %v1259
        %v1261 = vrot.slane %v752, %v1260
        %1263 = vbcast.lane.b32.xlu0 %v1261, 256
        %v1264 = vpop.permute.xlu0 %1263
        %v1265 = vlaneseq
        %v1266 = vshrl.u32 %v1265, 7
        %v1267 = vsub.s32 3, %v1266
        %v1268 = vrot.slane %v752, %v1267
        %1270 = vbcast.lane.b32.xlu0 %v1268, 256
        %v1271 = vpop.permute.xlu0 %1270
        %v1272 = vlaneseq
        %v1273 = vshrl.u32 %v1272, 7
        %v1274 = vsub.s32 0, %v1273
        %v1275 = vrot.slane %v784, %v1274
        %1277 = vbcast.lane.b32.xlu0 %v1275, 256
        %v1278 = vpop.permute.xlu0 %1277
        %v1279 = vlaneseq
        %v1280 = vshrl.u32 %v1279, 7
        %v1281 = vsub.s32 1, %v1280
        %v1282 = vrot.slane %v784, %v1281
        %1284 = vbcast.lane.b32.xlu0 %v1282, 256
        %v1285 = vpop.permute.xlu0 %1284
        %v1286 = vlaneseq
        %v1287 = vshrl.u32 %v1286, 7
        %v1288 = vsub.s32 2, %v1287
        %v1289 = vrot.slane %v784, %v1288
        %1291 = vbcast.lane.b32.xlu0 %v1289, 256
        %v1292 = vpop.permute.xlu0 %1291
        %v1293 = vlaneseq
        %v1294 = vshrl.u32 %v1293, 7
        %v1295 = vsub.s32 3, %v1294
        %v1296 = vrot.slane %v784, %v1295
        %1298 = vbcast.lane.b32.xlu0 %v1296, 256
        %v1299 = vpop.permute.xlu0 %1298
        %v1300 = vlaneseq
        %v1301 = vshrl.u32 %v1300, 7
        %v1302 = vsub.s32 0, %v1301
        %v1303 = vrot.slane %v816, %v1302
        %1305 = vbcast.lane.b32.xlu0 %v1303, 256
        %v1306 = vpop.permute.xlu0 %1305
        %v1307 = vlaneseq
        %v1308 = vshrl.u32 %v1307, 7
        %v1309 = vsub.s32 1, %v1308
        %v1310 = vrot.slane %v816, %v1309
        %1312 = vbcast.lane.b32.xlu0 %v1310, 256
        %v1313 = vpop.permute.xlu0 %1312
        %v1314 = vlaneseq
        %v1315 = vshrl.u32 %v1314, 7
        %v1316 = vsub.s32 2, %v1315
        %v1317 = vrot.slane %v816, %v1316
        %1319 = vbcast.lane.b32.xlu0 %v1317, 256
        %v1320 = vpop.permute.xlu0 %1319
        %v1321 = vlaneseq
        %v1322 = vshrl.u32 %v1321, 7
        %v1323 = vsub.s32 3, %v1322
        %v1324 = vrot.slane %v816, %v1323
        %1326 = vbcast.lane.b32.xlu0 %v1324, 256
        %v1327 = vpop.permute.xlu0 %1326
        %v1328 = vlaneseq
        %v1329 = vshrl.u32 %v1328, 7
        %v1330 = vsub.s32 0, %v1329
        %v1331 = vrot.slane %v848, %v1330
        %1333 = vbcast.lane.b32.xlu0 %v1331, 256
        %v1334 = vpop.permute.xlu0 %1333
        %v1335 = vlaneseq
        %v1336 = vshrl.u32 %v1335, 7
        %v1337 = vsub.s32 1, %v1336
        %v1338 = vrot.slane %v848, %v1337
        %1340 = vbcast.lane.b32.xlu0 %v1338, 256
        %v1341 = vpop.permute.xlu0 %1340
        %v1342 = vlaneseq
        %v1343 = vshrl.u32 %v1342, 7
        %v1344 = vsub.s32 2, %v1343
        %v1345 = vrot.slane %v848, %v1344
        %1347 = vbcast.lane.b32.xlu0 %v1345, 256
        %v1348 = vpop.permute.xlu0 %1347
        %v1349 = vlaneseq
        %v1350 = vshrl.u32 %v1349, 7
        %v1351 = vsub.s32 3, %v1350
        %v1352 = vrot.slane %v848, %v1351
        %1354 = vbcast.lane.b32.xlu0 %v1352, 256
        %v1355 = vpop.permute.xlu0 %1354
        %v1365 = vunpack.c.l.s4 1966171168
        %v1366 = vunpack.c.0.s8 %v1365
        %v1367 = vlaneseq
        %v1368 = vshrl.u32 %v1367, 7
        %v1369 = vsub.s32 %v1366, %v1368
        %v1370 = vrot.slane %v892, %v1369
        %v1371 = vcombine.high %v1370, %v1370
        %v1373 = vunpack.c.l.s4 1966171168
        %v1374 = vunpack.c.0.s8 %v1373
        %v1375 = vlaneseq
        %v1376 = vshrl.u32 %v1375, 7
        %v1377 = vsub.s32 %v1374, %v1376
        %v1378 = vrot.slane %v1370, %v1377
        %v1380 = vunpack.c.l.s4 1966171168
        %v1381 = vunpack.c.0.s8 %v1380
        %v1382 = vlaneseq
        %v1383 = vshrl.u32 %v1382, 7
        %v1384 = vsub.s32 %v1381, %v1383
        %v1385 = vrot.slane %v1371, %v1384
        %v1386 = vcombine.high %v1378, %v1378
        %v1387 = vcombine.high %v1385, %v1385
        %v1389 = vunpack.c.l.s4 1966171168
        %v1390 = vunpack.c.0.s8 %v1389
        %v1391 = vlaneseq
        %v1392 = vshrl.u32 %v1391, 7
        %v1393 = vsub.s32 %v1390, %v1392
        %v1394 = vrot.slane %v924, %v1393
        %v1395 = vcombine.high %v1394, %v1394
        %v1397 = vunpack.c.l.s4 1966171168
        %v1398 = vunpack.c.0.s8 %v1397
        %v1399 = vlaneseq
        %v1400 = vshrl.u32 %v1399, 7
        %v1401 = vsub.s32 %v1398, %v1400
        %v1402 = vrot.slane %v1394, %v1401
        %v1404 = vunpack.c.l.s4 1966171168
        %v1405 = vunpack.c.0.s8 %v1404
        %v1406 = vlaneseq
        %v1407 = vshrl.u32 %v1406, 7
        %v1408 = vsub.s32 %v1405, %v1407
        %v1409 = vrot.slane %v1395, %v1408
        %v1410 = vcombine.high %v1402, %v1402
        %v1411 = vcombine.high %v1409, %v1409
        %v1413 = vunpack.c.l.s4 1966171168
        %v1414 = vunpack.c.0.s8 %v1413
        %v1415 = vlaneseq
        %v1416 = vshrl.u32 %v1415, 7
        %v1417 = vsub.s32 %v1414, %v1416
        %v1418 = vrot.slane %v956, %v1417
        %v1419 = vcombine.high %v1418, %v1418
        %v1421 = vunpack.c.l.s4 1966171168
        %v1422 = vunpack.c.0.s8 %v1421
        %v1423 = vlaneseq
        %v1424 = vshrl.u32 %v1423, 7
        %v1425 = vsub.s32 %v1422, %v1424
        %v1426 = vrot.slane %v1418, %v1425
        %v1428 = vunpack.c.l.s4 1966171168
        %v1429 = vunpack.c.0.s8 %v1428
        %v1430 = vlaneseq
        %v1431 = vshrl.u32 %v1430, 7
        %v1432 = vsub.s32 %v1429, %v1431
        %v1433 = vrot.slane %v1419, %v1432
        %v1434 = vcombine.high %v1426, %v1426
        %v1435 = vcombine.high %v1433, %v1433
        %v1437 = vunpack.c.l.s4 1966171168
        %v1438 = vunpack.c.0.s8 %v1437
        %v1439 = vlaneseq
        %v1440 = vshrl.u32 %v1439, 7
        %v1441 = vsub.s32 %v1438, %v1440
        %v1442 = vrot.slane %v988, %v1441
        %v1443 = vcombine.high %v1442, %v1442
        %v1445 = vunpack.c.l.s4 1966171168
        %v1446 = vunpack.c.0.s8 %v1445
        %v1447 = vlaneseq
        %v1448 = vshrl.u32 %v1447, 7
        %v1449 = vsub.s32 %v1446, %v1448
        %v1450 = vrot.slane %v1442, %v1449
        %v1452 = vunpack.c.l.s4 1966171168
        %v1453 = vunpack.c.0.s8 %v1452
        %v1454 = vlaneseq
        %v1455 = vshrl.u32 %v1454, 7
        %v1456 = vsub.s32 %v1453, %v1455
        %v1457 = vrot.slane %v1443, %v1456
        %v1458 = vcombine.high %v1450, %v1450
        %v1459 = vcombine.high %v1457, %v1457
        %v1461 = vunpack.c.l.s4 1966171168
        %v1462 = vunpack.c.0.s8 %v1461
        %v1463 = vlaneseq
        %v1464 = vshrl.u32 %v1463, 7
        %v1465 = vsub.s32 %v1462, %v1464
        %v1466 = vrot.slane %v1020, %v1465
        %v1467 = vcombine.high %v1466, %v1466
        %v1469 = vunpack.c.l.s4 1966171168
        %v1470 = vunpack.c.0.s8 %v1469
        %v1471 = vlaneseq
        %v1472 = vshrl.u32 %v1471, 7
        %v1473 = vsub.s32 %v1470, %v1472
        %v1474 = vrot.slane %v1466, %v1473
        %v1476 = vunpack.c.l.s4 1966171168
        %v1477 = vunpack.c.0.s8 %v1476
        %v1478 = vlaneseq
        %v1479 = vshrl.u32 %v1478, 7
        %v1480 = vsub.s32 %v1477, %v1479
        %v1481 = vrot.slane %v1467, %v1480
        %v1482 = vcombine.high %v1474, %v1474
        %v1483 = vcombine.high %v1481, %v1481
        %v1485 = vunpack.c.l.s4 1966171168
        %v1486 = vunpack.c.0.s8 %v1485
        %v1487 = vlaneseq
        %v1488 = vshrl.u32 %v1487, 7
        %v1489 = vsub.s32 %v1486, %v1488
        %v1490 = vrot.slane %v1052, %v1489
        %v1491 = vcombine.high %v1490, %v1490
        %v1493 = vunpack.c.l.s4 1966171168
        %v1494 = vunpack.c.0.s8 %v1493
        %v1495 = vlaneseq
        %v1496 = vshrl.u32 %v1495, 7
        %v1497 = vsub.s32 %v1494, %v1496
        %v1498 = vrot.slane %v1490, %v1497
        %v1500 = vunpack.c.l.s4 1966171168
        %v1501 = vunpack.c.0.s8 %v1500
        %v1502 = vlaneseq
        %v1503 = vshrl.u32 %v1502, 7
        %v1504 = vsub.s32 %v1501, %v1503
        %v1505 = vrot.slane %v1491, %v1504
        %v1506 = vcombine.high %v1498, %v1498
        %v1507 = vcombine.high %v1505, %v1505
        %v1509 = vunpack.c.l.s4 1966171168
        %v1510 = vunpack.c.0.s8 %v1509
        %v1511 = vlaneseq
        %v1512 = vshrl.u32 %v1511, 7
        %v1513 = vsub.s32 %v1510, %v1512
        %v1514 = vrot.slane %v1084, %v1513
        %v1515 = vcombine.high %v1514, %v1514
        %v1517 = vunpack.c.l.s4 1966171168
        %v1518 = vunpack.c.0.s8 %v1517
        %v1519 = vlaneseq
        %v1520 = vshrl.u32 %v1519, 7
        %v1521 = vsub.s32 %v1518, %v1520
        %v1522 = vrot.slane %v1514, %v1521
        %v1524 = vunpack.c.l.s4 1966171168
        %v1525 = vunpack.c.0.s8 %v1524
        %v1526 = vlaneseq
        %v1527 = vshrl.u32 %v1526, 7
        %v1528 = vsub.s32 %v1525, %v1527
        %v1529 = vrot.slane %v1515, %v1528
        %v1530 = vcombine.high %v1522, %v1522
        %v1531 = vcombine.high %v1529, %v1529
        %v1533 = vunpack.c.l.s4 1966171168
        %v1534 = vunpack.c.0.s8 %v1533
        %v1535 = vlaneseq
        %v1536 = vshrl.u32 %v1535, 7
        %v1537 = vsub.s32 %v1534, %v1536
        %v1538 = vrot.slane %v1116, %v1537
        %v1539 = vcombine.high %v1538, %v1538
        %v1541 = vunpack.c.l.s4 1966171168
        %v1542 = vunpack.c.0.s8 %v1541
        %v1543 = vlaneseq
        %v1544 = vshrl.u32 %v1543, 7
        %v1545 = vsub.s32 %v1542, %v1544
        %v1546 = vrot.slane %v1538, %v1545
        %v1548 = vunpack.c.l.s4 1966171168
        %v1549 = vunpack.c.0.s8 %v1548
        %v1550 = vlaneseq
        %v1551 = vshrl.u32 %v1550, 7
        %v1552 = vsub.s32 %v1549, %v1551
        %v1553 = vrot.slane %v1539, %v1552
        %v1554 = vcombine.high %v1546, %v1546
        %v1555 = vcombine.high %v1553, %v1553
        %v1556 = vlaneseq
        %v1557 = vshrl.u32 %v1556, 7
        %v1558 = vsub.s32 0, %v1557
        %v1559 = vrot.slane %v1378, %v1558
        %v1560 = vlaneseq
        %v1561 = vshrl.u32 %v1560, 7
        %v1562 = vsub.s32 0, %v1561
        %v1563 = vrot.slane %v1385, %v1562
        %v1564 = vlaneseq
        %v1565 = vshrl.u32 %v1564, 7
        %v1566 = vsub.s32 0, %v1565
        %v1567 = vrot.slane %v1386, %v1566
        %v1568 = vlaneseq
        %v1569 = vshrl.u32 %v1568, 7
        %v1570 = vsub.s32 0, %v1569
        %v1571 = vrot.slane %v1387, %v1570
        %v1572 = vlaneseq
        %v1573 = vshrl.u32 %v1572, 7
        %v1574 = vsub.s32 0, %v1573
        %v1575 = vrot.slane %v1402, %v1574
        %v1576 = vlaneseq
        %v1577 = vshrl.u32 %v1576, 7
        %v1578 = vsub.s32 0, %v1577
        %v1579 = vrot.slane %v1409, %v1578
        %v1580 = vlaneseq
        %v1581 = vshrl.u32 %v1580, 7
        %v1582 = vsub.s32 0, %v1581
        %v1583 = vrot.slane %v1410, %v1582
        %v1584 = vlaneseq
        %v1585 = vshrl.u32 %v1584, 7
        %v1586 = vsub.s32 0, %v1585
        %v1587 = vrot.slane %v1411, %v1586
        %v1588 = vlaneseq
        %v1589 = vshrl.u32 %v1588, 7
        %v1590 = vsub.s32 0, %v1589
        %v1591 = vrot.slane %v1426, %v1590
        %v1592 = vlaneseq
        %v1593 = vshrl.u32 %v1592, 7
        %v1594 = vsub.s32 0, %v1593
        %v1595 = vrot.slane %v1433, %v1594
        %v1596 = vlaneseq
        %v1597 = vshrl.u32 %v1596, 7
        %v1598 = vsub.s32 0, %v1597
        %v1599 = vrot.slane %v1434, %v1598
        %v1600 = vlaneseq
        %v1601 = vshrl.u32 %v1600, 7
        %v1602 = vsub.s32 0, %v1601
        %v1603 = vrot.slane %v1435, %v1602
        %v1604 = vlaneseq
        %v1605 = vshrl.u32 %v1604, 7
        %v1606 = vsub.s32 0, %v1605
        %v1607 = vrot.slane %v1450, %v1606
        %v1608 = vlaneseq
        %v1609 = vshrl.u32 %v1608, 7
        %v1610 = vsub.s32 0, %v1609
        %v1611 = vrot.slane %v1457, %v1610
        %v1612 = vlaneseq
        %v1613 = vshrl.u32 %v1612, 7
        %v1614 = vsub.s32 0, %v1613
        %v1615 = vrot.slane %v1458, %v1614
        %v1616 = vlaneseq
        %v1617 = vshrl.u32 %v1616, 7
        %v1618 = vsub.s32 0, %v1617
        %v1619 = vrot.slane %v1459, %v1618
        %v1620 = vlaneseq
        %v1621 = vshrl.u32 %v1620, 7
        %v1622 = vsub.s32 0, %v1621
        %v1623 = vrot.slane %v1474, %v1622
        %v1624 = vlaneseq
        %v1625 = vshrl.u32 %v1624, 7
        %v1626 = vsub.s32 0, %v1625
        %v1627 = vrot.slane %v1481, %v1626
        %v1628 = vlaneseq
        %v1629 = vshrl.u32 %v1628, 7
        %v1630 = vsub.s32 0, %v1629
        %v1631 = vrot.slane %v1482, %v1630
        %v1632 = vlaneseq
        %v1633 = vshrl.u32 %v1632, 7
        %v1634 = vsub.s32 0, %v1633
        %v1635 = vrot.slane %v1483, %v1634
        %v1636 = vlaneseq
        %v1637 = vshrl.u32 %v1636, 7
        %v1638 = vsub.s32 0, %v1637
        %v1639 = vrot.slane %v1498, %v1638
        %v1640 = vlaneseq
        %v1641 = vshrl.u32 %v1640, 7
        %v1642 = vsub.s32 0, %v1641
        %v1643 = vrot.slane %v1505, %v1642
        %v1644 = vlaneseq
        %v1645 = vshrl.u32 %v1644, 7
        %v1646 = vsub.s32 0, %v1645
        %v1647 = vrot.slane %v1506, %v1646
        %v1648 = vlaneseq
        %v1649 = vshrl.u32 %v1648, 7
        %v1650 = vsub.s32 0, %v1649
        %v1651 = vrot.slane %v1507, %v1650
        %v1652 = vlaneseq
        %v1653 = vshrl.u32 %v1652, 7
        %v1654 = vsub.s32 0, %v1653
        %v1655 = vrot.slane %v1522, %v1654
        %v1656 = vlaneseq
        %v1657 = vshrl.u32 %v1656, 7
        %v1658 = vsub.s32 0, %v1657
        %v1659 = vrot.slane %v1529, %v1658
        %v1660 = vlaneseq
        %v1661 = vshrl.u32 %v1660, 7
        %v1662 = vsub.s32 0, %v1661
        %v1663 = vrot.slane %v1530, %v1662
        %v1664 = vlaneseq
        %v1665 = vshrl.u32 %v1664, 7
        %v1666 = vsub.s32 0, %v1665
        %v1667 = vrot.slane %v1531, %v1666
        %v1668 = vlaneseq
        %v1669 = vshrl.u32 %v1668, 7
        %v1670 = vsub.s32 0, %v1669
        %v1671 = vrot.slane %v1546, %v1670
        %v1672 = vlaneseq
        %v1673 = vshrl.u32 %v1672, 7
        %v1674 = vsub.s32 0, %v1673
        %v1675 = vrot.slane %v1553, %v1674
        %v1676 = vlaneseq
        %v1677 = vshrl.u32 %v1676, 7
        %v1678 = vsub.s32 0, %v1677
        %v1679 = vrot.slane %v1554, %v1678
        %v1680 = vlaneseq
        %v1681 = vshrl.u32 %v1680, 7
        %v1682 = vsub.s32 0, %v1681
        %v1683 = vrot.slane %v1555, %v1682
        %v1716 = vadd.f32 %v1138, %v1559
        %v1717 = vadd.f32 %v1145, %v1563
        %v1718 = vadd.f32 %v1152, %v1567
        %v1719 = vadd.f32 %v1159, %v1571
        %v1720 = vadd.f32 %v1166, %v1575
        %v1721 = vadd.f32 %v1173, %v1579
        %v1722 = vadd.f32 %v1180, %v1583
        %v1723 = vadd.f32 %v1187, %v1587
        %v1724 = vadd.f32 %v1194, %v1591
        %v1725 = vadd.f32 %v1201, %v1595
        %v1726 = vadd.f32 %v1208, %v1599
        %v1727 = vadd.f32 %v1215, %v1603
        %v1728 = vadd.f32 %v1222, %v1607
        %v1729 = vadd.f32 %v1229, %v1611
        %v1730 = vadd.f32 %v1236, %v1615
        %v1731 = vadd.f32 %v1243, %v1619
        %v1732 = vadd.f32 %v1250, %v1623
        %v1733 = vadd.f32 %v1257, %v1627
        %v1734 = vadd.f32 %v1264, %v1631
        %v1735 = vadd.f32 %v1271, %v1635
        %v1736 = vadd.f32 %v1278, %v1639
        %v1737 = vadd.f32 %v1285, %v1643
        %v1738 = vadd.f32 %v1292, %v1647
        %v1739 = vadd.f32 %v1299, %v1651
        %v1740 = vadd.f32 %v1306, %v1655
        %v1741 = vadd.f32 %v1313, %v1659
        %v1742 = vadd.f32 %v1320, %v1663
        %v1743 = vadd.f32 %v1327, %v1667
        %v1744 = vadd.f32 %v1334, %v1671
        %v1745 = vadd.f32 %v1341, %v1675
        %v1746 = vadd.f32 %v1348, %v1679
        %v1747 = vadd.f32 %v1355, %v1683
        %vm1748 = vcmp.gt.f32.partialorder %v1716, 0.0
        %vm1749 = vcmp.gt.f32.partialorder %v1717, 0.0
        %vm1750 = vcmp.gt.f32.partialorder %v1718, 0.0
        %vm1751 = vcmp.gt.f32.partialorder %v1719, 0.0
        %vm1752 = vcmp.gt.f32.partialorder %v1720, 0.0
        %vm1753 = vcmp.gt.f32.partialorder %v1721, 0.0
        %vm1754 = vcmp.gt.f32.partialorder %v1722, 0.0
        %vm1755 = vcmp.gt.f32.partialorder %v1723, 0.0
        %vm1756 = vcmp.gt.f32.partialorder %v1724, 0.0
        %vm1757 = vcmp.gt.f32.partialorder %v1725, 0.0
        %vm1758 = vcmp.gt.f32.partialorder %v1726, 0.0
        %vm1759 = vcmp.gt.f32.partialorder %v1727, 0.0
        %vm1760 = vcmp.gt.f32.partialorder %v1728, 0.0
        %vm1761 = vcmp.gt.f32.partialorder %v1729, 0.0
        %vm1762 = vcmp.gt.f32.partialorder %v1730, 0.0
        %vm1763 = vcmp.gt.f32.partialorder %v1731, 0.0
        %vm1764 = vcmp.gt.f32.partialorder %v1732, 0.0
        %vm1765 = vcmp.gt.f32.partialorder %v1733, 0.0
        %vm1766 = vcmp.gt.f32.partialorder %v1734, 0.0
        %vm1767 = vcmp.gt.f32.partialorder %v1735, 0.0
        %vm1768 = vcmp.gt.f32.partialorder %v1736, 0.0
        %vm1769 = vcmp.gt.f32.partialorder %v1737, 0.0
        %vm1770 = vcmp.gt.f32.partialorder %v1738, 0.0
        %vm1771 = vcmp.gt.f32.partialorder %v1739, 0.0
        %vm1772 = vcmp.gt.f32.partialorder %v1740, 0.0
        %vm1773 = vcmp.gt.f32.partialorder %v1741, 0.0
        %vm1774 = vcmp.gt.f32.partialorder %v1742, 0.0
        %vm1775 = vcmp.gt.f32.partialorder %v1743, 0.0
        %vm1776 = vcmp.gt.f32.partialorder %v1744, 0.0
        %vm1777 = vcmp.gt.f32.partialorder %v1745, 0.0
        %vm1778 = vcmp.gt.f32.partialorder %v1746, 0.0
        %vm1779 = vcmp.gt.f32.partialorder %v1747, 0.0
        %v1780 = vmul.f32 %v1716, 0.2
        %v1781 = vmul.f32 %v1717, 0.2
        %v1782 = vmul.f32 %v1718, 0.2
        %v1783 = vmul.f32 %v1719, 0.2
        %v1784 = vmul.f32 %v1720, 0.2
        %v1785 = vmul.f32 %v1721, 0.2
        %v1786 = vmul.f32 %v1722, 0.2
        %v1787 = vmul.f32 %v1723, 0.2
        %v1788 = vmul.f32 %v1724, 0.2
        %v1789 = vmul.f32 %v1725, 0.2
        %v1790 = vmul.f32 %v1726, 0.2
        %v1791 = vmul.f32 %v1727, 0.2
        %v1792 = vmul.f32 %v1728, 0.2
        %v1793 = vmul.f32 %v1729, 0.2
        %v1794 = vmul.f32 %v1730, 0.2
        %v1795 = vmul.f32 %v1731, 0.2
        %v1796 = vmul.f32 %v1732, 0.2
        %v1797 = vmul.f32 %v1733, 0.2
        %v1798 = vmul.f32 %v1734, 0.2
        %v1799 = vmul.f32 %v1735, 0.2
        %v1800 = vmul.f32 %v1736, 0.2
        %v1801 = vmul.f32 %v1737, 0.2
        %v1802 = vmul.f32 %v1738, 0.2
        %v1803 = vmul.f32 %v1739, 0.2
        %v1804 = vmul.f32 %v1740, 0.2
        %v1805 = vmul.f32 %v1741, 0.2
        %v1806 = vmul.f32 %v1742, 0.2
        %v1807 = vmul.f32 %v1743, 0.2
        %v1808 = vmul.f32 %v1744, 0.2
        %v1809 = vmul.f32 %v1745, 0.2
        %v1810 = vmul.f32 %v1746, 0.2
        %v1811 = vmul.f32 %v1747, 0.2
        %v1812 = vsel %vm1748, %v1716, %v1780
        %v1813 = vsel %vm1749, %v1717, %v1781
        %v1814 = vsel %vm1750, %v1718, %v1782
        %v1815 = vsel %vm1751, %v1719, %v1783
        %v1816 = vsel %vm1752, %v1720, %v1784
        %v1817 = vsel %vm1753, %v1721, %v1785
        %v1818 = vsel %vm1754, %v1722, %v1786
        %v1819 = vsel %vm1755, %v1723, %v1787
        %v1820 = vsel %vm1756, %v1724, %v1788
        %v1821 = vsel %vm1757, %v1725, %v1789
        %v1822 = vsel %vm1758, %v1726, %v1790
        %v1823 = vsel %vm1759, %v1727, %v1791
        %v1824 = vsel %vm1760, %v1728, %v1792
        %v1825 = vsel %vm1761, %v1729, %v1793
        %v1826 = vsel %vm1762, %v1730, %v1794
        %v1827 = vsel %vm1763, %v1731, %v1795
        %v1828 = vsel %vm1764, %v1732, %v1796
        %v1829 = vsel %vm1765, %v1733, %v1797
        %v1830 = vsel %vm1766, %v1734, %v1798
        %v1831 = vsel %vm1767, %v1735, %v1799
        %v1832 = vsel %vm1768, %v1736, %v1800
        %v1833 = vsel %vm1769, %v1737, %v1801
        %v1834 = vsel %vm1770, %v1738, %v1802
        %v1835 = vsel %vm1771, %v1739, %v1803
        %v1836 = vsel %vm1772, %v1740, %v1804
        %v1837 = vsel %vm1773, %v1741, %v1805
        %v1838 = vsel %vm1774, %v1742, %v1806
        %v1839 = vsel %vm1775, %v1743, %v1807
        %v1840 = vsel %vm1776, %v1744, %v1808
        %v1841 = vsel %vm1777, %v1745, %v1809
        %v1842 = vsel %vm1778, %v1746, %v1810
        %v1843 = vsel %vm1779, %v1747, %v1811
        %v1844 = vld [vmem:[%s263] sm:$0xf]
        %v1845 = vadd.f32 %v1812, %v1844
        %v1846 = vadd.f32 %v1813, %v1844
        %v1847 = vadd.f32 %v1814, %v1844
        %v1848 = vadd.f32 %v1815, %v1844
        %v1849 = vadd.f32 %v1816, %v1844
        %v1850 = vadd.f32 %v1817, %v1844
        %v1851 = vadd.f32 %v1818, %v1844
        %v1852 = vadd.f32 %v1819, %v1844
        %v1853 = vadd.f32 %v1820, %v1844
        %v1854 = vadd.f32 %v1821, %v1844
        %v1855 = vadd.f32 %v1822, %v1844
        %v1856 = vadd.f32 %v1823, %v1844
        %v1857 = vadd.f32 %v1824, %v1844
        %v1858 = vadd.f32 %v1825, %v1844
        %v1859 = vadd.f32 %v1826, %v1844
        %v1860 = vadd.f32 %v1827, %v1844
        %v1861 = vadd.f32 %v1828, %v1844
        %v1862 = vadd.f32 %v1829, %v1844
        %v1863 = vadd.f32 %v1830, %v1844
        %v1864 = vadd.f32 %v1831, %v1844
        %v1865 = vadd.f32 %v1832, %v1844
        %v1866 = vadd.f32 %v1833, %v1844
        %v1867 = vadd.f32 %v1834, %v1844
        %v1868 = vadd.f32 %v1835, %v1844
        %v1869 = vadd.f32 %v1836, %v1844
        %v1870 = vadd.f32 %v1837, %v1844
        %v1871 = vadd.f32 %v1838, %v1844
        %v1872 = vadd.f32 %v1839, %v1844
        %v1873 = vadd.f32 %v1840, %v1844
        %v1874 = vadd.f32 %v1841, %v1844
        %v1875 = vadd.f32 %v1842, %v1844
        %v1876 = vadd.f32 %v1843, %v1844
        %vm1877 = vcmask 27648
        %v1878 = vsel %vm1877, %v1845, -inf
        %1879 = vmax.xlane.f32.xlu0 %v1878
        %v1880 = vpop.xlane.xlu0 %1879
        %v1881 = vsel %vm1877, %v1846, -inf
        %1882 = vmax.xlane.f32.xlu0 %v1881
        %v1883 = vpop.xlane.xlu0 %1882
        %v1884 = vsel %vm1877, %v1847, -inf
        %1885 = vmax.xlane.f32.xlu0 %v1884
        %v1886 = vpop.xlane.xlu0 %1885
        %v1887 = vsel %vm1877, %v1848, -inf
        %1888 = vmax.xlane.f32.xlu0 %v1887
        %v1889 = vpop.xlane.xlu0 %1888
        %v1890 = vsel %vm1877, %v1849, -inf
        %1891 = vmax.xlane.f32.xlu0 %v1890
        %v1892 = vpop.xlane.xlu0 %1891
        %v1893 = vsel %vm1877, %v1850, -inf
        %1894 = vmax.xlane.f32.xlu0 %v1893
        %v1895 = vpop.xlane.xlu0 %1894
        %v1896 = vsel %vm1877, %v1851, -inf
        %1897 = vmax.xlane.f32.xlu0 %v1896
        %v1898 = vpop.xlane.xlu0 %1897
        %v1899 = vsel %vm1877, %v1852, -inf
        %1900 = vmax.xlane.f32.xlu0 %v1899
        %v1901 = vpop.xlane.xlu0 %1900
        %v1902 = vsel %vm1877, %v1853, -inf
        %1903 = vmax.xlane.f32.xlu0 %v1902
        %v1904 = vpop.xlane.xlu0 %1903
        %v1905 = vsel %vm1877, %v1854, -inf
        %1906 = vmax.xlane.f32.xlu0 %v1905
        %v1907 = vpop.xlane.xlu0 %1906
        %v1908 = vsel %vm1877, %v1855, -inf
        %1909 = vmax.xlane.f32.xlu0 %v1908
        %v1910 = vpop.xlane.xlu0 %1909
        %v1911 = vsel %vm1877, %v1856, -inf
        %1912 = vmax.xlane.f32.xlu0 %v1911
        %v1913 = vpop.xlane.xlu0 %1912
        %v1914 = vsel %vm1877, %v1857, -inf
        %1915 = vmax.xlane.f32.xlu0 %v1914
        %v1916 = vpop.xlane.xlu0 %1915
        %v1917 = vsel %vm1877, %v1858, -inf
        %1918 = vmax.xlane.f32.xlu0 %v1917
        %v1919 = vpop.xlane.xlu0 %1918
        %v1920 = vsel %vm1877, %v1859, -inf
        %1921 = vmax.xlane.f32.xlu0 %v1920
        %v1922 = vpop.xlane.xlu0 %1921
        %v1923 = vsel %vm1877, %v1860, -inf
        %1924 = vmax.xlane.f32.xlu0 %v1923
        %v1925 = vpop.xlane.xlu0 %1924
        %v1926 = vsel %vm1877, %v1861, -inf
        %1927 = vmax.xlane.f32.xlu0 %v1926
        %v1928 = vpop.xlane.xlu0 %1927
        %v1929 = vsel %vm1877, %v1862, -inf
        %1930 = vmax.xlane.f32.xlu0 %v1929
        %v1931 = vpop.xlane.xlu0 %1930
        %v1932 = vsel %vm1877, %v1863, -inf
        %1933 = vmax.xlane.f32.xlu0 %v1932
        %v1934 = vpop.xlane.xlu0 %1933
        %v1935 = vsel %vm1877, %v1864, -inf
        %1936 = vmax.xlane.f32.xlu0 %v1935
        %v1937 = vpop.xlane.xlu0 %1936
        %v1938 = vsel %vm1877, %v1865, -inf
        %1939 = vmax.xlane.f32.xlu0 %v1938
        %v1940 = vpop.xlane.xlu0 %1939
        %v1941 = vsel %vm1877, %v1866, -inf
        %1942 = vmax.xlane.f32.xlu0 %v1941
        %v1943 = vpop.xlane.xlu0 %1942
        %v1944 = vsel %vm1877, %v1867, -inf
        %1945 = vmax.xlane.f32.xlu0 %v1944
        %v1946 = vpop.xlane.xlu0 %1945
        %v1947 = vsel %vm1877, %v1868, -inf
        %1948 = vmax.xlane.f32.xlu0 %v1947
        %v1949 = vpop.xlane.xlu0 %1948
        %v1950 = vsel %vm1877, %v1869, -inf
        %1951 = vmax.xlane.f32.xlu0 %v1950
        %v1952 = vpop.xlane.xlu0 %1951
        %v1953 = vsel %vm1877, %v1870, -inf
        %1954 = vmax.xlane.f32.xlu0 %v1953
        %v1955 = vpop.xlane.xlu0 %1954
        %v1956 = vsel %vm1877, %v1871, -inf
        %1957 = vmax.xlane.f32.xlu0 %v1956
        %v1958 = vpop.xlane.xlu0 %1957
        %v1959 = vsel %vm1877, %v1872, -inf
        %1960 = vmax.xlane.f32.xlu0 %v1959
        %v1961 = vpop.xlane.xlu0 %1960
        %v1962 = vsel %vm1877, %v1873, -inf
        %1963 = vmax.xlane.f32.xlu0 %v1962
        %v1964 = vpop.xlane.xlu0 %1963
        %v1965 = vsel %vm1877, %v1874, -inf
        %1966 = vmax.xlane.f32.xlu0 %v1965
        %v1967 = vpop.xlane.xlu0 %1966
        %v1968 = vsel %vm1877, %v1875, -inf
        %1969 = vmax.xlane.f32.xlu0 %v1968
        %v1970 = vpop.xlane.xlu0 %1969
        %v1971 = vsel %vm1877, %v1876, -inf
        %1972 = vmax.xlane.f32.xlu0 %v1971
        %v1973 = vpop.xlane.xlu0 %1972
        %v1974 = vsub.f32 %v1845, %v1880
        %v1975 = vsub.f32 %v1846, %v1883
        %v1976 = vsub.f32 %v1847, %v1886
        %v1977 = vsub.f32 %v1848, %v1889
        %v1978 = vsub.f32 %v1849, %v1892
        %v1979 = vsub.f32 %v1850, %v1895
        %v1980 = vsub.f32 %v1851, %v1898
        %v1981 = vsub.f32 %v1852, %v1901
        %v1982 = vsub.f32 %v1853, %v1904
        %v1983 = vsub.f32 %v1854, %v1907
        %v1984 = vsub.f32 %v1855, %v1910
        %v1985 = vsub.f32 %v1856, %v1913
        %v1986 = vsub.f32 %v1857, %v1916
        %v1987 = vsub.f32 %v1858, %v1919
        %v1988 = vsub.f32 %v1859, %v1922
        %v1989 = vsub.f32 %v1860, %v1925
        %v1990 = vsub.f32 %v1861, %v1928
        %v1991 = vsub.f32 %v1862, %v1931
        %v1992 = vsub.f32 %v1863, %v1934
        %v1993 = vsub.f32 %v1864, %v1937
        %v1994 = vsub.f32 %v1865, %v1940
        %v1995 = vsub.f32 %v1866, %v1943
        %v1996 = vsub.f32 %v1867, %v1946
        %v1997 = vsub.f32 %v1868, %v1949
        %v1998 = vsub.f32 %v1869, %v1952
        %v1999 = vsub.f32 %v1870, %v1955
        %v2000 = vsub.f32 %v1871, %v1958
        %v2001 = vsub.f32 %v1872, %v1961
        %v2002 = vsub.f32 %v1873, %v1964
        %v2003 = vsub.f32 %v1874, %v1967
        %v2004 = vsub.f32 %v1875, %v1970
        %v2005 = vsub.f32 %v1876, %v1973
        %v2006 = vmul.f32 %v1974, 1.442695
        %v2007 = vpow.pop %v2006
        %v2008 = vmul.f32 %v1975, 1.442695
        %v2009 = vpow.pop %v2008
        %v2010 = vmul.f32 %v1976, 1.442695
        %v2011 = vpow.pop %v2010
        %v2012 = vmul.f32 %v1977, 1.442695
        %v2013 = vpow.pop %v2012
        %v2014 = vmul.f32 %v1978, 1.442695
        %v2015 = vpow.pop %v2014
        %v2016 = vmul.f32 %v1979, 1.442695
        %v2017 = vpow.pop %v2016
        %v2018 = vmul.f32 %v1980, 1.442695
        %v2019 = vpow.pop %v2018
        %v2020 = vmul.f32 %v1981, 1.442695
        %v2021 = vpow.pop %v2020
        %v2022 = vmul.f32 %v1982, 1.442695
        %v2023 = vpow.pop %v2022
        %v2024 = vmul.f32 %v1983, 1.442695
        %v2025 = vpow.pop %v2024
        %v2026 = vmul.f32 %v1984, 1.442695
        %v2027 = vpow.pop %v2026
        %v2028 = vmul.f32 %v1985, 1.442695
        %v2029 = vpow.pop %v2028
        %v2030 = vmul.f32 %v1986, 1.442695
        %v2031 = vpow.pop %v2030
        %v2032 = vmul.f32 %v1987, 1.442695
        %v2033 = vpow.pop %v2032
        %v2034 = vmul.f32 %v1988, 1.442695
        %v2035 = vpow.pop %v2034
        %v2036 = vmul.f32 %v1989, 1.442695
        %v2037 = vpow.pop %v2036
        %v2038 = vmul.f32 %v1990, 1.442695
        %v2039 = vpow.pop %v2038
        %v2040 = vmul.f32 %v1991, 1.442695
        %v2041 = vpow.pop %v2040
        %v2042 = vmul.f32 %v1992, 1.442695
        %v2043 = vpow.pop %v2042
        %v2044 = vmul.f32 %v1993, 1.442695
        %v2045 = vpow.pop %v2044
        %v2046 = vmul.f32 %v1994, 1.442695
        %v2047 = vpow.pop %v2046
        %v2048 = vmul.f32 %v1995, 1.442695
        %v2049 = vpow.pop %v2048
        %v2050 = vmul.f32 %v1996, 1.442695
        %v2051 = vpow.pop %v2050
        %v2052 = vmul.f32 %v1997, 1.442695
        %v2053 = vpow.pop %v2052
        %v2054 = vmul.f32 %v1998, 1.442695
        %v2055 = vpow.pop %v2054
        %v2056 = vmul.f32 %v1999, 1.442695
        %v2057 = vpow.pop %v2056
        %v2058 = vmul.f32 %v2000, 1.442695
        %v2059 = vpow.pop %v2058
        %v2060 = vmul.f32 %v2001, 1.442695
        %v2061 = vpow.pop %v2060
        %v2062 = vmul.f32 %v2002, 1.442695
        %v2063 = vpow.pop %v2062
        %v2064 = vmul.f32 %v2003, 1.442695
        %v2065 = vpow.pop %v2064
        %v2066 = vmul.f32 %v2004, 1.442695
        %v2067 = vpow.pop %v2066
        %v2068 = vmul.f32 %v2005, 1.442695
        %v2069 = vpow.pop %v2068
        %v2070 = vsel %vm1877, %v2007, 0.0
        %2071 = vadd.xlane.f32.xlu0 %v2070
        %v2072 = vpop.xlane.xlu0 %2071
        %v2073 = vsel %vm1877, %v2009, 0.0
        %2074 = vadd.xlane.f32.xlu0 %v2073
        %v2075 = vpop.xlane.xlu0 %2074
        %v2076 = vsel %vm1877, %v2011, 0.0
        %2077 = vadd.xlane.f32.xlu0 %v2076
        %v2078 = vpop.xlane.xlu0 %2077
        %v2079 = vsel %vm1877, %v2013, 0.0
        %2080 = vadd.xlane.f32.xlu0 %v2079
        %v2081 = vpop.xlane.xlu0 %2080
        %v2082 = vsel %vm1877, %v2015, 0.0
        %2083 = vadd.xlane.f32.xlu0 %v2082
        %v2084 = vpop.xlane.xlu0 %2083
        %v2085 = vsel %vm1877, %v2017, 0.0
        %2086 = vadd.xlane.f32.xlu0 %v2085
        %v2087 = vpop.xlane.xlu0 %2086
        %v2088 = vsel %vm1877, %v2019, 0.0
        %2089 = vadd.xlane.f32.xlu0 %v2088
        %v2090 = vpop.xlane.xlu0 %2089
        %v2091 = vsel %vm1877, %v2021, 0.0
        %2092 = vadd.xlane.f32.xlu0 %v2091
        %v2093 = vpop.xlane.xlu0 %2092
        %v2094 = vsel %vm1877, %v2023, 0.0
        %2095 = vadd.xlane.f32.xlu0 %v2094
        %v2096 = vpop.xlane.xlu0 %2095
        %v2097 = vsel %vm1877, %v2025, 0.0
        %2098 = vadd.xlane.f32.xlu0 %v2097
        %v2099 = vpop.xlane.xlu0 %2098
        %v2100 = vsel %vm1877, %v2027, 0.0
        %2101 = vadd.xlane.f32.xlu0 %v2100
        %v2102 = vpop.xlane.xlu0 %2101
        %v2103 = vsel %vm1877, %v2029, 0.0
        %2104 = vadd.xlane.f32.xlu0 %v2103
        %v2105 = vpop.xlane.xlu0 %2104
        %v2106 = vsel %vm1877, %v2031, 0.0
        %2107 = vadd.xlane.f32.xlu0 %v2106
        %v2108 = vpop.xlane.xlu0 %2107
        %v2109 = vsel %vm1877, %v2033, 0.0
        %2110 = vadd.xlane.f32.xlu0 %v2109
        %v2111 = vpop.xlane.xlu0 %2110
        %v2112 = vsel %vm1877, %v2035, 0.0
        %2113 = vadd.xlane.f32.xlu0 %v2112
        %v2114 = vpop.xlane.xlu0 %2113
        %v2115 = vsel %vm1877, %v2037, 0.0
        %2116 = vadd.xlane.f32.xlu0 %v2115
        %v2117 = vpop.xlane.xlu0 %2116
        %v2118 = vsel %vm1877, %v2039, 0.0
        %2119 = vadd.xlane.f32.xlu0 %v2118
        %v2120 = vpop.xlane.xlu0 %2119
        %v2121 = vsel %vm1877, %v2041, 0.0
        %2122 = vadd.xlane.f32.xlu0 %v2121
        %v2123 = vpop.xlane.xlu0 %2122
        %v2124 = vsel %vm1877, %v2043, 0.0
        %2125 = vadd.xlane.f32.xlu0 %v2124
        %v2126 = vpop.xlane.xlu0 %2125
        %v2127 = vsel %vm1877, %v2045, 0.0
        %2128 = vadd.xlane.f32.xlu0 %v2127
        %v2129 = vpop.xlane.xlu0 %2128
        %v2130 = vsel %vm1877, %v2047, 0.0
        %2131 = vadd.xlane.f32.xlu0 %v2130
        %v2132 = vpop.xlane.xlu0 %2131
        %v2133 = vsel %vm1877, %v2049, 0.0
        %2134 = vadd.xlane.f32.xlu0 %v2133
        %v2135 = vpop.xlane.xlu0 %2134
        %v2136 = vsel %vm1877, %v2051, 0.0
        %2137 = vadd.xlane.f32.xlu0 %v2136
        %v2138 = vpop.xlane.xlu0 %2137
        %v2139 = vsel %vm1877, %v2053, 0.0
        %2140 = vadd.xlane.f32.xlu0 %v2139
        %v2141 = vpop.xlane.xlu0 %2140
        %v2142 = vsel %vm1877, %v2055, 0.0
        %2143 = vadd.xlane.f32.xlu0 %v2142
        %v2144 = vpop.xlane.xlu0 %2143
        %v2145 = vsel %vm1877, %v2057, 0.0
        %2146 = vadd.xlane.f32.xlu0 %v2145
        %v2147 = vpop.xlane.xlu0 %2146
        %v2148 = vsel %vm1877, %v2059, 0.0
        %2149 = vadd.xlane.f32.xlu0 %v2148
        %v2150 = vpop.xlane.xlu0 %2149
        %v2151 = vsel %vm1877, %v2061, 0.0
        %2152 = vadd.xlane.f32.xlu0 %v2151
        %v2153 = vpop.xlane.xlu0 %2152
        %v2154 = vsel %vm1877, %v2063, 0.0
        %2155 = vadd.xlane.f32.xlu0 %v2154
        %v2156 = vpop.xlane.xlu0 %2155
        %v2157 = vsel %vm1877, %v2065, 0.0
        %2158 = vadd.xlane.f32.xlu0 %v2157
        %v2159 = vpop.xlane.xlu0 %2158
        %v2160 = vsel %vm1877, %v2067, 0.0
        %2161 = vadd.xlane.f32.xlu0 %v2160
        %v2162 = vpop.xlane.xlu0 %2161
        %v2163 = vsel %vm1877, %v2069, 0.0
        %2164 = vadd.xlane.f32.xlu0 %v2163
        %v2165 = vpop.xlane.xlu0 %2164
        %v2166 = vrcp.pop %v2072
        %v2167 = vrcp.pop %v2075
        %v2168 = vrcp.pop %v2078
        %v2169 = vrcp.pop %v2081
        %v2170 = vrcp.pop %v2084
        %v2171 = vrcp.pop %v2087
        %v2172 = vrcp.pop %v2090
        %v2173 = vrcp.pop %v2093
        %v2174 = vrcp.pop %v2096
        %v2175 = vrcp.pop %v2099
        %v2176 = vrcp.pop %v2102
        %v2177 = vrcp.pop %v2105
        %v2178 = vrcp.pop %v2108
        %v2179 = vrcp.pop %v2111
        %v2180 = vrcp.pop %v2114
        %v2181 = vrcp.pop %v2117
        %v2182 = vrcp.pop %v2120
        %v2183 = vrcp.pop %v2123
        %v2184 = vrcp.pop %v2126
        %v2185 = vrcp.pop %v2129
        %v2186 = vrcp.pop %v2132
        %v2187 = vrcp.pop %v2135
        %v2188 = vrcp.pop %v2138
        %v2189 = vrcp.pop %v2141
        %v2190 = vrcp.pop %v2144
        %v2191 = vrcp.pop %v2147
        %v2192 = vrcp.pop %v2150
        %v2193 = vrcp.pop %v2153
        %v2194 = vrcp.pop %v2156
        %v2195 = vrcp.pop %v2159
        %v2196 = vrcp.pop %v2162
        %v2197 = vrcp.pop %v2165
        %v2198 = vmul.f32 %v2007, %v2166
        %v2199 = vmul.f32 %v2009, %v2167
        %v2200 = vmul.f32 %v2011, %v2168
        %v2201 = vmul.f32 %v2013, %v2169
        %v2202 = vmul.f32 %v2015, %v2170
        %v2203 = vmul.f32 %v2017, %v2171
        %v2204 = vmul.f32 %v2019, %v2172
        %v2205 = vmul.f32 %v2021, %v2173
        %v2206 = vmul.f32 %v2023, %v2174
        %v2207 = vmul.f32 %v2025, %v2175
        %v2208 = vmul.f32 %v2027, %v2176
        %v2209 = vmul.f32 %v2029, %v2177
        %v2210 = vmul.f32 %v2031, %v2178
        %v2211 = vmul.f32 %v2033, %v2179
        %v2212 = vmul.f32 %v2035, %v2180
        %v2213 = vmul.f32 %v2037, %v2181
        %v2214 = vmul.f32 %v2039, %v2182
        %v2215 = vmul.f32 %v2041, %v2183
        %v2216 = vmul.f32 %v2043, %v2184
        %v2217 = vmul.f32 %v2045, %v2185
        %v2218 = vmul.f32 %v2047, %v2186
        %v2219 = vmul.f32 %v2049, %v2187
        %v2220 = vmul.f32 %v2051, %v2188
        %v2221 = vmul.f32 %v2053, %v2189
        %v2222 = vmul.f32 %v2055, %v2190
        %v2223 = vmul.f32 %v2057, %v2191
        %v2224 = vmul.f32 %v2059, %v2192
        %v2225 = vmul.f32 %v2061, %v2193
        %v2226 = vmul.f32 %v2063, %v2194
        %v2227 = vmul.f32 %v2065, %v2195
        %v2228 = vmul.f32 %v2067, %v2196
        %v2229 = vmul.f32 %v2069, %v2197
        %2234 = vrot.lane.b32.xlu0 %v464, 120
        %v2235 = vpop.permute.xlu0 %2234
        %2236 = vrot.lane.b32.xlu0 %v467, 120
        %v2237 = vpop.permute.xlu0 %2236
        %2238 = vrot.lane.b32.xlu0 %v472, 120
        %v2239 = vpop.permute.xlu0 %2238
        %2240 = vrot.lane.b32.xlu0 %v475, 120
        %v2241 = vpop.permute.xlu0 %2240
        %2246 = vrot.lane.b32.xlu0 %v464, 112
        %v2247 = vpop.permute.xlu0 %2246
        %2248 = vrot.lane.b32.xlu0 %v467, 112
        %v2249 = vpop.permute.xlu0 %2248
        %2250 = vrot.lane.b32.xlu0 %v472, 112
        %v2251 = vpop.permute.xlu0 %2250
        %2252 = vrot.lane.b32.xlu0 %v475, 112
        %v2253 = vpop.permute.xlu0 %2252
        %2258 = vrot.lane.b32.xlu0 %v464, 104
        %v2259 = vpop.permute.xlu0 %2258
        %2260 = vrot.lane.b32.xlu0 %v467, 104
        %v2261 = vpop.permute.xlu0 %2260
        %2262 = vrot.lane.b32.xlu0 %v472, 104
        %v2263 = vpop.permute.xlu0 %2262
        %2264 = vrot.lane.b32.xlu0 %v475, 104
        %v2265 = vpop.permute.xlu0 %2264
        %v2270 = vcombine.low %v464, %v2247
        %v2271 = vcombine.high %v464, %v2247
        %v2273 = vunpack.c.l.s4 1983009808
        %v2274 = vunpack.c.0.s8 %v2273
        %v2275 = vlaneseq
        %v2276 = vshrl.u32 %v2275, 7
        %v2277 = vsub.s32 %v2274, %v2276
        %v2278 = vrot.slane %v2270, %v2277
        %v2280 = vunpack.c.l.s4 1983009808
        %v2281 = vunpack.c.0.s8 %v2280
        %v2282 = vlaneseq
        %v2283 = vshrl.u32 %v2282, 7
        %v2284 = vsub.s32 %v2281, %v2283
        %v2285 = vrot.slane %v2271, %v2284
        %v2286 = vcombine.low %v2235, %v2259
        %v2287 = vcombine.high %v2235, %v2259
        %v2289 = vunpack.c.l.s4 1983009808
        %v2290 = vunpack.c.0.s8 %v2289
        %v2291 = vlaneseq
        %v2292 = vshrl.u32 %v2291, 7
        %v2293 = vsub.s32 %v2290, %v2292
        %v2294 = vrot.slane %v2286, %v2293
        %v2296 = vunpack.c.l.s4 1983009808
        %v2297 = vunpack.c.0.s8 %v2296
        %v2298 = vlaneseq
        %v2299 = vshrl.u32 %v2298, 7
        %v2300 = vsub.s32 %v2297, %v2299
        %v2301 = vrot.slane %v2287, %v2300
        %v2302 = vcombine.low %v2278, %v2294
        %v2303 = vcombine.high %v2278, %v2294
        %v2305 = vunpack.c.l.s4 1934713408
        %v2306 = vunpack.c.0.s8 %v2305
        %v2307 = vlaneseq
        %v2308 = vshrl.u32 %v2307, 7
        %v2309 = vsub.s32 %v2306, %v2308
        %v2310 = vrot.slane %v2302, %v2309
        %v2312 = vunpack.c.l.s4 1934713408
        %v2313 = vunpack.c.0.s8 %v2312
        %v2314 = vlaneseq
        %v2315 = vshrl.u32 %v2314, 7
        %v2316 = vsub.s32 %v2313, %v2315
        %v2317 = vrot.slane %v2303, %v2316
        %v2318 = vcombine.low %v2285, %v2301
        %v2319 = vcombine.high %v2285, %v2301
        %v2321 = vunpack.c.l.s4 1934713408
        %v2322 = vunpack.c.0.s8 %v2321
        %v2323 = vlaneseq
        %v2324 = vshrl.u32 %v2323, 7
        %v2325 = vsub.s32 %v2322, %v2324
        %v2326 = vrot.slane %v2318, %v2325
        %v2328 = vunpack.c.l.s4 1934713408
        %v2329 = vunpack.c.0.s8 %v2328
        %v2330 = vlaneseq
        %v2331 = vshrl.u32 %v2330, 7
        %v2332 = vsub.s32 %v2329, %v2331
        %v2333 = vrot.slane %v2319, %v2332
        %v2334 = vcombine.high %v2310, 0.0
        %v2335 = vcombine.high %v2317, 0.0
        %v2336 = vcombine.high %v2326, 0.0
        %v2337 = vcombine.high %v2333, 0.0
        %v2338 = vcombine.low %v467, %v2249
        %v2339 = vcombine.high %v467, %v2249
        %v2341 = vunpack.c.l.s4 1983009808
        %v2342 = vunpack.c.0.s8 %v2341
        %v2343 = vlaneseq
        %v2344 = vshrl.u32 %v2343, 7
        %v2345 = vsub.s32 %v2342, %v2344
        %v2346 = vrot.slane %v2338, %v2345
        %v2348 = vunpack.c.l.s4 1983009808
        %v2349 = vunpack.c.0.s8 %v2348
        %v2350 = vlaneseq
        %v2351 = vshrl.u32 %v2350, 7
        %v2352 = vsub.s32 %v2349, %v2351
        %v2353 = vrot.slane %v2339, %v2352
        %v2354 = vcombine.low %v2237, %v2261
        %v2355 = vcombine.high %v2237, %v2261
        %v2357 = vunpack.c.l.s4 1983009808
        %v2358 = vunpack.c.0.s8 %v2357
        %v2359 = vlaneseq
        %v2360 = vshrl.u32 %v2359, 7
        %v2361 = vsub.s32 %v2358, %v2360
        %v2362 = vrot.slane %v2354, %v2361
        %v2364 = vunpack.c.l.s4 1983009808
        %v2365 = vunpack.c.0.s8 %v2364
        %v2366 = vlaneseq
        %v2367 = vshrl.u32 %v2366, 7
        %v2368 = vsub.s32 %v2365, %v2367
        %v2369 = vrot.slane %v2355, %v2368
        %v2370 = vcombine.low %v2346, %v2362
        %v2371 = vcombine.high %v2346, %v2362
        %v2373 = vunpack.c.l.s4 1934713408
        %v2374 = vunpack.c.0.s8 %v2373
        %v2375 = vlaneseq
        %v2376 = vshrl.u32 %v2375, 7
        %v2377 = vsub.s32 %v2374, %v2376
        %v2378 = vrot.slane %v2370, %v2377
        %v2380 = vunpack.c.l.s4 1934713408
        %v2381 = vunpack.c.0.s8 %v2380
        %v2382 = vlaneseq
        %v2383 = vshrl.u32 %v2382, 7
        %v2384 = vsub.s32 %v2381, %v2383
        %v2385 = vrot.slane %v2371, %v2384
        %v2386 = vcombine.low %v2353, %v2369
        %v2387 = vcombine.high %v2353, %v2369
        %v2389 = vunpack.c.l.s4 1934713408
        %v2390 = vunpack.c.0.s8 %v2389
        %v2391 = vlaneseq
        %v2392 = vshrl.u32 %v2391, 7
        %v2393 = vsub.s32 %v2390, %v2392
        %v2394 = vrot.slane %v2386, %v2393
        %v2396 = vunpack.c.l.s4 1934713408
        %v2397 = vunpack.c.0.s8 %v2396
        %v2398 = vlaneseq
        %v2399 = vshrl.u32 %v2398, 7
        %v2400 = vsub.s32 %v2397, %v2399
        %v2401 = vrot.slane %v2387, %v2400
        %v2402 = vcombine.high %v2378, 0.0
        %v2403 = vcombine.high %v2385, 0.0
        %v2404 = vcombine.high %v2394, 0.0
        %v2405 = vcombine.high %v2401, 0.0
        %v2406 = vcombine.low %v472, %v2251
        %v2407 = vcombine.high %v472, %v2251
        %v2409 = vunpack.c.l.s4 1983009808
        %v2410 = vunpack.c.0.s8 %v2409
        %v2411 = vlaneseq
        %v2412 = vshrl.u32 %v2411, 7
        %v2413 = vsub.s32 %v2410, %v2412
        %v2414 = vrot.slane %v2406, %v2413
        %v2416 = vunpack.c.l.s4 1983009808
        %v2417 = vunpack.c.0.s8 %v2416
        %v2418 = vlaneseq
        %v2419 = vshrl.u32 %v2418, 7
        %v2420 = vsub.s32 %v2417, %v2419
        %v2421 = vrot.slane %v2407, %v2420
        %v2422 = vcombine.low %v2239, %v2263
        %v2423 = vcombine.high %v2239, %v2263
        %v2425 = vunpack.c.l.s4 1983009808
        %v2426 = vunpack.c.0.s8 %v2425
        %v2427 = vlaneseq
        %v2428 = vshrl.u32 %v2427, 7
        %v2429 = vsub.s32 %v2426, %v2428
        %v2430 = vrot.slane %v2422, %v2429
        %v2432 = vunpack.c.l.s4 1983009808
        %v2433 = vunpack.c.0.s8 %v2432
        %v2434 = vlaneseq
        %v2435 = vshrl.u32 %v2434, 7
        %v2436 = vsub.s32 %v2433, %v2435
        %v2437 = vrot.slane %v2423, %v2436
        %v2438 = vcombine.low %v2414, %v2430
        %v2439 = vcombine.high %v2414, %v2430
        %v2441 = vunpack.c.l.s4 1934713408
        %v2442 = vunpack.c.0.s8 %v2441
        %v2443 = vlaneseq
        %v2444 = vshrl.u32 %v2443, 7
        %v2445 = vsub.s32 %v2442, %v2444
        %v2446 = vrot.slane %v2438, %v2445
        %v2448 = vunpack.c.l.s4 1934713408
        %v2449 = vunpack.c.0.s8 %v2448
        %v2450 = vlaneseq
        %v2451 = vshrl.u32 %v2450, 7
        %v2452 = vsub.s32 %v2449, %v2451
        %v2453 = vrot.slane %v2439, %v2452
        %v2454 = vcombine.low %v2421, %v2437
        %v2455 = vcombine.high %v2421, %v2437
        %v2457 = vunpack.c.l.s4 1934713408
        %v2458 = vunpack.c.0.s8 %v2457
        %v2459 = vlaneseq
        %v2460 = vshrl.u32 %v2459, 7
        %v2461 = vsub.s32 %v2458, %v2460
        %v2462 = vrot.slane %v2454, %v2461
        %v2464 = vunpack.c.l.s4 1934713408
        %v2465 = vunpack.c.0.s8 %v2464
        %v2466 = vlaneseq
        %v2467 = vshrl.u32 %v2466, 7
        %v2468 = vsub.s32 %v2465, %v2467
        %v2469 = vrot.slane %v2455, %v2468
        %v2470 = vcombine.high %v2446, 0.0
        %v2471 = vcombine.high %v2453, 0.0
        %v2472 = vcombine.high %v2462, 0.0
        %v2473 = vcombine.high %v2469, 0.0
        %v2474 = vcombine.low %v475, %v2253
        %v2475 = vcombine.high %v475, %v2253
        %v2477 = vunpack.c.l.s4 1983009808
        %v2478 = vunpack.c.0.s8 %v2477
        %v2479 = vlaneseq
        %v2480 = vshrl.u32 %v2479, 7
        %v2481 = vsub.s32 %v2478, %v2480
        %v2482 = vrot.slane %v2474, %v2481
        %v2484 = vunpack.c.l.s4 1983009808
        %v2485 = vunpack.c.0.s8 %v2484
        %v2486 = vlaneseq
        %v2487 = vshrl.u32 %v2486, 7
        %v2488 = vsub.s32 %v2485, %v2487
        %v2489 = vrot.slane %v2475, %v2488
        %v2490 = vcombine.low %v2241, %v2265
        %v2491 = vcombine.high %v2241, %v2265
        %v2493 = vunpack.c.l.s4 1983009808
        %v2494 = vunpack.c.0.s8 %v2493
        %v2495 = vlaneseq
        %v2496 = vshrl.u32 %v2495, 7
        %v2497 = vsub.s32 %v2494, %v2496
        %v2498 = vrot.slane %v2490, %v2497
        %v2500 = vunpack.c.l.s4 1983009808
        %v2501 = vunpack.c.0.s8 %v2500
        %v2502 = vlaneseq
        %v2503 = vshrl.u32 %v2502, 7
        %v2504 = vsub.s32 %v2501, %v2503
        %v2505 = vrot.slane %v2491, %v2504
        %v2506 = vcombine.low %v2482, %v2498
        %v2507 = vcombine.high %v2482, %v2498
        %v2509 = vunpack.c.l.s4 1934713408
        %v2510 = vunpack.c.0.s8 %v2509
        %v2511 = vlaneseq
        %v2512 = vshrl.u32 %v2511, 7
        %v2513 = vsub.s32 %v2510, %v2512
        %v2514 = vrot.slane %v2506, %v2513
        %v2516 = vunpack.c.l.s4 1934713408
        %v2517 = vunpack.c.0.s8 %v2516
        %v2518 = vlaneseq
        %v2519 = vshrl.u32 %v2518, 7
        %v2520 = vsub.s32 %v2517, %v2519
        %v2521 = vrot.slane %v2507, %v2520
        %v2522 = vcombine.low %v2489, %v2505
        %v2523 = vcombine.high %v2489, %v2505
        %v2525 = vunpack.c.l.s4 1934713408
        %v2526 = vunpack.c.0.s8 %v2525
        %v2527 = vlaneseq
        %v2528 = vshrl.u32 %v2527, 7
        %v2529 = vsub.s32 %v2526, %v2528
        %v2530 = vrot.slane %v2522, %v2529
        %v2532 = vunpack.c.l.s4 1934713408
        %v2533 = vunpack.c.0.s8 %v2532
        %v2534 = vlaneseq
        %v2535 = vshrl.u32 %v2534, 7
        %v2536 = vsub.s32 %v2533, %v2535
        %v2537 = vrot.slane %v2523, %v2536
        %v2538 = vcombine.high %v2514, 0.0
        %v2539 = vcombine.high %v2521, 0.0
        %v2540 = vcombine.high %v2530, 0.0
        %v2541 = vcombine.high %v2537, 0.0
        %v2542 = vcombine.low %v2310, %v2317
        %v2544 = vunpack.c.l.s4 1983009808
        %v2545 = vunpack.c.0.s8 %v2544
        %v2546 = vlaneseq
        %v2547 = vshrl.u32 %v2546, 7
        %v2548 = vsub.s32 %v2545, %v2547
        %v2549 = vrot.slane %v2542, %v2548
        %v2550 = vcombine.low %v2334, %v2335
        %v2552 = vunpack.c.l.s4 1983009808
        %v2553 = vunpack.c.0.s8 %v2552
        %v2554 = vlaneseq
        %v2555 = vshrl.u32 %v2554, 7
        %v2556 = vsub.s32 %v2553, %v2555
        %v2557 = vrot.slane %v2550, %v2556
        %v2558 = vcombine.low %v2549, %v2557
        %v2559 = vcombine.high %v2549, %v2557
        %v2561 = vunpack.c.l.s4 1934713408
        %v2562 = vunpack.c.0.s8 %v2561
        %v2563 = vlaneseq
        %v2564 = vshrl.u32 %v2563, 7
        %v2565 = vsub.s32 %v2562, %v2564
        %v2566 = vrot.slane %v2558, %v2565
        %v2568 = vunpack.c.l.s4 1934713408
        %v2569 = vunpack.c.0.s8 %v2568
        %v2570 = vlaneseq
        %v2571 = vshrl.u32 %v2570, 7
        %v2572 = vsub.s32 %v2569, %v2571
        %v2573 = vrot.slane %v2559, %v2572
        %v2574 = vcombine.high %v2566, 0.0
        %v2575 = vcombine.high %v2573, 0.0
        %v2576 = vcombine.low %v2326, %v2333
        %v2578 = vunpack.c.l.s4 1983009808
        %v2579 = vunpack.c.0.s8 %v2578
        %v2580 = vlaneseq
        %v2581 = vshrl.u32 %v2580, 7
        %v2582 = vsub.s32 %v2579, %v2581
        %v2583 = vrot.slane %v2576, %v2582
        %v2584 = vcombine.low %v2336, %v2337
        %v2586 = vunpack.c.l.s4 1983009808
        %v2587 = vunpack.c.0.s8 %v2586
        %v2588 = vlaneseq
        %v2589 = vshrl.u32 %v2588, 7
        %v2590 = vsub.s32 %v2587, %v2589
        %v2591 = vrot.slane %v2584, %v2590
        %v2592 = vcombine.low %v2583, %v2591
        %v2593 = vcombine.high %v2583, %v2591
        %v2595 = vunpack.c.l.s4 1934713408
        %v2596 = vunpack.c.0.s8 %v2595
        %v2597 = vlaneseq
        %v2598 = vshrl.u32 %v2597, 7
        %v2599 = vsub.s32 %v2596, %v2598
        %v2600 = vrot.slane %v2592, %v2599
        %v2602 = vunpack.c.l.s4 1934713408
        %v2603 = vunpack.c.0.s8 %v2602
        %v2604 = vlaneseq
        %v2605 = vshrl.u32 %v2604, 7
        %v2606 = vsub.s32 %v2603, %v2605
        %v2607 = vrot.slane %v2593, %v2606
        %v2608 = vcombine.high %v2600, 0.0
        %v2609 = vcombine.high %v2607, 0.0
        %v2610 = vcombine.low %v2378, %v2385
        %v2612 = vunpack.c.l.s4 1983009808
        %v2613 = vunpack.c.0.s8 %v2612
        %v2614 = vlaneseq
        %v2615 = vshrl.u32 %v2614, 7
        %v2616 = vsub.s32 %v2613, %v2615
        %v2617 = vrot.slane %v2610, %v2616
        %v2618 = vcombine.low %v2402, %v2403
        %v2620 = vunpack.c.l.s4 1983009808
        %v2621 = vunpack.c.0.s8 %v2620
        %v2622 = vlaneseq
        %v2623 = vshrl.u32 %v2622, 7
        %v2624 = vsub.s32 %v2621, %v2623
        %v2625 = vrot.slane %v2618, %v2624
        %v2626 = vcombine.low %v2617, %v2625
        %v2627 = vcombine.high %v2617, %v2625
        %v2629 = vunpack.c.l.s4 1934713408
        %v2630 = vunpack.c.0.s8 %v2629
        %v2631 = vlaneseq
        %v2632 = vshrl.u32 %v2631, 7
        %v2633 = vsub.s32 %v2630, %v2632
        %v2634 = vrot.slane %v2626, %v2633
        %v2636 = vunpack.c.l.s4 1934713408
        %v2637 = vunpack.c.0.s8 %v2636
        %v2638 = vlaneseq
        %v2639 = vshrl.u32 %v2638, 7
        %v2640 = vsub.s32 %v2637, %v2639
        %v2641 = vrot.slane %v2627, %v2640
        %v2642 = vcombine.high %v2634, 0.0
        %v2643 = vcombine.high %v2641, 0.0
        %v2644 = vcombine.low %v2394, %v2401
        %v2646 = vunpack.c.l.s4 1983009808
        %v2647 = vunpack.c.0.s8 %v2646
        %v2648 = vlaneseq
        %v2649 = vshrl.u32 %v2648, 7
        %v2650 = vsub.s32 %v2647, %v2649
        %v2651 = vrot.slane %v2644, %v2650
        %v2652 = vcombine.low %v2404, %v2405
        %v2654 = vunpack.c.l.s4 1983009808
        %v2655 = vunpack.c.0.s8 %v2654
        %v2656 = vlaneseq
        %v2657 = vshrl.u32 %v2656, 7
        %v2658 = vsub.s32 %v2655, %v2657
        %v2659 = vrot.slane %v2652, %v2658
        %v2660 = vcombine.low %v2651, %v2659
        %v2661 = vcombine.high %v2651, %v2659
        %v2663 = vunpack.c.l.s4 1934713408
        %v2664 = vunpack.c.0.s8 %v2663
        %v2665 = vlaneseq
        %v2666 = vshrl.u32 %v2665, 7
        %v2667 = vsub.s32 %v2664, %v2666
        %v2668 = vrot.slane %v2660, %v2667
        %v2670 = vunpack.c.l.s4 1934713408
        %v2671 = vunpack.c.0.s8 %v2670
        %v2672 = vlaneseq
        %v2673 = vshrl.u32 %v2672, 7
        %v2674 = vsub.s32 %v2671, %v2673
        %v2675 = vrot.slane %v2661, %v2674
        %v2676 = vcombine.high %v2668, 0.0
        %v2677 = vcombine.high %v2675, 0.0
        %v2678 = vcombine.low %v2446, %v2453
        %v2680 = vunpack.c.l.s4 1983009808
        %v2681 = vunpack.c.0.s8 %v2680
        %v2682 = vlaneseq
        %v2683 = vshrl.u32 %v2682, 7
        %v2684 = vsub.s32 %v2681, %v2683
        %v2685 = vrot.slane %v2678, %v2684
        %v2686 = vcombine.low %v2470, %v2471
        %v2688 = vunpack.c.l.s4 1983009808
        %v2689 = vunpack.c.0.s8 %v2688
        %v2690 = vlaneseq
        %v2691 = vshrl.u32 %v2690, 7
        %v2692 = vsub.s32 %v2689, %v2691
        %v2693 = vrot.slane %v2686, %v2692
        %v2694 = vcombine.low %v2685, %v2693
        %v2695 = vcombine.high %v2685, %v2693
        %v2697 = vunpack.c.l.s4 1934713408
        %v2698 = vunpack.c.0.s8 %v2697
        %v2699 = vlaneseq
        %v2700 = vshrl.u32 %v2699, 7
        %v2701 = vsub.s32 %v2698, %v2700
        %v2702 = vrot.slane %v2694, %v2701
        %v2704 = vunpack.c.l.s4 1934713408
        %v2705 = vunpack.c.0.s8 %v2704
        %v2706 = vlaneseq
        %v2707 = vshrl.u32 %v2706, 7
        %v2708 = vsub.s32 %v2705, %v2707
        %v2709 = vrot.slane %v2695, %v2708
        %v2710 = vcombine.high %v2702, 0.0
        %v2711 = vcombine.high %v2709, 0.0
        %v2712 = vcombine.low %v2462, %v2469
        %v2714 = vunpack.c.l.s4 1983009808
        %v2715 = vunpack.c.0.s8 %v2714
        %v2716 = vlaneseq
        %v2717 = vshrl.u32 %v2716, 7
        %v2718 = vsub.s32 %v2715, %v2717
        %v2719 = vrot.slane %v2712, %v2718
        %v2720 = vcombine.low %v2472, %v2473
        %v2722 = vunpack.c.l.s4 1983009808
        %v2723 = vunpack.c.0.s8 %v2722
        %v2724 = vlaneseq
        %v2725 = vshrl.u32 %v2724, 7
        %v2726 = vsub.s32 %v2723, %v2725
        %v2727 = vrot.slane %v2720, %v2726
        %v2728 = vcombine.low %v2719, %v2727
        %v2729 = vcombine.high %v2719, %v2727
        %v2731 = vunpack.c.l.s4 1934713408
        %v2732 = vunpack.c.0.s8 %v2731
        %v2733 = vlaneseq
        %v2734 = vshrl.u32 %v2733, 7
        %v2735 = vsub.s32 %v2732, %v2734
        %v2736 = vrot.slane %v2728, %v2735
        %v2738 = vunpack.c.l.s4 1934713408
        %v2739 = vunpack.c.0.s8 %v2738
        %v2740 = vlaneseq
        %v2741 = vshrl.u32 %v2740, 7
        %v2742 = vsub.s32 %v2739, %v2741
        %v2743 = vrot.slane %v2729, %v2742
        %v2744 = vcombine.high %v2736, 0.0
        %v2745 = vcombine.high %v2743, 0.0
        %v2746 = vcombine.low %v2514, %v2521
        %v2748 = vunpack.c.l.s4 1983009808
        %v2749 = vunpack.c.0.s8 %v2748
        %v2750 = vlaneseq
        %v2751 = vshrl.u32 %v2750, 7
        %v2752 = vsub.s32 %v2749, %v2751
        %v2753 = vrot.slane %v2746, %v2752
        %v2754 = vcombine.low %v2538, %v2539
        %v2756 = vunpack.c.l.s4 1983009808
        %v2757 = vunpack.c.0.s8 %v2756
        %v2758 = vlaneseq
        %v2759 = vshrl.u32 %v2758, 7
        %v2760 = vsub.s32 %v2757, %v2759
        %v2761 = vrot.slane %v2754, %v2760
        %v2762 = vcombine.low %v2753, %v2761
        %v2763 = vcombine.high %v2753, %v2761
        %v2765 = vunpack.c.l.s4 1934713408
        %v2766 = vunpack.c.0.s8 %v2765
        %v2767 = vlaneseq
        %v2768 = vshrl.u32 %v2767, 7
        %v2769 = vsub.s32 %v2766, %v2768
        %v2770 = vrot.slane %v2762, %v2769
        %v2772 = vunpack.c.l.s4 1934713408
        %v2773 = vunpack.c.0.s8 %v2772
        %v2774 = vlaneseq
        %v2775 = vshrl.u32 %v2774, 7
        %v2776 = vsub.s32 %v2773, %v2775
        %v2777 = vrot.slane %v2763, %v2776
        %v2778 = vcombine.high %v2770, 0.0
        %v2779 = vcombine.high %v2777, 0.0
        %v2780 = vcombine.low %v2530, %v2537
        %v2782 = vunpack.c.l.s4 1983009808
        %v2783 = vunpack.c.0.s8 %v2782
        %v2784 = vlaneseq
        %v2785 = vshrl.u32 %v2784, 7
        %v2786 = vsub.s32 %v2783, %v2785
        %v2787 = vrot.slane %v2780, %v2786
        %v2788 = vcombine.low %v2540, %v2541
        %v2790 = vunpack.c.l.s4 1983009808
        %v2791 = vunpack.c.0.s8 %v2790
        %v2792 = vlaneseq
        %v2793 = vshrl.u32 %v2792, 7
        %v2794 = vsub.s32 %v2791, %v2793
        %v2795 = vrot.slane %v2788, %v2794
        %v2796 = vcombine.low %v2787, %v2795
        %v2797 = vcombine.high %v2787, %v2795
        %v2799 = vunpack.c.l.s4 1934713408
        %v2800 = vunpack.c.0.s8 %v2799
        %v2801 = vlaneseq
        %v2802 = vshrl.u32 %v2801, 7
        %v2803 = vsub.s32 %v2800, %v2802
        %v2804 = vrot.slane %v2796, %v2803
        %v2806 = vunpack.c.l.s4 1934713408
        %v2807 = vunpack.c.0.s8 %v2806
        %v2808 = vlaneseq
        %v2809 = vshrl.u32 %v2808, 7
        %v2810 = vsub.s32 %v2807, %v2809
        %v2811 = vrot.slane %v2797, %v2810
        %v2812 = vcombine.high %v2804, 0.0
        %v2813 = vcombine.high %v2811, 0.0
        %v2814 = vpack.c.bf16 %v2198, %v2198
        %v2815 = vpack.c.bf16 %v2199, %v2199
        %v2816 = vpack.c.bf16 %v2200, %v2200
        %v2817 = vpack.c.bf16 %v2201, %v2201
        %v2818 = vpack.c.bf16 %v2202, %v2202
        %v2819 = vpack.c.bf16 %v2203, %v2203
        %v2820 = vpack.c.bf16 %v2204, %v2204
        %v2821 = vpack.c.bf16 %v2205, %v2205
        %v2822 = vpack.c.bf16 %v2206, %v2206
        %v2823 = vpack.c.bf16 %v2207, %v2207
        %v2824 = vpack.c.bf16 %v2208, %v2208
        %v2825 = vpack.c.bf16 %v2209, %v2209
        %v2826 = vpack.c.bf16 %v2210, %v2210
        %v2827 = vpack.c.bf16 %v2211, %v2211
        %v2828 = vpack.c.bf16 %v2212, %v2212
        %v2829 = vpack.c.bf16 %v2213, %v2213
        %v2830 = vpack.c.bf16 %v2214, %v2214
        %v2831 = vpack.c.bf16 %v2215, %v2215
        %v2832 = vpack.c.bf16 %v2216, %v2216
        %v2833 = vpack.c.bf16 %v2217, %v2217
        %v2834 = vpack.c.bf16 %v2218, %v2218
        %v2835 = vpack.c.bf16 %v2219, %v2219
        %v2836 = vpack.c.bf16 %v2220, %v2220
        %v2837 = vpack.c.bf16 %v2221, %v2221
        %v2838 = vpack.c.bf16 %v2222, %v2222
        %v2839 = vpack.c.bf16 %v2223, %v2223
        %v2840 = vpack.c.bf16 %v2224, %v2224
        %v2841 = vpack.c.bf16 %v2225, %v2225
        %v2842 = vpack.c.bf16 %v2226, %v2226
        %v2843 = vpack.c.bf16 %v2227, %v2227
        %v2844 = vpack.c.bf16 %v2228, %v2228
        %v2845 = vpack.c.bf16 %v2229, %v2229
        %v2846 = vpack.c.bf16 %v2566, %v2566
        %v2847 = vpack.c.bf16 %v2574, %v2574
        %v2848 = vpack.c.bf16 %v2573, %v2573
        %v2849 = vpack.c.bf16 %v2575, %v2575
        %v2850 = vpack.c.bf16 %v2600, %v2600
        %v2851 = vpack.c.bf16 %v2608, %v2608
        %v2852 = vpack.c.bf16 %v2607, %v2607
        %v2853 = vpack.c.bf16 %v2609, %v2609
        %v2854 = vpack.c.bf16 %v2634, %v2634
        %v2855 = vpack.c.bf16 %v2642, %v2642
        %v2856 = vpack.c.bf16 %v2641, %v2641
        %v2857 = vpack.c.bf16 %v2643, %v2643
        %v2858 = vpack.c.bf16 %v2668, %v2668
        %v2859 = vpack.c.bf16 %v2676, %v2676
        %v2860 = vpack.c.bf16 %v2675, %v2675
        %v2861 = vpack.c.bf16 %v2677, %v2677
        %v2862 = vpack.c.bf16 %v2702, %v2702
        %v2863 = vpack.c.bf16 %v2710, %v2710
        %v2864 = vpack.c.bf16 %v2709, %v2709
        %v2865 = vpack.c.bf16 %v2711, %v2711
        %v2866 = vpack.c.bf16 %v2736, %v2736
        %v2867 = vpack.c.bf16 %v2744, %v2744
        %v2868 = vpack.c.bf16 %v2743, %v2743
        %v2869 = vpack.c.bf16 %v2745, %v2745
        %v2870 = vpack.c.bf16 %v2770, %v2770
        %v2871 = vpack.c.bf16 %v2778, %v2778
        %v2872 = vpack.c.bf16 %v2777, %v2777
        %v2873 = vpack.c.bf16 %v2779, %v2779
        %v2874 = vpack.c.bf16 %v2804, %v2804
        %v2875 = vpack.c.bf16 %v2812, %v2812
        %v2876 = vpack.c.bf16 %v2811, %v2811
        %v2877 = vpack.c.bf16 %v2813, %v2813
        %vm2878 = vcmask 31744
        %v2880 = vsel %vm2878, %v2814, 0
        %v2883 = vsel %vm360, %v2846, 0
        %2885 = vmatprep.subr.bf16.mxu0 0
        %2886 = vmatpush1.bf16.msra.mxu0 %v2883
        %2887 = vmatprep.subr.bf16.mxu0 0
        %2888 = vmatpush1.bf16.msra.mxu0 0
        %2889 = vmatprep.subr.bf16.mxu0 0
        %2890 = vmatpush1.bf16.msra.mxu0 0
        %2891 = vmatprep.subr.bf16.mxu0 0
        %2892 = vmatpush1.bf16.msra.mxu0 0
        %2893 = vmatprep.subr.bf16.mxu0 0
        %2894 = vmatpush1.bf16.msra.mxu0 0
        %2895 = vmatprep.subr.bf16.mxu0 0
        %2896 = vmatpush1.bf16.msra.mxu0 0
        %2897 = vmatprep.subr.bf16.mxu0 0
        %2898 = vmatpush1.bf16.msra.mxu0 0
        %2899 = vmatprep.subr.bf16.mxu0 0
        %2900 = vmatpush1.bf16.msra.mxu0 0
        %2901 = vmatprep.subr.bf16.mxu0 0
        %2902 = vmatpush1.bf16.msra.mxu0 0
        %2903 = vmatprep.subr.bf16.mxu0 0
        %2904 = vmatpush1.bf16.msra.mxu0 0
        %2905 = vmatprep.subr.bf16.mxu0 0
        %2906 = vmatpush1.bf16.msra.mxu0 0
        %2907 = vmatprep.subr.bf16.mxu0 0
        %2908 = vmatpush1.bf16.msra.mxu0 0
        %2909 = vmatprep.subr.bf16.mxu0 0
        %2910 = vmatpush1.bf16.msra.mxu0 0
        %2911 = vmatprep.subr.bf16.mxu0 0
        %2912 = vmatpush1.bf16.msra.mxu0 0
        %2913 = vmatprep.subr.bf16.mxu0 0
        %2914 = vmatpush1.bf16.msra.mxu0 0
        %2915 = vmatprep.subr.bf16.mxu0 0
        %2916 = vmatpush1.bf16.msra.mxu0 0
        %2917 = vmatprep.mubr.bf16.mxu0 0
        %2918 = vmatmul.mubr.bf16.gmra.mrb[0].mxu0 %v2880
        %v2919 = vpop.f32.mrb[0].mxu0
        %v2920 = vadd.f32 0.0, %v2919
        %v2921 = vpop.f32.mrb[0].mxu0
        %v2922 = vpop.f32.mrb[0].mxu0
        %v2923 = vpop.f32.mrb[0].mxu0
        %2924 = vdwg.mxu0
        %v2926 = vsel %vm2878, %v2815, 0
        %v2929 = vsel %vm360, %v2847, 0
        %2931 = vmatprep.subr.bf16.mxu0 0
        %2932 = vmatpush1.bf16.msra.mxu0 %v2929
        %2933 = vmatprep.subr.bf16.mxu0 0
        %2934 = vmatpush1.bf16.msra.mxu0 0
        %2935 = vmatprep.subr.bf16.mxu0 0
        %2936 = vmatpush1.bf16.msra.mxu0 0
        %2937 = vmatprep.subr.bf16.mxu0 0
        %2938 = vmatpush1.bf16.msra.mxu0 0
        %2939 = vmatprep.subr.bf16.mxu0 0
        %2940 = vmatpush1.bf16.msra.mxu0 0
        %2941 = vmatprep.subr.bf16.mxu0 0
        %2942 = vmatpush1.bf16.msra.mxu0 0
        %2943 = vmatprep.subr.bf16.mxu0 0
        %2944 = vmatpush1.bf16.msra.mxu0 0
        %2945 = vmatprep.subr.bf16.mxu0 0
        %2946 = vmatpush1.bf16.msra.mxu0 0
        %2947 = vmatprep.subr.bf16.mxu0 0
        %2948 = vmatpush1.bf16.msra.mxu0 0
        %2949 = vmatprep.subr.bf16.mxu0 0
        %2950 = vmatpush1.bf16.msra.mxu0 0
        %2951 = vmatprep.subr.bf16.mxu0 0
        %2952 = vmatpush1.bf16.msra.mxu0 0
        %2953 = vmatprep.subr.bf16.mxu0 0
        %2954 = vmatpush1.bf16.msra.mxu0 0
        %2955 = vmatprep.subr.bf16.mxu0 0
        %2956 = vmatpush1.bf16.msra.mxu0 0
        %2957 = vmatprep.subr.bf16.mxu0 0
        %2958 = vmatpush1.bf16.msra.mxu0 0
        %2959 = vmatprep.subr.bf16.mxu0 0
        %2960 = vmatpush1.bf16.msra.mxu0 0
        %2961 = vmatprep.subr.bf16.mxu0 0
        %2962 = vmatpush1.bf16.msra.mxu0 0
        %2963 = vmatprep.mubr.bf16.mxu0 0
        %2964 = vmatmul.mubr.bf16.gmra.mrb[0].mxu0 %v2926
        %v2965 = vpop.f32.mrb[0].mxu0
        %v2966 = vadd.f32 0.0, %v2965
        %v2967 = vpop.f32.mrb[0].mxu0
        %v2968 = vpop.f32.mrb[0].mxu0
        %v2969 = vpop.f32.mrb[0].mxu0
        %2970 = vdwg.mxu0
        %v2972 = vsel %vm2878, %v2816, 0
        %v2975 = vsel %vm360, %v2848, 0
        %2977 = vmatprep.subr.bf16.mxu0 0
        %2978 = vmatpush1.bf16.msra.mxu0 %v2975
        %2979 = vmatprep.subr.bf16.mxu0 0
        %2980 = vmatpush1.bf16.msra.mxu0 0
        %2981 = vmatprep.subr.bf16.mxu0 0
        %2982 = vmatpush1.bf16.msra.mxu0 0
        %2983 = vmatprep.subr.bf16.mxu0 0
        %2984 = vmatpush1.bf16.msra.mxu0 0
        %2985 = vmatprep.subr.bf16.mxu0 0
        %2986 = vmatpush1.bf16.msra.mxu0 0
        %2987 = vmatprep.subr.bf16.mxu0 0
        %2988 = vmatpush1.bf16.msra.mxu0 0
        %2989 = vmatprep.subr.bf16.mxu0 0
        %2990 = vmatpush1.bf16.msra.mxu0 0
        %2991 = vmatprep.subr.bf16.mxu0 0
        %2992 = vmatpush1.bf16.msra.mxu0 0
        %2993 = vmatprep.subr.bf16.mxu0 0
        %2994 = vmatpush1.bf16.msra.mxu0 0
        %2995 = vmatprep.subr.bf16.mxu0 0
        %2996 = vmatpush1.bf16.msra.mxu0 0
        %2997 = vmatprep.subr.bf16.mxu0 0
        %2998 = vmatpush1.bf16.msra.mxu0 0
        %2999 = vmatprep.subr.bf16.mxu0 0
        %3000 = vmatpush1.bf16.msra.mxu0 0
        %3001 = vmatprep.subr.bf16.mxu0 0
        %3002 = vmatpush1.bf16.msra.mxu0 0
        %3003 = vmatprep.subr.bf16.mxu0 0
        %3004 = vmatpush1.bf16.msra.mxu0 0
        %3005 = vmatprep.subr.bf16.mxu0 0
        %3006 = vmatpush1.bf16.msra.mxu0 0
        %3007 = vmatprep.subr.bf16.mxu0 0
        %3008 = vmatpush1.bf16.msra.mxu0 0
        %3009 = vmatprep.mubr.bf16.mxu0 0
        %3010 = vmatmul.mubr.bf16.gmra.mrb[0].mxu0 %v2972
        %v3011 = vpop.f32.mrb[0].mxu0
        %v3012 = vadd.f32 0.0, %v3011
        %v3013 = vpop.f32.mrb[0].mxu0
        %v3014 = vpop.f32.mrb[0].mxu0
        %v3015 = vpop.f32.mrb[0].mxu0
        %3016 = vdwg.mxu0
        %v3018 = vsel %vm2878, %v2817, 0
        %v3021 = vsel %vm360, %v2849, 0
        %3023 = vmatprep.subr.bf16.mxu0 0
        %3024 = vmatpush1.bf16.msra.mxu0 %v3021
        %3025 = vmatprep.subr.bf16.mxu0 0
        %3026 = vmatpush1.bf16.msra.mxu0 0
        %3027 = vmatprep.subr.bf16.mxu0 0
        %3028 = vmatpush1.bf16.msra.mxu0 0
        %3029 = vmatprep.subr.bf16.mxu0 0
        %3030 = vmatpush1.bf16.msra.mxu0 0
        %3031 = vmatprep.subr.bf16.mxu0 0
        %3032 = vmatpush1.bf16.msra.mxu0 0
        %3033 = vmatprep.subr.bf16.mxu0 0
        %3034 = vmatpush1.bf16.msra.mxu0 0
        %3035 = vmatprep.subr.bf16.mxu0 0
        %3036 = vmatpush1.bf16.msra.mxu0 0
        %3037 = vmatprep.subr.bf16.mxu0 0
        %3038 = vmatpush1.bf16.msra.mxu0 0
        %3039 = vmatprep.subr.bf16.mxu0 0
        %3040 = vmatpush1.bf16.msra.mxu0 0
        %3041 = vmatprep.subr.bf16.mxu0 0
        %3042 = vmatpush1.bf16.msra.mxu0 0
        %3043 = vmatprep.subr.bf16.mxu0 0
        %3044 = vmatpush1.bf16.msra.mxu0 0
        %3045 = vmatprep.subr.bf16.mxu0 0
        %3046 = vmatpush1.bf16.msra.mxu0 0
        %3047 = vmatprep.subr.bf16.mxu0 0
        %3048 = vmatpush1.bf16.msra.mxu0 0
        %3049 = vmatprep.subr.bf16.mxu0 0
        %3050 = vmatpush1.bf16.msra.mxu0 0
        %3051 = vmatprep.subr.bf16.mxu0 0
        %3052 = vmatpush1.bf16.msra.mxu0 0
        %3053 = vmatprep.subr.bf16.mxu0 0
        %3054 = vmatpush1.bf16.msra.mxu0 0
        %3055 = vmatprep.mubr.bf16.mxu0 0
        %3056 = vmatmul.mubr.bf16.gmra.mrb[0].mxu0 %v3018
        %v3057 = vpop.f32.mrb[0].mxu0
        %v3058 = vadd.f32 0.0, %v3057
        %v3059 = vpop.f32.mrb[0].mxu0
        %v3060 = vpop.f32.mrb[0].mxu0
        %v3061 = vpop.f32.mrb[0].mxu0
        %3062 = vdwg.mxu0
        %v3064 = vsel %vm2878, %v2818, 0
        %v3067 = vsel %vm360, %v2850, 0
        %3069 = vmatprep.subr.bf16.mxu0 0
        %3070 = vmatpush1.bf16.msra.mxu0 %v3067
        %3071 = vmatprep.subr.bf16.mxu0 0
        %3072 = vmatpush1.bf16.msra.mxu0 0
        %3073 = vmatprep.subr.bf16.mxu0 0
        %3074 = vmatpush1.bf16.msra.mxu0 0
        %3075 = vmatprep.subr.bf16.mxu0 0
        %3076 = vmatpush1.bf16.msra.mxu0 0
        %3077 = vmatprep.subr.bf16.mxu0 0
        %3078 = vmatpush1.bf16.msra.mxu0 0
        %3079 = vmatprep.subr.bf16.mxu0 0
        %3080 = vmatpush1.bf16.msra.mxu0 0
        %3081 = vmatprep.subr.bf16.mxu0 0
        %3082 = vmatpush1.bf16.msra.mxu0 0
        %3083 = vmatprep.subr.bf16.mxu0 0
        %3084 = vmatpush1.bf16.msra.mxu0 0
        %3085 = vmatprep.subr.bf16.mxu0 0
        %3086 = vmatpush1.bf16.msra.mxu0 0
        %3087 = vmatprep.subr.bf16.mxu0 0
        %3088 = vmatpush1.bf16.msra.mxu0 0
        %3089 = vmatprep.subr.bf16.mxu0 0
        %3090 = vmatpush1.bf16.msra.mxu0 0
        %3091 = vmatprep.subr.bf16.mxu0 0
        %3092 = vmatpush1.bf16.msra.mxu0 0
        %3093 = vmatprep.subr.bf16.mxu0 0
        %3094 = vmatpush1.bf16.msra.mxu0 0
        %3095 = vmatprep.subr.bf16.mxu0 0
        %3096 = vmatpush1.bf16.msra.mxu0 0
        %3097 = vmatprep.subr.bf16.mxu0 0
        %3098 = vmatpush1.bf16.msra.mxu0 0
        %3099 = vmatprep.subr.bf16.mxu0 0
        %3100 = vmatpush1.bf16.msra.mxu0 0
        %3101 = vmatprep.mubr.bf16.mxu0 0
        %3102 = vmatmul.mubr.bf16.gmra.mrb[0].mxu0 %v3064
        %v3103 = vpop.f32.mrb[0].mxu0
        %v3104 = vadd.f32 0.0, %v3103
        %v3105 = vpop.f32.mrb[0].mxu0
        %v3106 = vpop.f32.mrb[0].mxu0
        %v3107 = vpop.f32.mrb[0].mxu0
        %3108 = vdwg.mxu0
        %v3110 = vsel %vm2878, %v2819, 0
        %v3113 = vsel %vm360, %v2851, 0
        %3115 = vmatprep.subr.bf16.mxu0 0
        %3116 = vmatpush1.bf16.msra.mxu0 %v3113
        %3117 = vmatprep.subr.bf16.mxu0 0
        %3118 = vmatpush1.bf16.msra.mxu0 0
        %3119 = vmatprep.subr.bf16.mxu0 0
        %3120 = vmatpush1.bf16.msra.mxu0 0
        %3121 = vmatprep.subr.bf16.mxu0 0
        %3122 = vmatpush1.bf16.msra.mxu0 0
        %3123 = vmatprep.subr.bf16.mxu0 0
        %3124 = vmatpush1.bf16.msra.mxu0 0
        %3125 = vmatprep.subr.bf16.mxu0 0
        %3126 = vmatpush1.bf16.msra.mxu0 0
        %3127 = vmatprep.subr.bf16.mxu0 0
        %3128 = vmatpush1.bf16.msra.mxu0 0
        %3129 = vmatprep.subr.bf16.mxu0 0
        %3130 = vmatpush1.bf16.msra.mxu0 0
        %3131 = vmatprep.subr.bf16.mxu0 0
        %3132 = vmatpush1.bf16.msra.mxu0 0
        %3133 = vmatprep.subr.bf16.mxu0 0
        %3134 = vmatpush1.bf16.msra.mxu0 0
        %3135 = vmatprep.subr.bf16.mxu0 0
        %3136 = vmatpush1.bf16.msra.mxu0 0
        %3137 = vmatprep.subr.bf16.mxu0 0
        %3138 = vmatpush1.bf16.msra.mxu0 0
        %3139 = vmatprep.subr.bf16.mxu0 0
        %3140 = vmatpush1.bf16.msra.mxu0 0
        %3141 = vmatprep.subr.bf16.mxu0 0
        %3142 = vmatpush1.bf16.msra.mxu0 0
        %3143 = vmatprep.subr.bf16.mxu0 0
        %3144 = vmatpush1.bf16.msra.mxu0 0
        %3145 = vmatprep.subr.bf16.mxu0 0
        %3146 = vmatpush1.bf16.msra.mxu0 0
        %3147 = vmatprep.mubr.bf16.mxu0 0
        %3148 = vmatmul.mubr.bf16.gmra.mrb[0].mxu0 %v3110
        %v3149 = vpop.f32.mrb[0].mxu0
        %v3150 = vadd.f32 0.0, %v3149
        %v3151 = vpop.f32.mrb[0].mxu0
        %v3152 = vpop.f32.mrb[0].mxu0
        %v3153 = vpop.f32.mrb[0].mxu0
        %3154 = vdwg.mxu0
        %v3156 = vsel %vm2878, %v2820, 0
        %v3159 = vsel %vm360, %v2852, 0
        %3161 = vmatprep.subr.bf16.mxu0 0
        %3162 = vmatpush1.bf16.msra.mxu0 %v3159
        %3163 = vmatprep.subr.bf16.mxu0 0
        %3164 = vmatpush1.bf16.msra.mxu0 0
        %3165 = vmatprep.subr.bf16.mxu0 0
        %3166 = vmatpush1.bf16.msra.mxu0 0
        %3167 = vmatprep.subr.bf16.mxu0 0
        %3168 = vmatpush1.bf16.msra.mxu0 0
        %3169 = vmatprep.subr.bf16.mxu0 0
        %3170 = vmatpush1.bf16.msra.mxu0 0
        %3171 = vmatprep.subr.bf16.mxu0 0
        %3172 = vmatpush1.bf16.msra.mxu0 0
        %3173 = vmatprep.subr.bf16.mxu0 0
        %3174 = vmatpush1.bf16.msra.mxu0 0
        %3175 = vmatprep.subr.bf16.mxu0 0
        %3176 = vmatpush1.bf16.msra.mxu0 0
        %3177 = vmatprep.subr.bf16.mxu0 0
        %3178 = vmatpush1.bf16.msra.mxu0 0
        %3179 = vmatprep.subr.bf16.mxu0 0
        %3180 = vmatpush1.bf16.msra.mxu0 0
        %3181 = vmatprep.subr.bf16.mxu0 0
        %3182 = vmatpush1.bf16.msra.mxu0 0
        %3183 = vmatprep.subr.bf16.mxu0 0
        %3184 = vmatpush1.bf16.msra.mxu0 0
        %3185 = vmatprep.subr.bf16.mxu0 0
        %3186 = vmatpush1.bf16.msra.mxu0 0
        %3187 = vmatprep.subr.bf16.mxu0 0
        %3188 = vmatpush1.bf16.msra.mxu0 0
        %3189 = vmatprep.subr.bf16.mxu0 0
        %3190 = vmatpush1.bf16.msra.mxu0 0
        %3191 = vmatprep.subr.bf16.mxu0 0
        %3192 = vmatpush1.bf16.msra.mxu0 0
        %3193 = vmatprep.mubr.bf16.mxu0 0
        %3194 = vmatmul.mubr.bf16.gmra.mrb[0].mxu0 %v3156
        %v3195 = vpop.f32.mrb[0].mxu0
        %v3196 = vadd.f32 0.0, %v3195
        %v3197 = vpop.f32.mrb[0].mxu0
        %v3198 = vpop.f32.mrb[0].mxu0
        %v3199 = vpop.f32.mrb[0].mxu0
        %3200 = vdwg.mxu0
        %v3202 = vsel %vm2878, %v2821, 0
        %v3205 = vsel %vm360, %v2853, 0
        %3207 = vmatprep.subr.bf16.mxu0 0
        %3208 = vmatpush1.bf16.msra.mxu0 %v3205
        %3209 = vmatprep.subr.bf16.mxu0 0
        %3210 = vmatpush1.bf16.msra.mxu0 0
        %3211 = vmatprep.subr.bf16.mxu0 0
        %3212 = vmatpush1.bf16.msra.mxu0 0
        %3213 = vmatprep.subr.bf16.mxu0 0
        %3214 = vmatpush1.bf16.msra.mxu0 0
        %3215 = vmatprep.subr.bf16.mxu0 0
        %3216 = vmatpush1.bf16.msra.mxu0 0
        %3217 = vmatprep.subr.bf16.mxu0 0
        %3218 = vmatpush1.bf16.msra.mxu0 0
        %3219 = vmatprep.subr.bf16.mxu0 0
        %3220 = vmatpush1.bf16.msra.mxu0 0
        %3221 = vmatprep.subr.bf16.mxu0 0
        %3222 = vmatpush1.bf16.msra.mxu0 0
        %3223 = vmatprep.subr.bf16.mxu0 0
        %3224 = vmatpush1.bf16.msra.mxu0 0
        %3225 = vmatprep.subr.bf16.mxu0 0
        %3226 = vmatpush1.bf16.msra.mxu0 0
        %3227 = vmatprep.subr.bf16.mxu0 0
        %3228 = vmatpush1.bf16.msra.mxu0 0
        %3229 = vmatprep.subr.bf16.mxu0 0
        %3230 = vmatpush1.bf16.msra.mxu0 0
        %3231 = vmatprep.subr.bf16.mxu0 0
        %3232 = vmatpush1.bf16.msra.mxu0 0
        %3233 = vmatprep.subr.bf16.mxu0 0
        %3234 = vmatpush1.bf16.msra.mxu0 0
        %3235 = vmatprep.subr.bf16.mxu0 0
        %3236 = vmatpush1.bf16.msra.mxu0 0
        %3237 = vmatprep.subr.bf16.mxu0 0
        %3238 = vmatpush1.bf16.msra.mxu0 0
        %3239 = vmatprep.mubr.bf16.mxu0 0
        %3240 = vmatmul.mubr.bf16.gmra.mrb[0].mxu0 %v3202
        %v3241 = vpop.f32.mrb[0].mxu0
        %v3242 = vadd.f32 0.0, %v3241
        %v3243 = vpop.f32.mrb[0].mxu0
        %v3244 = vpop.f32.mrb[0].mxu0
        %v3245 = vpop.f32.mrb[0].mxu0
        %3246 = vdwg.mxu0
        %v3248 = vsel %vm2878, %v2822, 0
        %v3251 = vsel %vm360, %v2854, 0
        %3253 = vmatprep.subr.bf16.mxu0 0
        %3254 = vmatpush1.bf16.msra.mxu0 %v3251
        %3255 = vmatprep.subr.bf16.mxu0 0
        %3256 = vmatpush1.bf16.msra.mxu0 0
        %3257 = vmatprep.subr.bf16.mxu0 0
        %3258 = vmatpush1.bf16.msra.mxu0 0
        %3259 = vmatprep.subr.bf16.mxu0 0
        %3260 = vmatpush1.bf16.msra.mxu0 0
        %3261 = vmatprep.subr.bf16.mxu0 0
        %3262 = vmatpush1.bf16.msra.mxu0 0
        %3263 = vmatprep.subr.bf16.mxu0 0
        %3264 = vmatpush1.bf16.msra.mxu0 0
        %3265 = vmatprep.subr.bf16.mxu0 0
        %3266 = vmatpush1.bf16.msra.mxu0 0
        %3267 = vmatprep.subr.bf16.mxu0 0
        %3268 = vmatpush1.bf16.msra.mxu0 0
        %3269 = vmatprep.subr.bf16.mxu0 0
        %3270 = vmatpush1.bf16.msra.mxu0 0
        %3271 = vmatprep.subr.bf16.mxu0 0
        %3272 = vmatpush1.bf16.msra.mxu0 0
        %3273 = vmatprep.subr.bf16.mxu0 0
        %3274 = vmatpush1.bf16.msra.mxu0 0
        %3275 = vmatprep.subr.bf16.mxu0 0
        %3276 = vmatpush1.bf16.msra.mxu0 0
        %3277 = vmatprep.subr.bf16.mxu0 0
        %3278 = vmatpush1.bf16.msra.mxu0 0
        %3279 = vmatprep.subr.bf16.mxu0 0
        %3280 = vmatpush1.bf16.msra.mxu0 0
        %3281 = vmatprep.subr.bf16.mxu0 0
        %3282 = vmatpush1.bf16.msra.mxu0 0
        %3283 = vmatprep.subr.bf16.mxu0 0
        %3284 = vmatpush1.bf16.msra.mxu0 0
        %3285 = vmatprep.mubr.bf16.mxu0 0
        %3286 = vmatmul.mubr.bf16.gmra.mrb[0].mxu0 %v3248
        %v3287 = vpop.f32.mrb[0].mxu0
        %v3288 = vadd.f32 0.0, %v3287
        %v3289 = vpop.f32.mrb[0].mxu0
        %v3290 = vpop.f32.mrb[0].mxu0
        %v3291 = vpop.f32.mrb[0].mxu0
        %3292 = vdwg.mxu0
        %v3294 = vsel %vm2878, %v2823, 0
        %v3297 = vsel %vm360, %v2855, 0
        %3299 = vmatprep.subr.bf16.mxu0 0
        %3300 = vmatpush1.bf16.msra.mxu0 %v3297
        %3301 = vmatprep.subr.bf16.mxu0 0
        %3302 = vmatpush1.bf16.msra.mxu0 0
        %3303 = vmatprep.subr.bf16.mxu0 0
        %3304 = vmatpush1.bf16.msra.mxu0 0
        %3305 = vmatprep.subr.bf16.mxu0 0
        %3306 = vmatpush1.bf16.msra.mxu0 0
        %3307 = vmatprep.subr.bf16.mxu0 0
        %3308 = vmatpush1.bf16.msra.mxu0 0
        %3309 = vmatprep.subr.bf16.mxu0 0
        %3310 = vmatpush1.bf16.msra.mxu0 0
        %3311 = vmatprep.subr.bf16.mxu0 0
        %3312 = vmatpush1.bf16.msra.mxu0 0
        %3313 = vmatprep.subr.bf16.mxu0 0
        %3314 = vmatpush1.bf16.msra.mxu0 0
        %3315 = vmatprep.subr.bf16.mxu0 0
        %3316 = vmatpush1.bf16.msra.mxu0 0
        %3317 = vmatprep.subr.bf16.mxu0 0
        %3318 = vmatpush1.bf16.msra.mxu0 0
        %3319 = vmatprep.subr.bf16.mxu0 0
        %3320 = vmatpush1.bf16.msra.mxu0 0
        %3321 = vmatprep.subr.bf16.mxu0 0
        %3322 = vmatpush1.bf16.msra.mxu0 0
        %3323 = vmatprep.subr.bf16.mxu0 0
        %3324 = vmatpush1.bf16.msra.mxu0 0
        %3325 = vmatprep.subr.bf16.mxu0 0
        %3326 = vmatpush1.bf16.msra.mxu0 0
        %3327 = vmatprep.subr.bf16.mxu0 0
        %3328 = vmatpush1.bf16.msra.mxu0 0
        %3329 = vmatprep.subr.bf16.mxu0 0
        %3330 = vmatpush1.bf16.msra.mxu0 0
        %3331 = vmatprep.mubr.bf16.mxu0 0
        %3332 = vmatmul.mubr.bf16.gmra.mrb[0].mxu0 %v3294
        %v3333 = vpop.f32.mrb[0].mxu0
        %v3334 = vadd.f32 0.0, %v3333
        %v3335 = vpop.f32.mrb[0].mxu0
        %v3336 = vpop.f32.mrb[0].mxu0
        %v3337 = vpop.f32.mrb[0].mxu0
        %3338 = vdwg.mxu0
        %v3340 = vsel %vm2878, %v2824, 0
        %v3343 = vsel %vm360, %v2856, 0
        %3345 = vmatprep.subr.bf16.mxu0 0
        %3346 = vmatpush1.bf16.msra.mxu0 %v3343
        %3347 = vmatprep.subr.bf16.mxu0 0
        %3348 = vmatpush1.bf16.msra.mxu0 0
        %3349 = vmatprep.subr.bf16.mxu0 0
        %3350 = vmatpush1.bf16.msra.mxu0 0
        %3351 = vmatprep.subr.bf16.mxu0 0
        %3352 = vmatpush1.bf16.msra.mxu0 0
        %3353 = vmatprep.subr.bf16.mxu0 0
        %3354 = vmatpush1.bf16.msra.mxu0 0
        %3355 = vmatprep.subr.bf16.mxu0 0
        %3356 = vmatpush1.bf16.msra.mxu0 0
        %3357 = vmatprep.subr.bf16.mxu0 0
        %3358 = vmatpush1.bf16.msra.mxu0 0
        %3359 = vmatprep.subr.bf16.mxu0 0
        %3360 = vmatpush1.bf16.msra.mxu0 0
        %3361 = vmatprep.subr.bf16.mxu0 0
        %3362 = vmatpush1.bf16.msra.mxu0 0
        %3363 = vmatprep.subr.bf16.mxu0 0
        %3364 = vmatpush1.bf16.msra.mxu0 0
        %3365 = vmatprep.subr.bf16.mxu0 0
        %3366 = vmatpush1.bf16.msra.mxu0 0
        %3367 = vmatprep.subr.bf16.mxu0 0
        %3368 = vmatpush1.bf16.msra.mxu0 0
        %3369 = vmatprep.subr.bf16.mxu0 0
        %3370 = vmatpush1.bf16.msra.mxu0 0
        %3371 = vmatprep.subr.bf16.mxu0 0
        %3372 = vmatpush1.bf16.msra.mxu0 0
        %3373 = vmatprep.subr.bf16.mxu0 0
        %3374 = vmatpush1.bf16.msra.mxu0 0
        %3375 = vmatprep.subr.bf16.mxu0 0
        %3376 = vmatpush1.bf16.msra.mxu0 0
        %3377 = vmatprep.mubr.bf16.mxu0 0
        %3378 = vmatmul.mubr.bf16.gmra.mrb[0].mxu0 %v3340
        %v3379 = vpop.f32.mrb[0].mxu0
        %v3380 = vadd.f32 0.0, %v3379
        %v3381 = vpop.f32.mrb[0].mxu0
        %v3382 = vpop.f32.mrb[0].mxu0
        %v3383 = vpop.f32.mrb[0].mxu0
        %3384 = vdwg.mxu0
        %v3386 = vsel %vm2878, %v2825, 0
        %v3389 = vsel %vm360, %v2857, 0
        %3391 = vmatprep.subr.bf16.mxu0 0
        %3392 = vmatpush1.bf16.msra.mxu0 %v3389
        %3393 = vmatprep.subr.bf16.mxu0 0
        %3394 = vmatpush1.bf16.msra.mxu0 0
        %3395 = vmatprep.subr.bf16.mxu0 0
        %3396 = vmatpush1.bf16.msra.mxu0 0
        %3397 = vmatprep.subr.bf16.mxu0 0
        %3398 = vmatpush1.bf16.msra.mxu0 0
        %3399 = vmatprep.subr.bf16.mxu0 0
        %3400 = vmatpush1.bf16.msra.mxu0 0
        %3401 = vmatprep.subr.bf16.mxu0 0
        %3402 = vmatpush1.bf16.msra.mxu0 0
        %3403 = vmatprep.subr.bf16.mxu0 0
        %3404 = vmatpush1.bf16.msra.mxu0 0
        %3405 = vmatprep.subr.bf16.mxu0 0
        %3406 = vmatpush1.bf16.msra.mxu0 0
        %3407 = vmatprep.subr.bf16.mxu0 0
        %3408 = vmatpush1.bf16.msra.mxu0 0
        %3409 = vmatprep.subr.bf16.mxu0 0
        %3410 = vmatpush1.bf16.msra.mxu0 0
        %3411 = vmatprep.subr.bf16.mxu0 0
        %3412 = vmatpush1.bf16.msra.mxu0 0
        %3413 = vmatprep.subr.bf16.mxu0 0
        %3414 = vmatpush1.bf16.msra.mxu0 0
        %3415 = vmatprep.subr.bf16.mxu0 0
        %3416 = vmatpush1.bf16.msra.mxu0 0
        %3417 = vmatprep.subr.bf16.mxu0 0
        %3418 = vmatpush1.bf16.msra.mxu0 0
        %3419 = vmatprep.subr.bf16.mxu0 0
        %3420 = vmatpush1.bf16.msra.mxu0 0
        %3421 = vmatprep.subr.bf16.mxu0 0
        %3422 = vmatpush1.bf16.msra.mxu0 0
        %3423 = vmatprep.mubr.bf16.mxu0 0
        %3424 = vmatmul.mubr.bf16.gmra.mrb[0].mxu0 %v3386
        %v3425 = vpop.f32.mrb[0].mxu0
        %v3426 = vadd.f32 0.0, %v3425
        %v3427 = vpop.f32.mrb[0].mxu0
        %v3428 = vpop.f32.mrb[0].mxu0
        %v3429 = vpop.f32.mrb[0].mxu0
        %3430 = vdwg.mxu0
        %v3432 = vsel %vm2878, %v2826, 0
        %v3435 = vsel %vm360, %v2858, 0
        %3437 = vmatprep.subr.bf16.mxu0 0
        %3438 = vmatpush1.bf16.msra.mxu0 %v3435
        %3439 = vmatprep.subr.bf16.mxu0 0
        %3440 = vmatpush1.bf16.msra.mxu0 0
        %3441 = vmatprep.subr.bf16.mxu0 0
        %3442 = vmatpush1.bf16.msra.mxu0 0
        %3443 = vmatprep.subr.bf16.mxu0 0
        %3444 = vmatpush1.bf16.msra.mxu0 0
        %3445 = vmatprep.subr.bf16.mxu0 0
        %3446 = vmatpush1.bf16.msra.mxu0 0
        %3447 = vmatprep.subr.bf16.mxu0 0
        %3448 = vmatpush1.bf16.msra.mxu0 0
        %3449 = vmatprep.subr.bf16.mxu0 0
        %3450 = vmatpush1.bf16.msra.mxu0 0
        %3451 = vmatprep.subr.bf16.mxu0 0
        %3452 = vmatpush1.bf16.msra.mxu0 0
        %3453 = vmatprep.subr.bf16.mxu0 0
        %3454 = vmatpush1.bf16.msra.mxu0 0
        %3455 = vmatprep.subr.bf16.mxu0 0
        %3456 = vmatpush1.bf16.msra.mxu0 0
        %3457 = vmatprep.subr.bf16.mxu0 0
        %3458 = vmatpush1.bf16.msra.mxu0 0
        %3459 = vmatprep.subr.bf16.mxu0 0
        %3460 = vmatpush1.bf16.msra.mxu0 0
        %3461 = vmatprep.subr.bf16.mxu0 0
        %3462 = vmatpush1.bf16.msra.mxu0 0
        %3463 = vmatprep.subr.bf16.mxu0 0
        %3464 = vmatpush1.bf16.msra.mxu0 0
        %3465 = vmatprep.subr.bf16.mxu0 0
        %3466 = vmatpush1.bf16.msra.mxu0 0
        %3467 = vmatprep.subr.bf16.mxu0 0
        %3468 = vmatpush1.bf16.msra.mxu0 0
        %3469 = vmatprep.mubr.bf16.mxu0 0
        %3470 = vmatmul.mubr.bf16.gmra.mrb[0].mxu0 %v3432
        %v3471 = vpop.f32.mrb[0].mxu0
        %v3472 = vadd.f32 0.0, %v3471
        %v3473 = vpop.f32.mrb[0].mxu0
        %v3474 = vpop.f32.mrb[0].mxu0
        %v3475 = vpop.f32.mrb[0].mxu0
        %3476 = vdwg.mxu0
        %v3478 = vsel %vm2878, %v2827, 0
        %v3481 = vsel %vm360, %v2859, 0
        %3483 = vmatprep.subr.bf16.mxu0 0
        %3484 = vmatpush1.bf16.msra.mxu0 %v3481
        %3485 = vmatprep.subr.bf16.mxu0 0
        %3486 = vmatpush1.bf16.msra.mxu0 0
        %3487 = vmatprep.subr.bf16.mxu0 0
        %3488 = vmatpush1.bf16.msra.mxu0 0
        %3489 = vmatprep.subr.bf16.mxu0 0
        %3490 = vmatpush1.bf16.msra.mxu0 0
        %3491 = vmatprep.subr.bf16.mxu0 0
        %3492 = vmatpush1.bf16.msra.mxu0 0
        %3493 = vmatprep.subr.bf16.mxu0 0
        %3494 = vmatpush1.bf16.msra.mxu0 0
        %3495 = vmatprep.subr.bf16.mxu0 0
        %3496 = vmatpush1.bf16.msra.mxu0 0
        %3497 = vmatprep.subr.bf16.mxu0 0
        %3498 = vmatpush1.bf16.msra.mxu0 0
        %3499 = vmatprep.subr.bf16.mxu0 0
        %3500 = vmatpush1.bf16.msra.mxu0 0
        %3501 = vmatprep.subr.bf16.mxu0 0
        %3502 = vmatpush1.bf16.msra.mxu0 0
        %3503 = vmatprep.subr.bf16.mxu0 0
        %3504 = vmatpush1.bf16.msra.mxu0 0
        %3505 = vmatprep.subr.bf16.mxu0 0
        %3506 = vmatpush1.bf16.msra.mxu0 0
        %3507 = vmatprep.subr.bf16.mxu0 0
        %3508 = vmatpush1.bf16.msra.mxu0 0
        %3509 = vmatprep.subr.bf16.mxu0 0
        %3510 = vmatpush1.bf16.msra.mxu0 0
        %3511 = vmatprep.subr.bf16.mxu0 0
        %3512 = vmatpush1.bf16.msra.mxu0 0
        %3513 = vmatprep.subr.bf16.mxu0 0
        %3514 = vmatpush1.bf16.msra.mxu0 0
        %3515 = vmatprep.mubr.bf16.mxu0 0
        %3516 = vmatmul.mubr.bf16.gmra.mrb[0].mxu0 %v3478
        %v3517 = vpop.f32.mrb[0].mxu0
        %v3518 = vadd.f32 0.0, %v3517
        %v3519 = vpop.f32.mrb[0].mxu0
        %v3520 = vpop.f32.mrb[0].mxu0
        %v3521 = vpop.f32.mrb[0].mxu0
        %3522 = vdwg.mxu0
        %v3524 = vsel %vm2878, %v2828, 0
        %v3527 = vsel %vm360, %v2860, 0
        %3529 = vmatprep.subr.bf16.mxu0 0
        %3530 = vmatpush1.bf16.msra.mxu0 %v3527
        %3531 = vmatprep.subr.bf16.mxu0 0
        %3532 = vmatpush1.bf16.msra.mxu0 0
        %3533 = vmatprep.subr.bf16.mxu0 0
        %3534 = vmatpush1.bf16.msra.mxu0 0
        %3535 = vmatprep.subr.bf16.mxu0 0
        %3536 = vmatpush1.bf16.msra.mxu0 0
        %3537 = vmatprep.subr.bf16.mxu0 0
        %3538 = vmatpush1.bf16.msra.mxu0 0
        %3539 = vmatprep.subr.bf16.mxu0 0
        %3540 = vmatpush1.bf16.msra.mxu0 0
        %3541 = vmatprep.subr.bf16.mxu0 0
        %3542 = vmatpush1.bf16.msra.mxu0 0
        %3543 = vmatprep.subr.bf16.mxu0 0
        %3544 = vmatpush1.bf16.msra.mxu0 0
        %3545 = vmatprep.subr.bf16.mxu0 0
        %3546 = vmatpush1.bf16.msra.mxu0 0
        %3547 = vmatprep.subr.bf16.mxu0 0
        %3548 = vmatpush1.bf16.msra.mxu0 0
        %3549 = vmatprep.subr.bf16.mxu0 0
        %3550 = vmatpush1.bf16.msra.mxu0 0
        %3551 = vmatprep.subr.bf16.mxu0 0
        %3552 = vmatpush1.bf16.msra.mxu0 0
        %3553 = vmatprep.subr.bf16.mxu0 0
        %3554 = vmatpush1.bf16.msra.mxu0 0
        %3555 = vmatprep.subr.bf16.mxu0 0
        %3556 = vmatpush1.bf16.msra.mxu0 0
        %3557 = vmatprep.subr.bf16.mxu0 0
        %3558 = vmatpush1.bf16.msra.mxu0 0
        %3559 = vmatprep.subr.bf16.mxu0 0
        %3560 = vmatpush1.bf16.msra.mxu0 0
        %3561 = vmatprep.mubr.bf16.mxu0 0
        %3562 = vmatmul.mubr.bf16.gmra.mrb[0].mxu0 %v3524
        %v3563 = vpop.f32.mrb[0].mxu0
        %v3564 = vadd.f32 0.0, %v3563
        %v3565 = vpop.f32.mrb[0].mxu0
        %v3566 = vpop.f32.mrb[0].mxu0
        %v3567 = vpop.f32.mrb[0].mxu0
        %3568 = vdwg.mxu0
        %v3570 = vsel %vm2878, %v2829, 0
        %v3573 = vsel %vm360, %v2861, 0
        %3575 = vmatprep.subr.bf16.mxu0 0
        %3576 = vmatpush1.bf16.msra.mxu0 %v3573
        %3577 = vmatprep.subr.bf16.mxu0 0
        %3578 = vmatpush1.bf16.msra.mxu0 0
        %3579 = vmatprep.subr.bf16.mxu0 0
        %3580 = vmatpush1.bf16.msra.mxu0 0
        %3581 = vmatprep.subr.bf16.mxu0 0
        %3582 = vmatpush1.bf16.msra.mxu0 0
        %3583 = vmatprep.subr.bf16.mxu0 0
        %3584 = vmatpush1.bf16.msra.mxu0 0
        %3585 = vmatprep.subr.bf16.mxu0 0
        %3586 = vmatpush1.bf16.msra.mxu0 0
        %3587 = vmatprep.subr.bf16.mxu0 0
        %3588 = vmatpush1.bf16.msra.mxu0 0
        %3589 = vmatprep.subr.bf16.mxu0 0
        %3590 = vmatpush1.bf16.msra.mxu0 0
        %3591 = vmatprep.subr.bf16.mxu0 0
        %3592 = vmatpush1.bf16.msra.mxu0 0
        %3593 = vmatprep.subr.bf16.mxu0 0
        %3594 = vmatpush1.bf16.msra.mxu0 0
        %3595 = vmatprep.subr.bf16.mxu0 0
        %3596 = vmatpush1.bf16.msra.mxu0 0
        %3597 = vmatprep.subr.bf16.mxu0 0
        %3598 = vmatpush1.bf16.msra.mxu0 0
        %3599 = vmatprep.subr.bf16.mxu0 0
        %3600 = vmatpush1.bf16.msra.mxu0 0
        %3601 = vmatprep.subr.bf16.mxu0 0
        %3602 = vmatpush1.bf16.msra.mxu0 0
        %3603 = vmatprep.subr.bf16.mxu0 0
        %3604 = vmatpush1.bf16.msra.mxu0 0
        %3605 = vmatprep.subr.bf16.mxu0 0
        %3606 = vmatpush1.bf16.msra.mxu0 0
        %3607 = vmatprep.mubr.bf16.mxu0 0
        %3608 = vmatmul.mubr.bf16.gmra.mrb[0].mxu0 %v3570
        %v3609 = vpop.f32.mrb[0].mxu0
        %v3610 = vadd.f32 0.0, %v3609
        %v3611 = vpop.f32.mrb[0].mxu0
        %v3612 = vpop.f32.mrb[0].mxu0
        %v3613 = vpop.f32.mrb[0].mxu0
        %3614 = vdwg.mxu0
        %v3616 = vsel %vm2878, %v2830, 0
        %v3619 = vsel %vm360, %v2862, 0
        %3621 = vmatprep.subr.bf16.mxu0 0
        %3622 = vmatpush1.bf16.msra.mxu0 %v3619
        %3623 = vmatprep.subr.bf16.mxu0 0
        %3624 = vmatpush1.bf16.msra.mxu0 0
        %3625 = vmatprep.subr.bf16.mxu0 0
        %3626 = vmatpush1.bf16.msra.mxu0 0
        %3627 = vmatprep.subr.bf16.mxu0 0
        %3628 = vmatpush1.bf16.msra.mxu0 0
        %3629 = vmatprep.subr.bf16.mxu0 0
        %3630 = vmatpush1.bf16.msra.mxu0 0
        %3631 = vmatprep.subr.bf16.mxu0 0
        %3632 = vmatpush1.bf16.msra.mxu0 0
        %3633 = vmatprep.subr.bf16.mxu0 0
        %3634 = vmatpush1.bf16.msra.mxu0 0
        %3635 = vmatprep.subr.bf16.mxu0 0
        %3636 = vmatpush1.bf16.msra.mxu0 0
        %3637 = vmatprep.subr.bf16.mxu0 0
        %3638 = vmatpush1.bf16.msra.mxu0 0
        %3639 = vmatprep.subr.bf16.mxu0 0
        %3640 = vmatpush1.bf16.msra.mxu0 0
        %3641 = vmatprep.subr.bf16.mxu0 0
        %3642 = vmatpush1.bf16.msra.mxu0 0
        %3643 = vmatprep.subr.bf16.mxu0 0
        %3644 = vmatpush1.bf16.msra.mxu0 0
        %3645 = vmatprep.subr.bf16.mxu0 0
        %3646 = vmatpush1.bf16.msra.mxu0 0
        %3647 = vmatprep.subr.bf16.mxu0 0
        %3648 = vmatpush1.bf16.msra.mxu0 0
        %3649 = vmatprep.subr.bf16.mxu0 0
        %3650 = vmatpush1.bf16.msra.mxu0 0
        %3651 = vmatprep.subr.bf16.mxu0 0
        %3652 = vmatpush1.bf16.msra.mxu0 0
        %3653 = vmatprep.mubr.bf16.mxu0 0
        %3654 = vmatmul.mubr.bf16.gmra.mrb[0].mxu0 %v3616
        %v3655 = vpop.f32.mrb[0].mxu0
        %v3656 = vadd.f32 0.0, %v3655
        %v3657 = vpop.f32.mrb[0].mxu0
        %v3658 = vpop.f32.mrb[0].mxu0
        %v3659 = vpop.f32.mrb[0].mxu0
        %3660 = vdwg.mxu0
        %v3662 = vsel %vm2878, %v2831, 0
        %v3665 = vsel %vm360, %v2863, 0
        %3667 = vmatprep.subr.bf16.mxu0 0
        %3668 = vmatpush1.bf16.msra.mxu0 %v3665
        %3669 = vmatprep.subr.bf16.mxu0 0
        %3670 = vmatpush1.bf16.msra.mxu0 0
        %3671 = vmatprep.subr.bf16.mxu0 0
        %3672 = vmatpush1.bf16.msra.mxu0 0
        %3673 = vmatprep.subr.bf16.mxu0 0
        %3674 = vmatpush1.bf16.msra.mxu0 0
        %3675 = vmatprep.subr.bf16.mxu0 0
        %3676 = vmatpush1.bf16.msra.mxu0 0
        %3677 = vmatprep.subr.bf16.mxu0 0
        %3678 = vmatpush1.bf16.msra.mxu0 0
        %3679 = vmatprep.subr.bf16.mxu0 0
        %3680 = vmatpush1.bf16.msra.mxu0 0
        %3681 = vmatprep.subr.bf16.mxu0 0
        %3682 = vmatpush1.bf16.msra.mxu0 0
        %3683 = vmatprep.subr.bf16.mxu0 0
        %3684 = vmatpush1.bf16.msra.mxu0 0
        %3685 = vmatprep.subr.bf16.mxu0 0
        %3686 = vmatpush1.bf16.msra.mxu0 0
        %3687 = vmatprep.subr.bf16.mxu0 0
        %3688 = vmatpush1.bf16.msra.mxu0 0
        %3689 = vmatprep.subr.bf16.mxu0 0
        %3690 = vmatpush1.bf16.msra.mxu0 0
        %3691 = vmatprep.subr.bf16.mxu0 0
        %3692 = vmatpush1.bf16.msra.mxu0 0
        %3693 = vmatprep.subr.bf16.mxu0 0
        %3694 = vmatpush1.bf16.msra.mxu0 0
        %3695 = vmatprep.subr.bf16.mxu0 0
        %3696 = vmatpush1.bf16.msra.mxu0 0
        %3697 = vmatprep.subr.bf16.mxu0 0
        %3698 = vmatpush1.bf16.msra.mxu0 0
        %3699 = vmatprep.mubr.bf16.mxu0 0
        %3700 = vmatmul.mubr.bf16.gmra.mrb[0].mxu0 %v3662
        %v3701 = vpop.f32.mrb[0].mxu0
        %v3702 = vadd.f32 0.0, %v3701
        %v3703 = vpop.f32.mrb[0].mxu0
        %v3704 = vpop.f32.mrb[0].mxu0
        %v3705 = vpop.f32.mrb[0].mxu0
        %3706 = vdwg.mxu0
        %v3708 = vsel %vm2878, %v2832, 0
        %v3711 = vsel %vm360, %v2864, 0
        %3713 = vmatprep.subr.bf16.mxu0 0
        %3714 = vmatpush1.bf16.msra.mxu0 %v3711
        %3715 = vmatprep.subr.bf16.mxu0 0
        %3716 = vmatpush1.bf16.msra.mxu0 0
        %3717 = vmatprep.subr.bf16.mxu0 0
        %3718 = vmatpush1.bf16.msra.mxu0 0
        %3719 = vmatprep.subr.bf16.mxu0 0
        %3720 = vmatpush1.bf16.msra.mxu0 0
        %3721 = vmatprep.subr.bf16.mxu0 0
        %3722 = vmatpush1.bf16.msra.mxu0 0
        %3723 = vmatprep.subr.bf16.mxu0 0
        %3724 = vmatpush1.bf16.msra.mxu0 0
        %3725 = vmatprep.subr.bf16.mxu0 0
        %3726 = vmatpush1.bf16.msra.mxu0 0
        %3727 = vmatprep.subr.bf16.mxu0 0
        %3728 = vmatpush1.bf16.msra.mxu0 0
        %3729 = vmatprep.subr.bf16.mxu0 0
        %3730 = vmatpush1.bf16.msra.mxu0 0
        %3731 = vmatprep.subr.bf16.mxu0 0
        %3732 = vmatpush1.bf16.msra.mxu0 0
        %3733 = vmatprep.subr.bf16.mxu0 0
        %3734 = vmatpush1.bf16.msra.mxu0 0
        %3735 = vmatprep.subr.bf16.mxu0 0
        %3736 = vmatpush1.bf16.msra.mxu0 0
        %3737 = vmatprep.subr.bf16.mxu0 0
        %3738 = vmatpush1.bf16.msra.mxu0 0
        %3739 = vmatprep.subr.bf16.mxu0 0
        %3740 = vmatpush1.bf16.msra.mxu0 0
        %3741 = vmatprep.subr.bf16.mxu0 0
        %3742 = vmatpush1.bf16.msra.mxu0 0
        %3743 = vmatprep.subr.bf16.mxu0 0
        %3744 = vmatpush1.bf16.msra.mxu0 0
        %3745 = vmatprep.mubr.bf16.mxu0 0
        %3746 = vmatmul.mubr.bf16.gmra.mrb[0].mxu0 %v3708
        %v3747 = vpop.f32.mrb[0].mxu0
        %v3748 = vadd.f32 0.0, %v3747
        %v3749 = vpop.f32.mrb[0].mxu0
        %v3750 = vpop.f32.mrb[0].mxu0
        %v3751 = vpop.f32.mrb[0].mxu0
        %3752 = vdwg.mxu0
        %v3754 = vsel %vm2878, %v2833, 0
        %v3757 = vsel %vm360, %v2865, 0
        %3759 = vmatprep.subr.bf16.mxu0 0
        %3760 = vmatpush1.bf16.msra.mxu0 %v3757
        %3761 = vmatprep.subr.bf16.mxu0 0
        %3762 = vmatpush1.bf16.msra.mxu0 0
        %3763 = vmatprep.subr.bf16.mxu0 0
        %3764 = vmatpush1.bf16.msra.mxu0 0
        %3765 = vmatprep.subr.bf16.mxu0 0
        %3766 = vmatpush1.bf16.msra.mxu0 0
        %3767 = vmatprep.subr.bf16.mxu0 0
        %3768 = vmatpush1.bf16.msra.mxu0 0
        %3769 = vmatprep.subr.bf16.mxu0 0
        %3770 = vmatpush1.bf16.msra.mxu0 0
        %3771 = vmatprep.subr.bf16.mxu0 0
        %3772 = vmatpush1.bf16.msra.mxu0 0
        %3773 = vmatprep.subr.bf16.mxu0 0
        %3774 = vmatpush1.bf16.msra.mxu0 0
        %3775 = vmatprep.subr.bf16.mxu0 0
        %3776 = vmatpush1.bf16.msra.mxu0 0
        %3777 = vmatprep.subr.bf16.mxu0 0
        %3778 = vmatpush1.bf16.msra.mxu0 0
        %3779 = vmatprep.subr.bf16.mxu0 0
        %3780 = vmatpush1.bf16.msra.mxu0 0
        %3781 = vmatprep.subr.bf16.mxu0 0
        %3782 = vmatpush1.bf16.msra.mxu0 0
        %3783 = vmatprep.subr.bf16.mxu0 0
        %3784 = vmatpush1.bf16.msra.mxu0 0
        %3785 = vmatprep.subr.bf16.mxu0 0
        %3786 = vmatpush1.bf16.msra.mxu0 0
        %3787 = vmatprep.subr.bf16.mxu0 0
        %3788 = vmatpush1.bf16.msra.mxu0 0
        %3789 = vmatprep.subr.bf16.mxu0 0
        %3790 = vmatpush1.bf16.msra.mxu0 0
        %3791 = vmatprep.mubr.bf16.mxu0 0
        %3792 = vmatmul.mubr.bf16.gmra.mrb[0].mxu0 %v3754
        %v3793 = vpop.f32.mrb[0].mxu0
        %v3794 = vadd.f32 0.0, %v3793
        %v3795 = vpop.f32.mrb[0].mxu0
        %v3796 = vpop.f32.mrb[0].mxu0
        %v3797 = vpop.f32.mrb[0].mxu0
        %3798 = vdwg.mxu0
        %v3800 = vsel %vm2878, %v2834, 0
        %v3803 = vsel %vm360, %v2866, 0
        %3805 = vmatprep.subr.bf16.mxu0 0
        %3806 = vmatpush1.bf16.msra.mxu0 %v3803
        %3807 = vmatprep.subr.bf16.mxu0 0
        %3808 = vmatpush1.bf16.msra.mxu0 0
        %3809 = vmatprep.subr.bf16.mxu0 0
        %3810 = vmatpush1.bf16.msra.mxu0 0
        %3811 = vmatprep.subr.bf16.mxu0 0
        %3812 = vmatpush1.bf16.msra.mxu0 0
        %3813 = vmatprep.subr.bf16.mxu0 0
        %3814 = vmatpush1.bf16.msra.mxu0 0
        %3815 = vmatprep.subr.bf16.mxu0 0
        %3816 = vmatpush1.bf16.msra.mxu0 0
        %3817 = vmatprep.subr.bf16.mxu0 0
        %3818 = vmatpush1.bf16.msra.mxu0 0
        %3819 = vmatprep.subr.bf16.mxu0 0
        %3820 = vmatpush1.bf16.msra.mxu0 0
        %3821 = vmatprep.subr.bf16.mxu0 0
        %3822 = vmatpush1.bf16.msra.mxu0 0
        %3823 = vmatprep.subr.bf16.mxu0 0
        %3824 = vmatpush1.bf16.msra.mxu0 0
        %3825 = vmatprep.subr.bf16.mxu0 0
        %3826 = vmatpush1.bf16.msra.mxu0 0
        %3827 = vmatprep.subr.bf16.mxu0 0
        %3828 = vmatpush1.bf16.msra.mxu0 0
        %3829 = vmatprep.subr.bf16.mxu0 0
        %3830 = vmatpush1.bf16.msra.mxu0 0
        %3831 = vmatprep.subr.bf16.mxu0 0
        %3832 = vmatpush1.bf16.msra.mxu0 0
        %3833 = vmatprep.subr.bf16.mxu0 0
        %3834 = vmatpush1.bf16.msra.mxu0 0
        %3835 = vmatprep.subr.bf16.mxu0 0
        %3836 = vmatpush1.bf16.msra.mxu0 0
        %3837 = vmatprep.mubr.bf16.mxu0 0
        %3838 = vmatmul.mubr.bf16.gmra.mrb[0].mxu0 %v3800
        %v3839 = vpop.f32.mrb[0].mxu0
        %v3840 = vadd.f32 0.0, %v3839
        %v3841 = vpop.f32.mrb[0].mxu0
        %v3842 = vpop.f32.mrb[0].mxu0
        %v3843 = vpop.f32.mrb[0].mxu0
        %3844 = vdwg.mxu0
        %v3846 = vsel %vm2878, %v2835, 0
        %v3849 = vsel %vm360, %v2867, 0
        %3851 = vmatprep.subr.bf16.mxu0 0
        %3852 = vmatpush1.bf16.msra.mxu0 %v3849
        %3853 = vmatprep.subr.bf16.mxu0 0
        %3854 = vmatpush1.bf16.msra.mxu0 0
        %3855 = vmatprep.subr.bf16.mxu0 0
        %3856 = vmatpush1.bf16.msra.mxu0 0
        %3857 = vmatprep.subr.bf16.mxu0 0
        %3858 = vmatpush1.bf16.msra.mxu0 0
        %3859 = vmatprep.subr.bf16.mxu0 0
        %3860 = vmatpush1.bf16.msra.mxu0 0
        %3861 = vmatprep.subr.bf16.mxu0 0
        %3862 = vmatpush1.bf16.msra.mxu0 0
        %3863 = vmatprep.subr.bf16.mxu0 0
        %3864 = vmatpush1.bf16.msra.mxu0 0
        %3865 = vmatprep.subr.bf16.mxu0 0
        %3866 = vmatpush1.bf16.msra.mxu0 0
        %3867 = vmatprep.subr.bf16.mxu0 0
        %3868 = vmatpush1.bf16.msra.mxu0 0
        %3869 = vmatprep.subr.bf16.mxu0 0
        %3870 = vmatpush1.bf16.msra.mxu0 0
        %3871 = vmatprep.subr.bf16.mxu0 0
        %3872 = vmatpush1.bf16.msra.mxu0 0
        %3873 = vmatprep.subr.bf16.mxu0 0
        %3874 = vmatpush1.bf16.msra.mxu0 0
        %3875 = vmatprep.subr.bf16.mxu0 0
        %3876 = vmatpush1.bf16.msra.mxu0 0
        %3877 = vmatprep.subr.bf16.mxu0 0
        %3878 = vmatpush1.bf16.msra.mxu0 0
        %3879 = vmatprep.subr.bf16.mxu0 0
        %3880 = vmatpush1.bf16.msra.mxu0 0
        %3881 = vmatprep.subr.bf16.mxu0 0
        %3882 = vmatpush1.bf16.msra.mxu0 0
        %3883 = vmatprep.mubr.bf16.mxu0 0
        %3884 = vmatmul.mubr.bf16.gmra.mrb[0].mxu0 %v3846
        %v3885 = vpop.f32.mrb[0].mxu0
        %v3886 = vadd.f32 0.0, %v3885
        %v3887 = vpop.f32.mrb[0].mxu0
        %v3888 = vpop.f32.mrb[0].mxu0
        %v3889 = vpop.f32.mrb[0].mxu0
        %3890 = vdwg.mxu0
        %v3892 = vsel %vm2878, %v2836, 0
        %v3895 = vsel %vm360, %v2868, 0
        %3897 = vmatprep.subr.bf16.mxu0 0
        %3898 = vmatpush1.bf16.msra.mxu0 %v3895
        %3899 = vmatprep.subr.bf16.mxu0 0
        %3900 = vmatpush1.bf16.msra.mxu0 0
        %3901 = vmatprep.subr.bf16.mxu0 0
        %3902 = vmatpush1.bf16.msra.mxu0 0
        %3903 = vmatprep.subr.bf16.mxu0 0
        %3904 = vmatpush1.bf16.msra.mxu0 0
        %3905 = vmatprep.subr.bf16.mxu0 0
        %3906 = vmatpush1.bf16.msra.mxu0 0
        %3907 = vmatprep.subr.bf16.mxu0 0
        %3908 = vmatpush1.bf16.msra.mxu0 0
        %3909 = vmatprep.subr.bf16.mxu0 0
        %3910 = vmatpush1.bf16.msra.mxu0 0
        %3911 = vmatprep.subr.bf16.mxu0 0
        %3912 = vmatpush1.bf16.msra.mxu0 0
        %3913 = vmatprep.subr.bf16.mxu0 0
        %3914 = vmatpush1.bf16.msra.mxu0 0
        %3915 = vmatprep.subr.bf16.mxu0 0
        %3916 = vmatpush1.bf16.msra.mxu0 0
        %3917 = vmatprep.subr.bf16.mxu0 0
        %3918 = vmatpush1.bf16.msra.mxu0 0
        %3919 = vmatprep.subr.bf16.mxu0 0
        %3920 = vmatpush1.bf16.msra.mxu0 0
        %3921 = vmatprep.subr.bf16.mxu0 0
        %3922 = vmatpush1.bf16.msra.mxu0 0
        %3923 = vmatprep.subr.bf16.mxu0 0
        %3924 = vmatpush1.bf16.msra.mxu0 0
        %3925 = vmatprep.subr.bf16.mxu0 0
        %3926 = vmatpush1.bf16.msra.mxu0 0
        %3927 = vmatprep.subr.bf16.mxu0 0
        %3928 = vmatpush1.bf16.msra.mxu0 0
        %3929 = vmatprep.mubr.bf16.mxu0 0
        %3930 = vmatmul.mubr.bf16.gmra.mrb[0].mxu0 %v3892
        %v3931 = vpop.f32.mrb[0].mxu0
        %v3932 = vadd.f32 0.0, %v3931
        %v3933 = vpop.f32.mrb[0].mxu0
        %v3934 = vpop.f32.mrb[0].mxu0
        %v3935 = vpop.f32.mrb[0].mxu0
        %3936 = vdwg.mxu0
        %v3938 = vsel %vm2878, %v2837, 0
        %v3941 = vsel %vm360, %v2869, 0
        %3943 = vmatprep.subr.bf16.mxu0 0
        %3944 = vmatpush1.bf16.msra.mxu0 %v3941
        %3945 = vmatprep.subr.bf16.mxu0 0
        %3946 = vmatpush1.bf16.msra.mxu0 0
        %3947 = vmatprep.subr.bf16.mxu0 0
        %3948 = vmatpush1.bf16.msra.mxu0 0
        %3949 = vmatprep.subr.bf16.mxu0 0
        %3950 = vmatpush1.bf16.msra.mxu0 0
        %3951 = vmatprep.subr.bf16.mxu0 0
        %3952 = vmatpush1.bf16.msra.mxu0 0
        %3953 = vmatprep.subr.bf16.mxu0 0
        %3954 = vmatpush1.bf16.msra.mxu0 0
        %3955 = vmatprep.subr.bf16.mxu0 0
        %3956 = vmatpush1.bf16.msra.mxu0 0
        %3957 = vmatprep.subr.bf16.mxu0 0
        %3958 = vmatpush1.bf16.msra.mxu0 0
        %3959 = vmatprep.subr.bf16.mxu0 0
        %3960 = vmatpush1.bf16.msra.mxu0 0
        %3961 = vmatprep.subr.bf16.mxu0 0
        %3962 = vmatpush1.bf16.msra.mxu0 0
        %3963 = vmatprep.subr.bf16.mxu0 0
        %3964 = vmatpush1.bf16.msra.mxu0 0
        %3965 = vmatprep.subr.bf16.mxu0 0
        %3966 = vmatpush1.bf16.msra.mxu0 0
        %3967 = vmatprep.subr.bf16.mxu0 0
        %3968 = vmatpush1.bf16.msra.mxu0 0
        %3969 = vmatprep.subr.bf16.mxu0 0
        %3970 = vmatpush1.bf16.msra.mxu0 0
        %3971 = vmatprep.subr.bf16.mxu0 0
        %3972 = vmatpush1.bf16.msra.mxu0 0
        %3973 = vmatprep.subr.bf16.mxu0 0
        %3974 = vmatpush1.bf16.msra.mxu0 0
        %3975 = vmatprep.mubr.bf16.mxu0 0
        %3976 = vmatmul.mubr.bf16.gmra.mrb[0].mxu0 %v3938
        %v3977 = vpop.f32.mrb[0].mxu0
        %v3978 = vadd.f32 0.0, %v3977
        %v3979 = vpop.f32.mrb[0].mxu0
        %v3980 = vpop.f32.mrb[0].mxu0
        %v3981 = vpop.f32.mrb[0].mxu0
        %3982 = vdwg.mxu0
        %v3984 = vsel %vm2878, %v2838, 0
        %v3987 = vsel %vm360, %v2870, 0
        %3989 = vmatprep.subr.bf16.mxu0 0
        %3990 = vmatpush1.bf16.msra.mxu0 %v3987
        %3991 = vmatprep.subr.bf16.mxu0 0
        %3992 = vmatpush1.bf16.msra.mxu0 0
        %3993 = vmatprep.subr.bf16.mxu0 0
        %3994 = vmatpush1.bf16.msra.mxu0 0
        %3995 = vmatprep.subr.bf16.mxu0 0
        %3996 = vmatpush1.bf16.msra.mxu0 0
        %3997 = vmatprep.subr.bf16.mxu0 0
        %3998 = vmatpush1.bf16.msra.mxu0 0
        %3999 = vmatprep.subr.bf16.mxu0 0
        %4000 = vmatpush1.bf16.msra.mxu0 0
        %4001 = vmatprep.subr.bf16.mxu0 0
        %4002 = vmatpush1.bf16.msra.mxu0 0
        %4003 = vmatprep.subr.bf16.mxu0 0
        %4004 = vmatpush1.bf16.msra.mxu0 0
        %4005 = vmatprep.subr.bf16.mxu0 0
        %4006 = vmatpush1.bf16.msra.mxu0 0
        %4007 = vmatprep.subr.bf16.mxu0 0
        %4008 = vmatpush1.bf16.msra.mxu0 0
        %4009 = vmatprep.subr.bf16.mxu0 0
        %4010 = vmatpush1.bf16.msra.mxu0 0
        %4011 = vmatprep.subr.bf16.mxu0 0
        %4012 = vmatpush1.bf16.msra.mxu0 0
        %4013 = vmatprep.subr.bf16.mxu0 0
        %4014 = vmatpush1.bf16.msra.mxu0 0
        %4015 = vmatprep.subr.bf16.mxu0 0
        %4016 = vmatpush1.bf16.msra.mxu0 0
        %4017 = vmatprep.subr.bf16.mxu0 0
        %4018 = vmatpush1.bf16.msra.mxu0 0
        %4019 = vmatprep.subr.bf16.mxu0 0
        %4020 = vmatpush1.bf16.msra.mxu0 0
        %4021 = vmatprep.mubr.bf16.mxu0 0
        %4022 = vmatmul.mubr.bf16.gmra.mrb[0].mxu0 %v3984
        %v4023 = vpop.f32.mrb[0].mxu0
        %v4024 = vadd.f32 0.0, %v4023
        %v4025 = vpop.f32.mrb[0].mxu0
        %v4026 = vpop.f32.mrb[0].mxu0
        %v4027 = vpop.f32.mrb[0].mxu0
        %4028 = vdwg.mxu0
        %v4030 = vsel %vm2878, %v2839, 0
        %v4033 = vsel %vm360, %v2871, 0
        %4035 = vmatprep.subr.bf16.mxu0 0
        %4036 = vmatpush1.bf16.msra.mxu0 %v4033
        %4037 = vmatprep.subr.bf16.mxu0 0
        %4038 = vmatpush1.bf16.msra.mxu0 0
        %4039 = vmatprep.subr.bf16.mxu0 0
        %4040 = vmatpush1.bf16.msra.mxu0 0
        %4041 = vmatprep.subr.bf16.mxu0 0
        %4042 = vmatpush1.bf16.msra.mxu0 0
        %4043 = vmatprep.subr.bf16.mxu0 0
        %4044 = vmatpush1.bf16.msra.mxu0 0
        %4045 = vmatprep.subr.bf16.mxu0 0
        %4046 = vmatpush1.bf16.msra.mxu0 0
        %4047 = vmatprep.subr.bf16.mxu0 0
        %4048 = vmatpush1.bf16.msra.mxu0 0
        %4049 = vmatprep.subr.bf16.mxu0 0
        %4050 = vmatpush1.bf16.msra.mxu0 0
        %4051 = vmatprep.subr.bf16.mxu0 0
        %4052 = vmatpush1.bf16.msra.mxu0 0
        %4053 = vmatprep.subr.bf16.mxu0 0
        %4054 = vmatpush1.bf16.msra.mxu0 0
        %4055 = vmatprep.subr.bf16.mxu0 0
        %4056 = vmatpush1.bf16.msra.mxu0 0
        %4057 = vmatprep.subr.bf16.mxu0 0
        %4058 = vmatpush1.bf16.msra.mxu0 0
        %4059 = vmatprep.subr.bf16.mxu0 0
        %4060 = vmatpush1.bf16.msra.mxu0 0
        %4061 = vmatprep.subr.bf16.mxu0 0
        %4062 = vmatpush1.bf16.msra.mxu0 0
        %4063 = vmatprep.subr.bf16.mxu0 0
        %4064 = vmatpush1.bf16.msra.mxu0 0
        %4065 = vmatprep.subr.bf16.mxu0 0
        %4066 = vmatpush1.bf16.msra.mxu0 0
        %4067 = vmatprep.mubr.bf16.mxu0 0
        %4068 = vmatmul.mubr.bf16.gmra.mrb[0].mxu0 %v4030
        %v4069 = vpop.f32.mrb[0].mxu0
        %v4070 = vadd.f32 0.0, %v4069
        %v4071 = vpop.f32.mrb[0].mxu0
        %v4072 = vpop.f32.mrb[0].mxu0
        %v4073 = vpop.f32.mrb[0].mxu0
        %4074 = vdwg.mxu0
        %v4076 = vsel %vm2878, %v2840, 0
        %v4079 = vsel %vm360, %v2872, 0
        %4081 = vmatprep.subr.bf16.mxu0 0
        %4082 = vmatpush1.bf16.msra.mxu0 %v4079
        %4083 = vmatprep.subr.bf16.mxu0 0
        %4084 = vmatpush1.bf16.msra.mxu0 0
        %4085 = vmatprep.subr.bf16.mxu0 0
        %4086 = vmatpush1.bf16.msra.mxu0 0
        %4087 = vmatprep.subr.bf16.mxu0 0
        %4088 = vmatpush1.bf16.msra.mxu0 0
        %4089 = vmatprep.subr.bf16.mxu0 0
        %4090 = vmatpush1.bf16.msra.mxu0 0
        %4091 = vmatprep.subr.bf16.mxu0 0
        %4092 = vmatpush1.bf16.msra.mxu0 0
        %4093 = vmatprep.subr.bf16.mxu0 0
        %4094 = vmatpush1.bf16.msra.mxu0 0
        %4095 = vmatprep.subr.bf16.mxu0 0
        %4096 = vmatpush1.bf16.msra.mxu0 0
        %4097 = vmatprep.subr.bf16.mxu0 0
        %4098 = vmatpush1.bf16.msra.mxu0 0
        %4099 = vmatprep.subr.bf16.mxu0 0
        %4100 = vmatpush1.bf16.msra.mxu0 0
        %4101 = vmatprep.subr.bf16.mxu0 0
        %4102 = vmatpush1.bf16.msra.mxu0 0
        %4103 = vmatprep.subr.bf16.mxu0 0
        %4104 = vmatpush1.bf16.msra.mxu0 0
        %4105 = vmatprep.subr.bf16.mxu0 0
        %4106 = vmatpush1.bf16.msra.mxu0 0
        %4107 = vmatprep.subr.bf16.mxu0 0
        %4108 = vmatpush1.bf16.msra.mxu0 0
        %4109 = vmatprep.subr.bf16.mxu0 0
        %4110 = vmatpush1.bf16.msra.mxu0 0
        %4111 = vmatprep.subr.bf16.mxu0 0
        %4112 = vmatpush1.bf16.msra.mxu0 0
        %4113 = vmatprep.mubr.bf16.mxu0 0
        %4114 = vmatmul.mubr.bf16.gmra.mrb[0].mxu0 %v4076
        %v4115 = vpop.f32.mrb[0].mxu0
        %v4116 = vadd.f32 0.0, %v4115
        %v4117 = vpop.f32.mrb[0].mxu0
        %v4118 = vpop.f32.mrb[0].mxu0
        %v4119 = vpop.f32.mrb[0].mxu0
        %4120 = vdwg.mxu0
        %v4122 = vsel %vm2878, %v2841, 0
        %v4125 = vsel %vm360, %v2873, 0
        %4127 = vmatprep.subr.bf16.mxu0 0
        %4128 = vmatpush1.bf16.msra.mxu0 %v4125
        %4129 = vmatprep.subr.bf16.mxu0 0
        %4130 = vmatpush1.bf16.msra.mxu0 0
        %4131 = vmatprep.subr.bf16.mxu0 0
        %4132 = vmatpush1.bf16.msra.mxu0 0
        %4133 = vmatprep.subr.bf16.mxu0 0
        %4134 = vmatpush1.bf16.msra.mxu0 0
        %4135 = vmatprep.subr.bf16.mxu0 0
        %4136 = vmatpush1.bf16.msra.mxu0 0
        %4137 = vmatprep.subr.bf16.mxu0 0
        %4138 = vmatpush1.bf16.msra.mxu0 0
        %4139 = vmatprep.subr.bf16.mxu0 0
        %4140 = vmatpush1.bf16.msra.mxu0 0
        %4141 = vmatprep.subr.bf16.mxu0 0
        %4142 = vmatpush1.bf16.msra.mxu0 0
        %4143 = vmatprep.subr.bf16.mxu0 0
        %4144 = vmatpush1.bf16.msra.mxu0 0
        %4145 = vmatprep.subr.bf16.mxu0 0
        %4146 = vmatpush1.bf16.msra.mxu0 0
        %4147 = vmatprep.subr.bf16.mxu0 0
        %4148 = vmatpush1.bf16.msra.mxu0 0
        %4149 = vmatprep.subr.bf16.mxu0 0
        %4150 = vmatpush1.bf16.msra.mxu0 0
        %4151 = vmatprep.subr.bf16.mxu0 0
        %4152 = vmatpush1.bf16.msra.mxu0 0
        %4153 = vmatprep.subr.bf16.mxu0 0
        %4154 = vmatpush1.bf16.msra.mxu0 0
        %4155 = vmatprep.subr.bf16.mxu0 0
        %4156 = vmatpush1.bf16.msra.mxu0 0
        %4157 = vmatprep.subr.bf16.mxu0 0
        %4158 = vmatpush1.bf16.msra.mxu0 0
        %4159 = vmatprep.mubr.bf16.mxu0 0
        %4160 = vmatmul.mubr.bf16.gmra.mrb[0].mxu0 %v4122
        %v4161 = vpop.f32.mrb[0].mxu0
        %v4162 = vadd.f32 0.0, %v4161
        %v4163 = vpop.f32.mrb[0].mxu0
        %v4164 = vpop.f32.mrb[0].mxu0
        %v4165 = vpop.f32.mrb[0].mxu0
        %4166 = vdwg.mxu0
        %v4168 = vsel %vm2878, %v2842, 0
        %v4171 = vsel %vm360, %v2874, 0
        %4173 = vmatprep.subr.bf16.mxu0 0
        %4174 = vmatpush1.bf16.msra.mxu0 %v4171
        %4175 = vmatprep.subr.bf16.mxu0 0
        %4176 = vmatpush1.bf16.msra.mxu0 0
        %4177 = vmatprep.subr.bf16.mxu0 0
        %4178 = vmatpush1.bf16.msra.mxu0 0
        %4179 = vmatprep.subr.bf16.mxu0 0
        %4180 = vmatpush1.bf16.msra.mxu0 0
        %4181 = vmatprep.subr.bf16.mxu0 0
        %4182 = vmatpush1.bf16.msra.mxu0 0
        %4183 = vmatprep.subr.bf16.mxu0 0
        %4184 = vmatpush1.bf16.msra.mxu0 0
        %4185 = vmatprep.subr.bf16.mxu0 0
        %4186 = vmatpush1.bf16.msra.mxu0 0
        %4187 = vmatprep.subr.bf16.mxu0 0
        %4188 = vmatpush1.bf16.msra.mxu0 0
        %4189 = vmatprep.subr.bf16.mxu0 0
        %4190 = vmatpush1.bf16.msra.mxu0 0
        %4191 = vmatprep.subr.bf16.mxu0 0
        %4192 = vmatpush1.bf16.msra.mxu0 0
        %4193 = vmatprep.subr.bf16.mxu0 0
        %4194 = vmatpush1.bf16.msra.mxu0 0
        %4195 = vmatprep.subr.bf16.mxu0 0
        %4196 = vmatpush1.bf16.msra.mxu0 0
        %4197 = vmatprep.subr.bf16.mxu0 0
        %4198 = vmatpush1.bf16.msra.mxu0 0
        %4199 = vmatprep.subr.bf16.mxu0 0
        %4200 = vmatpush1.bf16.msra.mxu0 0
        %4201 = vmatprep.subr.bf16.mxu0 0
        %4202 = vmatpush1.bf16.msra.mxu0 0
        %4203 = vmatprep.subr.bf16.mxu0 0
        %4204 = vmatpush1.bf16.msra.mxu0 0
        %4205 = vmatprep.mubr.bf16.mxu0 0
        %4206 = vmatmul.mubr.bf16.gmra.mrb[0].mxu0 %v4168
        %v4207 = vpop.f32.mrb[0].mxu0
        %v4208 = vadd.f32 0.0, %v4207
        %v4209 = vpop.f32.mrb[0].mxu0
        %v4210 = vpop.f32.mrb[0].mxu0
        %v4211 = vpop.f32.mrb[0].mxu0
        %4212 = vdwg.mxu0
        %v4214 = vsel %vm2878, %v2843, 0
        %v4217 = vsel %vm360, %v2875, 0
        %4219 = vmatprep.subr.bf16.mxu0 0
        %4220 = vmatpush1.bf16.msra.mxu0 %v4217
        %4221 = vmatprep.subr.bf16.mxu0 0
        %4222 = vmatpush1.bf16.msra.mxu0 0
        %4223 = vmatprep.subr.bf16.mxu0 0
        %4224 = vmatpush1.bf16.msra.mxu0 0
        %4225 = vmatprep.subr.bf16.mxu0 0
        %4226 = vmatpush1.bf16.msra.mxu0 0
        %4227 = vmatprep.subr.bf16.mxu0 0
        %4228 = vmatpush1.bf16.msra.mxu0 0
        %4229 = vmatprep.subr.bf16.mxu0 0
        %4230 = vmatpush1.bf16.msra.mxu0 0
        %4231 = vmatprep.subr.bf16.mxu0 0
        %4232 = vmatpush1.bf16.msra.mxu0 0
        %4233 = vmatprep.subr.bf16.mxu0 0
        %4234 = vmatpush1.bf16.msra.mxu0 0
        %4235 = vmatprep.subr.bf16.mxu0 0
        %4236 = vmatpush1.bf16.msra.mxu0 0
        %4237 = vmatprep.subr.bf16.mxu0 0
        %4238 = vmatpush1.bf16.msra.mxu0 0
        %4239 = vmatprep.subr.bf16.mxu0 0
        %4240 = vmatpush1.bf16.msra.mxu0 0
        %4241 = vmatprep.subr.bf16.mxu0 0
        %4242 = vmatpush1.bf16.msra.mxu0 0
        %4243 = vmatprep.subr.bf16.mxu0 0
        %4244 = vmatpush1.bf16.msra.mxu0 0
        %4245 = vmatprep.subr.bf16.mxu0 0
        %4246 = vmatpush1.bf16.msra.mxu0 0
        %4247 = vmatprep.subr.bf16.mxu0 0
        %4248 = vmatpush1.bf16.msra.mxu0 0
        %4249 = vmatprep.subr.bf16.mxu0 0
        %4250 = vmatpush1.bf16.msra.mxu0 0
        %4251 = vmatprep.mubr.bf16.mxu0 0
        %4252 = vmatmul.mubr.bf16.gmra.mrb[0].mxu0 %v4214
        %v4253 = vpop.f32.mrb[0].mxu0
        %v4254 = vadd.f32 0.0, %v4253
        %v4255 = vpop.f32.mrb[0].mxu0
        %v4256 = vpop.f32.mrb[0].mxu0
        %v4257 = vpop.f32.mrb[0].mxu0
        %4258 = vdwg.mxu0
        %v4260 = vsel %vm2878, %v2844, 0
        %v4263 = vsel %vm360, %v2876, 0
        %4265 = vmatprep.subr.bf16.mxu0 0
        %4266 = vmatpush1.bf16.msra.mxu0 %v4263
        %4267 = vmatprep.subr.bf16.mxu0 0
        %4268 = vmatpush1.bf16.msra.mxu0 0
        %4269 = vmatprep.subr.bf16.mxu0 0
        %4270 = vmatpush1.bf16.msra.mxu0 0
        %4271 = vmatprep.subr.bf16.mxu0 0
        %4272 = vmatpush1.bf16.msra.mxu0 0
        %4273 = vmatprep.subr.bf16.mxu0 0
        %4274 = vmatpush1.bf16.msra.mxu0 0
        %4275 = vmatprep.subr.bf16.mxu0 0
        %4276 = vmatpush1.bf16.msra.mxu0 0
        %4277 = vmatprep.subr.bf16.mxu0 0
        %4278 = vmatpush1.bf16.msra.mxu0 0
        %4279 = vmatprep.subr.bf16.mxu0 0
        %4280 = vmatpush1.bf16.msra.mxu0 0
        %4281 = vmatprep.subr.bf16.mxu0 0
        %4282 = vmatpush1.bf16.msra.mxu0 0
        %4283 = vmatprep.subr.bf16.mxu0 0
        %4284 = vmatpush1.bf16.msra.mxu0 0
        %4285 = vmatprep.subr.bf16.mxu0 0
        %4286 = vmatpush1.bf16.msra.mxu0 0
        %4287 = vmatprep.subr.bf16.mxu0 0
        %4288 = vmatpush1.bf16.msra.mxu0 0
        %4289 = vmatprep.subr.bf16.mxu0 0
        %4290 = vmatpush1.bf16.msra.mxu0 0
        %4291 = vmatprep.subr.bf16.mxu0 0
        %4292 = vmatpush1.bf16.msra.mxu0 0
        %4293 = vmatprep.subr.bf16.mxu0 0
        %4294 = vmatpush1.bf16.msra.mxu0 0
        %4295 = vmatprep.subr.bf16.mxu0 0
        %4296 = vmatpush1.bf16.msra.mxu0 0
        %4297 = vmatprep.mubr.bf16.mxu0 0
        %4298 = vmatmul.mubr.bf16.gmra.mrb[0].mxu0 %v4260
        %v4299 = vpop.f32.mrb[0].mxu0
        %v4300 = vadd.f32 0.0, %v4299
        %v4301 = vpop.f32.mrb[0].mxu0
        %v4302 = vpop.f32.mrb[0].mxu0
        %v4303 = vpop.f32.mrb[0].mxu0
        %4304 = vdwg.mxu0
        %v4306 = vsel %vm2878, %v2845, 0
        %v4309 = vsel %vm360, %v2877, 0
        %4311 = vmatprep.subr.bf16.mxu0 0
        %4312 = vmatpush1.bf16.msra.mxu0 %v4309
        %4313 = vmatprep.subr.bf16.mxu0 0
        %4314 = vmatpush1.bf16.msra.mxu0 0
        %4315 = vmatprep.subr.bf16.mxu0 0
        %4316 = vmatpush1.bf16.msra.mxu0 0
        %4317 = vmatprep.subr.bf16.mxu0 0
        %4318 = vmatpush1.bf16.msra.mxu0 0
        %4319 = vmatprep.subr.bf16.mxu0 0
        %4320 = vmatpush1.bf16.msra.mxu0 0
        %4321 = vmatprep.subr.bf16.mxu0 0
        %4322 = vmatpush1.bf16.msra.mxu0 0
        %4323 = vmatprep.subr.bf16.mxu0 0
        %4324 = vmatpush1.bf16.msra.mxu0 0
        %4325 = vmatprep.subr.bf16.mxu0 0
        %4326 = vmatpush1.bf16.msra.mxu0 0
        %4327 = vmatprep.subr.bf16.mxu0 0
        %4328 = vmatpush1.bf16.msra.mxu0 0
        %4329 = vmatprep.subr.bf16.mxu0 0
        %4330 = vmatpush1.bf16.msra.mxu0 0
        %4331 = vmatprep.subr.bf16.mxu0 0
        %4332 = vmatpush1.bf16.msra.mxu0 0
        %4333 = vmatprep.subr.bf16.mxu0 0
        %4334 = vmatpush1.bf16.msra.mxu0 0
        %4335 = vmatprep.subr.bf16.mxu0 0
        %4336 = vmatpush1.bf16.msra.mxu0 0
        %4337 = vmatprep.subr.bf16.mxu0 0
        %4338 = vmatpush1.bf16.msra.mxu0 0
        %4339 = vmatprep.subr.bf16.mxu0 0
        %4340 = vmatpush1.bf16.msra.mxu0 0
        %4341 = vmatprep.subr.bf16.mxu0 0
        %4342 = vmatpush1.bf16.msra.mxu0 0
        %4343 = vmatprep.mubr.bf16.mxu0 0
        %4344 = vmatmul.mubr.bf16.gmra.mrb[0].mxu0 %v4306
        %v4345 = vpop.f32.mrb[0].mxu0
        %v4346 = vadd.f32 0.0, %v4345
        %v4347 = vpop.f32.mrb[0].mxu0
        %v4348 = vpop.f32.mrb[0].mxu0
        %v4349 = vpop.f32.mrb[0].mxu0
        %4350 = vdwg.mxu0
        %v4351 = vcombine.low %v2920, %v3012
        %v4353 = vunpack.c.l.s4 1983009808
        %v4354 = vunpack.c.0.s8 %v4353
        %v4355 = vlaneseq
        %v4356 = vshrl.u32 %v4355, 7
        %v4357 = vsub.s32 %v4354, %v4356
        %v4358 = vrot.slane %v4351, %v4357
        %v4359 = vcombine.low %v2966, %v3058
        %v4361 = vunpack.c.l.s4 1983009808
        %v4362 = vunpack.c.0.s8 %v4361
        %v4363 = vlaneseq
        %v4364 = vshrl.u32 %v4363, 7
        %v4365 = vsub.s32 %v4362, %v4364
        %v4366 = vrot.slane %v4359, %v4365
        %v4367 = vcombine.low %v4358, %v4366
        %v4368 = vcombine.high %v4358, %v4366
        %v4370 = vunpack.c.l.s4 1934713408
        %v4371 = vunpack.c.0.s8 %v4370
        %v4372 = vlaneseq
        %v4373 = vshrl.u32 %v4372, 7
        %v4374 = vsub.s32 %v4371, %v4373
        %v4375 = vrot.slane %v4367, %v4374
        %v4377 = vunpack.c.l.s4 1934713408
        %v4378 = vunpack.c.0.s8 %v4377
        %v4379 = vlaneseq
        %v4380 = vshrl.u32 %v4379, 7
        %v4381 = vsub.s32 %v4378, %v4380
        %v4382 = vrot.slane %v4368, %v4381
        %v4383 = vcombine.high %v4375, 0.0
        %v4384 = vcombine.high %v4382, 0.0
        %v4385 = vcombine.low %v3104, %v3196
        %v4387 = vunpack.c.l.s4 1983009808
        %v4388 = vunpack.c.0.s8 %v4387
        %v4389 = vlaneseq
        %v4390 = vshrl.u32 %v4389, 7
        %v4391 = vsub.s32 %v4388, %v4390
        %v4392 = vrot.slane %v4385, %v4391
        %v4393 = vcombine.low %v3150, %v3242
        %v4395 = vunpack.c.l.s4 1983009808
        %v4396 = vunpack.c.0.s8 %v4395
        %v4397 = vlaneseq
        %v4398 = vshrl.u32 %v4397, 7
        %v4399 = vsub.s32 %v4396, %v4398
        %v4400 = vrot.slane %v4393, %v4399
        %v4401 = vcombine.low %v4392, %v4400
        %v4402 = vcombine.high %v4392, %v4400
        %v4404 = vunpack.c.l.s4 1934713408
        %v4405 = vunpack.c.0.s8 %v4404
        %v4406 = vlaneseq
        %v4407 = vshrl.u32 %v4406, 7
        %v4408 = vsub.s32 %v4405, %v4407
        %v4409 = vrot.slane %v4401, %v4408
        %v4411 = vunpack.c.l.s4 1934713408
        %v4412 = vunpack.c.0.s8 %v4411
        %v4413 = vlaneseq
        %v4414 = vshrl.u32 %v4413, 7
        %v4415 = vsub.s32 %v4412, %v4414
        %v4416 = vrot.slane %v4402, %v4415
        %v4417 = vcombine.high %v4409, 0.0
        %v4418 = vcombine.high %v4416, 0.0
        %v4419 = vcombine.low %v3288, %v3380
        %v4421 = vunpack.c.l.s4 1983009808
        %v4422 = vunpack.c.0.s8 %v4421
        %v4423 = vlaneseq
        %v4424 = vshrl.u32 %v4423, 7
        %v4425 = vsub.s32 %v4422, %v4424
        %v4426 = vrot.slane %v4419, %v4425
        %v4427 = vcombine.low %v3334, %v3426
        %v4429 = vunpack.c.l.s4 1983009808
        %v4430 = vunpack.c.0.s8 %v4429
        %v4431 = vlaneseq
        %v4432 = vshrl.u32 %v4431, 7
        %v4433 = vsub.s32 %v4430, %v4432
        %v4434 = vrot.slane %v4427, %v4433
        %v4435 = vcombine.low %v4426, %v4434
        %v4436 = vcombine.high %v4426, %v4434
        %v4438 = vunpack.c.l.s4 1934713408
        %v4439 = vunpack.c.0.s8 %v4438
        %v4440 = vlaneseq
        %v4441 = vshrl.u32 %v4440, 7
        %v4442 = vsub.s32 %v4439, %v4441
        %v4443 = vrot.slane %v4435, %v4442
        %v4445 = vunpack.c.l.s4 1934713408
        %v4446 = vunpack.c.0.s8 %v4445
        %v4447 = vlaneseq
        %v4448 = vshrl.u32 %v4447, 7
        %v4449 = vsub.s32 %v4446, %v4448
        %v4450 = vrot.slane %v4436, %v4449
        %v4451 = vcombine.high %v4443, 0.0
        %v4452 = vcombine.high %v4450, 0.0
        %v4453 = vcombine.low %v3472, %v3564
        %v4455 = vunpack.c.l.s4 1983009808
        %v4456 = vunpack.c.0.s8 %v4455
        %v4457 = vlaneseq
        %v4458 = vshrl.u32 %v4457, 7
        %v4459 = vsub.s32 %v4456, %v4458
        %v4460 = vrot.slane %v4453, %v4459
        %v4461 = vcombine.low %v3518, %v3610
        %v4463 = vunpack.c.l.s4 1983009808
        %v4464 = vunpack.c.0.s8 %v4463
        %v4465 = vlaneseq
        %v4466 = vshrl.u32 %v4465, 7
        %v4467 = vsub.s32 %v4464, %v4466
        %v4468 = vrot.slane %v4461, %v4467
        %v4469 = vcombine.low %v4460, %v4468
        %v4470 = vcombine.high %v4460, %v4468
        %v4472 = vunpack.c.l.s4 1934713408
        %v4473 = vunpack.c.0.s8 %v4472
        %v4474 = vlaneseq
        %v4475 = vshrl.u32 %v4474, 7
        %v4476 = vsub.s32 %v4473, %v4475
        %v4477 = vrot.slane %v4469, %v4476
        %v4479 = vunpack.c.l.s4 1934713408
        %v4480 = vunpack.c.0.s8 %v4479
        %v4481 = vlaneseq
        %v4482 = vshrl.u32 %v4481, 7
        %v4483 = vsub.s32 %v4480, %v4482
        %v4484 = vrot.slane %v4470, %v4483
        %v4485 = vcombine.high %v4477, 0.0
        %v4486 = vcombine.high %v4484, 0.0
        %v4487 = vcombine.low %v3656, %v3748
        %v4489 = vunpack.c.l.s4 1983009808
        %v4490 = vunpack.c.0.s8 %v4489
        %v4491 = vlaneseq
        %v4492 = vshrl.u32 %v4491, 7
        %v4493 = vsub.s32 %v4490, %v4492
        %v4494 = vrot.slane %v4487, %v4493
        %v4495 = vcombine.low %v3702, %v3794
        %v4497 = vunpack.c.l.s4 1983009808
        %v4498 = vunpack.c.0.s8 %v4497
        %v4499 = vlaneseq
        %v4500 = vshrl.u32 %v4499, 7
        %v4501 = vsub.s32 %v4498, %v4500
        %v4502 = vrot.slane %v4495, %v4501
        %v4503 = vcombine.low %v4494, %v4502
        %v4504 = vcombine.high %v4494, %v4502
        %v4506 = vunpack.c.l.s4 1934713408
        %v4507 = vunpack.c.0.s8 %v4506
        %v4508 = vlaneseq
        %v4509 = vshrl.u32 %v4508, 7
        %v4510 = vsub.s32 %v4507, %v4509
        %v4511 = vrot.slane %v4503, %v4510
        %v4513 = vunpack.c.l.s4 1934713408
        %v4514 = vunpack.c.0.s8 %v4513
        %v4515 = vlaneseq
        %v4516 = vshrl.u32 %v4515, 7
        %v4517 = vsub.s32 %v4514, %v4516
        %v4518 = vrot.slane %v4504, %v4517
        %v4519 = vcombine.high %v4511, 0.0
        %v4520 = vcombine.high %v4518, 0.0
        %v4521 = vcombine.low %v3840, %v3932
        %v4523 = vunpack.c.l.s4 1983009808
        %v4524 = vunpack.c.0.s8 %v4523
        %v4525 = vlaneseq
        %v4526 = vshrl.u32 %v4525, 7
        %v4527 = vsub.s32 %v4524, %v4526
        %v4528 = vrot.slane %v4521, %v4527
        %v4529 = vcombine.low %v3886, %v3978
        %v4531 = vunpack.c.l.s4 1983009808
        %v4532 = vunpack.c.0.s8 %v4531
        %v4533 = vlaneseq
        %v4534 = vshrl.u32 %v4533, 7
        %v4535 = vsub.s32 %v4532, %v4534
        %v4536 = vrot.slane %v4529, %v4535
        %v4537 = vcombine.low %v4528, %v4536
        %v4538 = vcombine.high %v4528, %v4536
        %v4540 = vunpack.c.l.s4 1934713408
        %v4541 = vunpack.c.0.s8 %v4540
        %v4542 = vlaneseq
        %v4543 = vshrl.u32 %v4542, 7
        %v4544 = vsub.s32 %v4541, %v4543
        %v4545 = vrot.slane %v4537, %v4544
        %v4547 = vunpack.c.l.s4 1934713408
        %v4548 = vunpack.c.0.s8 %v4547
        %v4549 = vlaneseq
        %v4550 = vshrl.u32 %v4549, 7
        %v4551 = vsub.s32 %v4548, %v4550
        %v4552 = vrot.slane %v4538, %v4551
        %v4553 = vcombine.high %v4545, 0.0
        %v4554 = vcombine.high %v4552, 0.0
        %v4555 = vcombine.low %v4024, %v4116
        %v4557 = vunpack.c.l.s4 1983009808
        %v4558 = vunpack.c.0.s8 %v4557
        %v4559 = vlaneseq
        %v4560 = vshrl.u32 %v4559, 7
        %v4561 = vsub.s32 %v4558, %v4560
        %v4562 = vrot.slane %v4555, %v4561
        %v4563 = vcombine.low %v4070, %v4162
        %v4565 = vunpack.c.l.s4 1983009808
        %v4566 = vunpack.c.0.s8 %v4565
        %v4567 = vlaneseq
        %v4568 = vshrl.u32 %v4567, 7
        %v4569 = vsub.s32 %v4566, %v4568
        %v4570 = vrot.slane %v4563, %v4569
        %v4571 = vcombine.low %v4562, %v4570
        %v4572 = vcombine.high %v4562, %v4570
        %v4574 = vunpack.c.l.s4 1934713408
        %v4575 = vunpack.c.0.s8 %v4574
        %v4576 = vlaneseq
        %v4577 = vshrl.u32 %v4576, 7
        %v4578 = vsub.s32 %v4575, %v4577
        %v4579 = vrot.slane %v4571, %v4578
        %v4581 = vunpack.c.l.s4 1934713408
        %v4582 = vunpack.c.0.s8 %v4581
        %v4583 = vlaneseq
        %v4584 = vshrl.u32 %v4583, 7
        %v4585 = vsub.s32 %v4582, %v4584
        %v4586 = vrot.slane %v4572, %v4585
        %v4587 = vcombine.high %v4579, 0.0
        %v4588 = vcombine.high %v4586, 0.0
        %v4589 = vcombine.low %v4208, %v4300
        %v4591 = vunpack.c.l.s4 1983009808
        %v4592 = vunpack.c.0.s8 %v4591
        %v4593 = vlaneseq
        %v4594 = vshrl.u32 %v4593, 7
        %v4595 = vsub.s32 %v4592, %v4594
        %v4596 = vrot.slane %v4589, %v4595
        %v4597 = vcombine.low %v4254, %v4346
        %v4599 = vunpack.c.l.s4 1983009808
        %v4600 = vunpack.c.0.s8 %v4599
        %v4601 = vlaneseq
        %v4602 = vshrl.u32 %v4601, 7
        %v4603 = vsub.s32 %v4600, %v4602
        %v4604 = vrot.slane %v4597, %v4603
        %v4605 = vcombine.low %v4596, %v4604
        %v4606 = vcombine.high %v4596, %v4604
        %v4608 = vunpack.c.l.s4 1934713408
        %v4609 = vunpack.c.0.s8 %v4608
        %v4610 = vlaneseq
        %v4611 = vshrl.u32 %v4610, 7
        %v4612 = vsub.s32 %v4609, %v4611
        %v4613 = vrot.slane %v4605, %v4612
        %v4615 = vunpack.c.l.s4 1934713408
        %v4616 = vunpack.c.0.s8 %v4615
        %v4617 = vlaneseq
        %v4618 = vshrl.u32 %v4617, 7
        %v4619 = vsub.s32 %v4616, %v4618
        %v4620 = vrot.slane %v4606, %v4619
        %v4621 = vcombine.high %v4613, 0.0
        %v4622 = vcombine.high %v4620, 0.0
        %v4623 = vcombine.low %v4375, %v4443
        %v4625 = vunpack.c.l.s4 1983009808
        %v4626 = vunpack.c.0.s8 %v4625
        %v4627 = vlaneseq
        %v4628 = vshrl.u32 %v4627, 7
        %v4629 = vsub.s32 %v4626, %v4628
        %v4630 = vrot.slane %v4623, %v4629
        %v4631 = vcombine.low %v4409, %v4477
        %v4633 = vunpack.c.l.s4 1983009808
        %v4634 = vunpack.c.0.s8 %v4633
        %v4635 = vlaneseq
        %v4636 = vshrl.u32 %v4635, 7
        %v4637 = vsub.s32 %v4634, %v4636
        %v4638 = vrot.slane %v4631, %v4637
        %v4639 = vcombine.low %v4511, %v4579
        %v4641 = vunpack.c.l.s4 1983009808
        %v4642 = vunpack.c.0.s8 %v4641
        %v4643 = vlaneseq
        %v4644 = vshrl.u32 %v4643, 7
        %v4645 = vsub.s32 %v4642, %v4644
        %v4646 = vrot.slane %v4639, %v4645
        %v4647 = vcombine.low %v4545, %v4613
        %v4649 = vunpack.c.l.s4 1983009808
        %v4650 = vunpack.c.0.s8 %v4649
        %v4651 = vlaneseq
        %v4652 = vshrl.u32 %v4651, 7
        %v4653 = vsub.s32 %v4650, %v4652
        %v4654 = vrot.slane %v4647, %v4653
        %v4655 = vcombine.low %v4630, %v4638
        %v4656 = vcombine.high %v4630, %v4638
        %v4658 = vunpack.c.l.s4 1934713408
        %v4659 = vunpack.c.0.s8 %v4658
        %v4660 = vlaneseq
        %v4661 = vshrl.u32 %v4660, 7
        %v4662 = vsub.s32 %v4659, %v4661
        %v4663 = vrot.slane %v4655, %v4662
        %v4665 = vunpack.c.l.s4 1934713408
        %v4666 = vunpack.c.0.s8 %v4665
        %v4667 = vlaneseq
        %v4668 = vshrl.u32 %v4667, 7
        %v4669 = vsub.s32 %v4666, %v4668
        %v4670 = vrot.slane %v4656, %v4669
        %v4671 = vcombine.low %v4646, %v4654
        %v4672 = vcombine.high %v4646, %v4654
        %v4674 = vunpack.c.l.s4 1934713408
        %v4675 = vunpack.c.0.s8 %v4674
        %v4676 = vlaneseq
        %v4677 = vshrl.u32 %v4676, 7
        %v4678 = vsub.s32 %v4675, %v4677
        %v4679 = vrot.slane %v4671, %v4678
        %v4681 = vunpack.c.l.s4 1934713408
        %v4682 = vunpack.c.0.s8 %v4681
        %v4683 = vlaneseq
        %v4684 = vshrl.u32 %v4683, 7
        %v4685 = vsub.s32 %v4682, %v4684
        %v4686 = vrot.slane %v4672, %v4685
        %v4687 = vcombine.low %v4663, %v4679
        %v4688 = vcombine.high %v4663, %v4679
        %v4689 = vcombine.low %v4670, %v4686
        %v4690 = vcombine.high %v4670, %v4686
        %v4691 = vcombine.low %v4383, %v4451
        %v4693 = vunpack.c.l.s4 1983009808
        %v4694 = vunpack.c.0.s8 %v4693
        %v4695 = vlaneseq
        %v4696 = vshrl.u32 %v4695, 7
        %v4697 = vsub.s32 %v4694, %v4696
        %v4698 = vrot.slane %v4691, %v4697
        %v4699 = vcombine.low %v4417, %v4485
        %v4701 = vunpack.c.l.s4 1983009808
        %v4702 = vunpack.c.0.s8 %v4701
        %v4703 = vlaneseq
        %v4704 = vshrl.u32 %v4703, 7
        %v4705 = vsub.s32 %v4702, %v4704
        %v4706 = vrot.slane %v4699, %v4705
        %v4707 = vcombine.low %v4519, %v4587
        %v4709 = vunpack.c.l.s4 1983009808
        %v4710 = vunpack.c.0.s8 %v4709
        %v4711 = vlaneseq
        %v4712 = vshrl.u32 %v4711, 7
        %v4713 = vsub.s32 %v4710, %v4712
        %v4714 = vrot.slane %v4707, %v4713
        %v4715 = vcombine.low %v4553, %v4621
        %v4717 = vunpack.c.l.s4 1983009808
        %v4718 = vunpack.c.0.s8 %v4717
        %v4719 = vlaneseq
        %v4720 = vshrl.u32 %v4719, 7
        %v4721 = vsub.s32 %v4718, %v4720
        %v4722 = vrot.slane %v4715, %v4721
        %v4723 = vcombine.low %v4698, %v4706
        %v4724 = vcombine.high %v4698, %v4706
        %v4726 = vunpack.c.l.s4 1934713408
        %v4727 = vunpack.c.0.s8 %v4726
        %v4728 = vlaneseq
        %v4729 = vshrl.u32 %v4728, 7
        %v4730 = vsub.s32 %v4727, %v4729
        %v4731 = vrot.slane %v4723, %v4730
        %v4733 = vunpack.c.l.s4 1934713408
        %v4734 = vunpack.c.0.s8 %v4733
        %v4735 = vlaneseq
        %v4736 = vshrl.u32 %v4735, 7
        %v4737 = vsub.s32 %v4734, %v4736
        %v4738 = vrot.slane %v4724, %v4737
        %v4739 = vcombine.low %v4714, %v4722
        %v4740 = vcombine.high %v4714, %v4722
        %v4742 = vunpack.c.l.s4 1934713408
        %v4743 = vunpack.c.0.s8 %v4742
        %v4744 = vlaneseq
        %v4745 = vshrl.u32 %v4744, 7
        %v4746 = vsub.s32 %v4743, %v4745
        %v4747 = vrot.slane %v4739, %v4746
        %v4749 = vunpack.c.l.s4 1934713408
        %v4750 = vunpack.c.0.s8 %v4749
        %v4751 = vlaneseq
        %v4752 = vshrl.u32 %v4751, 7
        %v4753 = vsub.s32 %v4750, %v4752
        %v4754 = vrot.slane %v4740, %v4753
        %v4755 = vcombine.low %v4731, %v4747
        %v4756 = vcombine.high %v4731, %v4747
        %v4757 = vcombine.low %v4738, %v4754
        %v4758 = vcombine.high %v4738, %v4754
        %v4759 = vcombine.low %v4382, %v4450
        %v4761 = vunpack.c.l.s4 1983009808
        %v4762 = vunpack.c.0.s8 %v4761
        %v4763 = vlaneseq
        %v4764 = vshrl.u32 %v4763, 7
        %v4765 = vsub.s32 %v4762, %v4764
        %v4766 = vrot.slane %v4759, %v4765
        %v4767 = vcombine.low %v4416, %v4484
        %v4769 = vunpack.c.l.s4 1983009808
        %v4770 = vunpack.c.0.s8 %v4769
        %v4771 = vlaneseq
        %v4772 = vshrl.u32 %v4771, 7
        %v4773 = vsub.s32 %v4770, %v4772
        %v4774 = vrot.slane %v4767, %v4773
        %v4775 = vcombine.low %v4518, %v4586
        %v4777 = vunpack.c.l.s4 1983009808
        %v4778 = vunpack.c.0.s8 %v4777
        %v4779 = vlaneseq
        %v4780 = vshrl.u32 %v4779, 7
        %v4781 = vsub.s32 %v4778, %v4780
        %v4782 = vrot.slane %v4775, %v4781
        %v4783 = vcombine.low %v4552, %v4620
        %v4785 = vunpack.c.l.s4 1983009808
        %v4786 = vunpack.c.0.s8 %v4785
        %v4787 = vlaneseq
        %v4788 = vshrl.u32 %v4787, 7
        %v4789 = vsub.s32 %v4786, %v4788
        %v4790 = vrot.slane %v4783, %v4789
        %v4791 = vcombine.low %v4766, %v4774
        %v4792 = vcombine.high %v4766, %v4774
        %v4794 = vunpack.c.l.s4 1934713408
        %v4795 = vunpack.c.0.s8 %v4794
        %v4796 = vlaneseq
        %v4797 = vshrl.u32 %v4796, 7
        %v4798 = vsub.s32 %v4795, %v4797
        %v4799 = vrot.slane %v4791, %v4798
        %v4801 = vunpack.c.l.s4 1934713408
        %v4802 = vunpack.c.0.s8 %v4801
        %v4803 = vlaneseq
        %v4804 = vshrl.u32 %v4803, 7
        %v4805 = vsub.s32 %v4802, %v4804
        %v4806 = vrot.slane %v4792, %v4805
        %v4807 = vcombine.low %v4782, %v4790
        %v4808 = vcombine.high %v4782, %v4790
        %v4810 = vunpack.c.l.s4 1934713408
        %v4811 = vunpack.c.0.s8 %v4810
        %v4812 = vlaneseq
        %v4813 = vshrl.u32 %v4812, 7
        %v4814 = vsub.s32 %v4811, %v4813
        %v4815 = vrot.slane %v4807, %v4814
        %v4817 = vunpack.c.l.s4 1934713408
        %v4818 = vunpack.c.0.s8 %v4817
        %v4819 = vlaneseq
        %v4820 = vshrl.u32 %v4819, 7
        %v4821 = vsub.s32 %v4818, %v4820
        %v4822 = vrot.slane %v4808, %v4821
        %v4823 = vcombine.low %v4799, %v4815
        %v4824 = vcombine.high %v4799, %v4815
        %v4825 = vcombine.low %v4806, %v4822
        %v4826 = vcombine.high %v4806, %v4822
        %v4827 = vcombine.low %v4384, %v4452
        %v4829 = vunpack.c.l.s4 1983009808
        %v4830 = vunpack.c.0.s8 %v4829
        %v4831 = vlaneseq
        %v4832 = vshrl.u32 %v4831, 7
        %v4833 = vsub.s32 %v4830, %v4832
        %v4834 = vrot.slane %v4827, %v4833
        %v4835 = vcombine.low %v4418, %v4486
        %v4837 = vunpack.c.l.s4 1983009808
        %v4838 = vunpack.c.0.s8 %v4837
        %v4839 = vlaneseq
        %v4840 = vshrl.u32 %v4839, 7
        %v4841 = vsub.s32 %v4838, %v4840
        %v4842 = vrot.slane %v4835, %v4841
        %v4843 = vcombine.low %v4520, %v4588
        %v4845 = vunpack.c.l.s4 1983009808
        %v4846 = vunpack.c.0.s8 %v4845
        %v4847 = vlaneseq
        %v4848 = vshrl.u32 %v4847, 7
        %v4849 = vsub.s32 %v4846, %v4848
        %v4850 = vrot.slane %v4843, %v4849
        %v4851 = vcombine.low %v4554, %v4622
        %v4853 = vunpack.c.l.s4 1983009808
        %v4854 = vunpack.c.0.s8 %v4853
        %v4855 = vlaneseq
        %v4856 = vshrl.u32 %v4855, 7
        %v4857 = vsub.s32 %v4854, %v4856
        %v4858 = vrot.slane %v4851, %v4857
        %v4859 = vcombine.low %v4834, %v4842
        %v4860 = vcombine.high %v4834, %v4842
        %v4862 = vunpack.c.l.s4 1934713408
        %v4863 = vunpack.c.0.s8 %v4862
        %v4864 = vlaneseq
        %v4865 = vshrl.u32 %v4864, 7
        %v4866 = vsub.s32 %v4863, %v4865
        %v4867 = vrot.slane %v4859, %v4866
        %v4869 = vunpack.c.l.s4 1934713408
        %v4870 = vunpack.c.0.s8 %v4869
        %v4871 = vlaneseq
        %v4872 = vshrl.u32 %v4871, 7
        %v4873 = vsub.s32 %v4870, %v4872
        %v4874 = vrot.slane %v4860, %v4873
        %v4875 = vcombine.low %v4850, %v4858
        %v4876 = vcombine.high %v4850, %v4858
        %v4878 = vunpack.c.l.s4 1934713408
        %v4879 = vunpack.c.0.s8 %v4878
        %v4880 = vlaneseq
        %v4881 = vshrl.u32 %v4880, 7
        %v4882 = vsub.s32 %v4879, %v4881
        %v4883 = vrot.slane %v4875, %v4882
        %v4885 = vunpack.c.l.s4 1934713408
        %v4886 = vunpack.c.0.s8 %v4885
        %v4887 = vlaneseq
        %v4888 = vshrl.u32 %v4887, 7
        %v4889 = vsub.s32 %v4886, %v4888
        %v4890 = vrot.slane %v4876, %v4889
        %v4891 = vcombine.low %v4867, %v4883
        %v4892 = vcombine.high %v4867, %v4883
        %v4893 = vcombine.low %v4874, %v4890
        %v4894 = vcombine.high %v4874, %v4890
        %4899 = vrot.lane.b32.xlu0 %v4688, 8
        %v4900 = vpop.permute.xlu0 %4899
        %4901 = vrot.lane.b32.xlu0 %v4756, 8
        %v4902 = vpop.permute.xlu0 %4901
        %4903 = vrot.lane.b32.xlu0 %v4824, 8
        %v4904 = vpop.permute.xlu0 %4903
        %4905 = vrot.lane.b32.xlu0 %v4892, 8
        %v4906 = vpop.permute.xlu0 %4905
        %4915 = vrot.lane.b32.xlu0 %v4689, 16
        %v4916 = vpop.permute.xlu0 %4915
        %4917 = vrot.lane.b32.xlu0 %v4757, 16
        %v4918 = vpop.permute.xlu0 %4917
        %4919 = vrot.lane.b32.xlu0 %v4825, 16
        %v4920 = vpop.permute.xlu0 %4919
        %4921 = vrot.lane.b32.xlu0 %v4893, 16
        %v4922 = vpop.permute.xlu0 %4921
        %4931 = vrot.lane.b32.xlu0 %v4690, 24
        %v4932 = vpop.permute.xlu0 %4931
        %4933 = vrot.lane.b32.xlu0 %v4758, 24
        %v4934 = vpop.permute.xlu0 %4933
        %4935 = vrot.lane.b32.xlu0 %v4826, 24
        %v4936 = vpop.permute.xlu0 %4935
        %4937 = vrot.lane.b32.xlu0 %v4894, 24
        %v4938 = vpop.permute.xlu0 %4937
        %vm4943 = vcmask 64512
        %v4944 = vsel %vm4943, %v4687, %v4900
        %v4945 = vsel %vm4943, %v4755, %v4902
        %v4946 = vsel %vm4943, %v4823, %v4904
        %v4947 = vsel %vm4943, %v4891, %v4906
        %vm4948 = vcmask 130048
        %v4949 = vsel %vm4948, %v4944, %v4916
        %v4950 = vsel %vm4948, %v4945, %v4918
        %v4951 = vsel %vm4948, %v4946, %v4920
        %v4952 = vsel %vm4948, %v4947, %v4922
        %vm4953 = vcmask 195584
        %v4954 = vsel %vm4953, %v4949, %v4932
        %v4955 = vsel %vm4953, %v4950, %v4934
        %v4956 = vsel %vm4953, %v4951, %v4936
        %v4957 = vsel %vm4953, %v4952, %v4938
        %vm4958 = vcmp.gt.f32.partialorder %v4954, 0.0
        %vm4959 = vcmp.gt.f32.partialorder %v4955, 0.0
        %vm4960 = vcmp.gt.f32.partialorder %v4956, 0.0
        %vm4961 = vcmp.gt.f32.partialorder %v4957, 0.0
        %v4962 = vmin.f32 %v4954, 0.0
        %v4963 = vmin.f32 %v4955, 0.0
        %v4964 = vmin.f32 %v4956, 0.0
        %v4965 = vmin.f32 %v4957, 0.0
        %v4966 = vmul.f32 %v4962, 1.442695
        %v4967 = vpow.pop %v4966
        %v4968 = vmul.f32 %v4963, 1.442695
        %v4969 = vpow.pop %v4968
        %v4970 = vmul.f32 %v4964, 1.442695
        %v4971 = vpow.pop %v4970
        %v4972 = vmul.f32 %v4965, 1.442695
        %v4973 = vpow.pop %v4972
        %v4974 = vsub.f32 %v4967, 1.0
        %v4975 = vsub.f32 %v4969, 1.0
        %v4976 = vsub.f32 %v4971, 1.0
        %v4977 = vsub.f32 %v4973, 1.0
        %v4978 = vsel %vm4958, %v4954, %v4974
        %v4979 = vsel %vm4959, %v4955, %v4975
        %v4980 = vsel %vm4960, %v4956, %v4976
        %v4981 = vsel %vm4961, %v4957, %v4977
        %v4986 = vrot.slane %v4978, 7
        %v4987 = vrot.slane %v4979, 7
        %v4988 = vrot.slane %v4980, 7
        %v4989 = vrot.slane %v4981, 7
        %vm4994 = vcmask 1040384
        %v4995 = vsel %vm4994, 0.0, %v4986
        %v4996 = vsel %vm4994, 0.0, %v4987
        %v4997 = vsel %vm4994, 0.0, %v4988
        %v4998 = vsel %vm4994, 0.0, %v4989
        %v4999 = vsel %vm4994, %v4986, 0.0
        %v5000 = vsel %vm4994, %v4987, 0.0
        %v5001 = vsel %vm4994, %v4988, 0.0
        %v5002 = vsel %vm4994, %v4989, 0.0
        %vm5011 = vcmask 1046528
        %v5012 = vrot.slane %v4995, 1
        %v5013 = vrot.slane %v4999, 1
        %v5014 = vsel %vm5011, %v5012, %v5013
        %v5015 = vrot.slane %v4996, 1
        %v5016 = vrot.slane %v5000, 1
        %v5017 = vsel %vm5011, %v5015, %v5016
        %v5018 = vrot.slane %v4997, 1
        %v5019 = vrot.slane %v5001, 1
        %v5020 = vsel %vm5011, %v5018, %v5019
        %v5021 = vrot.slane %v4998, 1
        %v5022 = vrot.slane %v5002, 1
        %v5023 = vsel %vm5011, %v5021, %v5022
        %5024 = vrot.lane.b32.xlu0 %v5014, 32
        %v5025 = vpop.permute.xlu0 %5024
        %5026 = vrot.lane.b32.xlu0 %v5017, 32
        %v5027 = vpop.permute.xlu0 %5026
        %5028 = vrot.lane.b32.xlu0 %v5020, 32
        %v5029 = vpop.permute.xlu0 %5028
        %5030 = vrot.lane.b32.xlu0 %v5023, 32
        %v5031 = vpop.permute.xlu0 %5030
        %vm5036 = vcmask 1045504
        %v5037 = vrot.slane %v4995, 2
        %v5038 = vrot.slane %v4999, 2
        %v5039 = vsel %vm5036, %v5037, %v5038
        %v5040 = vrot.slane %v4996, 2
        %v5041 = vrot.slane %v5000, 2
        %v5042 = vsel %vm5036, %v5040, %v5041
        %v5043 = vrot.slane %v4997, 2
        %v5044 = vrot.slane %v5001, 2
        %v5045 = vsel %vm5036, %v5043, %v5044
        %v5046 = vrot.slane %v4998, 2
        %v5047 = vrot.slane %v5002, 2
        %v5048 = vsel %vm5036, %v5046, %v5047
        %5049 = vrot.lane.b32.xlu0 %v5039, 64
        %v5050 = vpop.permute.xlu0 %5049
        %5051 = vrot.lane.b32.xlu0 %v5042, 64
        %v5052 = vpop.permute.xlu0 %5051
        %5053 = vrot.lane.b32.xlu0 %v5045, 64
        %v5054 = vpop.permute.xlu0 %5053
        %5055 = vrot.lane.b32.xlu0 %v5048, 64
        %v5056 = vpop.permute.xlu0 %5055
        %v5061 = vsel %vm422, %v4995, %v5025
        %v5062 = vsel %vm422, %v4996, %v5027
        %v5063 = vsel %vm422, %v4997, %v5029
        %v5064 = vsel %vm422, %v4998, %v5031
        %vm5065 = vcmask 523264
        %v5066 = vsel %vm5065, %v5061, %v5050
        %v5067 = vsel %vm5065, %v5062, %v5052
        %v5068 = vsel %vm5065, %v5063, %v5054
        %v5069 = vsel %vm5065, %v5064, %v5056
        %v5070 = vpack.c.bf16 %v5067, %v5066
        %v5071 = vpack.c.bf16 %v5069, %v5068
        %v5072 = vld [vmem:[%s3 + $0x1a0] sm:$0xff]
        %v5073 = vld [vmem:[%s3 + $0x1b0] sm:$0xff]
        %v5074 = vld [vmem:[%s3 + $0x1c0] sm:$0xff]
        %v5075 = vld [vmem:[%s3 + $0x1d0] sm:$0xff]
        %v5076 = vld [vmem:[%s3 + $0x1e0] sm:$0xff]
        %v5077 = vld [vmem:[%s3 + $0x1f0] sm:$0xff]
        %v5078 = vld [vmem:[%s3 + $0x200] sm:$0xff]
        %v5079 = vld [vmem:[%s3 + $0x210] sm:$0xff]
        %v5080 = vld [vmem:[%s3 + $0x220] sm:$0xff]
        %v5081 = vld [vmem:[%s3 + $0x230] sm:$0xff]
        %v5082 = vld [vmem:[%s3 + $0x240] sm:$0xff]
        %v5083 = vld [vmem:[%s3 + $0x250] sm:$0xff]
        %v5084 = vpack.c.bf16 %v5073, %v5072
        %v5085 = vpack.c.bf16 %v5075, %v5074
        %v5086 = vpack.c.bf16 %v5077, %v5076
        %v5087 = vpack.c.bf16 %v5079, %v5078
        %v5088 = vpack.c.bf16 %v5081, %v5080
        %v5089 = vpack.c.bf16 %v5083, %v5082
        %v5090 = vld [vmem:[%s3 + $0x260] ss:$0 sm:$0xff]
        %vm5091 = vcmask 785408
        %v5093 = vsel %vm5091, %v5070, 0
        %v5096 = vsel %vm5091, %v5071, 0
        %5098 = vmatprep.subr.bf16.mxu0 0
        %5099 = vmatpush1.bf16.msra.mxu0 %v5084
        %5100 = vmatprep.subr.bf16.mxu0 0
        %5101 = vmatpush1.bf16.msra.mxu0 %v5085
        %5102 = vmatprep.subr.bf16.mxu0 0
        %5103 = vmatpush1.bf16.msra.mxu0 %v5086
        %5104 = vmatprep.subr.bf16.mxu0 0
        %5105 = vmatpush1.bf16.msra.mxu0 %v5087
        %5106 = vmatprep.subr.bf16.mxu0 0
        %5107 = vmatpush1.bf16.msra.mxu0 %v5088
        %5108 = vmatprep.subr.bf16.mxu0 0
        %5109 = vmatpush1.bf16.msra.mxu0 %v5089
        %5110 = vmatprep.subr.bf16.mxu0 0
        %5111 = vmatpush1.bf16.msra.mxu0 0
        %5112 = vmatprep.subr.bf16.mxu0 0
        %5113 = vmatpush1.bf16.msra.mxu0 0
        %5114 = vmatprep.subr.bf16.mxu0 0
        %5115 = vmatpush1.bf16.msra.mxu0 0
        %5116 = vmatprep.subr.bf16.mxu0 0
        %5117 = vmatpush1.bf16.msra.mxu0 0
        %5118 = vmatprep.subr.bf16.mxu0 0
        %5119 = vmatpush1.bf16.msra.mxu0 0
        %5120 = vmatprep.subr.bf16.mxu0 0
        %5121 = vmatpush1.bf16.msra.mxu0 0
        %5122 = vmatprep.subr.bf16.mxu0 0
        %5123 = vmatpush1.bf16.msra.mxu0 0
        %5124 = vmatprep.subr.bf16.mxu0 0
        %5125 = vmatpush1.bf16.msra.mxu0 0
        %5126 = vmatprep.subr.bf16.mxu0 0
        %5127 = vmatpush1.bf16.msra.mxu0 0
        %5128 = vmatprep.subr.bf16.mxu0 0
        %5129 = vmatpush1.bf16.msra.mxu0 0
        %5130 = vmatprep.mubr.bf16.mxu0 0
        %5131 = vmatmul.mubr.bf16.gmra.mrb[0].mxu0 %v5093
        %v5132 = vpop.f32.mrb[0].mxu0
        %v5133 = vadd.f32 %v5090, %v5132
        %v5134 = vpop.f32.mrb[0].mxu0
        %v5135 = vpop.f32.mrb[0].mxu0
        %v5136 = vadd.f32 %v5090, %v5135
        %v5137 = vpop.f32.mrb[0].mxu0
        %5138 = vmatprep.mubr.bf16.mxu0 0
        %5139 = vmatmul.mubr.bf16.gmra.mrb[0].mxu0 %v5096
        %v5140 = vpop.f32.mrb[0].mxu0
        %v5141 = vadd.f32 %v5090, %v5140
        %v5142 = vpop.f32.mrb[0].mxu0
        %v5143 = vpop.f32.mrb[0].mxu0
        %v5144 = vadd.f32 %v5090, %v5143
        %v5145 = vpop.f32.mrb[0].mxu0
        %5146 = vdwg.mxu0
        %vm5147 = vcmp.gt.f32.partialorder %v5133, 0.0
        %vm5148 = vcmp.gt.f32.partialorder %v5136, 0.0
        %vm5149 = vcmp.gt.f32.partialorder %v5141, 0.0
        %vm5150 = vcmp.gt.f32.partialorder %v5144, 0.0
        %v5151 = vmul.f32 %v5133, 0.2
        %v5152 = vmul.f32 %v5136, 0.2
        %v5153 = vmul.f32 %v5141, 0.2
        %v5154 = vmul.f32 %v5144, 0.2
        %v5155 = vsel %vm5147, %v5133, %v5151
        %v5156 = vsel %vm5148, %v5136, %v5152
        %v5157 = vsel %vm5149, %v5141, %v5153
        %v5158 = vsel %vm5150, %v5144, %v5154
        %5163 = vrot.lane.b32.xlu0 %v5155, 32
        %v5164 = vpop.permute.xlu0 %5163
        %5165 = vrot.lane.b32.xlu0 %v5156, 32
        %v5166 = vpop.permute.xlu0 %5165
        %5167 = vrot.lane.b32.xlu0 %v5157, 32
        %v5168 = vpop.permute.xlu0 %5167
        %5169 = vrot.lane.b32.xlu0 %v5158, 32
        %v5170 = vpop.permute.xlu0 %5169
        %v5175 = vsel %vm422, %v4978, %v5164
        %v5176 = vsel %vm422, %v4979, %v5166
        %v5177 = vsel %vm422, %v4980, %v5168
        %v5178 = vsel %vm422, %v4981, %v5170
        %v5179 = vld [vmem:[%s3 + $0x270] sm:$0xff]
        %v5180 = vadd.f32 %v5175, %v5179
        %v5181 = vadd.f32 %v5176, %v5179
        %v5182 = vadd.f32 %v5177, %v5179
        %v5183 = vadd.f32 %v5178, %v5179
        %v5184 = vpack.c.bf16 %v5181, %v5180
        %v5185 = vpack.c.bf16 %v5183, %v5182
        %v5186 = vld [vmem:[%s3 + $0x280] sm:$0xff]
        %v5187 = vld [vmem:[%s3 + $0x288] sm:$0xff]
        %v5188 = vld [vmem:[%s3 + $0x290] sm:$0xff]
        %v5189 = vld [vmem:[%s3 + $0x298] sm:$0xff]
        %v5190 = vld [vmem:[%s3 + $0x2a0] sm:$0xff]
        %v5191 = vld [vmem:[%s3 + $0x2a8] sm:$0xff]
        %v5192 = vld [vmem:[%s3 + $0x2b0] sm:$0xff]
        %v5193 = vld [vmem:[%s3 + $0x2b8] sm:$0xff]
        %v5194 = vld [vmem:[%s3 + $0x2c0] sm:$0xff]
        %v5195 = vld [vmem:[%s3 + $0x2c8] sm:$0xff]
        %v5196 = vld [vmem:[%s3 + $0x2d0] sm:$0xff]
        %v5197 = vld [vmem:[%s3 + $0x2d8] sm:$0xff]
        %v5198 = vpack.c.bf16 %v5188, %v5186
        %v5199 = vpack.c.bf16 %v5189, %v5187
        %v5200 = vpack.c.bf16 %v5192, %v5190
        %v5201 = vpack.c.bf16 %v5193, %v5191
        %v5202 = vpack.c.bf16 %v5196, %v5194
        %v5203 = vpack.c.bf16 %v5197, %v5195
        %s5204 = scalar_lea.vmem %s3, 736
        %v5205 = vld [vmem:[%s5204] ss:$8 sm:$0x3]
        %v5207 = vlaneseq
        %v5208 = vshrl.u32 %v5207, 7
        %v5209 = vsub.s32 0, %v5208
        %v5210 = vrot.slane %v5205, %v5209
        %v5211 = vlaneseq
        %v5212 = vshrl.u32 %v5211, 7
        %v5213 = vsub.s32 1, %v5212
        %v5214 = vrot.slane %v5205, %v5213
        %vm5217 = vcmask 392192
        %v5219 = vsel %vm5217, %v5184, 0
        %v5222 = vsel %vm5217, %v5185, 0
        %5224 = vmatprep.subr.bf16.mxu0 %v5199
        %5225 = vmatpush1.bf16.msra.mxu0 %v5198
        %5226 = vmatprep.subr.bf16.mxu0 %v5201
        %5227 = vmatpush1.bf16.msra.mxu0 %v5200
        %5228 = vmatprep.subr.bf16.mxu0 %v5203
        %5229 = vmatpush1.bf16.msra.mxu0 %v5202
        %5230 = vmatprep.subr.bf16.mxu0 0
        %5231 = vmatpush1.bf16.msra.mxu0 0
        %5232 = vmatprep.subr.bf16.mxu0 0
        %5233 = vmatpush1.bf16.msra.mxu0 0
        %5234 = vmatprep.subr.bf16.mxu0 0
        %5235 = vmatpush1.bf16.msra.mxu0 0
        %5236 = vmatprep.subr.bf16.mxu0 0
        %5237 = vmatpush1.bf16.msra.mxu0 0
        %5238 = vmatprep.subr.bf16.mxu0 0
        %5239 = vmatpush1.bf16.msra.mxu0 0
        %5240 = vmatprep.subr.bf16.mxu0 0
        %5241 = vmatpush1.bf16.msra.mxu0 0
        %5242 = vmatprep.subr.bf16.mxu0 0
        %5243 = vmatpush1.bf16.msra.mxu0 0
        %5244 = vmatprep.subr.bf16.mxu0 0
        %5245 = vmatpush1.bf16.msra.mxu0 0
        %5246 = vmatprep.subr.bf16.mxu0 0
        %5247 = vmatpush1.bf16.msra.mxu0 0
        %5248 = vmatprep.subr.bf16.mxu0 0
        %5249 = vmatpush1.bf16.msra.mxu0 0
        %5250 = vmatprep.subr.bf16.mxu0 0
        %5251 = vmatpush1.bf16.msra.mxu0 0
        %5252 = vmatprep.subr.bf16.mxu0 0
        %5253 = vmatpush1.bf16.msra.mxu0 0
        %5254 = vmatprep.subr.bf16.mxu0 0
        %5255 = vmatpush1.bf16.msra.mxu0 0
        %5256 = vmatprep.mubr.bf16.mxu0 0
        %5257 = vmatmul.mubr.bf16.gmra.mrb[0].mxu0 %v5219
        %v5258 = vpop.f32.mrb[0].mxu0
        %v5259 = vadd.f32 %v5210, %v5258
        %v5260 = vpop.f32.mrb[0].mxu0
        %v5261 = vadd.f32 %v5214, %v5260
        %v5262 = vpop.f32.mrb[0].mxu0
        %v5263 = vadd.f32 %v5210, %v5262
        %v5264 = vpop.f32.mrb[0].mxu0
        %v5265 = vadd.f32 %v5214, %v5264
        %5266 = vmatprep.mubr.bf16.mxu0 0
        %5267 = vmatmul.mubr.bf16.gmra.mrb[0].mxu0 %v5222
        %v5268 = vpop.f32.mrb[0].mxu0
        %v5269 = vadd.f32 %v5210, %v5268
        %v5270 = vpop.f32.mrb[0].mxu0
        %v5271 = vadd.f32 %v5214, %v5270
        %v5272 = vpop.f32.mrb[0].mxu0
        %v5273 = vadd.f32 %v5210, %v5272
        %v5274 = vpop.f32.mrb[0].mxu0
        %v5275 = vadd.f32 %v5214, %v5274
        %5276 = vdwg.mxu0
        %5281 = vrot.lane.b32.xlu0 %v5259, 112
        %v5282 = vpop.permute.xlu0 %5281
        %5283 = vrot.lane.b32.xlu0 %v5263, 112
        %v5284 = vpop.permute.xlu0 %5283
        %5285 = vrot.lane.b32.xlu0 %v5269, 112
        %v5286 = vpop.permute.xlu0 %5285
        %5287 = vrot.lane.b32.xlu0 %v5273, 112
        %v5288 = vpop.permute.xlu0 %5287
        %5293 = vrot.lane.b32.xlu0 %v5259, 96
        %v5294 = vpop.permute.xlu0 %5293
        %5295 = vrot.lane.b32.xlu0 %v5263, 96
        %v5296 = vpop.permute.xlu0 %5295
        %5297 = vrot.lane.b32.xlu0 %v5269, 96
        %v5298 = vpop.permute.xlu0 %5297
        %5299 = vrot.lane.b32.xlu0 %v5273, 96
        %v5300 = vpop.permute.xlu0 %5299
        %5305 = vrot.lane.b32.xlu0 %v5259, 80
        %v5306 = vpop.permute.xlu0 %5305
        %5307 = vrot.lane.b32.xlu0 %v5263, 80
        %v5308 = vpop.permute.xlu0 %5307
        %5309 = vrot.lane.b32.xlu0 %v5269, 80
        %v5310 = vpop.permute.xlu0 %5309
        %5311 = vrot.lane.b32.xlu0 %v5273, 80
        %v5312 = vpop.permute.xlu0 %5311
        %v5317 = vcombine.low %v5259, %v5294
        %v5318 = vcombine.high %v5259, %v5294
        %v5320 = vunpack.c.l.s4 1983009808
        %v5321 = vunpack.c.0.s8 %v5320
        %v5322 = vlaneseq
        %v5323 = vshrl.u32 %v5322, 7
        %v5324 = vsub.s32 %v5321, %v5323
        %v5325 = vrot.slane %v5317, %v5324
        %v5327 = vunpack.c.l.s4 1983009808
        %v5328 = vunpack.c.0.s8 %v5327
        %v5329 = vlaneseq
        %v5330 = vshrl.u32 %v5329, 7
        %v5331 = vsub.s32 %v5328, %v5330
        %v5332 = vrot.slane %v5318, %v5331
        %v5333 = vcombine.low %v5282, %v5306
        %v5334 = vcombine.high %v5282, %v5306
        %v5336 = vunpack.c.l.s4 1983009808
        %v5337 = vunpack.c.0.s8 %v5336
        %v5338 = vlaneseq
        %v5339 = vshrl.u32 %v5338, 7
        %v5340 = vsub.s32 %v5337, %v5339
        %v5341 = vrot.slane %v5333, %v5340
        %v5343 = vunpack.c.l.s4 1983009808
        %v5344 = vunpack.c.0.s8 %v5343
        %v5345 = vlaneseq
        %v5346 = vshrl.u32 %v5345, 7
        %v5347 = vsub.s32 %v5344, %v5346
        %v5348 = vrot.slane %v5334, %v5347
        %v5349 = vcombine.low %v5325, %v5341
        %v5350 = vcombine.high %v5325, %v5341
        %v5352 = vunpack.c.l.s4 1934713408
        %v5353 = vunpack.c.0.s8 %v5352
        %v5354 = vlaneseq
        %v5355 = vshrl.u32 %v5354, 7
        %v5356 = vsub.s32 %v5353, %v5355
        %v5357 = vrot.slane %v5349, %v5356
        %v5359 = vunpack.c.l.s4 1934713408
        %v5360 = vunpack.c.0.s8 %v5359
        %v5361 = vlaneseq
        %v5362 = vshrl.u32 %v5361, 7
        %v5363 = vsub.s32 %v5360, %v5362
        %v5364 = vrot.slane %v5350, %v5363
        %v5365 = vcombine.low %v5332, %v5348
        %v5366 = vcombine.high %v5332, %v5348
        %v5368 = vunpack.c.l.s4 1934713408
        %v5369 = vunpack.c.0.s8 %v5368
        %v5370 = vlaneseq
        %v5371 = vshrl.u32 %v5370, 7
        %v5372 = vsub.s32 %v5369, %v5371
        %v5373 = vrot.slane %v5365, %v5372
        %v5375 = vunpack.c.l.s4 1934713408
        %v5376 = vunpack.c.0.s8 %v5375
        %v5377 = vlaneseq
        %v5378 = vshrl.u32 %v5377, 7
        %v5379 = vsub.s32 %v5376, %v5378
        %v5380 = vrot.slane %v5366, %v5379
        %v5381 = vcombine.high %v5357, 0.0
        %v5382 = vcombine.high %v5364, 0.0
        %v5383 = vcombine.high %v5373, 0.0
        %v5384 = vcombine.high %v5380, 0.0
        %v5385 = vcombine.low %v5263, %v5296
        %v5386 = vcombine.high %v5263, %v5296
        %v5388 = vunpack.c.l.s4 1983009808
        %v5389 = vunpack.c.0.s8 %v5388
        %v5390 = vlaneseq
        %v5391 = vshrl.u32 %v5390, 7
        %v5392 = vsub.s32 %v5389, %v5391
        %v5393 = vrot.slane %v5385, %v5392
        %v5395 = vunpack.c.l.s4 1983009808
        %v5396 = vunpack.c.0.s8 %v5395
        %v5397 = vlaneseq
        %v5398 = vshrl.u32 %v5397, 7
        %v5399 = vsub.s32 %v5396, %v5398
        %v5400 = vrot.slane %v5386, %v5399
        %v5401 = vcombine.low %v5284, %v5308
        %v5402 = vcombine.high %v5284, %v5308
        %v5404 = vunpack.c.l.s4 1983009808
        %v5405 = vunpack.c.0.s8 %v5404
        %v5406 = vlaneseq
        %v5407 = vshrl.u32 %v5406, 7
        %v5408 = vsub.s32 %v5405, %v5407
        %v5409 = vrot.slane %v5401, %v5408
        %v5411 = vunpack.c.l.s4 1983009808
        %v5412 = vunpack.c.0.s8 %v5411
        %v5413 = vlaneseq
        %v5414 = vshrl.u32 %v5413, 7
        %v5415 = vsub.s32 %v5412, %v5414
        %v5416 = vrot.slane %v5402, %v5415
        %v5417 = vcombine.low %v5393, %v5409
        %v5418 = vcombine.high %v5393, %v5409
        %v5420 = vunpack.c.l.s4 1934713408
        %v5421 = vunpack.c.0.s8 %v5420
        %v5422 = vlaneseq
        %v5423 = vshrl.u32 %v5422, 7
        %v5424 = vsub.s32 %v5421, %v5423
        %v5425 = vrot.slane %v5417, %v5424
        %v5427 = vunpack.c.l.s4 1934713408
        %v5428 = vunpack.c.0.s8 %v5427
        %v5429 = vlaneseq
        %v5430 = vshrl.u32 %v5429, 7
        %v5431 = vsub.s32 %v5428, %v5430
        %v5432 = vrot.slane %v5418, %v5431
        %v5433 = vcombine.low %v5400, %v5416
        %v5434 = vcombine.high %v5400, %v5416
        %v5436 = vunpack.c.l.s4 1934713408
        %v5437 = vunpack.c.0.s8 %v5436
        %v5438 = vlaneseq
        %v5439 = vshrl.u32 %v5438, 7
        %v5440 = vsub.s32 %v5437, %v5439
        %v5441 = vrot.slane %v5433, %v5440
        %v5443 = vunpack.c.l.s4 1934713408
        %v5444 = vunpack.c.0.s8 %v5443
        %v5445 = vlaneseq
        %v5446 = vshrl.u32 %v5445, 7
        %v5447 = vsub.s32 %v5444, %v5446
        %v5448 = vrot.slane %v5434, %v5447
        %v5449 = vcombine.high %v5425, 0.0
        %v5450 = vcombine.high %v5432, 0.0
        %v5451 = vcombine.high %v5441, 0.0
        %v5452 = vcombine.high %v5448, 0.0
        %v5453 = vcombine.low %v5269, %v5298
        %v5454 = vcombine.high %v5269, %v5298
        %v5456 = vunpack.c.l.s4 1983009808
        %v5457 = vunpack.c.0.s8 %v5456
        %v5458 = vlaneseq
        %v5459 = vshrl.u32 %v5458, 7
        %v5460 = vsub.s32 %v5457, %v5459
        %v5461 = vrot.slane %v5453, %v5460
        %v5463 = vunpack.c.l.s4 1983009808
        %v5464 = vunpack.c.0.s8 %v5463
        %v5465 = vlaneseq
        %v5466 = vshrl.u32 %v5465, 7
        %v5467 = vsub.s32 %v5464, %v5466
        %v5468 = vrot.slane %v5454, %v5467
        %v5469 = vcombine.low %v5286, %v5310
        %v5470 = vcombine.high %v5286, %v5310
        %v5472 = vunpack.c.l.s4 1983009808
        %v5473 = vunpack.c.0.s8 %v5472
        %v5474 = vlaneseq
        %v5475 = vshrl.u32 %v5474, 7
        %v5476 = vsub.s32 %v5473, %v5475
        %v5477 = vrot.slane %v5469, %v5476
        %v5479 = vunpack.c.l.s4 1983009808
        %v5480 = vunpack.c.0.s8 %v5479
        %v5481 = vlaneseq
        %v5482 = vshrl.u32 %v5481, 7
        %v5483 = vsub.s32 %v5480, %v5482
        %v5484 = vrot.slane %v5470, %v5483
        %v5485 = vcombine.low %v5461, %v5477
        %v5486 = vcombine.high %v5461, %v5477
        %v5488 = vunpack.c.l.s4 1934713408
        %v5489 = vunpack.c.0.s8 %v5488
        %v5490 = vlaneseq
        %v5491 = vshrl.u32 %v5490, 7
        %v5492 = vsub.s32 %v5489, %v5491
        %v5493 = vrot.slane %v5485, %v5492
        %v5495 = vunpack.c.l.s4 1934713408
        %v5496 = vunpack.c.0.s8 %v5495
        %v5497 = vlaneseq
        %v5498 = vshrl.u32 %v5497, 7
        %v5499 = vsub.s32 %v5496, %v5498
        %v5500 = vrot.slane %v5486, %v5499
        %v5501 = vcombine.low %v5468, %v5484
        %v5502 = vcombine.high %v5468, %v5484
        %v5504 = vunpack.c.l.s4 1934713408
        %v5505 = vunpack.c.0.s8 %v5504
        %v5506 = vlaneseq
        %v5507 = vshrl.u32 %v5506, 7
        %v5508 = vsub.s32 %v5505, %v5507
        %v5509 = vrot.slane %v5501, %v5508
        %v5511 = vunpack.c.l.s4 1934713408
        %v5512 = vunpack.c.0.s8 %v5511
        %v5513 = vlaneseq
        %v5514 = vshrl.u32 %v5513, 7
        %v5515 = vsub.s32 %v5512, %v5514
        %v5516 = vrot.slane %v5502, %v5515
        %v5517 = vcombine.high %v5493, 0.0
        %v5518 = vcombine.high %v5500, 0.0
        %v5519 = vcombine.high %v5509, 0.0
        %v5520 = vcombine.high %v5516, 0.0
        %v5521 = vcombine.low %v5273, %v5300
        %v5522 = vcombine.high %v5273, %v5300
        %v5524 = vunpack.c.l.s4 1983009808
        %v5525 = vunpack.c.0.s8 %v5524
        %v5526 = vlaneseq
        %v5527 = vshrl.u32 %v5526, 7
        %v5528 = vsub.s32 %v5525, %v5527
        %v5529 = vrot.slane %v5521, %v5528
        %v5531 = vunpack.c.l.s4 1983009808
        %v5532 = vunpack.c.0.s8 %v5531
        %v5533 = vlaneseq
        %v5534 = vshrl.u32 %v5533, 7
        %v5535 = vsub.s32 %v5532, %v5534
        %v5536 = vrot.slane %v5522, %v5535
        %v5537 = vcombine.low %v5288, %v5312
        %v5538 = vcombine.high %v5288, %v5312
        %v5540 = vunpack.c.l.s4 1983009808
        %v5541 = vunpack.c.0.s8 %v5540
        %v5542 = vlaneseq
        %v5543 = vshrl.u32 %v5542, 7
        %v5544 = vsub.s32 %v5541, %v5543
        %v5545 = vrot.slane %v5537, %v5544
        %v5547 = vunpack.c.l.s4 1983009808
        %v5548 = vunpack.c.0.s8 %v5547
        %v5549 = vlaneseq
        %v5550 = vshrl.u32 %v5549, 7
        %v5551 = vsub.s32 %v5548, %v5550
        %v5552 = vrot.slane %v5538, %v5551
        %v5553 = vcombine.low %v5529, %v5545
        %v5554 = vcombine.high %v5529, %v5545
        %v5556 = vunpack.c.l.s4 1934713408
        %v5557 = vunpack.c.0.s8 %v5556
        %v5558 = vlaneseq
        %v5559 = vshrl.u32 %v5558, 7
        %v5560 = vsub.s32 %v5557, %v5559
        %v5561 = vrot.slane %v5553, %v5560
        %v5563 = vunpack.c.l.s4 1934713408
        %v5564 = vunpack.c.0.s8 %v5563
        %v5565 = vlaneseq
        %v5566 = vshrl.u32 %v5565, 7
        %v5567 = vsub.s32 %v5564, %v5566
        %v5568 = vrot.slane %v5554, %v5567
        %v5569 = vcombine.low %v5536, %v5552
        %v5570 = vcombine.high %v5536, %v5552
        %v5572 = vunpack.c.l.s4 1934713408
        %v5573 = vunpack.c.0.s8 %v5572
        %v5574 = vlaneseq
        %v5575 = vshrl.u32 %v5574, 7
        %v5576 = vsub.s32 %v5573, %v5575
        %v5577 = vrot.slane %v5569, %v5576
        %v5579 = vunpack.c.l.s4 1934713408
        %v5580 = vunpack.c.0.s8 %v5579
        %v5581 = vlaneseq
        %v5582 = vshrl.u32 %v5581, 7
        %v5583 = vsub.s32 %v5580, %v5582
        %v5584 = vrot.slane %v5570, %v5583
        %v5585 = vcombine.high %v5561, 0.0
        %v5586 = vcombine.high %v5568, 0.0
        %v5587 = vcombine.high %v5577, 0.0
        %v5588 = vcombine.high %v5584, 0.0
        %v5589 = vcombine.low %v5357, %v5364
        %v5591 = vunpack.c.l.s4 1983009808
        %v5592 = vunpack.c.0.s8 %v5591
        %v5593 = vlaneseq
        %v5594 = vshrl.u32 %v5593, 7
        %v5595 = vsub.s32 %v5592, %v5594
        %v5596 = vrot.slane %v5589, %v5595
        %v5597 = vcombine.low %v5381, %v5382
        %v5599 = vunpack.c.l.s4 1983009808
        %v5600 = vunpack.c.0.s8 %v5599
        %v5601 = vlaneseq
        %v5602 = vshrl.u32 %v5601, 7
        %v5603 = vsub.s32 %v5600, %v5602
        %v5604 = vrot.slane %v5597, %v5603
        %v5605 = vcombine.low %v5373, %v5380
        %v5607 = vunpack.c.l.s4 1983009808
        %v5608 = vunpack.c.0.s8 %v5607
        %v5609 = vlaneseq
        %v5610 = vshrl.u32 %v5609, 7
        %v5611 = vsub.s32 %v5608, %v5610
        %v5612 = vrot.slane %v5605, %v5611
        %v5613 = vcombine.low %v5383, %v5384
        %v5615 = vunpack.c.l.s4 1983009808
        %v5616 = vunpack.c.0.s8 %v5615
        %v5617 = vlaneseq
        %v5618 = vshrl.u32 %v5617, 7
        %v5619 = vsub.s32 %v5616, %v5618
        %v5620 = vrot.slane %v5613, %v5619
        %v5621 = vcombine.low %v5596, %v5604
        %v5622 = vcombine.high %v5596, %v5604
        %v5624 = vunpack.c.l.s4 1934713408
        %v5625 = vunpack.c.0.s8 %v5624
        %v5626 = vlaneseq
        %v5627 = vshrl.u32 %v5626, 7
        %v5628 = vsub.s32 %v5625, %v5627
        %v5629 = vrot.slane %v5621, %v5628
        %v5631 = vunpack.c.l.s4 1934713408
        %v5632 = vunpack.c.0.s8 %v5631
        %v5633 = vlaneseq
        %v5634 = vshrl.u32 %v5633, 7
        %v5635 = vsub.s32 %v5632, %v5634
        %v5636 = vrot.slane %v5622, %v5635
        %v5637 = vcombine.low %v5612, %v5620
        %v5638 = vcombine.high %v5612, %v5620
        %v5640 = vunpack.c.l.s4 1934713408
        %v5641 = vunpack.c.0.s8 %v5640
        %v5642 = vlaneseq
        %v5643 = vshrl.u32 %v5642, 7
        %v5644 = vsub.s32 %v5641, %v5643
        %v5645 = vrot.slane %v5637, %v5644
        %v5647 = vunpack.c.l.s4 1934713408
        %v5648 = vunpack.c.0.s8 %v5647
        %v5649 = vlaneseq
        %v5650 = vshrl.u32 %v5649, 7
        %v5651 = vsub.s32 %v5648, %v5650
        %v5652 = vrot.slane %v5638, %v5651
        %v5653 = vcombine.low %v5629, %v5645
        %v5654 = vcombine.high %v5629, %v5645
        %v5655 = vcombine.low %v5636, %v5652
        %v5656 = vcombine.high %v5636, %v5652
        %v5657 = vcombine.low %v5425, %v5432
        %v5659 = vunpack.c.l.s4 1983009808
        %v5660 = vunpack.c.0.s8 %v5659
        %v5661 = vlaneseq
        %v5662 = vshrl.u32 %v5661, 7
        %v5663 = vsub.s32 %v5660, %v5662
        %v5664 = vrot.slane %v5657, %v5663
        %v5665 = vcombine.low %v5449, %v5450
        %v5667 = vunpack.c.l.s4 1983009808
        %v5668 = vunpack.c.0.s8 %v5667
        %v5669 = vlaneseq
        %v5670 = vshrl.u32 %v5669, 7
        %v5671 = vsub.s32 %v5668, %v5670
        %v5672 = vrot.slane %v5665, %v5671
        %v5673 = vcombine.low %v5441, %v5448
        %v5675 = vunpack.c.l.s4 1983009808
        %v5676 = vunpack.c.0.s8 %v5675
        %v5677 = vlaneseq
        %v5678 = vshrl.u32 %v5677, 7
        %v5679 = vsub.s32 %v5676, %v5678
        %v5680 = vrot.slane %v5673, %v5679
        %v5681 = vcombine.low %v5451, %v5452
        %v5683 = vunpack.c.l.s4 1983009808
        %v5684 = vunpack.c.0.s8 %v5683
        %v5685 = vlaneseq
        %v5686 = vshrl.u32 %v5685, 7
        %v5687 = vsub.s32 %v5684, %v5686
        %v5688 = vrot.slane %v5681, %v5687
        %v5689 = vcombine.low %v5664, %v5672
        %v5690 = vcombine.high %v5664, %v5672
        %v5692 = vunpack.c.l.s4 1934713408
        %v5693 = vunpack.c.0.s8 %v5692
        %v5694 = vlaneseq
        %v5695 = vshrl.u32 %v5694, 7
        %v5696 = vsub.s32 %v5693, %v5695
        %v5697 = vrot.slane %v5689, %v5696
        %v5699 = vunpack.c.l.s4 1934713408
        %v5700 = vunpack.c.0.s8 %v5699
        %v5701 = vlaneseq
        %v5702 = vshrl.u32 %v5701, 7
        %v5703 = vsub.s32 %v5700, %v5702
        %v5704 = vrot.slane %v5690, %v5703
        %v5705 = vcombine.low %v5680, %v5688
        %v5706 = vcombine.high %v5680, %v5688
        %v5708 = vunpack.c.l.s4 1934713408
        %v5709 = vunpack.c.0.s8 %v5708
        %v5710 = vlaneseq
        %v5711 = vshrl.u32 %v5710, 7
        %v5712 = vsub.s32 %v5709, %v5711
        %v5713 = vrot.slane %v5705, %v5712
        %v5715 = vunpack.c.l.s4 1934713408
        %v5716 = vunpack.c.0.s8 %v5715
        %v5717 = vlaneseq
        %v5718 = vshrl.u32 %v5717, 7
        %v5719 = vsub.s32 %v5716, %v5718
        %v5720 = vrot.slane %v5706, %v5719
        %v5721 = vcombine.low %v5697, %v5713
        %v5722 = vcombine.high %v5697, %v5713
        %v5723 = vcombine.low %v5704, %v5720
        %v5724 = vcombine.high %v5704, %v5720
        %v5725 = vcombine.low %v5493, %v5500
        %v5727 = vunpack.c.l.s4 1983009808
        %v5728 = vunpack.c.0.s8 %v5727
        %v5729 = vlaneseq
        %v5730 = vshrl.u32 %v5729, 7
        %v5731 = vsub.s32 %v5728, %v5730
        %v5732 = vrot.slane %v5725, %v5731
        %v5733 = vcombine.low %v5517, %v5518
        %v5735 = vunpack.c.l.s4 1983009808
        %v5736 = vunpack.c.0.s8 %v5735
        %v5737 = vlaneseq
        %v5738 = vshrl.u32 %v5737, 7
        %v5739 = vsub.s32 %v5736, %v5738
        %v5740 = vrot.slane %v5733, %v5739
        %v5741 = vcombine.low %v5509, %v5516
        %v5743 = vunpack.c.l.s4 1983009808
        %v5744 = vunpack.c.0.s8 %v5743
        %v5745 = vlaneseq
        %v5746 = vshrl.u32 %v5745, 7
        %v5747 = vsub.s32 %v5744, %v5746
        %v5748 = vrot.slane %v5741, %v5747
        %v5749 = vcombine.low %v5519, %v5520
        %v5751 = vunpack.c.l.s4 1983009808
        %v5752 = vunpack.c.0.s8 %v5751
        %v5753 = vlaneseq
        %v5754 = vshrl.u32 %v5753, 7
        %v5755 = vsub.s32 %v5752, %v5754
        %v5756 = vrot.slane %v5749, %v5755
        %v5757 = vcombine.low %v5732, %v5740
        %v5758 = vcombine.high %v5732, %v5740
        %v5760 = vunpack.c.l.s4 1934713408
        %v5761 = vunpack.c.0.s8 %v5760
        %v5762 = vlaneseq
        %v5763 = vshrl.u32 %v5762, 7
        %v5764 = vsub.s32 %v5761, %v5763
        %v5765 = vrot.slane %v5757, %v5764
        %v5767 = vunpack.c.l.s4 1934713408
        %v5768 = vunpack.c.0.s8 %v5767
        %v5769 = vlaneseq
        %v5770 = vshrl.u32 %v5769, 7
        %v5771 = vsub.s32 %v5768, %v5770
        %v5772 = vrot.slane %v5758, %v5771
        %v5773 = vcombine.low %v5748, %v5756
        %v5774 = vcombine.high %v5748, %v5756
        %v5776 = vunpack.c.l.s4 1934713408
        %v5777 = vunpack.c.0.s8 %v5776
        %v5778 = vlaneseq
        %v5779 = vshrl.u32 %v5778, 7
        %v5780 = vsub.s32 %v5777, %v5779
        %v5781 = vrot.slane %v5773, %v5780
        %v5783 = vunpack.c.l.s4 1934713408
        %v5784 = vunpack.c.0.s8 %v5783
        %v5785 = vlaneseq
        %v5786 = vshrl.u32 %v5785, 7
        %v5787 = vsub.s32 %v5784, %v5786
        %v5788 = vrot.slane %v5774, %v5787
        %v5789 = vcombine.low %v5765, %v5781
        %v5790 = vcombine.high %v5765, %v5781
        %v5791 = vcombine.low %v5772, %v5788
        %v5792 = vcombine.high %v5772, %v5788
        %v5793 = vcombine.low %v5561, %v5568
        %v5795 = vunpack.c.l.s4 1983009808
        %v5796 = vunpack.c.0.s8 %v5795
        %v5797 = vlaneseq
        %v5798 = vshrl.u32 %v5797, 7
        %v5799 = vsub.s32 %v5796, %v5798
        %v5800 = vrot.slane %v5793, %v5799
        %v5801 = vcombine.low %v5585, %v5586
        %v5803 = vunpack.c.l.s4 1983009808
        %v5804 = vunpack.c.0.s8 %v5803
        %v5805 = vlaneseq
        %v5806 = vshrl.u32 %v5805, 7
        %v5807 = vsub.s32 %v5804, %v5806
        %v5808 = vrot.slane %v5801, %v5807
        %v5809 = vcombine.low %v5577, %v5584
        %v5811 = vunpack.c.l.s4 1983009808
        %v5812 = vunpack.c.0.s8 %v5811
        %v5813 = vlaneseq
        %v5814 = vshrl.u32 %v5813, 7
        %v5815 = vsub.s32 %v5812, %v5814
        %v5816 = vrot.slane %v5809, %v5815
        %v5817 = vcombine.low %v5587, %v5588
        %v5819 = vunpack.c.l.s4 1983009808
        %v5820 = vunpack.c.0.s8 %v5819
        %v5821 = vlaneseq
        %v5822 = vshrl.u32 %v5821, 7
        %v5823 = vsub.s32 %v5820, %v5822
        %v5824 = vrot.slane %v5817, %v5823
        %v5825 = vcombine.low %v5800, %v5808
        %v5826 = vcombine.high %v5800, %v5808
        %v5828 = vunpack.c.l.s4 1934713408
        %v5829 = vunpack.c.0.s8 %v5828
        %v5830 = vlaneseq
        %v5831 = vshrl.u32 %v5830, 7
        %v5832 = vsub.s32 %v5829, %v5831
        %v5833 = vrot.slane %v5825, %v5832
        %v5835 = vunpack.c.l.s4 1934713408
        %v5836 = vunpack.c.0.s8 %v5835
        %v5837 = vlaneseq
        %v5838 = vshrl.u32 %v5837, 7
        %v5839 = vsub.s32 %v5836, %v5838
        %v5840 = vrot.slane %v5826, %v5839
        %v5841 = vcombine.low %v5816, %v5824
        %v5842 = vcombine.high %v5816, %v5824
        %v5844 = vunpack.c.l.s4 1934713408
        %v5845 = vunpack.c.0.s8 %v5844
        %v5846 = vlaneseq
        %v5847 = vshrl.u32 %v5846, 7
        %v5848 = vsub.s32 %v5845, %v5847
        %v5849 = vrot.slane %v5841, %v5848
        %v5851 = vunpack.c.l.s4 1934713408
        %v5852 = vunpack.c.0.s8 %v5851
        %v5853 = vlaneseq
        %v5854 = vshrl.u32 %v5853, 7
        %v5855 = vsub.s32 %v5852, %v5854
        %v5856 = vrot.slane %v5842, %v5855
        %v5857 = vcombine.low %v5833, %v5849
        %v5858 = vcombine.high %v5833, %v5849
        %v5859 = vcombine.low %v5840, %v5856
        %v5860 = vcombine.high %v5840, %v5856
        %5861 = vrot.lane.b32.xlu0 %v5259, 64
        %v5862 = vpop.permute.xlu0 %5861
        %5863 = vrot.lane.b32.xlu0 %v5263, 64
        %v5864 = vpop.permute.xlu0 %5863
        %5865 = vrot.lane.b32.xlu0 %v5269, 64
        %v5866 = vpop.permute.xlu0 %5865
        %5867 = vrot.lane.b32.xlu0 %v5273, 64
        %v5868 = vpop.permute.xlu0 %5867
        %5869 = vrot.lane.b32.xlu0 %v5282, 64
        %v5870 = vpop.permute.xlu0 %5869
        %5871 = vrot.lane.b32.xlu0 %v5284, 64
        %v5872 = vpop.permute.xlu0 %5871
        %5873 = vrot.lane.b32.xlu0 %v5286, 64
        %v5874 = vpop.permute.xlu0 %5873
        %5875 = vrot.lane.b32.xlu0 %v5288, 64
        %v5876 = vpop.permute.xlu0 %5875
        %5877 = vrot.lane.b32.xlu0 %v5294, 64
        %v5878 = vpop.permute.xlu0 %5877
        %5879 = vrot.lane.b32.xlu0 %v5296, 64
        %v5880 = vpop.permute.xlu0 %5879
        %5881 = vrot.lane.b32.xlu0 %v5298, 64
        %v5882 = vpop.permute.xlu0 %5881
        %5883 = vrot.lane.b32.xlu0 %v5300, 64
        %v5884 = vpop.permute.xlu0 %5883
        %5885 = vrot.lane.b32.xlu0 %v5306, 64
        %v5886 = vpop.permute.xlu0 %5885
        %5887 = vrot.lane.b32.xlu0 %v5308, 64
        %v5888 = vpop.permute.xlu0 %5887
        %5889 = vrot.lane.b32.xlu0 %v5310, 64
        %v5890 = vpop.permute.xlu0 %5889
        %5891 = vrot.lane.b32.xlu0 %v5312, 64
        %v5892 = vpop.permute.xlu0 %5891
        %v5909 = vcombine.low %v5862, %v5878
        %v5910 = vcombine.high %v5862, %v5878
        %v5912 = vunpack.c.l.s4 1983009808
        %v5913 = vunpack.c.0.s8 %v5912
        %v5914 = vlaneseq
        %v5915 = vshrl.u32 %v5914, 7
        %v5916 = vsub.s32 %v5913, %v5915
        %v5917 = vrot.slane %v5909, %v5916
        %v5919 = vunpack.c.l.s4 1983009808
        %v5920 = vunpack.c.0.s8 %v5919
        %v5921 = vlaneseq
        %v5922 = vshrl.u32 %v5921, 7
        %v5923 = vsub.s32 %v5920, %v5922
        %v5924 = vrot.slane %v5910, %v5923
        %v5925 = vcombine.low %v5870, %v5886
        %v5926 = vcombine.high %v5870, %v5886
        %v5928 = vunpack.c.l.s4 1983009808
        %v5929 = vunpack.c.0.s8 %v5928
        %v5930 = vlaneseq
        %v5931 = vshrl.u32 %v5930, 7
        %v5932 = vsub.s32 %v5929, %v5931
        %v5933 = vrot.slane %v5925, %v5932
        %v5935 = vunpack.c.l.s4 1983009808
        %v5936 = vunpack.c.0.s8 %v5935
        %v5937 = vlaneseq
        %v5938 = vshrl.u32 %v5937, 7
        %v5939 = vsub.s32 %v5936, %v5938
        %v5940 = vrot.slane %v5926, %v5939
        %v5941 = vcombine.low %v5917, %v5933
        %v5942 = vcombine.high %v5917, %v5933
        %v5944 = vunpack.c.l.s4 1934713408
        %v5945 = vunpack.c.0.s8 %v5944
        %v5946 = vlaneseq
        %v5947 = vshrl.u32 %v5946, 7
        %v5948 = vsub.s32 %v5945, %v5947
        %v5949 = vrot.slane %v5941, %v5948
        %v5951 = vunpack.c.l.s4 1934713408
        %v5952 = vunpack.c.0.s8 %v5951
        %v5953 = vlaneseq
        %v5954 = vshrl.u32 %v5953, 7
        %v5955 = vsub.s32 %v5952, %v5954
        %v5956 = vrot.slane %v5942, %v5955
        %v5957 = vcombine.low %v5924, %v5940
        %v5958 = vcombine.high %v5924, %v5940
        %v5960 = vunpack.c.l.s4 1934713408
        %v5961 = vunpack.c.0.s8 %v5960
        %v5962 = vlaneseq
        %v5963 = vshrl.u32 %v5962, 7
        %v5964 = vsub.s32 %v5961, %v5963
        %v5965 = vrot.slane %v5957, %v5964
        %v5967 = vunpack.c.l.s4 1934713408
        %v5968 = vunpack.c.0.s8 %v5967
        %v5969 = vlaneseq
        %v5970 = vshrl.u32 %v5969, 7
        %v5971 = vsub.s32 %v5968, %v5970
        %v5972 = vrot.slane %v5958, %v5971
        %v5973 = vcombine.high %v5949, 0.0
        %v5974 = vcombine.high %v5956, 0.0
        %v5975 = vcombine.high %v5965, 0.0
        %v5976 = vcombine.high %v5972, 0.0
        %v5977 = vcombine.low %v5864, %v5880
        %v5978 = vcombine.high %v5864, %v5880
        %v5980 = vunpack.c.l.s4 1983009808
        %v5981 = vunpack.c.0.s8 %v5980
        %v5982 = vlaneseq
        %v5983 = vshrl.u32 %v5982, 7
        %v5984 = vsub.s32 %v5981, %v5983
        %v5985 = vrot.slane %v5977, %v5984
        %v5987 = vunpack.c.l.s4 1983009808
        %v5988 = vunpack.c.0.s8 %v5987
        %v5989 = vlaneseq
        %v5990 = vshrl.u32 %v5989, 7
        %v5991 = vsub.s32 %v5988, %v5990
        %v5992 = vrot.slane %v5978, %v5991
        %v5993 = vcombine.low %v5872, %v5888
        %v5994 = vcombine.high %v5872, %v5888
        %v5996 = vunpack.c.l.s4 1983009808
        %v5997 = vunpack.c.0.s8 %v5996
        %v5998 = vlaneseq
        %v5999 = vshrl.u32 %v5998, 7
        %v6000 = vsub.s32 %v5997, %v5999
        %v6001 = vrot.slane %v5993, %v6000
        %v6003 = vunpack.c.l.s4 1983009808
        %v6004 = vunpack.c.0.s8 %v6003
        %v6005 = vlaneseq
        %v6006 = vshrl.u32 %v6005, 7
        %v6007 = vsub.s32 %v6004, %v6006
        %v6008 = vrot.slane %v5994, %v6007
        %v6009 = vcombine.low %v5985, %v6001
        %v6010 = vcombine.high %v5985, %v6001
        %v6012 = vunpack.c.l.s4 1934713408
        %v6013 = vunpack.c.0.s8 %v6012
        %v6014 = vlaneseq
        %v6015 = vshrl.u32 %v6014, 7
        %v6016 = vsub.s32 %v6013, %v6015
        %v6017 = vrot.slane %v6009, %v6016
        %v6019 = vunpack.c.l.s4 1934713408
        %v6020 = vunpack.c.0.s8 %v6019
        %v6021 = vlaneseq
        %v6022 = vshrl.u32 %v6021, 7
        %v6023 = vsub.s32 %v6020, %v6022
        %v6024 = vrot.slane %v6010, %v6023
        %v6025 = vcombine.low %v5992, %v6008
        %v6026 = vcombine.high %v5992, %v6008
        %v6028 = vunpack.c.l.s4 1934713408
        %v6029 = vunpack.c.0.s8 %v6028
        %v6030 = vlaneseq
        %v6031 = vshrl.u32 %v6030, 7
        %v6032 = vsub.s32 %v6029, %v6031
        %v6033 = vrot.slane %v6025, %v6032
        %v6035 = vunpack.c.l.s4 1934713408
        %v6036 = vunpack.c.0.s8 %v6035
        %v6037 = vlaneseq
        %v6038 = vshrl.u32 %v6037, 7
        %v6039 = vsub.s32 %v6036, %v6038
        %v6040 = vrot.slane %v6026, %v6039
        %v6041 = vcombine.high %v6017, 0.0
        %v6042 = vcombine.high %v6024, 0.0
        %v6043 = vcombine.high %v6033, 0.0
        %v6044 = vcombine.high %v6040, 0.0
        %v6045 = vcombine.low %v5866, %v5882
        %v6046 = vcombine.high %v5866, %v5882
        %v6048 = vunpack.c.l.s4 1983009808
        %v6049 = vunpack.c.0.s8 %v6048
        %v6050 = vlaneseq
        %v6051 = vshrl.u32 %v6050, 7
        %v6052 = vsub.s32 %v6049, %v6051
        %v6053 = vrot.slane %v6045, %v6052
        %v6055 = vunpack.c.l.s4 1983009808
        %v6056 = vunpack.c.0.s8 %v6055
        %v6057 = vlaneseq
        %v6058 = vshrl.u32 %v6057, 7
        %v6059 = vsub.s32 %v6056, %v6058
        %v6060 = vrot.slane %v6046, %v6059
        %v6061 = vcombine.low %v5874, %v5890
        %v6062 = vcombine.high %v5874, %v5890
        %v6064 = vunpack.c.l.s4 1983009808
        %v6065 = vunpack.c.0.s8 %v6064
        %v6066 = vlaneseq
        %v6067 = vshrl.u32 %v6066, 7
        %v6068 = vsub.s32 %v6065, %v6067
        %v6069 = vrot.slane %v6061, %v6068
        %v6071 = vunpack.c.l.s4 1983009808
        %v6072 = vunpack.c.0.s8 %v6071
        %v6073 = vlaneseq
        %v6074 = vshrl.u32 %v6073, 7
        %v6075 = vsub.s32 %v6072, %v6074
        %v6076 = vrot.slane %v6062, %v6075
        %v6077 = vcombine.low %v6053, %v6069
        %v6078 = vcombine.high %v6053, %v6069
        %v6080 = vunpack.c.l.s4 1934713408
        %v6081 = vunpack.c.0.s8 %v6080
        %v6082 = vlaneseq
        %v6083 = vshrl.u32 %v6082, 7
        %v6084 = vsub.s32 %v6081, %v6083
        %v6085 = vrot.slane %v6077, %v6084
        %v6087 = vunpack.c.l.s4 1934713408
        %v6088 = vunpack.c.0.s8 %v6087
        %v6089 = vlaneseq
        %v6090 = vshrl.u32 %v6089, 7
        %v6091 = vsub.s32 %v6088, %v6090
        %v6092 = vrot.slane %v6078, %v6091
        %v6093 = vcombine.low %v6060, %v6076
        %v6094 = vcombine.high %v6060, %v6076
        %v6096 = vunpack.c.l.s4 1934713408
        %v6097 = vunpack.c.0.s8 %v6096
        %v6098 = vlaneseq
        %v6099 = vshrl.u32 %v6098, 7
        %v6100 = vsub.s32 %v6097, %v6099
        %v6101 = vrot.slane %v6093, %v6100
        %v6103 = vunpack.c.l.s4 1934713408
        %v6104 = vunpack.c.0.s8 %v6103
        %v6105 = vlaneseq
        %v6106 = vshrl.u32 %v6105, 7
        %v6107 = vsub.s32 %v6104, %v6106
        %v6108 = vrot.slane %v6094, %v6107
        %v6109 = vcombine.high %v6085, 0.0
        %v6110 = vcombine.high %v6092, 0.0
        %v6111 = vcombine.high %v6101, 0.0
        %v6112 = vcombine.high %v6108, 0.0
        %v6113 = vcombine.low %v5868, %v5884
        %v6114 = vcombine.high %v5868, %v5884
        %v6116 = vunpack.c.l.s4 1983009808
        %v6117 = vunpack.c.0.s8 %v6116
        %v6118 = vlaneseq
        %v6119 = vshrl.u32 %v6118, 7
        %v6120 = vsub.s32 %v6117, %v6119
        %v6121 = vrot.slane %v6113, %v6120
        %v6123 = vunpack.c.l.s4 1983009808
        %v6124 = vunpack.c.0.s8 %v6123
        %v6125 = vlaneseq
        %v6126 = vshrl.u32 %v6125, 7
        %v6127 = vsub.s32 %v6124, %v6126
        %v6128 = vrot.slane %v6114, %v6127
        %v6129 = vcombine.low %v5876, %v5892
        %v6130 = vcombine.high %v5876, %v5892
        %v6132 = vunpack.c.l.s4 1983009808
        %v6133 = vunpack.c.0.s8 %v6132
        %v6134 = vlaneseq
        %v6135 = vshrl.u32 %v6134, 7
        %v6136 = vsub.s32 %v6133, %v6135
        %v6137 = vrot.slane %v6129, %v6136
        %v6139 = vunpack.c.l.s4 1983009808
        %v6140 = vunpack.c.0.s8 %v6139
        %v6141 = vlaneseq
        %v6142 = vshrl.u32 %v6141, 7
        %v6143 = vsub.s32 %v6140, %v6142
        %v6144 = vrot.slane %v6130, %v6143
        %v6145 = vcombine.low %v6121, %v6137
        %v6146 = vcombine.high %v6121, %v6137
        %v6148 = vunpack.c.l.s4 1934713408
        %v6149 = vunpack.c.0.s8 %v6148
        %v6150 = vlaneseq
        %v6151 = vshrl.u32 %v6150, 7
        %v6152 = vsub.s32 %v6149, %v6151
        %v6153 = vrot.slane %v6145, %v6152
        %v6155 = vunpack.c.l.s4 1934713408
        %v6156 = vunpack.c.0.s8 %v6155
        %v6157 = vlaneseq
        %v6158 = vshrl.u32 %v6157, 7
        %v6159 = vsub.s32 %v6156, %v6158
        %v6160 = vrot.slane %v6146, %v6159
        %v6161 = vcombine.low %v6128, %v6144
        %v6162 = vcombine.high %v6128, %v6144
        %v6164 = vunpack.c.l.s4 1934713408
        %v6165 = vunpack.c.0.s8 %v6164
        %v6166 = vlaneseq
        %v6167 = vshrl.u32 %v6166, 7
        %v6168 = vsub.s32 %v6165, %v6167
        %v6169 = vrot.slane %v6161, %v6168
        %v6171 = vunpack.c.l.s4 1934713408
        %v6172 = vunpack.c.0.s8 %v6171
        %v6173 = vlaneseq
        %v6174 = vshrl.u32 %v6173, 7
        %v6175 = vsub.s32 %v6172, %v6174
        %v6176 = vrot.slane %v6162, %v6175
        %v6177 = vcombine.high %v6153, 0.0
        %v6178 = vcombine.high %v6160, 0.0
        %v6179 = vcombine.high %v6169, 0.0
        %v6180 = vcombine.high %v6176, 0.0
        %v6181 = vcombine.low %v5949, %v5956
        %v6183 = vunpack.c.l.s4 1983009808
        %v6184 = vunpack.c.0.s8 %v6183
        %v6185 = vlaneseq
        %v6186 = vshrl.u32 %v6185, 7
        %v6187 = vsub.s32 %v6184, %v6186
        %v6188 = vrot.slane %v6181, %v6187
        %v6189 = vcombine.low %v5973, %v5974
        %v6191 = vunpack.c.l.s4 1983009808
        %v6192 = vunpack.c.0.s8 %v6191
        %v6193 = vlaneseq
        %v6194 = vshrl.u32 %v6193, 7
        %v6195 = vsub.s32 %v6192, %v6194
        %v6196 = vrot.slane %v6189, %v6195
        %v6197 = vcombine.low %v5965, %v5972
        %v6199 = vunpack.c.l.s4 1983009808
        %v6200 = vunpack.c.0.s8 %v6199
        %v6201 = vlaneseq
        %v6202 = vshrl.u32 %v6201, 7
        %v6203 = vsub.s32 %v6200, %v6202
        %v6204 = vrot.slane %v6197, %v6203
        %v6205 = vcombine.low %v5975, %v5976
        %v6207 = vunpack.c.l.s4 1983009808
        %v6208 = vunpack.c.0.s8 %v6207
        %v6209 = vlaneseq
        %v6210 = vshrl.u32 %v6209, 7
        %v6211 = vsub.s32 %v6208, %v6210
        %v6212 = vrot.slane %v6205, %v6211
        %v6213 = vcombine.low %v6188, %v6196
        %v6214 = vcombine.high %v6188, %v6196
        %v6216 = vunpack.c.l.s4 1934713408
        %v6217 = vunpack.c.0.s8 %v6216
        %v6218 = vlaneseq
        %v6219 = vshrl.u32 %v6218, 7
        %v6220 = vsub.s32 %v6217, %v6219
        %v6221 = vrot.slane %v6213, %v6220
        %v6223 = vunpack.c.l.s4 1934713408
        %v6224 = vunpack.c.0.s8 %v6223
        %v6225 = vlaneseq
        %v6226 = vshrl.u32 %v6225, 7
        %v6227 = vsub.s32 %v6224, %v6226
        %v6228 = vrot.slane %v6214, %v6227
        %v6229 = vcombine.low %v6204, %v6212
        %v6230 = vcombine.high %v6204, %v6212
        %v6232 = vunpack.c.l.s4 1934713408
        %v6233 = vunpack.c.0.s8 %v6232
        %v6234 = vlaneseq
        %v6235 = vshrl.u32 %v6234, 7
        %v6236 = vsub.s32 %v6233, %v6235
        %v6237 = vrot.slane %v6229, %v6236
        %v6239 = vunpack.c.l.s4 1934713408
        %v6240 = vunpack.c.0.s8 %v6239
        %v6241 = vlaneseq
        %v6242 = vshrl.u32 %v6241, 7
        %v6243 = vsub.s32 %v6240, %v6242
        %v6244 = vrot.slane %v6230, %v6243
        %v6245 = vcombine.low %v6221, %v6237
        %v6246 = vcombine.high %v6221, %v6237
        %v6247 = vcombine.low %v6228, %v6244
        %v6248 = vcombine.high %v6228, %v6244
        %v6249 = vcombine.low %v6017, %v6024
        %v6251 = vunpack.c.l.s4 1983009808
        %v6252 = vunpack.c.0.s8 %v6251
        %v6253 = vlaneseq
        %v6254 = vshrl.u32 %v6253, 7
        %v6255 = vsub.s32 %v6252, %v6254
        %v6256 = vrot.slane %v6249, %v6255
        %v6257 = vcombine.low %v6041, %v6042
        %v6259 = vunpack.c.l.s4 1983009808
        %v6260 = vunpack.c.0.s8 %v6259
        %v6261 = vlaneseq
        %v6262 = vshrl.u32 %v6261, 7
        %v6263 = vsub.s32 %v6260, %v6262
        %v6264 = vrot.slane %v6257, %v6263
        %v6265 = vcombine.low %v6033, %v6040
        %v6267 = vunpack.c.l.s4 1983009808
        %v6268 = vunpack.c.0.s8 %v6267
        %v6269 = vlaneseq
        %v6270 = vshrl.u32 %v6269, 7
        %v6271 = vsub.s32 %v6268, %v6270
        %v6272 = vrot.slane %v6265, %v6271
        %v6273 = vcombine.low %v6043, %v6044
        %v6275 = vunpack.c.l.s4 1983009808
        %v6276 = vunpack.c.0.s8 %v6275
        %v6277 = vlaneseq
        %v6278 = vshrl.u32 %v6277, 7
        %v6279 = vsub.s32 %v6276, %v6278
        %v6280 = vrot.slane %v6273, %v6279
        %v6281 = vcombine.low %v6256, %v6264
        %v6282 = vcombine.high %v6256, %v6264
        %v6284 = vunpack.c.l.s4 1934713408
        %v6285 = vunpack.c.0.s8 %v6284
        %v6286 = vlaneseq
        %v6287 = vshrl.u32 %v6286, 7
        %v6288 = vsub.s32 %v6285, %v6287
        %v6289 = vrot.slane %v6281, %v6288
        %v6291 = vunpack.c.l.s4 1934713408
        %v6292 = vunpack.c.0.s8 %v6291
        %v6293 = vlaneseq
        %v6294 = vshrl.u32 %v6293, 7
        %v6295 = vsub.s32 %v6292, %v6294
        %v6296 = vrot.slane %v6282, %v6295
        %v6297 = vcombine.low %v6272, %v6280
        %v6298 = vcombine.high %v6272, %v6280
        %v6300 = vunpack.c.l.s4 1934713408
        %v6301 = vunpack.c.0.s8 %v6300
        %v6302 = vlaneseq
        %v6303 = vshrl.u32 %v6302, 7
        %v6304 = vsub.s32 %v6301, %v6303
        %v6305 = vrot.slane %v6297, %v6304
        %v6307 = vunpack.c.l.s4 1934713408
        %v6308 = vunpack.c.0.s8 %v6307
        %v6309 = vlaneseq
        %v6310 = vshrl.u32 %v6309, 7
        %v6311 = vsub.s32 %v6308, %v6310
        %v6312 = vrot.slane %v6298, %v6311
        %v6313 = vcombine.low %v6289, %v6305
        %v6314 = vcombine.high %v6289, %v6305
        %v6315 = vcombine.low %v6296, %v6312
        %v6316 = vcombine.high %v6296, %v6312
        %v6317 = vcombine.low %v6085, %v6092
        %v6319 = vunpack.c.l.s4 1983009808
        %v6320 = vunpack.c.0.s8 %v6319
        %v6321 = vlaneseq
        %v6322 = vshrl.u32 %v6321, 7
        %v6323 = vsub.s32 %v6320, %v6322
        %v6324 = vrot.slane %v6317, %v6323
        %v6325 = vcombine.low %v6109, %v6110
        %v6327 = vunpack.c.l.s4 1983009808
        %v6328 = vunpack.c.0.s8 %v6327
        %v6329 = vlaneseq
        %v6330 = vshrl.u32 %v6329, 7
        %v6331 = vsub.s32 %v6328, %v6330
        %v6332 = vrot.slane %v6325, %v6331
        %v6333 = vcombine.low %v6101, %v6108
        %v6335 = vunpack.c.l.s4 1983009808
        %v6336 = vunpack.c.0.s8 %v6335
        %v6337 = vlaneseq
        %v6338 = vshrl.u32 %v6337, 7
        %v6339 = vsub.s32 %v6336, %v6338
        %v6340 = vrot.slane %v6333, %v6339
        %v6341 = vcombine.low %v6111, %v6112
        %v6343 = vunpack.c.l.s4 1983009808
        %v6344 = vunpack.c.0.s8 %v6343
        %v6345 = vlaneseq
        %v6346 = vshrl.u32 %v6345, 7
        %v6347 = vsub.s32 %v6344, %v6346
        %v6348 = vrot.slane %v6341, %v6347
        %v6349 = vcombine.low %v6324, %v6332
        %v6350 = vcombine.high %v6324, %v6332
        %v6352 = vunpack.c.l.s4 1934713408
        %v6353 = vunpack.c.0.s8 %v6352
        %v6354 = vlaneseq
        %v6355 = vshrl.u32 %v6354, 7
        %v6356 = vsub.s32 %v6353, %v6355
        %v6357 = vrot.slane %v6349, %v6356
        %v6359 = vunpack.c.l.s4 1934713408
        %v6360 = vunpack.c.0.s8 %v6359
        %v6361 = vlaneseq
        %v6362 = vshrl.u32 %v6361, 7
        %v6363 = vsub.s32 %v6360, %v6362
        %v6364 = vrot.slane %v6350, %v6363
        %v6365 = vcombine.low %v6340, %v6348
        %v6366 = vcombine.high %v6340, %v6348
        %v6368 = vunpack.c.l.s4 1934713408
        %v6369 = vunpack.c.0.s8 %v6368
        %v6370 = vlaneseq
        %v6371 = vshrl.u32 %v6370, 7
        %v6372 = vsub.s32 %v6369, %v6371
        %v6373 = vrot.slane %v6365, %v6372
        %v6375 = vunpack.c.l.s4 1934713408
        %v6376 = vunpack.c.0.s8 %v6375
        %v6377 = vlaneseq
        %v6378 = vshrl.u32 %v6377, 7
        %v6379 = vsub.s32 %v6376, %v6378
        %v6380 = vrot.slane %v6366, %v6379
        %v6381 = vcombine.low %v6357, %v6373
        %v6382 = vcombine.high %v6357, %v6373
        %v6383 = vcombine.low %v6364, %v6380
        %v6384 = vcombine.high %v6364, %v6380
        %v6385 = vcombine.low %v6153, %v6160
        %v6387 = vunpack.c.l.s4 1983009808
        %v6388 = vunpack.c.0.s8 %v6387
        %v6389 = vlaneseq
        %v6390 = vshrl.u32 %v6389, 7
        %v6391 = vsub.s32 %v6388, %v6390
        %v6392 = vrot.slane %v6385, %v6391
        %v6393 = vcombine.low %v6177, %v6178
        %v6395 = vunpack.c.l.s4 1983009808
        %v6396 = vunpack.c.0.s8 %v6395
        %v6397 = vlaneseq
        %v6398 = vshrl.u32 %v6397, 7
        %v6399 = vsub.s32 %v6396, %v6398
        %v6400 = vrot.slane %v6393, %v6399
        %v6401 = vcombine.low %v6169, %v6176
        %v6403 = vunpack.c.l.s4 1983009808
        %v6404 = vunpack.c.0.s8 %v6403
        %v6405 = vlaneseq
        %v6406 = vshrl.u32 %v6405, 7
        %v6407 = vsub.s32 %v6404, %v6406
        %v6408 = vrot.slane %v6401, %v6407
        %v6409 = vcombine.low %v6179, %v6180
        %v6411 = vunpack.c.l.s4 1983009808
        %v6412 = vunpack.c.0.s8 %v6411
        %v6413 = vlaneseq
        %v6414 = vshrl.u32 %v6413, 7
        %v6415 = vsub.s32 %v6412, %v6414
        %v6416 = vrot.slane %v6409, %v6415
        %v6417 = vcombine.low %v6392, %v6400
        %v6418 = vcombine.high %v6392, %v6400
        %v6420 = vunpack.c.l.s4 1934713408
        %v6421 = vunpack.c.0.s8 %v6420
        %v6422 = vlaneseq
        %v6423 = vshrl.u32 %v6422, 7
        %v6424 = vsub.s32 %v6421, %v6423
        %v6425 = vrot.slane %v6417, %v6424
        %v6427 = vunpack.c.l.s4 1934713408
        %v6428 = vunpack.c.0.s8 %v6427
        %v6429 = vlaneseq
        %v6430 = vshrl.u32 %v6429, 7
        %v6431 = vsub.s32 %v6428, %v6430
        %v6432 = vrot.slane %v6418, %v6431
        %v6433 = vcombine.low %v6408, %v6416
        %v6434 = vcombine.high %v6408, %v6416
        %v6436 = vunpack.c.l.s4 1934713408
        %v6437 = vunpack.c.0.s8 %v6436
        %v6438 = vlaneseq
        %v6439 = vshrl.u32 %v6438, 7
        %v6440 = vsub.s32 %v6437, %v6439
        %v6441 = vrot.slane %v6433, %v6440
        %v6443 = vunpack.c.l.s4 1934713408
        %v6444 = vunpack.c.0.s8 %v6443
        %v6445 = vlaneseq
        %v6446 = vshrl.u32 %v6445, 7
        %v6447 = vsub.s32 %v6444, %v6446
        %v6448 = vrot.slane %v6434, %v6447
        %v6449 = vcombine.low %v6425, %v6441
        %v6450 = vcombine.high %v6425, %v6441
        %v6451 = vcombine.low %v6432, %v6448
        %v6452 = vcombine.high %v6432, %v6448
        %6457 = vrot.lane.b32.xlu0 %v5261, 112
        %v6458 = vpop.permute.xlu0 %6457
        %6459 = vrot.lane.b32.xlu0 %v5265, 112
        %v6460 = vpop.permute.xlu0 %6459
        %6461 = vrot.lane.b32.xlu0 %v5271, 112
        %v6462 = vpop.permute.xlu0 %6461
        %6463 = vrot.lane.b32.xlu0 %v5275, 112
        %v6464 = vpop.permute.xlu0 %6463
        %6469 = vrot.lane.b32.xlu0 %v5261, 96
        %v6470 = vpop.permute.xlu0 %6469
        %6471 = vrot.lane.b32.xlu0 %v5265, 96
        %v6472 = vpop.permute.xlu0 %6471
        %6473 = vrot.lane.b32.xlu0 %v5271, 96
        %v6474 = vpop.permute.xlu0 %6473
        %6475 = vrot.lane.b32.xlu0 %v5275, 96
        %v6476 = vpop.permute.xlu0 %6475
        %6481 = vrot.lane.b32.xlu0 %v5261, 80
        %v6482 = vpop.permute.xlu0 %6481
        %6483 = vrot.lane.b32.xlu0 %v5265, 80
        %v6484 = vpop.permute.xlu0 %6483
        %6485 = vrot.lane.b32.xlu0 %v5271, 80
        %v6486 = vpop.permute.xlu0 %6485
        %6487 = vrot.lane.b32.xlu0 %v5275, 80
        %v6488 = vpop.permute.xlu0 %6487
        %v6493 = vcombine.low %v5261, %v6470
        %v6494 = vcombine.high %v5261, %v6470
        %v6496 = vunpack.c.l.s4 1983009808
        %v6497 = vunpack.c.0.s8 %v6496
        %v6498 = vlaneseq
        %v6499 = vshrl.u32 %v6498, 7
        %v6500 = vsub.s32 %v6497, %v6499
        %v6501 = vrot.slane %v6493, %v6500
        %v6503 = vunpack.c.l.s4 1983009808
        %v6504 = vunpack.c.0.s8 %v6503
        %v6505 = vlaneseq
        %v6506 = vshrl.u32 %v6505, 7
        %v6507 = vsub.s32 %v6504, %v6506
        %v6508 = vrot.slane %v6494, %v6507
        %v6509 = vcombine.low %v6458, %v6482
        %v6510 = vcombine.high %v6458, %v6482
        %v6512 = vunpack.c.l.s4 1983009808
        %v6513 = vunpack.c.0.s8 %v6512
        %v6514 = vlaneseq
        %v6515 = vshrl.u32 %v6514, 7
        %v6516 = vsub.s32 %v6513, %v6515
        %v6517 = vrot.slane %v6509, %v6516
        %v6519 = vunpack.c.l.s4 1983009808
        %v6520 = vunpack.c.0.s8 %v6519
        %v6521 = vlaneseq
        %v6522 = vshrl.u32 %v6521, 7
        %v6523 = vsub.s32 %v6520, %v6522
        %v6524 = vrot.slane %v6510, %v6523
        %v6525 = vcombine.low %v6501, %v6517
        %v6526 = vcombine.high %v6501, %v6517
        %v6528 = vunpack.c.l.s4 1934713408
        %v6529 = vunpack.c.0.s8 %v6528
        %v6530 = vlaneseq
        %v6531 = vshrl.u32 %v6530, 7
        %v6532 = vsub.s32 %v6529, %v6531
        %v6533 = vrot.slane %v6525, %v6532
        %v6535 = vunpack.c.l.s4 1934713408
        %v6536 = vunpack.c.0.s8 %v6535
        %v6537 = vlaneseq
        %v6538 = vshrl.u32 %v6537, 7
        %v6539 = vsub.s32 %v6536, %v6538
        %v6540 = vrot.slane %v6526, %v6539
        %v6541 = vcombine.low %v6508, %v6524
        %v6542 = vcombine.high %v6508, %v6524
        %v6544 = vunpack.c.l.s4 1934713408
        %v6545 = vunpack.c.0.s8 %v6544
        %v6546 = vlaneseq
        %v6547 = vshrl.u32 %v6546, 7
        %v6548 = vsub.s32 %v6545, %v6547
        %v6549 = vrot.slane %v6541, %v6548
        %v6551 = vunpack.c.l.s4 1934713408
        %v6552 = vunpack.c.0.s8 %v6551
        %v6553 = vlaneseq
        %v6554 = vshrl.u32 %v6553, 7
        %v6555 = vsub.s32 %v6552, %v6554
        %v6556 = vrot.slane %v6542, %v6555
        %v6557 = vcombine.high %v6533, 0.0
        %v6558 = vcombine.high %v6540, 0.0
        %v6559 = vcombine.high %v6549, 0.0
        %v6560 = vcombine.high %v6556, 0.0
        %v6561 = vcombine.low %v5265, %v6472
        %v6562 = vcombine.high %v5265, %v6472
        %v6564 = vunpack.c.l.s4 1983009808
        %v6565 = vunpack.c.0.s8 %v6564
        %v6566 = vlaneseq
        %v6567 = vshrl.u32 %v6566, 7
        %v6568 = vsub.s32 %v6565, %v6567
        %v6569 = vrot.slane %v6561, %v6568
        %v6571 = vunpack.c.l.s4 1983009808
        %v6572 = vunpack.c.0.s8 %v6571
        %v6573 = vlaneseq
        %v6574 = vshrl.u32 %v6573, 7
        %v6575 = vsub.s32 %v6572, %v6574
        %v6576 = vrot.slane %v6562, %v6575
        %v6577 = vcombine.low %v6460, %v6484
        %v6578 = vcombine.high %v6460, %v6484
        %v6580 = vunpack.c.l.s4 1983009808
        %v6581 = vunpack.c.0.s8 %v6580
        %v6582 = vlaneseq
        %v6583 = vshrl.u32 %v6582, 7
        %v6584 = vsub.s32 %v6581, %v6583
        %v6585 = vrot.slane %v6577, %v6584
        %v6587 = vunpack.c.l.s4 1983009808
        %v6588 = vunpack.c.0.s8 %v6587
        %v6589 = vlaneseq
        %v6590 = vshrl.u32 %v6589, 7
        %v6591 = vsub.s32 %v6588, %v6590
        %v6592 = vrot.slane %v6578, %v6591
        %v6593 = vcombine.low %v6569, %v6585
        %v6594 = vcombine.high %v6569, %v6585
        %v6596 = vunpack.c.l.s4 1934713408
        %v6597 = vunpack.c.0.s8 %v6596
        %v6598 = vlaneseq
        %v6599 = vshrl.u32 %v6598, 7
        %v6600 = vsub.s32 %v6597, %v6599
        %v6601 = vrot.slane %v6593, %v6600
        %v6603 = vunpack.c.l.s4 1934713408
        %v6604 = vunpack.c.0.s8 %v6603
        %v6605 = vlaneseq
        %v6606 = vshrl.u32 %v6605, 7
        %v6607 = vsub.s32 %v6604, %v6606
        %v6608 = vrot.slane %v6594, %v6607
        %v6609 = vcombine.low %v6576, %v6592
        %v6610 = vcombine.high %v6576, %v6592
        %v6612 = vunpack.c.l.s4 1934713408
        %v6613 = vunpack.c.0.s8 %v6612
        %v6614 = vlaneseq
        %v6615 = vshrl.u32 %v6614, 7
        %v6616 = vsub.s32 %v6613, %v6615
        %v6617 = vrot.slane %v6609, %v6616
        %v6619 = vunpack.c.l.s4 1934713408
        %v6620 = vunpack.c.0.s8 %v6619
        %v6621 = vlaneseq
        %v6622 = vshrl.u32 %v6621, 7
        %v6623 = vsub.s32 %v6620, %v6622
        %v6624 = vrot.slane %v6610, %v6623
        %v6625 = vcombine.high %v6601, 0.0
        %v6626 = vcombine.high %v6608, 0.0
        %v6627 = vcombine.high %v6617, 0.0
        %v6628 = vcombine.high %v6624, 0.0
        %v6629 = vcombine.low %v5271, %v6474
        %v6630 = vcombine.high %v5271, %v6474
        %v6632 = vunpack.c.l.s4 1983009808
        %v6633 = vunpack.c.0.s8 %v6632
        %v6634 = vlaneseq
        %v6635 = vshrl.u32 %v6634, 7
        %v6636 = vsub.s32 %v6633, %v6635
        %v6637 = vrot.slane %v6629, %v6636
        %v6639 = vunpack.c.l.s4 1983009808
        %v6640 = vunpack.c.0.s8 %v6639
        %v6641 = vlaneseq
        %v6642 = vshrl.u32 %v6641, 7
        %v6643 = vsub.s32 %v6640, %v6642
        %v6644 = vrot.slane %v6630, %v6643
        %v6645 = vcombine.low %v6462, %v6486
        %v6646 = vcombine.high %v6462, %v6486
        %v6648 = vunpack.c.l.s4 1983009808
        %v6649 = vunpack.c.0.s8 %v6648
        %v6650 = vlaneseq
        %v6651 = vshrl.u32 %v6650, 7
        %v6652 = vsub.s32 %v6649, %v6651
        %v6653 = vrot.slane %v6645, %v6652
        %v6655 = vunpack.c.l.s4 1983009808
        %v6656 = vunpack.c.0.s8 %v6655
        %v6657 = vlaneseq
        %v6658 = vshrl.u32 %v6657, 7
        %v6659 = vsub.s32 %v6656, %v6658
        %v6660 = vrot.slane %v6646, %v6659
        %v6661 = vcombine.low %v6637, %v6653
        %v6662 = vcombine.high %v6637, %v6653
        %v6664 = vunpack.c.l.s4 1934713408
        %v6665 = vunpack.c.0.s8 %v6664
        %v6666 = vlaneseq
        %v6667 = vshrl.u32 %v6666, 7
        %v6668 = vsub.s32 %v6665, %v6667
        %v6669 = vrot.slane %v6661, %v6668
        %v6671 = vunpack.c.l.s4 1934713408
        %v6672 = vunpack.c.0.s8 %v6671
        %v6673 = vlaneseq
        %v6674 = vshrl.u32 %v6673, 7
        %v6675 = vsub.s32 %v6672, %v6674
        %v6676 = vrot.slane %v6662, %v6675
        %v6677 = vcombine.low %v6644, %v6660
        %v6678 = vcombine.high %v6644, %v6660
        %v6680 = vunpack.c.l.s4 1934713408
        %v6681 = vunpack.c.0.s8 %v6680
        %v6682 = vlaneseq
        %v6683 = vshrl.u32 %v6682, 7
        %v6684 = vsub.s32 %v6681, %v6683
        %v6685 = vrot.slane %v6677, %v6684
        %v6687 = vunpack.c.l.s4 1934713408
        %v6688 = vunpack.c.0.s8 %v6687
        %v6689 = vlaneseq
        %v6690 = vshrl.u32 %v6689, 7
        %v6691 = vsub.s32 %v6688, %v6690
        %v6692 = vrot.slane %v6678, %v6691
        %v6693 = vcombine.high %v6669, 0.0
        %v6694 = vcombine.high %v6676, 0.0
        %v6695 = vcombine.high %v6685, 0.0
        %v6696 = vcombine.high %v6692, 0.0
        %v6697 = vcombine.low %v5275, %v6476
        %v6698 = vcombine.high %v5275, %v6476
        %v6700 = vunpack.c.l.s4 1983009808
        %v6701 = vunpack.c.0.s8 %v6700
        %v6702 = vlaneseq
        %v6703 = vshrl.u32 %v6702, 7
        %v6704 = vsub.s32 %v6701, %v6703
        %v6705 = vrot.slane %v6697, %v6704
        %v6707 = vunpack.c.l.s4 1983009808
        %v6708 = vunpack.c.0.s8 %v6707
        %v6709 = vlaneseq
        %v6710 = vshrl.u32 %v6709, 7
        %v6711 = vsub.s32 %v6708, %v6710
        %v6712 = vrot.slane %v6698, %v6711
        %v6713 = vcombine.low %v6464, %v6488
        %v6714 = vcombine.high %v6464, %v6488
        %v6716 = vunpack.c.l.s4 1983009808
        %v6717 = vunpack.c.0.s8 %v6716
        %v6718 = vlaneseq
        %v6719 = vshrl.u32 %v6718, 7
        %v6720 = vsub.s32 %v6717, %v6719
        %v6721 = vrot.slane %v6713, %v6720
        %v6723 = vunpack.c.l.s4 1983009808
        %v6724 = vunpack.c.0.s8 %v6723
        %v6725 = vlaneseq
        %v6726 = vshrl.u32 %v6725, 7
        %v6727 = vsub.s32 %v6724, %v6726
        %v6728 = vrot.slane %v6714, %v6727
        %v6729 = vcombine.low %v6705, %v6721
        %v6730 = vcombine.high %v6705, %v6721
        %v6732 = vunpack.c.l.s4 1934713408
        %v6733 = vunpack.c.0.s8 %v6732
        %v6734 = vlaneseq
        %v6735 = vshrl.u32 %v6734, 7
        %v6736 = vsub.s32 %v6733, %v6735
        %v6737 = vrot.slane %v6729, %v6736
        %v6739 = vunpack.c.l.s4 1934713408
        %v6740 = vunpack.c.0.s8 %v6739
        %v6741 = vlaneseq
        %v6742 = vshrl.u32 %v6741, 7
        %v6743 = vsub.s32 %v6740, %v6742
        %v6744 = vrot.slane %v6730, %v6743
        %v6745 = vcombine.low %v6712, %v6728
        %v6746 = vcombine.high %v6712, %v6728
        %v6748 = vunpack.c.l.s4 1934713408
        %v6749 = vunpack.c.0.s8 %v6748
        %v6750 = vlaneseq
        %v6751 = vshrl.u32 %v6750, 7
        %v6752 = vsub.s32 %v6749, %v6751
        %v6753 = vrot.slane %v6745, %v6752
        %v6755 = vunpack.c.l.s4 1934713408
        %v6756 = vunpack.c.0.s8 %v6755
        %v6757 = vlaneseq
        %v6758 = vshrl.u32 %v6757, 7
        %v6759 = vsub.s32 %v6756, %v6758
        %v6760 = vrot.slane %v6746, %v6759
        %v6761 = vcombine.high %v6737, 0.0
        %v6762 = vcombine.high %v6744, 0.0
        %v6763 = vcombine.high %v6753, 0.0
        %v6764 = vcombine.high %v6760, 0.0
        %v6765 = vcombine.low %v6533, %v6540
        %v6767 = vunpack.c.l.s4 1983009808
        %v6768 = vunpack.c.0.s8 %v6767
        %v6769 = vlaneseq
        %v6770 = vshrl.u32 %v6769, 7
        %v6771 = vsub.s32 %v6768, %v6770
        %v6772 = vrot.slane %v6765, %v6771
        %v6773 = vcombine.low %v6557, %v6558
        %v6775 = vunpack.c.l.s4 1983009808
        %v6776 = vunpack.c.0.s8 %v6775
        %v6777 = vlaneseq
        %v6778 = vshrl.u32 %v6777, 7
        %v6779 = vsub.s32 %v6776, %v6778
        %v6780 = vrot.slane %v6773, %v6779
        %v6781 = vcombine.low %v6549, %v6556
        %v6783 = vunpack.c.l.s4 1983009808
        %v6784 = vunpack.c.0.s8 %v6783
        %v6785 = vlaneseq
        %v6786 = vshrl.u32 %v6785, 7
        %v6787 = vsub.s32 %v6784, %v6786
        %v6788 = vrot.slane %v6781, %v6787
        %v6789 = vcombine.low %v6559, %v6560
        %v6791 = vunpack.c.l.s4 1983009808
        %v6792 = vunpack.c.0.s8 %v6791
        %v6793 = vlaneseq
        %v6794 = vshrl.u32 %v6793, 7
        %v6795 = vsub.s32 %v6792, %v6794
        %v6796 = vrot.slane %v6789, %v6795
        %v6797 = vcombine.low %v6772, %v6780
        %v6798 = vcombine.high %v6772, %v6780
        %v6800 = vunpack.c.l.s4 1934713408
        %v6801 = vunpack.c.0.s8 %v6800
        %v6802 = vlaneseq
        %v6803 = vshrl.u32 %v6802, 7
        %v6804 = vsub.s32 %v6801, %v6803
        %v6805 = vrot.slane %v6797, %v6804
        %v6807 = vunpack.c.l.s4 1934713408
        %v6808 = vunpack.c.0.s8 %v6807
        %v6809 = vlaneseq
        %v6810 = vshrl.u32 %v6809, 7
        %v6811 = vsub.s32 %v6808, %v6810
        %v6812 = vrot.slane %v6798, %v6811
        %v6813 = vcombine.low %v6788, %v6796
        %v6814 = vcombine.high %v6788, %v6796
        %v6816 = vunpack.c.l.s4 1934713408
        %v6817 = vunpack.c.0.s8 %v6816
        %v6818 = vlaneseq
        %v6819 = vshrl.u32 %v6818, 7
        %v6820 = vsub.s32 %v6817, %v6819
        %v6821 = vrot.slane %v6813, %v6820
        %v6823 = vunpack.c.l.s4 1934713408
        %v6824 = vunpack.c.0.s8 %v6823
        %v6825 = vlaneseq
        %v6826 = vshrl.u32 %v6825, 7
        %v6827 = vsub.s32 %v6824, %v6826
        %v6828 = vrot.slane %v6814, %v6827
        %v6829 = vcombine.low %v6805, %v6821
        %v6830 = vcombine.high %v6805, %v6821
        %v6831 = vcombine.low %v6812, %v6828
        %v6832 = vcombine.high %v6812, %v6828
        %v6833 = vcombine.low %v6601, %v6608
        %v6835 = vunpack.c.l.s4 1983009808
        %v6836 = vunpack.c.0.s8 %v6835
        %v6837 = vlaneseq
        %v6838 = vshrl.u32 %v6837, 7
        %v6839 = vsub.s32 %v6836, %v6838
        %v6840 = vrot.slane %v6833, %v6839
        %v6841 = vcombine.low %v6625, %v6626
        %v6843 = vunpack.c.l.s4 1983009808
        %v6844 = vunpack.c.0.s8 %v6843
        %v6845 = vlaneseq
        %v6846 = vshrl.u32 %v6845, 7
        %v6847 = vsub.s32 %v6844, %v6846
        %v6848 = vrot.slane %v6841, %v6847
        %v6849 = vcombine.low %v6617, %v6624
        %v6851 = vunpack.c.l.s4 1983009808
        %v6852 = vunpack.c.0.s8 %v6851
        %v6853 = vlaneseq
        %v6854 = vshrl.u32 %v6853, 7
        %v6855 = vsub.s32 %v6852, %v6854
        %v6856 = vrot.slane %v6849, %v6855
        %v6857 = vcombine.low %v6627, %v6628
        %v6859 = vunpack.c.l.s4 1983009808
        %v6860 = vunpack.c.0.s8 %v6859
        %v6861 = vlaneseq
        %v6862 = vshrl.u32 %v6861, 7
        %v6863 = vsub.s32 %v6860, %v6862
        %v6864 = vrot.slane %v6857, %v6863
        %v6865 = vcombine.low %v6840, %v6848
        %v6866 = vcombine.high %v6840, %v6848
        %v6868 = vunpack.c.l.s4 1934713408
        %v6869 = vunpack.c.0.s8 %v6868
        %v6870 = vlaneseq
        %v6871 = vshrl.u32 %v6870, 7
        %v6872 = vsub.s32 %v6869, %v6871
        %v6873 = vrot.slane %v6865, %v6872
        %v6875 = vunpack.c.l.s4 1934713408
        %v6876 = vunpack.c.0.s8 %v6875
        %v6877 = vlaneseq
        %v6878 = vshrl.u32 %v6877, 7
        %v6879 = vsub.s32 %v6876, %v6878
        %v6880 = vrot.slane %v6866, %v6879
        %v6881 = vcombine.low %v6856, %v6864
        %v6882 = vcombine.high %v6856, %v6864
        %v6884 = vunpack.c.l.s4 1934713408
        %v6885 = vunpack.c.0.s8 %v6884
        %v6886 = vlaneseq
        %v6887 = vshrl.u32 %v6886, 7
        %v6888 = vsub.s32 %v6885, %v6887
        %v6889 = vrot.slane %v6881, %v6888
        %v6891 = vunpack.c.l.s4 1934713408
        %v6892 = vunpack.c.0.s8 %v6891
        %v6893 = vlaneseq
        %v6894 = vshrl.u32 %v6893, 7
        %v6895 = vsub.s32 %v6892, %v6894
        %v6896 = vrot.slane %v6882, %v6895
        %v6897 = vcombine.low %v6873, %v6889
        %v6898 = vcombine.high %v6873, %v6889
        %v6899 = vcombine.low %v6880, %v6896
        %v6900 = vcombine.high %v6880, %v6896
        %v6901 = vcombine.low %v6669, %v6676
        %v6903 = vunpack.c.l.s4 1983009808
        %v6904 = vunpack.c.0.s8 %v6903
        %v6905 = vlaneseq
        %v6906 = vshrl.u32 %v6905, 7
        %v6907 = vsub.s32 %v6904, %v6906
        %v6908 = vrot.slane %v6901, %v6907
        %v6909 = vcombine.low %v6693, %v6694
        %v6911 = vunpack.c.l.s4 1983009808
        %v6912 = vunpack.c.0.s8 %v6911
        %v6913 = vlaneseq
        %v6914 = vshrl.u32 %v6913, 7
        %v6915 = vsub.s32 %v6912, %v6914
        %v6916 = vrot.slane %v6909, %v6915
        %v6917 = vcombine.low %v6685, %v6692
        %v6919 = vunpack.c.l.s4 1983009808
        %v6920 = vunpack.c.0.s8 %v6919
        %v6921 = vlaneseq
        %v6922 = vshrl.u32 %v6921, 7
        %v6923 = vsub.s32 %v6920, %v6922
        %v6924 = vrot.slane %v6917, %v6923
        %v6925 = vcombine.low %v6695, %v6696
        %v6927 = vunpack.c.l.s4 1983009808
        %v6928 = vunpack.c.0.s8 %v6927
        %v6929 = vlaneseq
        %v6930 = vshrl.u32 %v6929, 7
        %v6931 = vsub.s32 %v6928, %v6930
        %v6932 = vrot.slane %v6925, %v6931
        %v6933 = vcombine.low %v6908, %v6916
        %v6934 = vcombine.high %v6908, %v6916
        %v6936 = vunpack.c.l.s4 1934713408
        %v6937 = vunpack.c.0.s8 %v6936
        %v6938 = vlaneseq
        %v6939 = vshrl.u32 %v6938, 7
        %v6940 = vsub.s32 %v6937, %v6939
        %v6941 = vrot.slane %v6933, %v6940
        %v6943 = vunpack.c.l.s4 1934713408
        %v6944 = vunpack.c.0.s8 %v6943
        %v6945 = vlaneseq
        %v6946 = vshrl.u32 %v6945, 7
        %v6947 = vsub.s32 %v6944, %v6946
        %v6948 = vrot.slane %v6934, %v6947
        %v6949 = vcombine.low %v6924, %v6932
        %v6950 = vcombine.high %v6924, %v6932
        %v6952 = vunpack.c.l.s4 1934713408
        %v6953 = vunpack.c.0.s8 %v6952
        %v6954 = vlaneseq
        %v6955 = vshrl.u32 %v6954, 7
        %v6956 = vsub.s32 %v6953, %v6955
        %v6957 = vrot.slane %v6949, %v6956
        %v6959 = vunpack.c.l.s4 1934713408
        %v6960 = vunpack.c.0.s8 %v6959
        %v6961 = vlaneseq
        %v6962 = vshrl.u32 %v6961, 7
        %v6963 = vsub.s32 %v6960, %v6962
        %v6964 = vrot.slane %v6950, %v6963
        %v6965 = vcombine.low %v6941, %v6957
        %v6966 = vcombine.high %v6941, %v6957
        %v6967 = vcombine.low %v6948, %v6964
        %v6968 = vcombine.high %v6948, %v6964
        %v6969 = vcombine.low %v6737, %v6744
        %v6971 = vunpack.c.l.s4 1983009808
        %v6972 = vunpack.c.0.s8 %v6971
        %v6973 = vlaneseq
        %v6974 = vshrl.u32 %v6973, 7
        %v6975 = vsub.s32 %v6972, %v6974
        %v6976 = vrot.slane %v6969, %v6975
        %v6977 = vcombine.low %v6761, %v6762
        %v6979 = vunpack.c.l.s4 1983009808
        %v6980 = vunpack.c.0.s8 %v6979
        %v6981 = vlaneseq
        %v6982 = vshrl.u32 %v6981, 7
        %v6983 = vsub.s32 %v6980, %v6982
        %v6984 = vrot.slane %v6977, %v6983
        %v6985 = vcombine.low %v6753, %v6760
        %v6987 = vunpack.c.l.s4 1983009808
        %v6988 = vunpack.c.0.s8 %v6987
        %v6989 = vlaneseq
        %v6990 = vshrl.u32 %v6989, 7
        %v6991 = vsub.s32 %v6988, %v6990
        %v6992 = vrot.slane %v6985, %v6991
        %v6993 = vcombine.low %v6763, %v6764
        %v6995 = vunpack.c.l.s4 1983009808
        %v6996 = vunpack.c.0.s8 %v6995
        %v6997 = vlaneseq
        %v6998 = vshrl.u32 %v6997, 7
        %v6999 = vsub.s32 %v6996, %v6998
        %v7000 = vrot.slane %v6993, %v6999
        %v7001 = vcombine.low %v6976, %v6984
        %v7002 = vcombine.high %v6976, %v6984
        %v7004 = vunpack.c.l.s4 1934713408
        %v7005 = vunpack.c.0.s8 %v7004
        %v7006 = vlaneseq
        %v7007 = vshrl.u32 %v7006, 7
        %v7008 = vsub.s32 %v7005, %v7007
        %v7009 = vrot.slane %v7001, %v7008
        %v7011 = vunpack.c.l.s4 1934713408
        %v7012 = vunpack.c.0.s8 %v7011
        %v7013 = vlaneseq
        %v7014 = vshrl.u32 %v7013, 7
        %v7015 = vsub.s32 %v7012, %v7014
        %v7016 = vrot.slane %v7002, %v7015
        %v7017 = vcombine.low %v6992, %v7000
        %v7018 = vcombine.high %v6992, %v7000
        %v7020 = vunpack.c.l.s4 1934713408
        %v7021 = vunpack.c.0.s8 %v7020
        %v7022 = vlaneseq
        %v7023 = vshrl.u32 %v7022, 7
        %v7024 = vsub.s32 %v7021, %v7023
        %v7025 = vrot.slane %v7017, %v7024
        %v7027 = vunpack.c.l.s4 1934713408
        %v7028 = vunpack.c.0.s8 %v7027
        %v7029 = vlaneseq
        %v7030 = vshrl.u32 %v7029, 7
        %v7031 = vsub.s32 %v7028, %v7030
        %v7032 = vrot.slane %v7018, %v7031
        %v7033 = vcombine.low %v7009, %v7025
        %v7034 = vcombine.high %v7009, %v7025
        %v7035 = vcombine.low %v7016, %v7032
        %v7036 = vcombine.high %v7016, %v7032
        %v7037 = vpack.c.bf16 %v5653, %v5653
        %v7038 = vpack.c.bf16 %v5654, %v5654
        %v7039 = vpack.c.bf16 %v5655, %v5655
        %v7040 = vpack.c.bf16 %v5656, %v5656
        %v7041 = vpack.c.bf16 %v5721, %v5721
        %v7042 = vpack.c.bf16 %v5722, %v5722
        %v7043 = vpack.c.bf16 %v5723, %v5723
        %v7044 = vpack.c.bf16 %v5724, %v5724
        %v7045 = vpack.c.bf16 %v5789, %v5789
        %v7046 = vpack.c.bf16 %v5790, %v5790
        %v7047 = vpack.c.bf16 %v5791, %v5791
        %v7048 = vpack.c.bf16 %v5792, %v5792
        %v7049 = vpack.c.bf16 %v5857, %v5857
        %v7050 = vpack.c.bf16 %v5858, %v5858
        %v7051 = vpack.c.bf16 %v5859, %v5859
        %v7052 = vpack.c.bf16 %v5860, %v5860
        %v7053 = vpack.c.bf16 %v6245, %v6245
        %v7054 = vpack.c.bf16 %v6246, %v6246
        %v7055 = vpack.c.bf16 %v6247, %v6247
        %v7056 = vpack.c.bf16 %v6248, %v6248
        %v7057 = vpack.c.bf16 %v6313, %v6313
        %v7058 = vpack.c.bf16 %v6314, %v6314
        %v7059 = vpack.c.bf16 %v6315, %v6315
        %v7060 = vpack.c.bf16 %v6316, %v6316
        %v7061 = vpack.c.bf16 %v6381, %v6381
        %v7062 = vpack.c.bf16 %v6382, %v6382
        %v7063 = vpack.c.bf16 %v6383, %v6383
        %v7064 = vpack.c.bf16 %v6384, %v6384
        %v7065 = vpack.c.bf16 %v6449, %v6449
        %v7066 = vpack.c.bf16 %v6450, %v6450
        %v7067 = vpack.c.bf16 %v6451, %v6451
        %v7068 = vpack.c.bf16 %v6452, %v6452
        %v7070 = vsel %vm4948, %v7037, 0
        %v7073 = vsel %vm4948, %v7053, 0
        %7075 = vmatprep.subr.bf16.mxu0 0
        %7076 = vmatpush1.bf16.xpose.msra.mxu0 %v7073
        %7077 = vmatprep.subr.bf16.mxu0 0
        %7078 = vmatpush1.bf16.xpose.msra.mxu0 0
        %7079 = vmatprep.subr.bf16.mxu0 0
        %7080 = vmatpush1.bf16.xpose.msra.mxu0 0
        %7081 = vmatprep.subr.bf16.mxu0 0
        %7082 = vmatpush1.bf16.xpose.msra.mxu0 0
        %7083 = vmatprep.subr.bf16.mxu0 0
        %7084 = vmatpush1.bf16.xpose.msra.mxu0 0
        %7085 = vmatprep.subr.bf16.mxu0 0
        %7086 = vmatpush1.bf16.xpose.msra.mxu0 0
        %7087 = vmatprep.subr.bf16.mxu0 0
        %7088 = vmatpush1.bf16.xpose.msra.mxu0 0
        %7089 = vmatprep.subr.bf16.mxu0 0
        %7090 = vmatpush1.bf16.xpose.msra.mxu0 0
        %7091 = vmatprep.subr.bf16.mxu0 0
        %7092 = vmatpush1.bf16.xpose.msra.mxu0 0
        %7093 = vmatprep.subr.bf16.mxu0 0
        %7094 = vmatpush1.bf16.xpose.msra.mxu0 0
        %7095 = vmatprep.subr.bf16.mxu0 0
        %7096 = vmatpush1.bf16.xpose.msra.mxu0 0
        %7097 = vmatprep.subr.bf16.mxu0 0
        %7098 = vmatpush1.bf16.xpose.msra.mxu0 0
        %7099 = vmatprep.subr.bf16.mxu0 0
        %7100 = vmatpush1.bf16.xpose.msra.mxu0 0
        %7101 = vmatprep.subr.bf16.mxu0 0
        %7102 = vmatpush1.bf16.xpose.msra.mxu0 0
        %7103 = vmatprep.subr.bf16.mxu0 0
        %7104 = vmatpush1.bf16.xpose.msra.mxu0 0
        %7105 = vmatprep.subr.bf16.mxu0 0
        %7106 = vmatpush1.bf16.xpose.msra.mxu0 0
        %7107 = vmatprep.mubr.bf16.mxu0 0
        %7108 = vmatmul.mubr.bf16.gmra.mrb[0].mxu0 %v7070
        %v7109 = vpop.f32.mrb[0].mxu0
        %v7110 = vadd.f32 0.0, %v7109
        %v7111 = vpop.f32.mrb[0].mxu0
        %v7112 = vpop.f32.mrb[0].mxu0
        %v7113 = vpop.f32.mrb[0].mxu0
        %7114 = vdwg.mxu0
        %v7116 = vsel %vm4948, %v7038, 0
        %v7119 = vsel %vm4948, %v7054, 0
        %7121 = vmatprep.subr.bf16.mxu0 0
        %7122 = vmatpush1.bf16.xpose.msra.mxu0 %v7119
        %7123 = vmatprep.subr.bf16.mxu0 0
        %7124 = vmatpush1.bf16.xpose.msra.mxu0 0
        %7125 = vmatprep.subr.bf16.mxu0 0
        %7126 = vmatpush1.bf16.xpose.msra.mxu0 0
        %7127 = vmatprep.subr.bf16.mxu0 0
        %7128 = vmatpush1.bf16.xpose.msra.mxu0 0
        %7129 = vmatprep.subr.bf16.mxu0 0
        %7130 = vmatpush1.bf16.xpose.msra.mxu0 0
        %7131 = vmatprep.subr.bf16.mxu0 0
        %7132 = vmatpush1.bf16.xpose.msra.mxu0 0
        %7133 = vmatprep.subr.bf16.mxu0 0
        %7134 = vmatpush1.bf16.xpose.msra.mxu0 0
        %7135 = vmatprep.subr.bf16.mxu0 0
        %7136 = vmatpush1.bf16.xpose.msra.mxu0 0
        %7137 = vmatprep.subr.bf16.mxu0 0
        %7138 = vmatpush1.bf16.xpose.msra.mxu0 0
        %7139 = vmatprep.subr.bf16.mxu0 0
        %7140 = vmatpush1.bf16.xpose.msra.mxu0 0
        %7141 = vmatprep.subr.bf16.mxu0 0
        %7142 = vmatpush1.bf16.xpose.msra.mxu0 0
        %7143 = vmatprep.subr.bf16.mxu0 0
        %7144 = vmatpush1.bf16.xpose.msra.mxu0 0
        %7145 = vmatprep.subr.bf16.mxu0 0
        %7146 = vmatpush1.bf16.xpose.msra.mxu0 0
        %7147 = vmatprep.subr.bf16.mxu0 0
        %7148 = vmatpush1.bf16.xpose.msra.mxu0 0
        %7149 = vmatprep.subr.bf16.mxu0 0
        %7150 = vmatpush1.bf16.xpose.msra.mxu0 0
        %7151 = vmatprep.subr.bf16.mxu0 0
        %7152 = vmatpush1.bf16.xpose.msra.mxu0 0
        %7153 = vmatprep.mubr.bf16.mxu0 0
        %7154 = vmatmul.mubr.bf16.gmra.mrb[0].mxu0 %v7116
        %v7155 = vpop.f32.mrb[0].mxu0
        %v7156 = vadd.f32 0.0, %v7155
        %v7157 = vpop.f32.mrb[0].mxu0
        %v7158 = vpop.f32.mrb[0].mxu0
        %v7159 = vpop.f32.mrb[0].mxu0
        %7160 = vdwg.mxu0
        %v7162 = vsel %vm4948, %v7039, 0
        %v7165 = vsel %vm4948, %v7055, 0
        %7167 = vmatprep.subr.bf16.mxu0 0
        %7168 = vmatpush1.bf16.xpose.msra.mxu0 %v7165
        %7169 = vmatprep.subr.bf16.mxu0 0
        %7170 = vmatpush1.bf16.xpose.msra.mxu0 0
        %7171 = vmatprep.subr.bf16.mxu0 0
        %7172 = vmatpush1.bf16.xpose.msra.mxu0 0
        %7173 = vmatprep.subr.bf16.mxu0 0
        %7174 = vmatpush1.bf16.xpose.msra.mxu0 0
        %7175 = vmatprep.subr.bf16.mxu0 0
        %7176 = vmatpush1.bf16.xpose.msra.mxu0 0
        %7177 = vmatprep.subr.bf16.mxu0 0
        %7178 = vmatpush1.bf16.xpose.msra.mxu0 0
        %7179 = vmatprep.subr.bf16.mxu0 0
        %7180 = vmatpush1.bf16.xpose.msra.mxu0 0
        %7181 = vmatprep.subr.bf16.mxu0 0
        %7182 = vmatpush1.bf16.xpose.msra.mxu0 0
        %7183 = vmatprep.subr.bf16.mxu0 0
        %7184 = vmatpush1.bf16.xpose.msra.mxu0 0
        %7185 = vmatprep.subr.bf16.mxu0 0
        %7186 = vmatpush1.bf16.xpose.msra.mxu0 0
        %7187 = vmatprep.subr.bf16.mxu0 0
        %7188 = vmatpush1.bf16.xpose.msra.mxu0 0
        %7189 = vmatprep.subr.bf16.mxu0 0
        %7190 = vmatpush1.bf16.xpose.msra.mxu0 0
        %7191 = vmatprep.subr.bf16.mxu0 0
        %7192 = vmatpush1.bf16.xpose.msra.mxu0 0
        %7193 = vmatprep.subr.bf16.mxu0 0
        %7194 = vmatpush1.bf16.xpose.msra.mxu0 0
        %7195 = vmatprep.subr.bf16.mxu0 0
        %7196 = vmatpush1.bf16.xpose.msra.mxu0 0
        %7197 = vmatprep.subr.bf16.mxu0 0
        %7198 = vmatpush1.bf16.xpose.msra.mxu0 0
        %7199 = vmatprep.mubr.bf16.mxu0 0
        %7200 = vmatmul.mubr.bf16.gmra.mrb[0].mxu0 %v7162
        %v7201 = vpop.f32.mrb[0].mxu0
        %v7202 = vadd.f32 0.0, %v7201
        %v7203 = vpop.f32.mrb[0].mxu0
        %v7204 = vpop.f32.mrb[0].mxu0
        %v7205 = vpop.f32.mrb[0].mxu0
        %7206 = vdwg.mxu0
        %v7208 = vsel %vm4948, %v7040, 0
        %v7211 = vsel %vm4948, %v7056, 0
        %7213 = vmatprep.subr.bf16.mxu0 0
        %7214 = vmatpush1.bf16.xpose.msra.mxu0 %v7211
        %7215 = vmatprep.subr.bf16.mxu0 0
        %7216 = vmatpush1.bf16.xpose.msra.mxu0 0
        %7217 = vmatprep.subr.bf16.mxu0 0
        %7218 = vmatpush1.bf16.xpose.msra.mxu0 0
        %7219 = vmatprep.subr.bf16.mxu0 0
        %7220 = vmatpush1.bf16.xpose.msra.mxu0 0
        %7221 = vmatprep.subr.bf16.mxu0 0
        %7222 = vmatpush1.bf16.xpose.msra.mxu0 0
        %7223 = vmatprep.subr.bf16.mxu0 0
        %7224 = vmatpush1.bf16.xpose.msra.mxu0 0
        %7225 = vmatprep.subr.bf16.mxu0 0
        %7226 = vmatpush1.bf16.xpose.msra.mxu0 0
        %7227 = vmatprep.subr.bf16.mxu0 0
        %7228 = vmatpush1.bf16.xpose.msra.mxu0 0
        %7229 = vmatprep.subr.bf16.mxu0 0
        %7230 = vmatpush1.bf16.xpose.msra.mxu0 0
        %7231 = vmatprep.subr.bf16.mxu0 0
        %7232 = vmatpush1.bf16.xpose.msra.mxu0 0
        %7233 = vmatprep.subr.bf16.mxu0 0
        %7234 = vmatpush1.bf16.xpose.msra.mxu0 0
        %7235 = vmatprep.subr.bf16.mxu0 0
        %7236 = vmatpush1.bf16.xpose.msra.mxu0 0
        %7237 = vmatprep.subr.bf16.mxu0 0
        %7238 = vmatpush1.bf16.xpose.msra.mxu0 0
        %7239 = vmatprep.subr.bf16.mxu0 0
        %7240 = vmatpush1.bf16.xpose.msra.mxu0 0
        %7241 = vmatprep.subr.bf16.mxu0 0
        %7242 = vmatpush1.bf16.xpose.msra.mxu0 0
        %7243 = vmatprep.subr.bf16.mxu0 0
        %7244 = vmatpush1.bf16.xpose.msra.mxu0 0
        %7245 = vmatprep.mubr.bf16.mxu0 0
        %7246 = vmatmul.mubr.bf16.gmra.mrb[0].mxu0 %v7208
        %v7247 = vpop.f32.mrb[0].mxu0
        %v7248 = vadd.f32 0.0, %v7247
        %v7249 = vpop.f32.mrb[0].mxu0
        %v7250 = vpop.f32.mrb[0].mxu0
        %v7251 = vpop.f32.mrb[0].mxu0
        %7252 = vdwg.mxu0
        %v7254 = vsel %vm4948, %v7041, 0
        %v7257 = vsel %vm4948, %v7057, 0
        %7259 = vmatprep.subr.bf16.mxu0 0
        %7260 = vmatpush1.bf16.xpose.msra.mxu0 %v7257
        %7261 = vmatprep.subr.bf16.mxu0 0
        %7262 = vmatpush1.bf16.xpose.msra.mxu0 0
        %7263 = vmatprep.subr.bf16.mxu0 0
        %7264 = vmatpush1.bf16.xpose.msra.mxu0 0
        %7265 = vmatprep.subr.bf16.mxu0 0
        %7266 = vmatpush1.bf16.xpose.msra.mxu0 0
        %7267 = vmatprep.subr.bf16.mxu0 0
        %7268 = vmatpush1.bf16.xpose.msra.mxu0 0
        %7269 = vmatprep.subr.bf16.mxu0 0
        %7270 = vmatpush1.bf16.xpose.msra.mxu0 0
        %7271 = vmatprep.subr.bf16.mxu0 0
        %7272 = vmatpush1.bf16.xpose.msra.mxu0 0
        %7273 = vmatprep.subr.bf16.mxu0 0
        %7274 = vmatpush1.bf16.xpose.msra.mxu0 0
        %7275 = vmatprep.subr.bf16.mxu0 0
        %7276 = vmatpush1.bf16.xpose.msra.mxu0 0
        %7277 = vmatprep.subr.bf16.mxu0 0
        %7278 = vmatpush1.bf16.xpose.msra.mxu0 0
        %7279 = vmatprep.subr.bf16.mxu0 0
        %7280 = vmatpush1.bf16.xpose.msra.mxu0 0
        %7281 = vmatprep.subr.bf16.mxu0 0
        %7282 = vmatpush1.bf16.xpose.msra.mxu0 0
        %7283 = vmatprep.subr.bf16.mxu0 0
        %7284 = vmatpush1.bf16.xpose.msra.mxu0 0
        %7285 = vmatprep.subr.bf16.mxu0 0
        %7286 = vmatpush1.bf16.xpose.msra.mxu0 0
        %7287 = vmatprep.subr.bf16.mxu0 0
        %7288 = vmatpush1.bf16.xpose.msra.mxu0 0
        %7289 = vmatprep.subr.bf16.mxu0 0
        %7290 = vmatpush1.bf16.xpose.msra.mxu0 0
        %7291 = vmatprep.mubr.bf16.mxu0 0
        %7292 = vmatmul.mubr.bf16.gmra.mrb[0].mxu0 %v7254
        %v7293 = vpop.f32.mrb[0].mxu0
        %v7294 = vadd.f32 0.0, %v7293
        %v7295 = vpop.f32.mrb[0].mxu0
        %v7296 = vpop.f32.mrb[0].mxu0
        %v7297 = vpop.f32.mrb[0].mxu0
        %7298 = vdwg.mxu0
        %v7300 = vsel %vm4948, %v7042, 0
        %v7303 = vsel %vm4948, %v7058, 0
        %7305 = vmatprep.subr.bf16.mxu0 0
        %7306 = vmatpush1.bf16.xpose.msra.mxu0 %v7303
        %7307 = vmatprep.subr.bf16.mxu0 0
        %7308 = vmatpush1.bf16.xpose.msra.mxu0 0
        %7309 = vmatprep.subr.bf16.mxu0 0
        %7310 = vmatpush1.bf16.xpose.msra.mxu0 0
        %7311 = vmatprep.subr.bf16.mxu0 0
        %7312 = vmatpush1.bf16.xpose.msra.mxu0 0
        %7313 = vmatprep.subr.bf16.mxu0 0
        %7314 = vmatpush1.bf16.xpose.msra.mxu0 0
        %7315 = vmatprep.subr.bf16.mxu0 0
        %7316 = vmatpush1.bf16.xpose.msra.mxu0 0
        %7317 = vmatprep.subr.bf16.mxu0 0
        %7318 = vmatpush1.bf16.xpose.msra.mxu0 0
        %7319 = vmatprep.subr.bf16.mxu0 0
        %7320 = vmatpush1.bf16.xpose.msra.mxu0 0
        %7321 = vmatprep.subr.bf16.mxu0 0
        %7322 = vmatpush1.bf16.xpose.msra.mxu0 0
        %7323 = vmatprep.subr.bf16.mxu0 0
        %7324 = vmatpush1.bf16.xpose.msra.mxu0 0
        %7325 = vmatprep.subr.bf16.mxu0 0
        %7326 = vmatpush1.bf16.xpose.msra.mxu0 0
        %7327 = vmatprep.subr.bf16.mxu0 0
        %7328 = vmatpush1.bf16.xpose.msra.mxu0 0
        %7329 = vmatprep.subr.bf16.mxu0 0
        %7330 = vmatpush1.bf16.xpose.msra.mxu0 0
        %7331 = vmatprep.subr.bf16.mxu0 0
        %7332 = vmatpush1.bf16.xpose.msra.mxu0 0
        %7333 = vmatprep.subr.bf16.mxu0 0
        %7334 = vmatpush1.bf16.xpose.msra.mxu0 0
        %7335 = vmatprep.subr.bf16.mxu0 0
        %7336 = vmatpush1.bf16.xpose.msra.mxu0 0
        %7337 = vmatprep.mubr.bf16.mxu0 0
        %7338 = vmatmul.mubr.bf16.gmra.mrb[0].mxu0 %v7300
        %v7339 = vpop.f32.mrb[0].mxu0
        %v7340 = vadd.f32 0.0, %v7339
        %v7341 = vpop.f32.mrb[0].mxu0
        %v7342 = vpop.f32.mrb[0].mxu0
        %v7343 = vpop.f32.mrb[0].mxu0
        %7344 = vdwg.mxu0
        %v7346 = vsel %vm4948, %v7043, 0
        %v7349 = vsel %vm4948, %v7059, 0
        %7351 = vmatprep.subr.bf16.mxu0 0
        %7352 = vmatpush1.bf16.xpose.msra.mxu0 %v7349
        %7353 = vmatprep.subr.bf16.mxu0 0
        %7354 = vmatpush1.bf16.xpose.msra.mxu0 0
        %7355 = vmatprep.subr.bf16.mxu0 0
        %7356 = vmatpush1.bf16.xpose.msra.mxu0 0
        %7357 = vmatprep.subr.bf16.mxu0 0
        %7358 = vmatpush1.bf16.xpose.msra.mxu0 0
        %7359 = vmatprep.subr.bf16.mxu0 0
        %7360 = vmatpush1.bf16.xpose.msra.mxu0 0
        %7361 = vmatprep.subr.bf16.mxu0 0
        %7362 = vmatpush1.bf16.xpose.msra.mxu0 0
        %7363 = vmatprep.subr.bf16.mxu0 0
        %7364 = vmatpush1.bf16.xpose.msra.mxu0 0
        %7365 = vmatprep.subr.bf16.mxu0 0
        %7366 = vmatpush1.bf16.xpose.msra.mxu0 0
        %7367 = vmatprep.subr.bf16.mxu0 0
        %7368 = vmatpush1.bf16.xpose.msra.mxu0 0
        %7369 = vmatprep.subr.bf16.mxu0 0
        %7370 = vmatpush1.bf16.xpose.msra.mxu0 0
        %7371 = vmatprep.subr.bf16.mxu0 0
        %7372 = vmatpush1.bf16.xpose.msra.mxu0 0
        %7373 = vmatprep.subr.bf16.mxu0 0
        %7374 = vmatpush1.bf16.xpose.msra.mxu0 0
        %7375 = vmatprep.subr.bf16.mxu0 0
        %7376 = vmatpush1.bf16.xpose.msra.mxu0 0
        %7377 = vmatprep.subr.bf16.mxu0 0
        %7378 = vmatpush1.bf16.xpose.msra.mxu0 0
        %7379 = vmatprep.subr.bf16.mxu0 0
        %7380 = vmatpush1.bf16.xpose.msra.mxu0 0
        %7381 = vmatprep.subr.bf16.mxu0 0
        %7382 = vmatpush1.bf16.xpose.msra.mxu0 0
        %7383 = vmatprep.mubr.bf16.mxu0 0
        %7384 = vmatmul.mubr.bf16.gmra.mrb[0].mxu0 %v7346
        %v7385 = vpop.f32.mrb[0].mxu0
        %v7386 = vadd.f32 0.0, %v7385
        %v7387 = vpop.f32.mrb[0].mxu0
        %v7388 = vpop.f32.mrb[0].mxu0
        %v7389 = vpop.f32.mrb[0].mxu0
        %7390 = vdwg.mxu0
        %v7392 = vsel %vm4948, %v7044, 0
        %v7395 = vsel %vm4948, %v7060, 0
        %7397 = vmatprep.subr.bf16.mxu0 0
        %7398 = vmatpush1.bf16.xpose.msra.mxu0 %v7395
        %7399 = vmatprep.subr.bf16.mxu0 0
        %7400 = vmatpush1.bf16.xpose.msra.mxu0 0
        %7401 = vmatprep.subr.bf16.mxu0 0
        %7402 = vmatpush1.bf16.xpose.msra.mxu0 0
        %7403 = vmatprep.subr.bf16.mxu0 0
        %7404 = vmatpush1.bf16.xpose.msra.mxu0 0
        %7405 = vmatprep.subr.bf16.mxu0 0
        %7406 = vmatpush1.bf16.xpose.msra.mxu0 0
        %7407 = vmatprep.subr.bf16.mxu0 0
        %7408 = vmatpush1.bf16.xpose.msra.mxu0 0
        %7409 = vmatprep.subr.bf16.mxu0 0
        %7410 = vmatpush1.bf16.xpose.msra.mxu0 0
        %7411 = vmatprep.subr.bf16.mxu0 0
        %7412 = vmatpush1.bf16.xpose.msra.mxu0 0
        %7413 = vmatprep.subr.bf16.mxu0 0
        %7414 = vmatpush1.bf16.xpose.msra.mxu0 0
        %7415 = vmatprep.subr.bf16.mxu0 0
        %7416 = vmatpush1.bf16.xpose.msra.mxu0 0
        %7417 = vmatprep.subr.bf16.mxu0 0
        %7418 = vmatpush1.bf16.xpose.msra.mxu0 0
        %7419 = vmatprep.subr.bf16.mxu0 0
        %7420 = vmatpush1.bf16.xpose.msra.mxu0 0
        %7421 = vmatprep.subr.bf16.mxu0 0
        %7422 = vmatpush1.bf16.xpose.msra.mxu0 0
        %7423 = vmatprep.subr.bf16.mxu0 0
        %7424 = vmatpush1.bf16.xpose.msra.mxu0 0
        %7425 = vmatprep.subr.bf16.mxu0 0
        %7426 = vmatpush1.bf16.xpose.msra.mxu0 0
        %7427 = vmatprep.subr.bf16.mxu0 0
        %7428 = vmatpush1.bf16.xpose.msra.mxu0 0
        %7429 = vmatprep.mubr.bf16.mxu0 0
        %7430 = vmatmul.mubr.bf16.gmra.mrb[0].mxu0 %v7392
        %v7431 = vpop.f32.mrb[0].mxu0
        %v7432 = vadd.f32 0.0, %v7431
        %v7433 = vpop.f32.mrb[0].mxu0
        %v7434 = vpop.f32.mrb[0].mxu0
        %v7435 = vpop.f32.mrb[0].mxu0
        %7436 = vdwg.mxu0
        %v7438 = vsel %vm4948, %v7045, 0
        %v7441 = vsel %vm4948, %v7061, 0
        %7443 = vmatprep.subr.bf16.mxu0 0
        %7444 = vmatpush1.bf16.xpose.msra.mxu0 %v7441
        %7445 = vmatprep.subr.bf16.mxu0 0
        %7446 = vmatpush1.bf16.xpose.msra.mxu0 0
        %7447 = vmatprep.subr.bf16.mxu0 0
        %7448 = vmatpush1.bf16.xpose.msra.mxu0 0
        %7449 = vmatprep.subr.bf16.mxu0 0
        %7450 = vmatpush1.bf16.xpose.msra.mxu0 0
        %7451 = vmatprep.subr.bf16.mxu0 0
        %7452 = vmatpush1.bf16.xpose.msra.mxu0 0
        %7453 = vmatprep.subr.bf16.mxu0 0
        %7454 = vmatpush1.bf16.xpose.msra.mxu0 0
        %7455 = vmatprep.subr.bf16.mxu0 0
        %7456 = vmatpush1.bf16.xpose.msra.mxu0 0
        %7457 = vmatprep.subr.bf16.mxu0 0
        %7458 = vmatpush1.bf16.xpose.msra.mxu0 0
        %7459 = vmatprep.subr.bf16.mxu0 0
        %7460 = vmatpush1.bf16.xpose.msra.mxu0 0
        %7461 = vmatprep.subr.bf16.mxu0 0
        %7462 = vmatpush1.bf16.xpose.msra.mxu0 0
        %7463 = vmatprep.subr.bf16.mxu0 0
        %7464 = vmatpush1.bf16.xpose.msra.mxu0 0
        %7465 = vmatprep.subr.bf16.mxu0 0
        %7466 = vmatpush1.bf16.xpose.msra.mxu0 0
        %7467 = vmatprep.subr.bf16.mxu0 0
        %7468 = vmatpush1.bf16.xpose.msra.mxu0 0
        %7469 = vmatprep.subr.bf16.mxu0 0
        %7470 = vmatpush1.bf16.xpose.msra.mxu0 0
        %7471 = vmatprep.subr.bf16.mxu0 0
        %7472 = vmatpush1.bf16.xpose.msra.mxu0 0
        %7473 = vmatprep.subr.bf16.mxu0 0
        %7474 = vmatpush1.bf16.xpose.msra.mxu0 0
        %7475 = vmatprep.mubr.bf16.mxu0 0
        %7476 = vmatmul.mubr.bf16.gmra.mrb[0].mxu0 %v7438
        %v7477 = vpop.f32.mrb[0].mxu0
        %v7478 = vadd.f32 0.0, %v7477
        %v7479 = vpop.f32.mrb[0].mxu0
        %v7480 = vpop.f32.mrb[0].mxu0
        %v7481 = vpop.f32.mrb[0].mxu0
        %7482 = vdwg.mxu0
        %v7484 = vsel %vm4948, %v7046, 0
        %v7487 = vsel %vm4948, %v7062, 0
        %7489 = vmatprep.subr.bf16.mxu0 0
        %7490 = vmatpush1.bf16.xpose.msra.mxu0 %v7487
        %7491 = vmatprep.subr.bf16.mxu0 0
        %7492 = vmatpush1.bf16.xpose.msra.mxu0 0
        %7493 = vmatprep.subr.bf16.mxu0 0
        %7494 = vmatpush1.bf16.xpose.msra.mxu0 0
        %7495 = vmatprep.subr.bf16.mxu0 0
        %7496 = vmatpush1.bf16.xpose.msra.mxu0 0
        %7497 = vmatprep.subr.bf16.mxu0 0
        %7498 = vmatpush1.bf16.xpose.msra.mxu0 0
        %7499 = vmatprep.subr.bf16.mxu0 0
        %7500 = vmatpush1.bf16.xpose.msra.mxu0 0
        %7501 = vmatprep.subr.bf16.mxu0 0
        %7502 = vmatpush1.bf16.xpose.msra.mxu0 0
        %7503 = vmatprep.subr.bf16.mxu0 0
        %7504 = vmatpush1.bf16.xpose.msra.mxu0 0
        %7505 = vmatprep.subr.bf16.mxu0 0
        %7506 = vmatpush1.bf16.xpose.msra.mxu0 0
        %7507 = vmatprep.subr.bf16.mxu0 0
        %7508 = vmatpush1.bf16.xpose.msra.mxu0 0
        %7509 = vmatprep.subr.bf16.mxu0 0
        %7510 = vmatpush1.bf16.xpose.msra.mxu0 0
        %7511 = vmatprep.subr.bf16.mxu0 0
        %7512 = vmatpush1.bf16.xpose.msra.mxu0 0
        %7513 = vmatprep.subr.bf16.mxu0 0
        %7514 = vmatpush1.bf16.xpose.msra.mxu0 0
        %7515 = vmatprep.subr.bf16.mxu0 0
        %7516 = vmatpush1.bf16.xpose.msra.mxu0 0
        %7517 = vmatprep.subr.bf16.mxu0 0
        %7518 = vmatpush1.bf16.xpose.msra.mxu0 0
        %7519 = vmatprep.subr.bf16.mxu0 0
        %7520 = vmatpush1.bf16.xpose.msra.mxu0 0
        %7521 = vmatprep.mubr.bf16.mxu0 0
        %7522 = vmatmul.mubr.bf16.gmra.mrb[0].mxu0 %v7484
        %v7523 = vpop.f32.mrb[0].mxu0
        %v7524 = vadd.f32 0.0, %v7523
        %v7525 = vpop.f32.mrb[0].mxu0
        %v7526 = vpop.f32.mrb[0].mxu0
        %v7527 = vpop.f32.mrb[0].mxu0
        %7528 = vdwg.mxu0
        %v7530 = vsel %vm4948, %v7047, 0
        %v7533 = vsel %vm4948, %v7063, 0
        %7535 = vmatprep.subr.bf16.mxu0 0
        %7536 = vmatpush1.bf16.xpose.msra.mxu0 %v7533
        %7537 = vmatprep.subr.bf16.mxu0 0
        %7538 = vmatpush1.bf16.xpose.msra.mxu0 0
        %7539 = vmatprep.subr.bf16.mxu0 0
        %7540 = vmatpush1.bf16.xpose.msra.mxu0 0
        %7541 = vmatprep.subr.bf16.mxu0 0
        %7542 = vmatpush1.bf16.xpose.msra.mxu0 0
        %7543 = vmatprep.subr.bf16.mxu0 0
        %7544 = vmatpush1.bf16.xpose.msra.mxu0 0
        %7545 = vmatprep.subr.bf16.mxu0 0
        %7546 = vmatpush1.bf16.xpose.msra.mxu0 0
        %7547 = vmatprep.subr.bf16.mxu0 0
        %7548 = vmatpush1.bf16.xpose.msra.mxu0 0
        %7549 = vmatprep.subr.bf16.mxu0 0
        %7550 = vmatpush1.bf16.xpose.msra.mxu0 0
        %7551 = vmatprep.subr.bf16.mxu0 0
        %7552 = vmatpush1.bf16.xpose.msra.mxu0 0
        %7553 = vmatprep.subr.bf16.mxu0 0
        %7554 = vmatpush1.bf16.xpose.msra.mxu0 0
        %7555 = vmatprep.subr.bf16.mxu0 0
        %7556 = vmatpush1.bf16.xpose.msra.mxu0 0
        %7557 = vmatprep.subr.bf16.mxu0 0
        %7558 = vmatpush1.bf16.xpose.msra.mxu0 0
        %7559 = vmatprep.subr.bf16.mxu0 0
        %7560 = vmatpush1.bf16.xpose.msra.mxu0 0
        %7561 = vmatprep.subr.bf16.mxu0 0
        %7562 = vmatpush1.bf16.xpose.msra.mxu0 0
        %7563 = vmatprep.subr.bf16.mxu0 0
        %7564 = vmatpush1.bf16.xpose.msra.mxu0 0
        %7565 = vmatprep.subr.bf16.mxu0 0
        %7566 = vmatpush1.bf16.xpose.msra.mxu0 0
        %7567 = vmatprep.mubr.bf16.mxu0 0
        %7568 = vmatmul.mubr.bf16.gmra.mrb[0].mxu0 %v7530
        %v7569 = vpop.f32.mrb[0].mxu0
        %v7570 = vadd.f32 0.0, %v7569
        %v7571 = vpop.f32.mrb[0].mxu0
        %v7572 = vpop.f32.mrb[0].mxu0
        %v7573 = vpop.f32.mrb[0].mxu0
        %7574 = vdwg.mxu0
        %v7576 = vsel %vm4948, %v7048, 0
        %v7579 = vsel %vm4948, %v7064, 0
        %7581 = vmatprep.subr.bf16.mxu0 0
        %7582 = vmatpush1.bf16.xpose.msra.mxu0 %v7579
        %7583 = vmatprep.subr.bf16.mxu0 0
        %7584 = vmatpush1.bf16.xpose.msra.mxu0 0
        %7585 = vmatprep.subr.bf16.mxu0 0
        %7586 = vmatpush1.bf16.xpose.msra.mxu0 0
        %7587 = vmatprep.subr.bf16.mxu0 0
        %7588 = vmatpush1.bf16.xpose.msra.mxu0 0
        %7589 = vmatprep.subr.bf16.mxu0 0
        %7590 = vmatpush1.bf16.xpose.msra.mxu0 0
        %7591 = vmatprep.subr.bf16.mxu0 0
        %7592 = vmatpush1.bf16.xpose.msra.mxu0 0
        %7593 = vmatprep.subr.bf16.mxu0 0
        %7594 = vmatpush1.bf16.xpose.msra.mxu0 0
        %7595 = vmatprep.subr.bf16.mxu0 0
        %7596 = vmatpush1.bf16.xpose.msra.mxu0 0
        %7597 = vmatprep.subr.bf16.mxu0 0
        %7598 = vmatpush1.bf16.xpose.msra.mxu0 0
        %7599 = vmatprep.subr.bf16.mxu0 0
        %7600 = vmatpush1.bf16.xpose.msra.mxu0 0
        %7601 = vmatprep.subr.bf16.mxu0 0
        %7602 = vmatpush1.bf16.xpose.msra.mxu0 0
        %7603 = vmatprep.subr.bf16.mxu0 0
        %7604 = vmatpush1.bf16.xpose.msra.mxu0 0
        %7605 = vmatprep.subr.bf16.mxu0 0
        %7606 = vmatpush1.bf16.xpose.msra.mxu0 0
        %7607 = vmatprep.subr.bf16.mxu0 0
        %7608 = vmatpush1.bf16.xpose.msra.mxu0 0
        %7609 = vmatprep.subr.bf16.mxu0 0
        %7610 = vmatpush1.bf16.xpose.msra.mxu0 0
        %7611 = vmatprep.subr.bf16.mxu0 0
        %7612 = vmatpush1.bf16.xpose.msra.mxu0 0
        %7613 = vmatprep.mubr.bf16.mxu0 0
        %7614 = vmatmul.mubr.bf16.gmra.mrb[0].mxu0 %v7576
        %v7615 = vpop.f32.mrb[0].mxu0
        %v7616 = vadd.f32 0.0, %v7615
        %v7617 = vpop.f32.mrb[0].mxu0
        %v7618 = vpop.f32.mrb[0].mxu0
        %v7619 = vpop.f32.mrb[0].mxu0
        %7620 = vdwg.mxu0
        %v7622 = vsel %vm4948, %v7049, 0
        %v7625 = vsel %vm4948, %v7065, 0
        %7627 = vmatprep.subr.bf16.mxu0 0
        %7628 = vmatpush1.bf16.xpose.msra.mxu0 %v7625
        %7629 = vmatprep.subr.bf16.mxu0 0
        %7630 = vmatpush1.bf16.xpose.msra.mxu0 0
        %7631 = vmatprep.subr.bf16.mxu0 0
        %7632 = vmatpush1.bf16.xpose.msra.mxu0 0
        %7633 = vmatprep.subr.bf16.mxu0 0
        %7634 = vmatpush1.bf16.xpose.msra.mxu0 0
        %7635 = vmatprep.subr.bf16.mxu0 0
        %7636 = vmatpush1.bf16.xpose.msra.mxu0 0
        %7637 = vmatprep.subr.bf16.mxu0 0
        %7638 = vmatpush1.bf16.xpose.msra.mxu0 0
        %7639 = vmatprep.subr.bf16.mxu0 0
        %7640 = vmatpush1.bf16.xpose.msra.mxu0 0
        %7641 = vmatprep.subr.bf16.mxu0 0
        %7642 = vmatpush1.bf16.xpose.msra.mxu0 0
        %7643 = vmatprep.subr.bf16.mxu0 0
        %7644 = vmatpush1.bf16.xpose.msra.mxu0 0
        %7645 = vmatprep.subr.bf16.mxu0 0
        %7646 = vmatpush1.bf16.xpose.msra.mxu0 0
        %7647 = vmatprep.subr.bf16.mxu0 0
        %7648 = vmatpush1.bf16.xpose.msra.mxu0 0
        %7649 = vmatprep.subr.bf16.mxu0 0
        %7650 = vmatpush1.bf16.xpose.msra.mxu0 0
        %7651 = vmatprep.subr.bf16.mxu0 0
        %7652 = vmatpush1.bf16.xpose.msra.mxu0 0
        %7653 = vmatprep.subr.bf16.mxu0 0
        %7654 = vmatpush1.bf16.xpose.msra.mxu0 0
        %7655 = vmatprep.subr.bf16.mxu0 0
        %7656 = vmatpush1.bf16.xpose.msra.mxu0 0
        %7657 = vmatprep.subr.bf16.mxu0 0
        %7658 = vmatpush1.bf16.xpose.msra.mxu0 0
        %7659 = vmatprep.mubr.bf16.mxu0 0
        %7660 = vmatmul.mubr.bf16.gmra.mrb[0].mxu0 %v7622
        %v7661 = vpop.f32.mrb[0].mxu0
        %v7662 = vadd.f32 0.0, %v7661
        %v7663 = vpop.f32.mrb[0].mxu0
        %v7664 = vpop.f32.mrb[0].mxu0
        %v7665 = vpop.f32.mrb[0].mxu0
        %7666 = vdwg.mxu0
        %v7668 = vsel %vm4948, %v7050, 0
        %v7671 = vsel %vm4948, %v7066, 0
        %7673 = vmatprep.subr.bf16.mxu0 0
        %7674 = vmatpush1.bf16.xpose.msra.mxu0 %v7671
        %7675 = vmatprep.subr.bf16.mxu0 0
        %7676 = vmatpush1.bf16.xpose.msra.mxu0 0
        %7677 = vmatprep.subr.bf16.mxu0 0
        %7678 = vmatpush1.bf16.xpose.msra.mxu0 0
        %7679 = vmatprep.subr.bf16.mxu0 0
        %7680 = vmatpush1.bf16.xpose.msra.mxu0 0
        %7681 = vmatprep.subr.bf16.mxu0 0
        %7682 = vmatpush1.bf16.xpose.msra.mxu0 0
        %7683 = vmatprep.subr.bf16.mxu0 0
        %7684 = vmatpush1.bf16.xpose.msra.mxu0 0
        %7685 = vmatprep.subr.bf16.mxu0 0
        %7686 = vmatpush1.bf16.xpose.msra.mxu0 0
        %7687 = vmatprep.subr.bf16.mxu0 0
        %7688 = vmatpush1.bf16.xpose.msra.mxu0 0
        %7689 = vmatprep.subr.bf16.mxu0 0
        %7690 = vmatpush1.bf16.xpose.msra.mxu0 0
        %7691 = vmatprep.subr.bf16.mxu0 0
        %7692 = vmatpush1.bf16.xpose.msra.mxu0 0
        %7693 = vmatprep.subr.bf16.mxu0 0
        %7694 = vmatpush1.bf16.xpose.msra.mxu0 0
        %7695 = vmatprep.subr.bf16.mxu0 0
        %7696 = vmatpush1.bf16.xpose.msra.mxu0 0
        %7697 = vmatprep.subr.bf16.mxu0 0
        %7698 = vmatpush1.bf16.xpose.msra.mxu0 0
        %7699 = vmatprep.subr.bf16.mxu0 0
        %7700 = vmatpush1.bf16.xpose.msra.mxu0 0
        %7701 = vmatprep.subr.bf16.mxu0 0
        %7702 = vmatpush1.bf16.xpose.msra.mxu0 0
        %7703 = vmatprep.subr.bf16.mxu0 0
        %7704 = vmatpush1.bf16.xpose.msra.mxu0 0
        %7705 = vmatprep.mubr.bf16.mxu0 0
        %7706 = vmatmul.mubr.bf16.gmra.mrb[0].mxu0 %v7668
        %v7707 = vpop.f32.mrb[0].mxu0
        %v7708 = vadd.f32 0.0, %v7707
        %v7709 = vpop.f32.mrb[0].mxu0
        %v7710 = vpop.f32.mrb[0].mxu0
        %v7711 = vpop.f32.mrb[0].mxu0
        %7712 = vdwg.mxu0
        %v7714 = vsel %vm4948, %v7051, 0
        %v7717 = vsel %vm4948, %v7067, 0
        %7719 = vmatprep.subr.bf16.mxu0 0
        %7720 = vmatpush1.bf16.xpose.msra.mxu0 %v7717
        %7721 = vmatprep.subr.bf16.mxu0 0
        %7722 = vmatpush1.bf16.xpose.msra.mxu0 0
        %7723 = vmatprep.subr.bf16.mxu0 0
        %7724 = vmatpush1.bf16.xpose.msra.mxu0 0
        %7725 = vmatprep.subr.bf16.mxu0 0
        %7726 = vmatpush1.bf16.xpose.msra.mxu0 0
        %7727 = vmatprep.subr.bf16.mxu0 0
        %7728 = vmatpush1.bf16.xpose.msra.mxu0 0
        %7729 = vmatprep.subr.bf16.mxu0 0
        %7730 = vmatpush1.bf16.xpose.msra.mxu0 0
        %7731 = vmatprep.subr.bf16.mxu0 0
        %7732 = vmatpush1.bf16.xpose.msra.mxu0 0
        %7733 = vmatprep.subr.bf16.mxu0 0
        %7734 = vmatpush1.bf16.xpose.msra.mxu0 0
        %7735 = vmatprep.subr.bf16.mxu0 0
        %7736 = vmatpush1.bf16.xpose.msra.mxu0 0
        %7737 = vmatprep.subr.bf16.mxu0 0
        %7738 = vmatpush1.bf16.xpose.msra.mxu0 0
        %7739 = vmatprep.subr.bf16.mxu0 0
        %7740 = vmatpush1.bf16.xpose.msra.mxu0 0
        %7741 = vmatprep.subr.bf16.mxu0 0
        %7742 = vmatpush1.bf16.xpose.msra.mxu0 0
        %7743 = vmatprep.subr.bf16.mxu0 0
        %7744 = vmatpush1.bf16.xpose.msra.mxu0 0
        %7745 = vmatprep.subr.bf16.mxu0 0
        %7746 = vmatpush1.bf16.xpose.msra.mxu0 0
        %7747 = vmatprep.subr.bf16.mxu0 0
        %7748 = vmatpush1.bf16.xpose.msra.mxu0 0
        %7749 = vmatprep.subr.bf16.mxu0 0
        %7750 = vmatpush1.bf16.xpose.msra.mxu0 0
        %7751 = vmatprep.mubr.bf16.mxu0 0
        %7752 = vmatmul.mubr.bf16.gmra.mrb[0].mxu0 %v7714
        %v7753 = vpop.f32.mrb[0].mxu0
        %v7754 = vadd.f32 0.0, %v7753
        %v7755 = vpop.f32.mrb[0].mxu0
        %v7756 = vpop.f32.mrb[0].mxu0
        %v7757 = vpop.f32.mrb[0].mxu0
        %7758 = vdwg.mxu0
        %v7760 = vsel %vm4948, %v7052, 0
        %v7763 = vsel %vm4948, %v7068, 0
        %7765 = vmatprep.subr.bf16.mxu0 0
        %7766 = vmatpush1.bf16.xpose.msra.mxu0 %v7763
        %7767 = vmatprep.subr.bf16.mxu0 0
        %7768 = vmatpush1.bf16.xpose.msra.mxu0 0
        %7769 = vmatprep.subr.bf16.mxu0 0
        %7770 = vmatpush1.bf16.xpose.msra.mxu0 0
        %7771 = vmatprep.subr.bf16.mxu0 0
        %7772 = vmatpush1.bf16.xpose.msra.mxu0 0
        %7773 = vmatprep.subr.bf16.mxu0 0
        %7774 = vmatpush1.bf16.xpose.msra.mxu0 0
        %7775 = vmatprep.subr.bf16.mxu0 0
        %7776 = vmatpush1.bf16.xpose.msra.mxu0 0
        %7777 = vmatprep.subr.bf16.mxu0 0
        %7778 = vmatpush1.bf16.xpose.msra.mxu0 0
        %7779 = vmatprep.subr.bf16.mxu0 0
        %7780 = vmatpush1.bf16.xpose.msra.mxu0 0
        %7781 = vmatprep.subr.bf16.mxu0 0
        %7782 = vmatpush1.bf16.xpose.msra.mxu0 0
        %7783 = vmatprep.subr.bf16.mxu0 0
        %7784 = vmatpush1.bf16.xpose.msra.mxu0 0
        %7785 = vmatprep.subr.bf16.mxu0 0
        %7786 = vmatpush1.bf16.xpose.msra.mxu0 0
        %7787 = vmatprep.subr.bf16.mxu0 0
        %7788 = vmatpush1.bf16.xpose.msra.mxu0 0
        %7789 = vmatprep.subr.bf16.mxu0 0
        %7790 = vmatpush1.bf16.xpose.msra.mxu0 0
        %7791 = vmatprep.subr.bf16.mxu0 0
        %7792 = vmatpush1.bf16.xpose.msra.mxu0 0
        %7793 = vmatprep.subr.bf16.mxu0 0
        %7794 = vmatpush1.bf16.xpose.msra.mxu0 0
        %7795 = vmatprep.subr.bf16.mxu0 0
        %7796 = vmatpush1.bf16.xpose.msra.mxu0 0
        %7797 = vmatprep.mubr.bf16.mxu0 0
        %7798 = vmatmul.mubr.bf16.gmra.mrb[0].mxu0 %v7760
        %v7799 = vpop.f32.mrb[0].mxu0
        %v7800 = vadd.f32 0.0, %v7799
        %v7801 = vpop.f32.mrb[0].mxu0
        %v7802 = vpop.f32.mrb[0].mxu0
        %v7803 = vpop.f32.mrb[0].mxu0
        %7804 = vdwg.mxu0
        %v7805 = vmul.f32 %v7110, 0.28867513
        %v7806 = vmul.f32 %v7156, 0.28867513
        %v7807 = vmul.f32 %v7202, 0.28867513
        %v7808 = vmul.f32 %v7248, 0.28867513
        %v7809 = vmul.f32 %v7294, 0.28867513
        %v7810 = vmul.f32 %v7340, 0.28867513
        %v7811 = vmul.f32 %v7386, 0.28867513
        %v7812 = vmul.f32 %v7432, 0.28867513
        %v7813 = vmul.f32 %v7478, 0.28867513
        %v7814 = vmul.f32 %v7524, 0.28867513
        %v7815 = vmul.f32 %v7570, 0.28867513
        %v7816 = vmul.f32 %v7616, 0.28867513
        %v7817 = vmul.f32 %v7662, 0.28867513
        %v7818 = vmul.f32 %v7708, 0.28867513
        %v7819 = vmul.f32 %v7754, 0.28867513
        %v7820 = vmul.f32 %v7800, 0.28867513
        %v7821 = vld [vmem:[%s267] sm:$0xf]
        %v7824 = vunpack.c.l.s4 1966171168
        %v7825 = vunpack.c.0.s8 %v7824
        %v7826 = vlaneseq
        %v7827 = vshrl.u32 %v7826, 7
        %v7828 = vsub.s32 %v7825, %v7827
        %v7829 = vrot.slane %v7821, %v7828
        %v7830 = vcombine.high %v7829, %v7829
        %v7832 = vunpack.c.l.s4 1966171168
        %v7833 = vunpack.c.0.s8 %v7832
        %v7834 = vlaneseq
        %v7835 = vshrl.u32 %v7834, 7
        %v7836 = vsub.s32 %v7833, %v7835
        %v7837 = vrot.slane %v7829, %v7836
        %v7839 = vunpack.c.l.s4 1966171168
        %v7840 = vunpack.c.0.s8 %v7839
        %v7841 = vlaneseq
        %v7842 = vshrl.u32 %v7841, 7
        %v7843 = vsub.s32 %v7840, %v7842
        %v7844 = vrot.slane %v7830, %v7843
        %v7845 = vcombine.high %v7837, %v7837
        %v7846 = vcombine.high %v7844, %v7844
        %v7847 = vlaneseq
        %v7848 = vshrl.u32 %v7847, 7
        %v7849 = vsub.s32 0, %v7848
        %v7850 = vrot.slane %v7837, %v7849
        %v7851 = vlaneseq
        %v7852 = vshrl.u32 %v7851, 7
        %v7853 = vsub.s32 0, %v7852
        %v7854 = vrot.slane %v7844, %v7853
        %v7855 = vlaneseq
        %v7856 = vshrl.u32 %v7855, 7
        %v7857 = vsub.s32 0, %v7856
        %v7858 = vrot.slane %v7845, %v7857
        %v7859 = vlaneseq
        %v7860 = vshrl.u32 %v7859, 7
        %v7861 = vsub.s32 0, %v7860
        %v7862 = vrot.slane %v7846, %v7861
        %v7864 = vunpack.c.l.s4 1966171168
        %v7865 = vunpack.c.0.s8 %v7864
        %v7866 = vlaneseq
        %v7867 = vshrl.u32 %v7866, 7
        %v7868 = vsub.s32 %v7865, %v7867
        %v7869 = vrot.slane %v7850, %v7868
        %v7870 = vcombine.high %v7869, %v7869
        %v7872 = vunpack.c.l.s4 1966171168
        %v7873 = vunpack.c.0.s8 %v7872
        %v7874 = vlaneseq
        %v7875 = vshrl.u32 %v7874, 7
        %v7876 = vsub.s32 %v7873, %v7875
        %v7877 = vrot.slane %v7869, %v7876
        %v7879 = vunpack.c.l.s4 1966171168
        %v7880 = vunpack.c.0.s8 %v7879
        %v7881 = vlaneseq
        %v7882 = vshrl.u32 %v7881, 7
        %v7883 = vsub.s32 %v7880, %v7882
        %v7884 = vrot.slane %v7870, %v7883
        %v7885 = vcombine.high %v7877, %v7877
        %v7886 = vcombine.high %v7884, %v7884
        %v7888 = vunpack.c.l.s4 1966171168
        %v7889 = vunpack.c.0.s8 %v7888
        %v7890 = vlaneseq
        %v7891 = vshrl.u32 %v7890, 7
        %v7892 = vsub.s32 %v7889, %v7891
        %v7893 = vrot.slane %v7854, %v7892
        %v7894 = vcombine.high %v7893, %v7893
        %v7896 = vunpack.c.l.s4 1966171168
        %v7897 = vunpack.c.0.s8 %v7896
        %v7898 = vlaneseq
        %v7899 = vshrl.u32 %v7898, 7
        %v7900 = vsub.s32 %v7897, %v7899
        %v7901 = vrot.slane %v7893, %v7900
        %v7903 = vunpack.c.l.s4 1966171168
        %v7904 = vunpack.c.0.s8 %v7903
        %v7905 = vlaneseq
        %v7906 = vshrl.u32 %v7905, 7
        %v7907 = vsub.s32 %v7904, %v7906
        %v7908 = vrot.slane %v7894, %v7907
        %v7909 = vcombine.high %v7901, %v7901
        %v7910 = vcombine.high %v7908, %v7908
        %v7912 = vunpack.c.l.s4 1966171168
        %v7913 = vunpack.c.0.s8 %v7912
        %v7914 = vlaneseq
        %v7915 = vshrl.u32 %v7914, 7
        %v7916 = vsub.s32 %v7913, %v7915
        %v7917 = vrot.slane %v7858, %v7916
        %v7918 = vcombine.high %v7917, %v7917
        %v7920 = vunpack.c.l.s4 1966171168
        %v7921 = vunpack.c.0.s8 %v7920
        %v7922 = vlaneseq
        %v7923 = vshrl.u32 %v7922, 7
        %v7924 = vsub.s32 %v7921, %v7923
        %v7925 = vrot.slane %v7917, %v7924
        %v7927 = vunpack.c.l.s4 1966171168
        %v7928 = vunpack.c.0.s8 %v7927
        %v7929 = vlaneseq
        %v7930 = vshrl.u32 %v7929, 7
        %v7931 = vsub.s32 %v7928, %v7930
        %v7932 = vrot.slane %v7918, %v7931
        %v7933 = vcombine.high %v7925, %v7925
        %v7934 = vcombine.high %v7932, %v7932
        %v7936 = vunpack.c.l.s4 1966171168
        %v7937 = vunpack.c.0.s8 %v7936
        %v7938 = vlaneseq
        %v7939 = vshrl.u32 %v7938, 7
        %v7940 = vsub.s32 %v7937, %v7939
        %v7941 = vrot.slane %v7862, %v7940
        %v7942 = vcombine.high %v7941, %v7941
        %v7944 = vunpack.c.l.s4 1966171168
        %v7945 = vunpack.c.0.s8 %v7944
        %v7946 = vlaneseq
        %v7947 = vshrl.u32 %v7946, 7
        %v7948 = vsub.s32 %v7945, %v7947
        %v7949 = vrot.slane %v7941, %v7948
        %v7951 = vunpack.c.l.s4 1966171168
        %v7952 = vunpack.c.0.s8 %v7951
        %v7953 = vlaneseq
        %v7954 = vshrl.u32 %v7953, 7
        %v7955 = vsub.s32 %v7952, %v7954
        %v7956 = vrot.slane %v7942, %v7955
        %v7957 = vcombine.high %v7949, %v7949
        %v7958 = vcombine.high %v7956, %v7956
        %v7959 = vlaneseq
        %v7960 = vshrl.u32 %v7959, 7
        %v7961 = vsub.s32 0, %v7960
        %v7962 = vrot.slane %v7877, %v7961
        %v7963 = vlaneseq
        %v7964 = vshrl.u32 %v7963, 7
        %v7965 = vsub.s32 0, %v7964
        %v7966 = vrot.slane %v7884, %v7965
        %v7967 = vlaneseq
        %v7968 = vshrl.u32 %v7967, 7
        %v7969 = vsub.s32 0, %v7968
        %v7970 = vrot.slane %v7885, %v7969
        %v7971 = vlaneseq
        %v7972 = vshrl.u32 %v7971, 7
        %v7973 = vsub.s32 0, %v7972
        %v7974 = vrot.slane %v7886, %v7973
        %v7975 = vlaneseq
        %v7976 = vshrl.u32 %v7975, 7
        %v7977 = vsub.s32 0, %v7976
        %v7978 = vrot.slane %v7901, %v7977
        %v7979 = vlaneseq
        %v7980 = vshrl.u32 %v7979, 7
        %v7981 = vsub.s32 0, %v7980
        %v7982 = vrot.slane %v7908, %v7981
        %v7983 = vlaneseq
        %v7984 = vshrl.u32 %v7983, 7
        %v7985 = vsub.s32 0, %v7984
        %v7986 = vrot.slane %v7909, %v7985
        %v7987 = vlaneseq
        %v7988 = vshrl.u32 %v7987, 7
        %v7989 = vsub.s32 0, %v7988
        %v7990 = vrot.slane %v7910, %v7989
        %v7991 = vlaneseq
        %v7992 = vshrl.u32 %v7991, 7
        %v7993 = vsub.s32 0, %v7992
        %v7994 = vrot.slane %v7925, %v7993
        %v7995 = vlaneseq
        %v7996 = vshrl.u32 %v7995, 7
        %v7997 = vsub.s32 0, %v7996
        %v7998 = vrot.slane %v7932, %v7997
        %v7999 = vlaneseq
        %v8000 = vshrl.u32 %v7999, 7
        %v8001 = vsub.s32 0, %v8000
        %v8002 = vrot.slane %v7933, %v8001
        %v8003 = vlaneseq
        %v8004 = vshrl.u32 %v8003, 7
        %v8005 = vsub.s32 0, %v8004
        %v8006 = vrot.slane %v7934, %v8005
        %v8007 = vlaneseq
        %v8008 = vshrl.u32 %v8007, 7
        %v8009 = vsub.s32 0, %v8008
        %v8010 = vrot.slane %v7949, %v8009
        %v8011 = vlaneseq
        %v8012 = vshrl.u32 %v8011, 7
        %v8013 = vsub.s32 0, %v8012
        %v8014 = vrot.slane %v7956, %v8013
        %v8015 = vlaneseq
        %v8016 = vshrl.u32 %v8015, 7
        %v8017 = vsub.s32 0, %v8016
        %v8018 = vrot.slane %v7957, %v8017
        %v8019 = vlaneseq
        %v8020 = vshrl.u32 %v8019, 7
        %v8021 = vsub.s32 0, %v8020
        %v8022 = vrot.slane %v7958, %v8021
        %v8039 = vadd.f32 %v7805, %v7962
        %v8040 = vadd.f32 %v7806, %v7966
        %v8041 = vadd.f32 %v7807, %v7970
        %v8042 = vadd.f32 %v7808, %v7974
        %v8043 = vadd.f32 %v7809, %v7978
        %v8044 = vadd.f32 %v7810, %v7982
        %v8045 = vadd.f32 %v7811, %v7986
        %v8046 = vadd.f32 %v7812, %v7990
        %v8047 = vadd.f32 %v7813, %v7994
        %v8048 = vadd.f32 %v7814, %v7998
        %v8049 = vadd.f32 %v7815, %v8002
        %v8050 = vadd.f32 %v7816, %v8006
        %v8051 = vadd.f32 %v7817, %v8010
        %v8052 = vadd.f32 %v7818, %v8014
        %v8053 = vadd.f32 %v7819, %v8018
        %v8054 = vadd.f32 %v7820, %v8022
        %v8055 = vsel %vm4943, %v8039, -inf
        %8056 = vmax.xlane.f32.xlu0 %v8055
        %v8057 = vpop.xlane.xlu0 %8056
        %v8058 = vsel %vm4943, %v8040, -inf
        %8059 = vmax.xlane.f32.xlu0 %v8058
        %v8060 = vpop.xlane.xlu0 %8059
        %v8061 = vsel %vm4943, %v8041, -inf
        %8062 = vmax.xlane.f32.xlu0 %v8061
        %v8063 = vpop.xlane.xlu0 %8062
        %v8064 = vsel %vm4943, %v8042, -inf
        %8065 = vmax.xlane.f32.xlu0 %v8064
        %v8066 = vpop.xlane.xlu0 %8065
        %v8067 = vsel %vm4943, %v8043, -inf
        %8068 = vmax.xlane.f32.xlu0 %v8067
        %v8069 = vpop.xlane.xlu0 %8068
        %v8070 = vsel %vm4943, %v8044, -inf
        %8071 = vmax.xlane.f32.xlu0 %v8070
        %v8072 = vpop.xlane.xlu0 %8071
        %v8073 = vsel %vm4943, %v8045, -inf
        %8074 = vmax.xlane.f32.xlu0 %v8073
        %v8075 = vpop.xlane.xlu0 %8074
        %v8076 = vsel %vm4943, %v8046, -inf
        %8077 = vmax.xlane.f32.xlu0 %v8076
        %v8078 = vpop.xlane.xlu0 %8077
        %v8079 = vsel %vm4943, %v8047, -inf
        %8080 = vmax.xlane.f32.xlu0 %v8079
        %v8081 = vpop.xlane.xlu0 %8080
        %v8082 = vsel %vm4943, %v8048, -inf
        %8083 = vmax.xlane.f32.xlu0 %v8082
        %v8084 = vpop.xlane.xlu0 %8083
        %v8085 = vsel %vm4943, %v8049, -inf
        %8086 = vmax.xlane.f32.xlu0 %v8085
        %v8087 = vpop.xlane.xlu0 %8086
        %v8088 = vsel %vm4943, %v8050, -inf
        %8089 = vmax.xlane.f32.xlu0 %v8088
        %v8090 = vpop.xlane.xlu0 %8089
        %v8091 = vsel %vm4943, %v8051, -inf
        %8092 = vmax.xlane.f32.xlu0 %v8091
        %v8093 = vpop.xlane.xlu0 %8092
        %v8094 = vsel %vm4943, %v8052, -inf
        %8095 = vmax.xlane.f32.xlu0 %v8094
        %v8096 = vpop.xlane.xlu0 %8095
        %v8097 = vsel %vm4943, %v8053, -inf
        %8098 = vmax.xlane.f32.xlu0 %v8097
        %v8099 = vpop.xlane.xlu0 %8098
        %v8100 = vsel %vm4943, %v8054, -inf
        %8101 = vmax.xlane.f32.xlu0 %v8100
        %v8102 = vpop.xlane.xlu0 %8101
        %v8103 = vsub.f32 %v8039, %v8057
        %v8104 = vsub.f32 %v8040, %v8060
        %v8105 = vsub.f32 %v8041, %v8063
        %v8106 = vsub.f32 %v8042, %v8066
        %v8107 = vsub.f32 %v8043, %v8069
        %v8108 = vsub.f32 %v8044, %v8072
        %v8109 = vsub.f32 %v8045, %v8075
        %v8110 = vsub.f32 %v8046, %v8078
        %v8111 = vsub.f32 %v8047, %v8081
        %v8112 = vsub.f32 %v8048, %v8084
        %v8113 = vsub.f32 %v8049, %v8087
        %v8114 = vsub.f32 %v8050, %v8090
        %v8115 = vsub.f32 %v8051, %v8093
        %v8116 = vsub.f32 %v8052, %v8096
        %v8117 = vsub.f32 %v8053, %v8099
        %v8118 = vsub.f32 %v8054, %v8102
        %v8119 = vmul.f32 %v8103, 1.442695
        %v8120 = vpow.pop %v8119
        %v8121 = vmul.f32 %v8104, 1.442695
        %v8122 = vpow.pop %v8121
        %v8123 = vmul.f32 %v8105, 1.442695
        %v8124 = vpow.pop %v8123
        %v8125 = vmul.f32 %v8106, 1.442695
        %v8126 = vpow.pop %v8125
        %v8127 = vmul.f32 %v8107, 1.442695
        %v8128 = vpow.pop %v8127
        %v8129 = vmul.f32 %v8108, 1.442695
        %v8130 = vpow.pop %v8129
        %v8131 = vmul.f32 %v8109, 1.442695
        %v8132 = vpow.pop %v8131
        %v8133 = vmul.f32 %v8110, 1.442695
        %v8134 = vpow.pop %v8133
        %v8135 = vmul.f32 %v8111, 1.442695
        %v8136 = vpow.pop %v8135
        %v8137 = vmul.f32 %v8112, 1.442695
        %v8138 = vpow.pop %v8137
        %v8139 = vmul.f32 %v8113, 1.442695
        %v8140 = vpow.pop %v8139
        %v8141 = vmul.f32 %v8114, 1.442695
        %v8142 = vpow.pop %v8141
        %v8143 = vmul.f32 %v8115, 1.442695
        %v8144 = vpow.pop %v8143
        %v8145 = vmul.f32 %v8116, 1.442695
        %v8146 = vpow.pop %v8145
        %v8147 = vmul.f32 %v8117, 1.442695
        %v8148 = vpow.pop %v8147
        %v8149 = vmul.f32 %v8118, 1.442695
        %v8150 = vpow.pop %v8149
        %v8151 = vsel %vm4943, %v8120, 0.0
        %8152 = vadd.xlane.f32.xlu0 %v8151
        %v8153 = vpop.xlane.xlu0 %8152
        %v8154 = vsel %vm4943, %v8122, 0.0
        %8155 = vadd.xlane.f32.xlu0 %v8154
        %v8156 = vpop.xlane.xlu0 %8155
        %v8157 = vsel %vm4943, %v8124, 0.0
        %8158 = vadd.xlane.f32.xlu0 %v8157
        %v8159 = vpop.xlane.xlu0 %8158
        %v8160 = vsel %vm4943, %v8126, 0.0
        %8161 = vadd.xlane.f32.xlu0 %v8160
        %v8162 = vpop.xlane.xlu0 %8161
        %v8163 = vsel %vm4943, %v8128, 0.0
        %8164 = vadd.xlane.f32.xlu0 %v8163
        %v8165 = vpop.xlane.xlu0 %8164
        %v8166 = vsel %vm4943, %v8130, 0.0
        %8167 = vadd.xlane.f32.xlu0 %v8166
        %v8168 = vpop.xlane.xlu0 %8167
        %v8169 = vsel %vm4943, %v8132, 0.0
        %8170 = vadd.xlane.f32.xlu0 %v8169
        %v8171 = vpop.xlane.xlu0 %8170
        %v8172 = vsel %vm4943, %v8134, 0.0
        %8173 = vadd.xlane.f32.xlu0 %v8172
        %v8174 = vpop.xlane.xlu0 %8173
        %v8175 = vsel %vm4943, %v8136, 0.0
        %8176 = vadd.xlane.f32.xlu0 %v8175
        %v8177 = vpop.xlane.xlu0 %8176
        %v8178 = vsel %vm4943, %v8138, 0.0
        %8179 = vadd.xlane.f32.xlu0 %v8178
        %v8180 = vpop.xlane.xlu0 %8179
        %v8181 = vsel %vm4943, %v8140, 0.0
        %8182 = vadd.xlane.f32.xlu0 %v8181
        %v8183 = vpop.xlane.xlu0 %8182
        %v8184 = vsel %vm4943, %v8142, 0.0
        %8185 = vadd.xlane.f32.xlu0 %v8184
        %v8186 = vpop.xlane.xlu0 %8185
        %v8187 = vsel %vm4943, %v8144, 0.0
        %8188 = vadd.xlane.f32.xlu0 %v8187
        %v8189 = vpop.xlane.xlu0 %8188
        %v8190 = vsel %vm4943, %v8146, 0.0
        %8191 = vadd.xlane.f32.xlu0 %v8190
        %v8192 = vpop.xlane.xlu0 %8191
        %v8193 = vsel %vm4943, %v8148, 0.0
        %8194 = vadd.xlane.f32.xlu0 %v8193
        %v8195 = vpop.xlane.xlu0 %8194
        %v8196 = vsel %vm4943, %v8150, 0.0
        %8197 = vadd.xlane.f32.xlu0 %v8196
        %v8198 = vpop.xlane.xlu0 %8197
        %v8199 = vrcp.pop %v8153
        %v8200 = vrcp.pop %v8156
        %v8201 = vrcp.pop %v8159
        %v8202 = vrcp.pop %v8162
        %v8203 = vrcp.pop %v8165
        %v8204 = vrcp.pop %v8168
        %v8205 = vrcp.pop %v8171
        %v8206 = vrcp.pop %v8174
        %v8207 = vrcp.pop %v8177
        %v8208 = vrcp.pop %v8180
        %v8209 = vrcp.pop %v8183
        %v8210 = vrcp.pop %v8186
        %v8211 = vrcp.pop %v8189
        %v8212 = vrcp.pop %v8192
        %v8213 = vrcp.pop %v8195
        %v8214 = vrcp.pop %v8198
        %v8215 = vmul.f32 %v8120, %v8199
        %v8216 = vmul.f32 %v8122, %v8200
        %v8217 = vmul.f32 %v8124, %v8201
        %v8218 = vmul.f32 %v8126, %v8202
        %v8219 = vmul.f32 %v8128, %v8203
        %v8220 = vmul.f32 %v8130, %v8204
        %v8221 = vmul.f32 %v8132, %v8205
        %v8222 = vmul.f32 %v8134, %v8206
        %v8223 = vmul.f32 %v8136, %v8207
        %v8224 = vmul.f32 %v8138, %v8208
        %v8225 = vmul.f32 %v8140, %v8209
        %v8226 = vmul.f32 %v8142, %v8210
        %v8227 = vmul.f32 %v8144, %v8211
        %v8228 = vmul.f32 %v8146, %v8212
        %v8229 = vmul.f32 %v8148, %v8213
        %v8230 = vmul.f32 %v8150, %v8214
        %v8231 = vpack.c.bf16 %v8215, %v8215
        %v8232 = vpack.c.bf16 %v8216, %v8216
        %v8233 = vpack.c.bf16 %v8217, %v8217
        %v8234 = vpack.c.bf16 %v8218, %v8218
        %v8235 = vpack.c.bf16 %v8219, %v8219
        %v8236 = vpack.c.bf16 %v8220, %v8220
        %v8237 = vpack.c.bf16 %v8221, %v8221
        %v8238 = vpack.c.bf16 %v8222, %v8222
        %v8239 = vpack.c.bf16 %v8223, %v8223
        %v8240 = vpack.c.bf16 %v8224, %v8224
        %v8241 = vpack.c.bf16 %v8225, %v8225
        %v8242 = vpack.c.bf16 %v8226, %v8226
        %v8243 = vpack.c.bf16 %v8227, %v8227
        %v8244 = vpack.c.bf16 %v8228, %v8228
        %v8245 = vpack.c.bf16 %v8229, %v8229
        %v8246 = vpack.c.bf16 %v8230, %v8230
        %v8247 = vpack.c.bf16 %v6829, %v6829
        %v8248 = vpack.c.bf16 %v6830, %v6830
        %v8249 = vpack.c.bf16 %v6831, %v6831
        %v8250 = vpack.c.bf16 %v6832, %v6832
        %v8251 = vpack.c.bf16 %v6897, %v6897
        %v8252 = vpack.c.bf16 %v6898, %v6898
        %v8253 = vpack.c.bf16 %v6899, %v6899
        %v8254 = vpack.c.bf16 %v6900, %v6900
        %v8255 = vpack.c.bf16 %v6965, %v6965
        %v8256 = vpack.c.bf16 %v6966, %v6966
        %v8257 = vpack.c.bf16 %v6967, %v6967
        %v8258 = vpack.c.bf16 %v6968, %v6968
        %v8259 = vpack.c.bf16 %v7033, %v7033
        %v8260 = vpack.c.bf16 %v7034, %v7034
        %v8261 = vpack.c.bf16 %v7035, %v7035
        %v8262 = vpack.c.bf16 %v7036, %v7036
        %v8264 = vsel %vm4943, %v8231, 0
        %vm8266 = vcmask 1043456
        %v8268 = vsel %vm8266, %v8247, 0
        %8270 = vmatprep.subr.bf16.mxu0 0
        %8271 = vmatpush1.bf16.msra.mxu0 %v8268
        %8272 = vmatprep.subr.bf16.mxu0 0
        %8273 = vmatpush1.bf16.msra.mxu0 0
        %8274 = vmatprep.subr.bf16.mxu0 0
        %8275 = vmatpush1.bf16.msra.mxu0 0
        %8276 = vmatprep.subr.bf16.mxu0 0
        %8277 = vmatpush1.bf16.msra.mxu0 0
        %8278 = vmatprep.subr.bf16.mxu0 0
        %8279 = vmatpush1.bf16.msra.mxu0 0
        %8280 = vmatprep.subr.bf16.mxu0 0
        %8281 = vmatpush1.bf16.msra.mxu0 0
        %8282 = vmatprep.subr.bf16.mxu0 0
        %8283 = vmatpush1.bf16.msra.mxu0 0
        %8284 = vmatprep.subr.bf16.mxu0 0
        %8285 = vmatpush1.bf16.msra.mxu0 0
        %8286 = vmatprep.subr.bf16.mxu0 0
        %8287 = vmatpush1.bf16.msra.mxu0 0
        %8288 = vmatprep.subr.bf16.mxu0 0
        %8289 = vmatpush1.bf16.msra.mxu0 0
        %8290 = vmatprep.subr.bf16.mxu0 0
        %8291 = vmatpush1.bf16.msra.mxu0 0
        %8292 = vmatprep.subr.bf16.mxu0 0
        %8293 = vmatpush1.bf16.msra.mxu0 0
        %8294 = vmatprep.subr.bf16.mxu0 0
        %8295 = vmatpush1.bf16.msra.mxu0 0
        %8296 = vmatprep.subr.bf16.mxu0 0
        %8297 = vmatpush1.bf16.msra.mxu0 0
        %8298 = vmatprep.subr.bf16.mxu0 0
        %8299 = vmatpush1.bf16.msra.mxu0 0
        %8300 = vmatprep.subr.bf16.mxu0 0
        %8301 = vmatpush1.bf16.msra.mxu0 0
        %8302 = vmatprep.mubr.bf16.mxu0 0
        %8303 = vmatmul.mubr.bf16.gmra.mrb[0].mxu0 %v8264
        %v8304 = vpop.f32.mrb[0].mxu0
        %v8305 = vadd.f32 0.0, %v8304
        %v8306 = vpop.f32.mrb[0].mxu0
        %v8307 = vpop.f32.mrb[0].mxu0
        %v8308 = vpop.f32.mrb[0].mxu0
        %8309 = vdwg.mxu0
        %v8311 = vsel %vm4943, %v8232, 0
        %v8314 = vsel %vm8266, %v8248, 0
        %8316 = vmatprep.subr.bf16.mxu0 0
        %8317 = vmatpush1.bf16.msra.mxu0 %v8314
        %8318 = vmatprep.subr.bf16.mxu0 0
        %8319 = vmatpush1.bf16.msra.mxu0 0
        %8320 = vmatprep.subr.bf16.mxu0 0
        %8321 = vmatpush1.bf16.msra.mxu0 0
        %8322 = vmatprep.subr.bf16.mxu0 0
        %8323 = vmatpush1.bf16.msra.mxu0 0
        %8324 = vmatprep.subr.bf16.mxu0 0
        %8325 = vmatpush1.bf16.msra.mxu0 0
        %8326 = vmatprep.subr.bf16.mxu0 0
        %8327 = vmatpush1.bf16.msra.mxu0 0
        %8328 = vmatprep.subr.bf16.mxu0 0
        %8329 = vmatpush1.bf16.msra.mxu0 0
        %8330 = vmatprep.subr.bf16.mxu0 0
        %8331 = vmatpush1.bf16.msra.mxu0 0
        %8332 = vmatprep.subr.bf16.mxu0 0
        %8333 = vmatpush1.bf16.msra.mxu0 0
        %8334 = vmatprep.subr.bf16.mxu0 0
        %8335 = vmatpush1.bf16.msra.mxu0 0
        %8336 = vmatprep.subr.bf16.mxu0 0
        %8337 = vmatpush1.bf16.msra.mxu0 0
        %8338 = vmatprep.subr.bf16.mxu0 0
        %8339 = vmatpush1.bf16.msra.mxu0 0
        %8340 = vmatprep.subr.bf16.mxu0 0
        %8341 = vmatpush1.bf16.msra.mxu0 0
        %8342 = vmatprep.subr.bf16.mxu0 0
        %8343 = vmatpush1.bf16.msra.mxu0 0
        %8344 = vmatprep.subr.bf16.mxu0 0
        %8345 = vmatpush1.bf16.msra.mxu0 0
        %8346 = vmatprep.subr.bf16.mxu0 0
        %8347 = vmatpush1.bf16.msra.mxu0 0
        %8348 = vmatprep.mubr.bf16.mxu0 0
        %8349 = vmatmul.mubr.bf16.gmra.mrb[0].mxu0 %v8311
        %v8350 = vpop.f32.mrb[0].mxu0
        %v8351 = vadd.f32 0.0, %v8350
        %v8352 = vpop.f32.mrb[0].mxu0
        %v8353 = vpop.f32.mrb[0].mxu0
        %v8354 = vpop.f32.mrb[0].mxu0
        %8355 = vdwg.mxu0
        %v8357 = vsel %vm4943, %v8233, 0
        %v8360 = vsel %vm8266, %v8249, 0
        %8362 = vmatprep.subr.bf16.mxu0 0
        %8363 = vmatpush1.bf16.msra.mxu0 %v8360
        %8364 = vmatprep.subr.bf16.mxu0 0
        %8365 = vmatpush1.bf16.msra.mxu0 0
        %8366 = vmatprep.subr.bf16.mxu0 0
        %8367 = vmatpush1.bf16.msra.mxu0 0
        %8368 = vmatprep.subr.bf16.mxu0 0
        %8369 = vmatpush1.bf16.msra.mxu0 0
        %8370 = vmatprep.subr.bf16.mxu0 0
        %8371 = vmatpush1.bf16.msra.mxu0 0
        %8372 = vmatprep.subr.bf16.mxu0 0
        %8373 = vmatpush1.bf16.msra.mxu0 0
        %8374 = vmatprep.subr.bf16.mxu0 0
        %8375 = vmatpush1.bf16.msra.mxu0 0
        %8376 = vmatprep.subr.bf16.mxu0 0
        %8377 = vmatpush1.bf16.msra.mxu0 0
        %8378 = vmatprep.subr.bf16.mxu0 0
        %8379 = vmatpush1.bf16.msra.mxu0 0
        %8380 = vmatprep.subr.bf16.mxu0 0
        %8381 = vmatpush1.bf16.msra.mxu0 0
        %8382 = vmatprep.subr.bf16.mxu0 0
        %8383 = vmatpush1.bf16.msra.mxu0 0
        %8384 = vmatprep.subr.bf16.mxu0 0
        %8385 = vmatpush1.bf16.msra.mxu0 0
        %8386 = vmatprep.subr.bf16.mxu0 0
        %8387 = vmatpush1.bf16.msra.mxu0 0
        %8388 = vmatprep.subr.bf16.mxu0 0
        %8389 = vmatpush1.bf16.msra.mxu0 0
        %8390 = vmatprep.subr.bf16.mxu0 0
        %8391 = vmatpush1.bf16.msra.mxu0 0
        %8392 = vmatprep.subr.bf16.mxu0 0
        %8393 = vmatpush1.bf16.msra.mxu0 0
        %8394 = vmatprep.mubr.bf16.mxu0 0
        %8395 = vmatmul.mubr.bf16.gmra.mrb[0].mxu0 %v8357
        %v8396 = vpop.f32.mrb[0].mxu0
        %v8397 = vadd.f32 0.0, %v8396
        %v8398 = vpop.f32.mrb[0].mxu0
        %v8399 = vpop.f32.mrb[0].mxu0
        %v8400 = vpop.f32.mrb[0].mxu0
        %8401 = vdwg.mxu0
        %v8403 = vsel %vm4943, %v8234, 0
        %v8406 = vsel %vm8266, %v8250, 0
        %8408 = vmatprep.subr.bf16.mxu0 0
        %8409 = vmatpush1.bf16.msra.mxu0 %v8406
        %8410 = vmatprep.subr.bf16.mxu0 0
        %8411 = vmatpush1.bf16.msra.mxu0 0
        %8412 = vmatprep.subr.bf16.mxu0 0
        %8413 = vmatpush1.bf16.msra.mxu0 0
        %8414 = vmatprep.subr.bf16.mxu0 0
        %8415 = vmatpush1.bf16.msra.mxu0 0
        %8416 = vmatprep.subr.bf16.mxu0 0
        %8417 = vmatpush1.bf16.msra.mxu0 0
        %8418 = vmatprep.subr.bf16.mxu0 0
        %8419 = vmatpush1.bf16.msra.mxu0 0
        %8420 = vmatprep.subr.bf16.mxu0 0
        %8421 = vmatpush1.bf16.msra.mxu0 0
        %8422 = vmatprep.subr.bf16.mxu0 0
        %8423 = vmatpush1.bf16.msra.mxu0 0
        %8424 = vmatprep.subr.bf16.mxu0 0
        %8425 = vmatpush1.bf16.msra.mxu0 0
        %8426 = vmatprep.subr.bf16.mxu0 0
        %8427 = vmatpush1.bf16.msra.mxu0 0
        %8428 = vmatprep.subr.bf16.mxu0 0
        %8429 = vmatpush1.bf16.msra.mxu0 0
        %8430 = vmatprep.subr.bf16.mxu0 0
        %8431 = vmatpush1.bf16.msra.mxu0 0
        %8432 = vmatprep.subr.bf16.mxu0 0
        %8433 = vmatpush1.bf16.msra.mxu0 0
        %8434 = vmatprep.subr.bf16.mxu0 0
        %8435 = vmatpush1.bf16.msra.mxu0 0
        %8436 = vmatprep.subr.bf16.mxu0 0
        %8437 = vmatpush1.bf16.msra.mxu0 0
        %8438 = vmatprep.subr.bf16.mxu0 0
        %8439 = vmatpush1.bf16.msra.mxu0 0
        %8440 = vmatprep.mubr.bf16.mxu0 0
        %8441 = vmatmul.mubr.bf16.gmra.mrb[0].mxu0 %v8403
        %v8442 = vpop.f32.mrb[0].mxu0
        %v8443 = vadd.f32 0.0, %v8442
        %v8444 = vpop.f32.mrb[0].mxu0
        %v8445 = vpop.f32.mrb[0].mxu0
        %v8446 = vpop.f32.mrb[0].mxu0
        %8447 = vdwg.mxu0
        %v8449 = vsel %vm4943, %v8235, 0
        %v8452 = vsel %vm8266, %v8251, 0
        %8454 = vmatprep.subr.bf16.mxu0 0
        %8455 = vmatpush1.bf16.msra.mxu0 %v8452
        %8456 = vmatprep.subr.bf16.mxu0 0
        %8457 = vmatpush1.bf16.msra.mxu0 0
        %8458 = vmatprep.subr.bf16.mxu0 0
        %8459 = vmatpush1.bf16.msra.mxu0 0
        %8460 = vmatprep.subr.bf16.mxu0 0
        %8461 = vmatpush1.bf16.msra.mxu0 0
        %8462 = vmatprep.subr.bf16.mxu0 0
        %8463 = vmatpush1.bf16.msra.mxu0 0
        %8464 = vmatprep.subr.bf16.mxu0 0
        %8465 = vmatpush1.bf16.msra.mxu0 0
        %8466 = vmatprep.subr.bf16.mxu0 0
        %8467 = vmatpush1.bf16.msra.mxu0 0
        %8468 = vmatprep.subr.bf16.mxu0 0
        %8469 = vmatpush1.bf16.msra.mxu0 0
        %8470 = vmatprep.subr.bf16.mxu0 0
        %8471 = vmatpush1.bf16.msra.mxu0 0
        %8472 = vmatprep.subr.bf16.mxu0 0
        %8473 = vmatpush1.bf16.msra.mxu0 0
        %8474 = vmatprep.subr.bf16.mxu0 0
        %8475 = vmatpush1.bf16.msra.mxu0 0
        %8476 = vmatprep.subr.bf16.mxu0 0
        %8477 = vmatpush1.bf16.msra.mxu0 0
        %8478 = vmatprep.subr.bf16.mxu0 0
        %8479 = vmatpush1.bf16.msra.mxu0 0
        %8480 = vmatprep.subr.bf16.mxu0 0
        %8481 = vmatpush1.bf16.msra.mxu0 0
        %8482 = vmatprep.subr.bf16.mxu0 0
        %8483 = vmatpush1.bf16.msra.mxu0 0
        %8484 = vmatprep.subr.bf16.mxu0 0
        %8485 = vmatpush1.bf16.msra.mxu0 0
        %8486 = vmatprep.mubr.bf16.mxu0 0
        %8487 = vmatmul.mubr.bf16.gmra.mrb[0].mxu0 %v8449
        %v8488 = vpop.f32.mrb[0].mxu0
        %v8489 = vadd.f32 0.0, %v8488
        %v8490 = vpop.f32.mrb[0].mxu0
        %v8491 = vpop.f32.mrb[0].mxu0
        %v8492 = vpop.f32.mrb[0].mxu0
        %8493 = vdwg.mxu0
        %v8495 = vsel %vm4943, %v8236, 0
        %v8498 = vsel %vm8266, %v8252, 0
        %8500 = vmatprep.subr.bf16.mxu0 0
        %8501 = vmatpush1.bf16.msra.mxu0 %v8498
        %8502 = vmatprep.subr.bf16.mxu0 0
        %8503 = vmatpush1.bf16.msra.mxu0 0
        %8504 = vmatprep.subr.bf16.mxu0 0
        %8505 = vmatpush1.bf16.msra.mxu0 0
        %8506 = vmatprep.subr.bf16.mxu0 0
        %8507 = vmatpush1.bf16.msra.mxu0 0
        %8508 = vmatprep.subr.bf16.mxu0 0
        %8509 = vmatpush1.bf16.msra.mxu0 0
        %8510 = vmatprep.subr.bf16.mxu0 0
        %8511 = vmatpush1.bf16.msra.mxu0 0
        %8512 = vmatprep.subr.bf16.mxu0 0
        %8513 = vmatpush1.bf16.msra.mxu0 0
        %8514 = vmatprep.subr.bf16.mxu0 0
        %8515 = vmatpush1.bf16.msra.mxu0 0
        %8516 = vmatprep.subr.bf16.mxu0 0
        %8517 = vmatpush1.bf16.msra.mxu0 0
        %8518 = vmatprep.subr.bf16.mxu0 0
        %8519 = vmatpush1.bf16.msra.mxu0 0
        %8520 = vmatprep.subr.bf16.mxu0 0
        %8521 = vmatpush1.bf16.msra.mxu0 0
        %8522 = vmatprep.subr.bf16.mxu0 0
        %8523 = vmatpush1.bf16.msra.mxu0 0
        %8524 = vmatprep.subr.bf16.mxu0 0
        %8525 = vmatpush1.bf16.msra.mxu0 0
        %8526 = vmatprep.subr.bf16.mxu0 0
        %8527 = vmatpush1.bf16.msra.mxu0 0
        %8528 = vmatprep.subr.bf16.mxu0 0
        %8529 = vmatpush1.bf16.msra.mxu0 0
        %8530 = vmatprep.subr.bf16.mxu0 0
        %8531 = vmatpush1.bf16.msra.mxu0 0
        %8532 = vmatprep.mubr.bf16.mxu0 0
        %8533 = vmatmul.mubr.bf16.gmra.mrb[0].mxu0 %v8495
        %v8534 = vpop.f32.mrb[0].mxu0
        %v8535 = vadd.f32 0.0, %v8534
        %v8536 = vpop.f32.mrb[0].mxu0
        %v8537 = vpop.f32.mrb[0].mxu0
        %v8538 = vpop.f32.mrb[0].mxu0
        %8539 = vdwg.mxu0
        %v8541 = vsel %vm4943, %v8237, 0
        %v8544 = vsel %vm8266, %v8253, 0
        %8546 = vmatprep.subr.bf16.mxu0 0
        %8547 = vmatpush1.bf16.msra.mxu0 %v8544
        %8548 = vmatprep.subr.bf16.mxu0 0
        %8549 = vmatpush1.bf16.msra.mxu0 0
        %8550 = vmatprep.subr.bf16.mxu0 0
        %8551 = vmatpush1.bf16.msra.mxu0 0
        %8552 = vmatprep.subr.bf16.mxu0 0
        %8553 = vmatpush1.bf16.msra.mxu0 0
        %8554 = vmatprep.subr.bf16.mxu0 0
        %8555 = vmatpush1.bf16.msra.mxu0 0
        %8556 = vmatprep.subr.bf16.mxu0 0
        %8557 = vmatpush1.bf16.msra.mxu0 0
        %8558 = vmatprep.subr.bf16.mxu0 0
        %8559 = vmatpush1.bf16.msra.mxu0 0
        %8560 = vmatprep.subr.bf16.mxu0 0
        %8561 = vmatpush1.bf16.msra.mxu0 0
        %8562 = vmatprep.subr.bf16.mxu0 0
        %8563 = vmatpush1.bf16.msra.mxu0 0
        %8564 = vmatprep.subr.bf16.mxu0 0
        %8565 = vmatpush1.bf16.msra.mxu0 0
        %8566 = vmatprep.subr.bf16.mxu0 0
        %8567 = vmatpush1.bf16.msra.mxu0 0
        %8568 = vmatprep.subr.bf16.mxu0 0
        %8569 = vmatpush1.bf16.msra.mxu0 0
        %8570 = vmatprep.subr.bf16.mxu0 0
        %8571 = vmatpush1.bf16.msra.mxu0 0
        %8572 = vmatprep.subr.bf16.mxu0 0
        %8573 = vmatpush1.bf16.msra.mxu0 0
        %8574 = vmatprep.subr.bf16.mxu0 0
        %8575 = vmatpush1.bf16.msra.mxu0 0
        %8576 = vmatprep.subr.bf16.mxu0 0
        %8577 = vmatpush1.bf16.msra.mxu0 0
        %8578 = vmatprep.mubr.bf16.mxu0 0
        %8579 = vmatmul.mubr.bf16.gmra.mrb[0].mxu0 %v8541
        %v8580 = vpop.f32.mrb[0].mxu0
        %v8581 = vadd.f32 0.0, %v8580
        %v8582 = vpop.f32.mrb[0].mxu0
        %v8583 = vpop.f32.mrb[0].mxu0
        %v8584 = vpop.f32.mrb[0].mxu0
        %8585 = vdwg.mxu0
        %v8587 = vsel %vm4943, %v8238, 0
        %v8590 = vsel %vm8266, %v8254, 0
        %8592 = vmatprep.subr.bf16.mxu0 0
        %8593 = vmatpush1.bf16.msra.mxu0 %v8590
        %8594 = vmatprep.subr.bf16.mxu0 0
        %8595 = vmatpush1.bf16.msra.mxu0 0
        %8596 = vmatprep.subr.bf16.mxu0 0
        %8597 = vmatpush1.bf16.msra.mxu0 0
        %8598 = vmatprep.subr.bf16.mxu0 0
        %8599 = vmatpush1.bf16.msra.mxu0 0
        %8600 = vmatprep.subr.bf16.mxu0 0
        %8601 = vmatpush1.bf16.msra.mxu0 0
        %8602 = vmatprep.subr.bf16.mxu0 0
        %8603 = vmatpush1.bf16.msra.mxu0 0
        %8604 = vmatprep.subr.bf16.mxu0 0
        %8605 = vmatpush1.bf16.msra.mxu0 0
        %8606 = vmatprep.subr.bf16.mxu0 0
        %8607 = vmatpush1.bf16.msra.mxu0 0
        %8608 = vmatprep.subr.bf16.mxu0 0
        %8609 = vmatpush1.bf16.msra.mxu0 0
        %8610 = vmatprep.subr.bf16.mxu0 0
        %8611 = vmatpush1.bf16.msra.mxu0 0
        %8612 = vmatprep.subr.bf16.mxu0 0
        %8613 = vmatpush1.bf16.msra.mxu0 0
        %8614 = vmatprep.subr.bf16.mxu0 0
        %8615 = vmatpush1.bf16.msra.mxu0 0
        %8616 = vmatprep.subr.bf16.mxu0 0
        %8617 = vmatpush1.bf16.msra.mxu0 0
        %8618 = vmatprep.subr.bf16.mxu0 0
        %8619 = vmatpush1.bf16.msra.mxu0 0
        %8620 = vmatprep.subr.bf16.mxu0 0
        %8621 = vmatpush1.bf16.msra.mxu0 0
        %8622 = vmatprep.subr.bf16.mxu0 0
        %8623 = vmatpush1.bf16.msra.mxu0 0
        %8624 = vmatprep.mubr.bf16.mxu0 0
        %8625 = vmatmul.mubr.bf16.gmra.mrb[0].mxu0 %v8587
        %v8626 = vpop.f32.mrb[0].mxu0
        %v8627 = vadd.f32 0.0, %v8626
        %v8628 = vpop.f32.mrb[0].mxu0
        %v8629 = vpop.f32.mrb[0].mxu0
        %v8630 = vpop.f32.mrb[0].mxu0
        %8631 = vdwg.mxu0
        %v8633 = vsel %vm4943, %v8239, 0
        %v8636 = vsel %vm8266, %v8255, 0
        %8638 = vmatprep.subr.bf16.mxu0 0
        %8639 = vmatpush1.bf16.msra.mxu0 %v8636
        %8640 = vmatprep.subr.bf16.mxu0 0
        %8641 = vmatpush1.bf16.msra.mxu0 0
        %8642 = vmatprep.subr.bf16.mxu0 0
        %8643 = vmatpush1.bf16.msra.mxu0 0
        %8644 = vmatprep.subr.bf16.mxu0 0
        %8645 = vmatpush1.bf16.msra.mxu0 0
        %8646 = vmatprep.subr.bf16.mxu0 0
        %8647 = vmatpush1.bf16.msra.mxu0 0
        %8648 = vmatprep.subr.bf16.mxu0 0
        %8649 = vmatpush1.bf16.msra.mxu0 0
        %8650 = vmatprep.subr.bf16.mxu0 0
        %8651 = vmatpush1.bf16.msra.mxu0 0
        %8652 = vmatprep.subr.bf16.mxu0 0
        %8653 = vmatpush1.bf16.msra.mxu0 0
        %8654 = vmatprep.subr.bf16.mxu0 0
        %8655 = vmatpush1.bf16.msra.mxu0 0
        %8656 = vmatprep.subr.bf16.mxu0 0
        %8657 = vmatpush1.bf16.msra.mxu0 0
        %8658 = vmatprep.subr.bf16.mxu0 0
        %8659 = vmatpush1.bf16.msra.mxu0 0
        %8660 = vmatprep.subr.bf16.mxu0 0
        %8661 = vmatpush1.bf16.msra.mxu0 0
        %8662 = vmatprep.subr.bf16.mxu0 0
        %8663 = vmatpush1.bf16.msra.mxu0 0
        %8664 = vmatprep.subr.bf16.mxu0 0
        %8665 = vmatpush1.bf16.msra.mxu0 0
        %8666 = vmatprep.subr.bf16.mxu0 0
        %8667 = vmatpush1.bf16.msra.mxu0 0
        %8668 = vmatprep.subr.bf16.mxu0 0
        %8669 = vmatpush1.bf16.msra.mxu0 0
        %8670 = vmatprep.mubr.bf16.mxu0 0
        %8671 = vmatmul.mubr.bf16.gmra.mrb[0].mxu0 %v8633
        %v8672 = vpop.f32.mrb[0].mxu0
        %v8673 = vadd.f32 0.0, %v8672
        %v8674 = vpop.f32.mrb[0].mxu0
        %v8675 = vpop.f32.mrb[0].mxu0
        %v8676 = vpop.f32.mrb[0].mxu0
        %8677 = vdwg.mxu0
        %v8679 = vsel %vm4943, %v8240, 0
        %v8682 = vsel %vm8266, %v8256, 0
        %8684 = vmatprep.subr.bf16.mxu0 0
        %8685 = vmatpush1.bf16.msra.mxu0 %v8682
        %8686 = vmatprep.subr.bf16.mxu0 0
        %8687 = vmatpush1.bf16.msra.mxu0 0
        %8688 = vmatprep.subr.bf16.mxu0 0
        %8689 = vmatpush1.bf16.msra.mxu0 0
        %8690 = vmatprep.subr.bf16.mxu0 0
        %8691 = vmatpush1.bf16.msra.mxu0 0
        %8692 = vmatprep.subr.bf16.mxu0 0
        %8693 = vmatpush1.bf16.msra.mxu0 0
        %8694 = vmatprep.subr.bf16.mxu0 0
        %8695 = vmatpush1.bf16.msra.mxu0 0
        %8696 = vmatprep.subr.bf16.mxu0 0
        %8697 = vmatpush1.bf16.msra.mxu0 0
        %8698 = vmatprep.subr.bf16.mxu0 0
        %8699 = vmatpush1.bf16.msra.mxu0 0
        %8700 = vmatprep.subr.bf16.mxu0 0
        %8701 = vmatpush1.bf16.msra.mxu0 0
        %8702 = vmatprep.subr.bf16.mxu0 0
        %8703 = vmatpush1.bf16.msra.mxu0 0
        %8704 = vmatprep.subr.bf16.mxu0 0
        %8705 = vmatpush1.bf16.msra.mxu0 0
        %8706 = vmatprep.subr.bf16.mxu0 0
        %8707 = vmatpush1.bf16.msra.mxu0 0
        %8708 = vmatprep.subr.bf16.mxu0 0
        %8709 = vmatpush1.bf16.msra.mxu0 0
        %8710 = vmatprep.subr.bf16.mxu0 0
        %8711 = vmatpush1.bf16.msra.mxu0 0
        %8712 = vmatprep.subr.bf16.mxu0 0
        %8713 = vmatpush1.bf16.msra.mxu0 0
        %8714 = vmatprep.subr.bf16.mxu0 0
        %8715 = vmatpush1.bf16.msra.mxu0 0
        %8716 = vmatprep.mubr.bf16.mxu0 0
        %8717 = vmatmul.mubr.bf16.gmra.mrb[0].mxu0 %v8679
        %v8718 = vpop.f32.mrb[0].mxu0
        %v8719 = vadd.f32 0.0, %v8718
        %v8720 = vpop.f32.mrb[0].mxu0
        %v8721 = vpop.f32.mrb[0].mxu0
        %v8722 = vpop.f32.mrb[0].mxu0
        %8723 = vdwg.mxu0
        %v8725 = vsel %vm4943, %v8241, 0
        %v8728 = vsel %vm8266, %v8257, 0
        %8730 = vmatprep.subr.bf16.mxu0 0
        %8731 = vmatpush1.bf16.msra.mxu0 %v8728
        %8732 = vmatprep.subr.bf16.mxu0 0
        %8733 = vmatpush1.bf16.msra.mxu0 0
        %8734 = vmatprep.subr.bf16.mxu0 0
        %8735 = vmatpush1.bf16.msra.mxu0 0
        %8736 = vmatprep.subr.bf16.mxu0 0
        %8737 = vmatpush1.bf16.msra.mxu0 0
        %8738 = vmatprep.subr.bf16.mxu0 0
        %8739 = vmatpush1.bf16.msra.mxu0 0
        %8740 = vmatprep.subr.bf16.mxu0 0
        %8741 = vmatpush1.bf16.msra.mxu0 0
        %8742 = vmatprep.subr.bf16.mxu0 0
        %8743 = vmatpush1.bf16.msra.mxu0 0
        %8744 = vmatprep.subr.bf16.mxu0 0
        %8745 = vmatpush1.bf16.msra.mxu0 0
        %8746 = vmatprep.subr.bf16.mxu0 0
        %8747 = vmatpush1.bf16.msra.mxu0 0
        %8748 = vmatprep.subr.bf16.mxu0 0
        %8749 = vmatpush1.bf16.msra.mxu0 0
        %8750 = vmatprep.subr.bf16.mxu0 0
        %8751 = vmatpush1.bf16.msra.mxu0 0
        %8752 = vmatprep.subr.bf16.mxu0 0
        %8753 = vmatpush1.bf16.msra.mxu0 0
        %8754 = vmatprep.subr.bf16.mxu0 0
        %8755 = vmatpush1.bf16.msra.mxu0 0
        %8756 = vmatprep.subr.bf16.mxu0 0
        %8757 = vmatpush1.bf16.msra.mxu0 0
        %8758 = vmatprep.subr.bf16.mxu0 0
        %8759 = vmatpush1.bf16.msra.mxu0 0
        %8760 = vmatprep.subr.bf16.mxu0 0
        %8761 = vmatpush1.bf16.msra.mxu0 0
        %8762 = vmatprep.mubr.bf16.mxu0 0
        %8763 = vmatmul.mubr.bf16.gmra.mrb[0].mxu0 %v8725
        %v8764 = vpop.f32.mrb[0].mxu0
        %v8765 = vadd.f32 0.0, %v8764
        %v8766 = vpop.f32.mrb[0].mxu0
        %v8767 = vpop.f32.mrb[0].mxu0
        %v8768 = vpop.f32.mrb[0].mxu0
        %8769 = vdwg.mxu0
        %v8771 = vsel %vm4943, %v8242, 0
        %v8774 = vsel %vm8266, %v8258, 0
        %8776 = vmatprep.subr.bf16.mxu0 0
        %8777 = vmatpush1.bf16.msra.mxu0 %v8774
        %8778 = vmatprep.subr.bf16.mxu0 0
        %8779 = vmatpush1.bf16.msra.mxu0 0
        %8780 = vmatprep.subr.bf16.mxu0 0
        %8781 = vmatpush1.bf16.msra.mxu0 0
        %8782 = vmatprep.subr.bf16.mxu0 0
        %8783 = vmatpush1.bf16.msra.mxu0 0
        %8784 = vmatprep.subr.bf16.mxu0 0
        %8785 = vmatpush1.bf16.msra.mxu0 0
        %8786 = vmatprep.subr.bf16.mxu0 0
        %8787 = vmatpush1.bf16.msra.mxu0 0
        %8788 = vmatprep.subr.bf16.mxu0 0
        %8789 = vmatpush1.bf16.msra.mxu0 0
        %8790 = vmatprep.subr.bf16.mxu0 0
        %8791 = vmatpush1.bf16.msra.mxu0 0
        %8792 = vmatprep.subr.bf16.mxu0 0
        %8793 = vmatpush1.bf16.msra.mxu0 0
        %8794 = vmatprep.subr.bf16.mxu0 0
        %8795 = vmatpush1.bf16.msra.mxu0 0
        %8796 = vmatprep.subr.bf16.mxu0 0
        %8797 = vmatpush1.bf16.msra.mxu0 0
        %8798 = vmatprep.subr.bf16.mxu0 0
        %8799 = vmatpush1.bf16.msra.mxu0 0
        %8800 = vmatprep.subr.bf16.mxu0 0
        %8801 = vmatpush1.bf16.msra.mxu0 0
        %8802 = vmatprep.subr.bf16.mxu0 0
        %8803 = vmatpush1.bf16.msra.mxu0 0
        %8804 = vmatprep.subr.bf16.mxu0 0
        %8805 = vmatpush1.bf16.msra.mxu0 0
        %8806 = vmatprep.subr.bf16.mxu0 0
        %8807 = vmatpush1.bf16.msra.mxu0 0
        %8808 = vmatprep.mubr.bf16.mxu0 0
        %8809 = vmatmul.mubr.bf16.gmra.mrb[0].mxu0 %v8771
        %v8810 = vpop.f32.mrb[0].mxu0
        %v8811 = vadd.f32 0.0, %v8810
        %v8812 = vpop.f32.mrb[0].mxu0
        %v8813 = vpop.f32.mrb[0].mxu0
        %v8814 = vpop.f32.mrb[0].mxu0
        %8815 = vdwg.mxu0
        %v8817 = vsel %vm4943, %v8243, 0
        %v8820 = vsel %vm8266, %v8259, 0
        %8822 = vmatprep.subr.bf16.mxu0 0
        %8823 = vmatpush1.bf16.msra.mxu0 %v8820
        %8824 = vmatprep.subr.bf16.mxu0 0
        %8825 = vmatpush1.bf16.msra.mxu0 0
        %8826 = vmatprep.subr.bf16.mxu0 0
        %8827 = vmatpush1.bf16.msra.mxu0 0
        %8828 = vmatprep.subr.bf16.mxu0 0
        %8829 = vmatpush1.bf16.msra.mxu0 0
        %8830 = vmatprep.subr.bf16.mxu0 0
        %8831 = vmatpush1.bf16.msra.mxu0 0
        %8832 = vmatprep.subr.bf16.mxu0 0
        %8833 = vmatpush1.bf16.msra.mxu0 0
        %8834 = vmatprep.subr.bf16.mxu0 0
        %8835 = vmatpush1.bf16.msra.mxu0 0
        %8836 = vmatprep.subr.bf16.mxu0 0
        %8837 = vmatpush1.bf16.msra.mxu0 0
        %8838 = vmatprep.subr.bf16.mxu0 0
        %8839 = vmatpush1.bf16.msra.mxu0 0
        %8840 = vmatprep.subr.bf16.mxu0 0
        %8841 = vmatpush1.bf16.msra.mxu0 0
        %8842 = vmatprep.subr.bf16.mxu0 0
        %8843 = vmatpush1.bf16.msra.mxu0 0
        %8844 = vmatprep.subr.bf16.mxu0 0
        %8845 = vmatpush1.bf16.msra.mxu0 0
        %8846 = vmatprep.subr.bf16.mxu0 0
        %8847 = vmatpush1.bf16.msra.mxu0 0
        %8848 = vmatprep.subr.bf16.mxu0 0
        %8849 = vmatpush1.bf16.msra.mxu0 0
        %8850 = vmatprep.subr.bf16.mxu0 0
        %8851 = vmatpush1.bf16.msra.mxu0 0
        %8852 = vmatprep.subr.bf16.mxu0 0
        %8853 = vmatpush1.bf16.msra.mxu0 0
        %8854 = vmatprep.mubr.bf16.mxu0 0
        %8855 = vmatmul.mubr.bf16.gmra.mrb[0].mxu0 %v8817
        %v8856 = vpop.f32.mrb[0].mxu0
        %v8857 = vadd.f32 0.0, %v8856
        %v8858 = vpop.f32.mrb[0].mxu0
        %v8859 = vpop.f32.mrb[0].mxu0
        %v8860 = vpop.f32.mrb[0].mxu0
        %8861 = vdwg.mxu0
        %v8863 = vsel %vm4943, %v8244, 0
        %v8866 = vsel %vm8266, %v8260, 0
        %8868 = vmatprep.subr.bf16.mxu0 0
        %8869 = vmatpush1.bf16.msra.mxu0 %v8866
        %8870 = vmatprep.subr.bf16.mxu0 0
        %8871 = vmatpush1.bf16.msra.mxu0 0
        %8872 = vmatprep.subr.bf16.mxu0 0
        %8873 = vmatpush1.bf16.msra.mxu0 0
        %8874 = vmatprep.subr.bf16.mxu0 0
        %8875 = vmatpush1.bf16.msra.mxu0 0
        %8876 = vmatprep.subr.bf16.mxu0 0
        %8877 = vmatpush1.bf16.msra.mxu0 0
        %8878 = vmatprep.subr.bf16.mxu0 0
        %8879 = vmatpush1.bf16.msra.mxu0 0
        %8880 = vmatprep.subr.bf16.mxu0 0
        %8881 = vmatpush1.bf16.msra.mxu0 0
        %8882 = vmatprep.subr.bf16.mxu0 0
        %8883 = vmatpush1.bf16.msra.mxu0 0
        %8884 = vmatprep.subr.bf16.mxu0 0
        %8885 = vmatpush1.bf16.msra.mxu0 0
        %8886 = vmatprep.subr.bf16.mxu0 0
        %8887 = vmatpush1.bf16.msra.mxu0 0
        %8888 = vmatprep.subr.bf16.mxu0 0
        %8889 = vmatpush1.bf16.msra.mxu0 0
        %8890 = vmatprep.subr.bf16.mxu0 0
        %8891 = vmatpush1.bf16.msra.mxu0 0
        %8892 = vmatprep.subr.bf16.mxu0 0
        %8893 = vmatpush1.bf16.msra.mxu0 0
        %8894 = vmatprep.subr.bf16.mxu0 0
        %8895 = vmatpush1.bf16.msra.mxu0 0
        %8896 = vmatprep.subr.bf16.mxu0 0
        %8897 = vmatpush1.bf16.msra.mxu0 0
        %8898 = vmatprep.subr.bf16.mxu0 0
        %8899 = vmatpush1.bf16.msra.mxu0 0
        %8900 = vmatprep.mubr.bf16.mxu0 0
        %8901 = vmatmul.mubr.bf16.gmra.mrb[0].mxu0 %v8863
        %v8902 = vpop.f32.mrb[0].mxu0
        %v8903 = vadd.f32 0.0, %v8902
        %v8904 = vpop.f32.mrb[0].mxu0
        %v8905 = vpop.f32.mrb[0].mxu0
        %v8906 = vpop.f32.mrb[0].mxu0
        %8907 = vdwg.mxu0
        %v8909 = vsel %vm4943, %v8245, 0
        %v8912 = vsel %vm8266, %v8261, 0
        %8914 = vmatprep.subr.bf16.mxu0 0
        %8915 = vmatpush1.bf16.msra.mxu0 %v8912
        %8916 = vmatprep.subr.bf16.mxu0 0
        %8917 = vmatpush1.bf16.msra.mxu0 0
        %8918 = vmatprep.subr.bf16.mxu0 0
        %8919 = vmatpush1.bf16.msra.mxu0 0
        %8920 = vmatprep.subr.bf16.mxu0 0
        %8921 = vmatpush1.bf16.msra.mxu0 0
        %8922 = vmatprep.subr.bf16.mxu0 0
        %8923 = vmatpush1.bf16.msra.mxu0 0
        %8924 = vmatprep.subr.bf16.mxu0 0
        %8925 = vmatpush1.bf16.msra.mxu0 0
        %8926 = vmatprep.subr.bf16.mxu0 0
        %8927 = vmatpush1.bf16.msra.mxu0 0
        %8928 = vmatprep.subr.bf16.mxu0 0
        %8929 = vmatpush1.bf16.msra.mxu0 0
        %8930 = vmatprep.subr.bf16.mxu0 0
        %8931 = vmatpush1.bf16.msra.mxu0 0
        %8932 = vmatprep.subr.bf16.mxu0 0
        %8933 = vmatpush1.bf16.msra.mxu0 0
        %8934 = vmatprep.subr.bf16.mxu0 0
        %8935 = vmatpush1.bf16.msra.mxu0 0
        %8936 = vmatprep.subr.bf16.mxu0 0
        %8937 = vmatpush1.bf16.msra.mxu0 0
        %8938 = vmatprep.subr.bf16.mxu0 0
        %8939 = vmatpush1.bf16.msra.mxu0 0
        %8940 = vmatprep.subr.bf16.mxu0 0
        %8941 = vmatpush1.bf16.msra.mxu0 0
        %8942 = vmatprep.subr.bf16.mxu0 0
        %8943 = vmatpush1.bf16.msra.mxu0 0
        %8944 = vmatprep.subr.bf16.mxu0 0
        %8945 = vmatpush1.bf16.msra.mxu0 0
        %8946 = vmatprep.mubr.bf16.mxu0 0
        %8947 = vmatmul.mubr.bf16.gmra.mrb[0].mxu0 %v8909
        %v8948 = vpop.f32.mrb[0].mxu0
        %v8949 = vadd.f32 0.0, %v8948
        %v8950 = vpop.f32.mrb[0].mxu0
        %v8951 = vpop.f32.mrb[0].mxu0
        %v8952 = vpop.f32.mrb[0].mxu0
        %8953 = vdwg.mxu0
        %v8955 = vsel %vm4943, %v8246, 0
        %v8958 = vsel %vm8266, %v8262, 0
        %8960 = vmatprep.subr.bf16.mxu0 0
        %8961 = vmatpush1.bf16.msra.mxu0 %v8958
        %8962 = vmatprep.subr.bf16.mxu0 0
        %8963 = vmatpush1.bf16.msra.mxu0 0
        %8964 = vmatprep.subr.bf16.mxu0 0
        %8965 = vmatpush1.bf16.msra.mxu0 0
        %8966 = vmatprep.subr.bf16.mxu0 0
        %8967 = vmatpush1.bf16.msra.mxu0 0
        %8968 = vmatprep.subr.bf16.mxu0 0
        %8969 = vmatpush1.bf16.msra.mxu0 0
        %8970 = vmatprep.subr.bf16.mxu0 0
        %8971 = vmatpush1.bf16.msra.mxu0 0
        %8972 = vmatprep.subr.bf16.mxu0 0
        %8973 = vmatpush1.bf16.msra.mxu0 0
        %8974 = vmatprep.subr.bf16.mxu0 0
        %8975 = vmatpush1.bf16.msra.mxu0 0
        %8976 = vmatprep.subr.bf16.mxu0 0
        %8977 = vmatpush1.bf16.msra.mxu0 0
        %8978 = vmatprep.subr.bf16.mxu0 0
        %8979 = vmatpush1.bf16.msra.mxu0 0
        %8980 = vmatprep.subr.bf16.mxu0 0
        %8981 = vmatpush1.bf16.msra.mxu0 0
        %8982 = vmatprep.subr.bf16.mxu0 0
        %8983 = vmatpush1.bf16.msra.mxu0 0
        %8984 = vmatprep.subr.bf16.mxu0 0
        %8985 = vmatpush1.bf16.msra.mxu0 0
        %8986 = vmatprep.subr.bf16.mxu0 0
        %8987 = vmatpush1.bf16.msra.mxu0 0
        %8988 = vmatprep.subr.bf16.mxu0 0
        %8989 = vmatpush1.bf16.msra.mxu0 0
        %8990 = vmatprep.subr.bf16.mxu0 0
        %8991 = vmatpush1.bf16.msra.mxu0 0
        %8992 = vmatprep.mubr.bf16.mxu0 0
        %8993 = vmatmul.mubr.bf16.gmra.mrb[0].mxu0 %v8955
        %v8994 = vpop.f32.mrb[0].mxu0
        %v8995 = vadd.f32 0.0, %v8994
        %v8996 = vpop.f32.mrb[0].mxu0
        %v8997 = vpop.f32.mrb[0].mxu0
        %v8998 = vpop.f32.mrb[0].mxu0
        %8999 = vdwg.mxu0
        %v9000 = vcombine.low %v8305, %v8397
        %v9001 = vcombine.high %v8305, %v8397
        %v9003 = vunpack.c.l.s4 1983009808
        %v9004 = vunpack.c.0.s8 %v9003
        %v9005 = vlaneseq
        %v9006 = vshrl.u32 %v9005, 7
        %v9007 = vsub.s32 %v9004, %v9006
        %v9008 = vrot.slane %v9000, %v9007
        %v9010 = vunpack.c.l.s4 1983009808
        %v9011 = vunpack.c.0.s8 %v9010
        %v9012 = vlaneseq
        %v9013 = vshrl.u32 %v9012, 7
        %v9014 = vsub.s32 %v9011, %v9013
        %v9015 = vrot.slane %v9001, %v9014
        %v9016 = vcombine.low %v8351, %v8443
        %v9017 = vcombine.high %v8351, %v8443
        %v9019 = vunpack.c.l.s4 1983009808
        %v9020 = vunpack.c.0.s8 %v9019
        %v9021 = vlaneseq
        %v9022 = vshrl.u32 %v9021, 7
        %v9023 = vsub.s32 %v9020, %v9022
        %v9024 = vrot.slane %v9016, %v9023
        %v9026 = vunpack.c.l.s4 1983009808
        %v9027 = vunpack.c.0.s8 %v9026
        %v9028 = vlaneseq
        %v9029 = vshrl.u32 %v9028, 7
        %v9030 = vsub.s32 %v9027, %v9029
        %v9031 = vrot.slane %v9017, %v9030
        %v9032 = vcombine.low %v9008, %v9024
        %v9033 = vcombine.high %v9008, %v9024
        %v9035 = vunpack.c.l.s4 1934713408
        %v9036 = vunpack.c.0.s8 %v9035
        %v9037 = vlaneseq
        %v9038 = vshrl.u32 %v9037, 7
        %v9039 = vsub.s32 %v9036, %v9038
        %v9040 = vrot.slane %v9032, %v9039
        %v9042 = vunpack.c.l.s4 1934713408
        %v9043 = vunpack.c.0.s8 %v9042
        %v9044 = vlaneseq
        %v9045 = vshrl.u32 %v9044, 7
        %v9046 = vsub.s32 %v9043, %v9045
        %v9047 = vrot.slane %v9033, %v9046
        %v9048 = vcombine.low %v9015, %v9031
        %v9049 = vcombine.high %v9015, %v9031
        %v9051 = vunpack.c.l.s4 1934713408
        %v9052 = vunpack.c.0.s8 %v9051
        %v9053 = vlaneseq
        %v9054 = vshrl.u32 %v9053, 7
        %v9055 = vsub.s32 %v9052, %v9054
        %v9056 = vrot.slane %v9048, %v9055
        %v9058 = vunpack.c.l.s4 1934713408
        %v9059 = vunpack.c.0.s8 %v9058
        %v9060 = vlaneseq
        %v9061 = vshrl.u32 %v9060, 7
        %v9062 = vsub.s32 %v9059, %v9061
        %v9063 = vrot.slane %v9049, %v9062
        %v9064 = vcombine.high %v9040, 0.0
        %v9065 = vcombine.high %v9047, 0.0
        %v9066 = vcombine.high %v9056, 0.0
        %v9067 = vcombine.high %v9063, 0.0
        %v9068 = vcombine.low %v8489, %v8581
        %v9069 = vcombine.high %v8489, %v8581
        %v9071 = vunpack.c.l.s4 1983009808
        %v9072 = vunpack.c.0.s8 %v9071
        %v9073 = vlaneseq
        %v9074 = vshrl.u32 %v9073, 7
        %v9075 = vsub.s32 %v9072, %v9074
        %v9076 = vrot.slane %v9068, %v9075
        %v9078 = vunpack.c.l.s4 1983009808
        %v9079 = vunpack.c.0.s8 %v9078
        %v9080 = vlaneseq
        %v9081 = vshrl.u32 %v9080, 7
        %v9082 = vsub.s32 %v9079, %v9081
        %v9083 = vrot.slane %v9069, %v9082
        %v9084 = vcombine.low %v8535, %v8627
        %v9085 = vcombine.high %v8535, %v8627
        %v9087 = vunpack.c.l.s4 1983009808
        %v9088 = vunpack.c.0.s8 %v9087
        %v9089 = vlaneseq
        %v9090 = vshrl.u32 %v9089, 7
        %v9091 = vsub.s32 %v9088, %v9090
        %v9092 = vrot.slane %v9084, %v9091
        %v9094 = vunpack.c.l.s4 1983009808
        %v9095 = vunpack.c.0.s8 %v9094
        %v9096 = vlaneseq
        %v9097 = vshrl.u32 %v9096, 7
        %v9098 = vsub.s32 %v9095, %v9097
        %v9099 = vrot.slane %v9085, %v9098
        %v9100 = vcombine.low %v9076, %v9092
        %v9101 = vcombine.high %v9076, %v9092
        %v9103 = vunpack.c.l.s4 1934713408
        %v9104 = vunpack.c.0.s8 %v9103
        %v9105 = vlaneseq
        %v9106 = vshrl.u32 %v9105, 7
        %v9107 = vsub.s32 %v9104, %v9106
        %v9108 = vrot.slane %v9100, %v9107
        %v9110 = vunpack.c.l.s4 1934713408
        %v9111 = vunpack.c.0.s8 %v9110
        %v9112 = vlaneseq
        %v9113 = vshrl.u32 %v9112, 7
        %v9114 = vsub.s32 %v9111, %v9113
        %v9115 = vrot.slane %v9101, %v9114
        %v9116 = vcombine.low %v9083, %v9099
        %v9117 = vcombine.high %v9083, %v9099
        %v9119 = vunpack.c.l.s4 1934713408
        %v9120 = vunpack.c.0.s8 %v9119
        %v9121 = vlaneseq
        %v9122 = vshrl.u32 %v9121, 7
        %v9123 = vsub.s32 %v9120, %v9122
        %v9124 = vrot.slane %v9116, %v9123
        %v9126 = vunpack.c.l.s4 1934713408
        %v9127 = vunpack.c.0.s8 %v9126
        %v9128 = vlaneseq
        %v9129 = vshrl.u32 %v9128, 7
        %v9130 = vsub.s32 %v9127, %v9129
        %v9131 = vrot.slane %v9117, %v9130
        %v9132 = vcombine.high %v9108, 0.0
        %v9133 = vcombine.high %v9115, 0.0
        %v9134 = vcombine.high %v9124, 0.0
        %v9135 = vcombine.high %v9131, 0.0
        %v9136 = vcombine.low %v8673, %v8765
        %v9137 = vcombine.high %v8673, %v8765
        %v9139 = vunpack.c.l.s4 1983009808
        %v9140 = vunpack.c.0.s8 %v9139
        %v9141 = vlaneseq
        %v9142 = vshrl.u32 %v9141, 7
        %v9143 = vsub.s32 %v9140, %v9142
        %v9144 = vrot.slane %v9136, %v9143
        %v9146 = vunpack.c.l.s4 1983009808
        %v9147 = vunpack.c.0.s8 %v9146
        %v9148 = vlaneseq
        %v9149 = vshrl.u32 %v9148, 7
        %v9150 = vsub.s32 %v9147, %v9149
        %v9151 = vrot.slane %v9137, %v9150
        %v9152 = vcombine.low %v8719, %v8811
        %v9153 = vcombine.high %v8719, %v8811
        %v9155 = vunpack.c.l.s4 1983009808
        %v9156 = vunpack.c.0.s8 %v9155
        %v9157 = vlaneseq
        %v9158 = vshrl.u32 %v9157, 7
        %v9159 = vsub.s32 %v9156, %v9158
        %v9160 = vrot.slane %v9152, %v9159
        %v9162 = vunpack.c.l.s4 1983009808
        %v9163 = vunpack.c.0.s8 %v9162
        %v9164 = vlaneseq
        %v9165 = vshrl.u32 %v9164, 7
        %v9166 = vsub.s32 %v9163, %v9165
        %v9167 = vrot.slane %v9153, %v9166
        %v9168 = vcombine.low %v9144, %v9160
        %v9169 = vcombine.high %v9144, %v9160
        %v9171 = vunpack.c.l.s4 1934713408
        %v9172 = vunpack.c.0.s8 %v9171
        %v9173 = vlaneseq
        %v9174 = vshrl.u32 %v9173, 7
        %v9175 = vsub.s32 %v9172, %v9174
        %v9176 = vrot.slane %v9168, %v9175
        %v9178 = vunpack.c.l.s4 1934713408
        %v9179 = vunpack.c.0.s8 %v9178
        %v9180 = vlaneseq
        %v9181 = vshrl.u32 %v9180, 7
        %v9182 = vsub.s32 %v9179, %v9181
        %v9183 = vrot.slane %v9169, %v9182
        %v9184 = vcombine.low %v9151, %v9167
        %v9185 = vcombine.high %v9151, %v9167
        %v9187 = vunpack.c.l.s4 1934713408
        %v9188 = vunpack.c.0.s8 %v9187
        %v9189 = vlaneseq
        %v9190 = vshrl.u32 %v9189, 7
        %v9191 = vsub.s32 %v9188, %v9190
        %v9192 = vrot.slane %v9184, %v9191
        %v9194 = vunpack.c.l.s4 1934713408
        %v9195 = vunpack.c.0.s8 %v9194
        %v9196 = vlaneseq
        %v9197 = vshrl.u32 %v9196, 7
        %v9198 = vsub.s32 %v9195, %v9197
        %v9199 = vrot.slane %v9185, %v9198
        %v9200 = vcombine.high %v9176, 0.0
        %v9201 = vcombine.high %v9183, 0.0
        %v9202 = vcombine.high %v9192, 0.0
        %v9203 = vcombine.high %v9199, 0.0
        %v9204 = vcombine.low %v8857, %v8949
        %v9205 = vcombine.high %v8857, %v8949
        %v9207 = vunpack.c.l.s4 1983009808
        %v9208 = vunpack.c.0.s8 %v9207
        %v9209 = vlaneseq
        %v9210 = vshrl.u32 %v9209, 7
        %v9211 = vsub.s32 %v9208, %v9210
        %v9212 = vrot.slane %v9204, %v9211
        %v9214 = vunpack.c.l.s4 1983009808
        %v9215 = vunpack.c.0.s8 %v9214
        %v9216 = vlaneseq
        %v9217 = vshrl.u32 %v9216, 7
        %v9218 = vsub.s32 %v9215, %v9217
        %v9219 = vrot.slane %v9205, %v9218
        %v9220 = vcombine.low %v8903, %v8995
        %v9221 = vcombine.high %v8903, %v8995
        %v9223 = vunpack.c.l.s4 1983009808
        %v9224 = vunpack.c.0.s8 %v9223
        %v9225 = vlaneseq
        %v9226 = vshrl.u32 %v9225, 7
        %v9227 = vsub.s32 %v9224, %v9226
        %v9228 = vrot.slane %v9220, %v9227
        %v9230 = vunpack.c.l.s4 1983009808
        %v9231 = vunpack.c.0.s8 %v9230
        %v9232 = vlaneseq
        %v9233 = vshrl.u32 %v9232, 7
        %v9234 = vsub.s32 %v9231, %v9233
        %v9235 = vrot.slane %v9221, %v9234
        %v9236 = vcombine.low %v9212, %v9228
        %v9237 = vcombine.high %v9212, %v9228
        %v9239 = vunpack.c.l.s4 1934713408
        %v9240 = vunpack.c.0.s8 %v9239
        %v9241 = vlaneseq
        %v9242 = vshrl.u32 %v9241, 7
        %v9243 = vsub.s32 %v9240, %v9242
        %v9244 = vrot.slane %v9236, %v9243
        %v9246 = vunpack.c.l.s4 1934713408
        %v9247 = vunpack.c.0.s8 %v9246
        %v9248 = vlaneseq
        %v9249 = vshrl.u32 %v9248, 7
        %v9250 = vsub.s32 %v9247, %v9249
        %v9251 = vrot.slane %v9237, %v9250
        %v9252 = vcombine.low %v9219, %v9235
        %v9253 = vcombine.high %v9219, %v9235
        %v9255 = vunpack.c.l.s4 1934713408
        %v9256 = vunpack.c.0.s8 %v9255
        %v9257 = vlaneseq
        %v9258 = vshrl.u32 %v9257, 7
        %v9259 = vsub.s32 %v9256, %v9258
        %v9260 = vrot.slane %v9252, %v9259
        %v9262 = vunpack.c.l.s4 1934713408
        %v9263 = vunpack.c.0.s8 %v9262
        %v9264 = vlaneseq
        %v9265 = vshrl.u32 %v9264, 7
        %v9266 = vsub.s32 %v9263, %v9265
        %v9267 = vrot.slane %v9253, %v9266
        %v9268 = vcombine.high %v9244, 0.0
        %v9269 = vcombine.high %v9251, 0.0
        %v9270 = vcombine.high %v9260, 0.0
        %v9271 = vcombine.high %v9267, 0.0
        %v9272 = vcombine.low %v9040, %v9047
        %v9274 = vunpack.c.l.s4 1983009808
        %v9275 = vunpack.c.0.s8 %v9274
        %v9276 = vlaneseq
        %v9277 = vshrl.u32 %v9276, 7
        %v9278 = vsub.s32 %v9275, %v9277
        %v9279 = vrot.slane %v9272, %v9278
        %v9280 = vcombine.low %v9064, %v9065
        %v9282 = vunpack.c.l.s4 1983009808
        %v9283 = vunpack.c.0.s8 %v9282
        %v9284 = vlaneseq
        %v9285 = vshrl.u32 %v9284, 7
        %v9286 = vsub.s32 %v9283, %v9285
        %v9287 = vrot.slane %v9280, %v9286
        %v9288 = vcombine.low %v9056, %v9063
        %v9290 = vunpack.c.l.s4 1983009808
        %v9291 = vunpack.c.0.s8 %v9290
        %v9292 = vlaneseq
        %v9293 = vshrl.u32 %v9292, 7
        %v9294 = vsub.s32 %v9291, %v9293
        %v9295 = vrot.slane %v9288, %v9294
        %v9296 = vcombine.low %v9066, %v9067
        %v9298 = vunpack.c.l.s4 1983009808
        %v9299 = vunpack.c.0.s8 %v9298
        %v9300 = vlaneseq
        %v9301 = vshrl.u32 %v9300, 7
        %v9302 = vsub.s32 %v9299, %v9301
        %v9303 = vrot.slane %v9296, %v9302
        %v9304 = vcombine.low %v9279, %v9287
        %v9305 = vcombine.high %v9279, %v9287
        %v9307 = vunpack.c.l.s4 1934713408
        %v9308 = vunpack.c.0.s8 %v9307
        %v9309 = vlaneseq
        %v9310 = vshrl.u32 %v9309, 7
        %v9311 = vsub.s32 %v9308, %v9310
        %v9312 = vrot.slane %v9304, %v9311
        %v9314 = vunpack.c.l.s4 1934713408
        %v9315 = vunpack.c.0.s8 %v9314
        %v9316 = vlaneseq
        %v9317 = vshrl.u32 %v9316, 7
        %v9318 = vsub.s32 %v9315, %v9317
        %v9319 = vrot.slane %v9305, %v9318
        %v9320 = vcombine.low %v9295, %v9303
        %v9321 = vcombine.high %v9295, %v9303
        %v9323 = vunpack.c.l.s4 1934713408
        %v9324 = vunpack.c.0.s8 %v9323
        %v9325 = vlaneseq
        %v9326 = vshrl.u32 %v9325, 7
        %v9327 = vsub.s32 %v9324, %v9326
        %v9328 = vrot.slane %v9320, %v9327
        %v9330 = vunpack.c.l.s4 1934713408
        %v9331 = vunpack.c.0.s8 %v9330
        %v9332 = vlaneseq
        %v9333 = vshrl.u32 %v9332, 7
        %v9334 = vsub.s32 %v9331, %v9333
        %v9335 = vrot.slane %v9321, %v9334
        %v9336 = vcombine.low %v9312, %v9328
        %v9337 = vcombine.high %v9312, %v9328
        %v9338 = vcombine.low %v9319, %v9335
        %v9339 = vcombine.high %v9319, %v9335
        %v9340 = vcombine.low %v9108, %v9115
        %v9342 = vunpack.c.l.s4 1983009808
        %v9343 = vunpack.c.0.s8 %v9342
        %v9344 = vlaneseq
        %v9345 = vshrl.u32 %v9344, 7
        %v9346 = vsub.s32 %v9343, %v9345
        %v9347 = vrot.slane %v9340, %v9346
        %v9348 = vcombine.low %v9132, %v9133
        %v9350 = vunpack.c.l.s4 1983009808
        %v9351 = vunpack.c.0.s8 %v9350
        %v9352 = vlaneseq
        %v9353 = vshrl.u32 %v9352, 7
        %v9354 = vsub.s32 %v9351, %v9353
        %v9355 = vrot.slane %v9348, %v9354
        %v9356 = vcombine.low %v9124, %v9131
        %v9358 = vunpack.c.l.s4 1983009808
        %v9359 = vunpack.c.0.s8 %v9358
        %v9360 = vlaneseq
        %v9361 = vshrl.u32 %v9360, 7
        %v9362 = vsub.s32 %v9359, %v9361
        %v9363 = vrot.slane %v9356, %v9362
        %v9364 = vcombine.low %v9134, %v9135
        %v9366 = vunpack.c.l.s4 1983009808
        %v9367 = vunpack.c.0.s8 %v9366
        %v9368 = vlaneseq
        %v9369 = vshrl.u32 %v9368, 7
        %v9370 = vsub.s32 %v9367, %v9369
        %v9371 = vrot.slane %v9364, %v9370
        %v9372 = vcombine.low %v9347, %v9355
        %v9373 = vcombine.high %v9347, %v9355
        %v9375 = vunpack.c.l.s4 1934713408
        %v9376 = vunpack.c.0.s8 %v9375
        %v9377 = vlaneseq
        %v9378 = vshrl.u32 %v9377, 7
        %v9379 = vsub.s32 %v9376, %v9378
        %v9380 = vrot.slane %v9372, %v9379
        %v9382 = vunpack.c.l.s4 1934713408
        %v9383 = vunpack.c.0.s8 %v9382
        %v9384 = vlaneseq
        %v9385 = vshrl.u32 %v9384, 7
        %v9386 = vsub.s32 %v9383, %v9385
        %v9387 = vrot.slane %v9373, %v9386
        %v9388 = vcombine.low %v9363, %v9371
        %v9389 = vcombine.high %v9363, %v9371
        %v9391 = vunpack.c.l.s4 1934713408
        %v9392 = vunpack.c.0.s8 %v9391
        %v9393 = vlaneseq
        %v9394 = vshrl.u32 %v9393, 7
        %v9395 = vsub.s32 %v9392, %v9394
        %v9396 = vrot.slane %v9388, %v9395
        %v9398 = vunpack.c.l.s4 1934713408
        %v9399 = vunpack.c.0.s8 %v9398
        %v9400 = vlaneseq
        %v9401 = vshrl.u32 %v9400, 7
        %v9402 = vsub.s32 %v9399, %v9401
        %v9403 = vrot.slane %v9389, %v9402
        %v9404 = vcombine.low %v9380, %v9396
        %v9405 = vcombine.high %v9380, %v9396
        %v9406 = vcombine.low %v9387, %v9403
        %v9407 = vcombine.high %v9387, %v9403
        %v9408 = vcombine.low %v9176, %v9183
        %v9410 = vunpack.c.l.s4 1983009808
        %v9411 = vunpack.c.0.s8 %v9410
        %v9412 = vlaneseq
        %v9413 = vshrl.u32 %v9412, 7
        %v9414 = vsub.s32 %v9411, %v9413
        %v9415 = vrot.slane %v9408, %v9414
        %v9416 = vcombine.low %v9200, %v9201
        %v9418 = vunpack.c.l.s4 1983009808
        %v9419 = vunpack.c.0.s8 %v9418
        %v9420 = vlaneseq
        %v9421 = vshrl.u32 %v9420, 7
        %v9422 = vsub.s32 %v9419, %v9421
        %v9423 = vrot.slane %v9416, %v9422
        %v9424 = vcombine.low %v9192, %v9199
        %v9426 = vunpack.c.l.s4 1983009808
        %v9427 = vunpack.c.0.s8 %v9426
        %v9428 = vlaneseq
        %v9429 = vshrl.u32 %v9428, 7
        %v9430 = vsub.s32 %v9427, %v9429
        %v9431 = vrot.slane %v9424, %v9430
        %v9432 = vcombine.low %v9202, %v9203
        %v9434 = vunpack.c.l.s4 1983009808
        %v9435 = vunpack.c.0.s8 %v9434
        %v9436 = vlaneseq
        %v9437 = vshrl.u32 %v9436, 7
        %v9438 = vsub.s32 %v9435, %v9437
        %v9439 = vrot.slane %v9432, %v9438
        %v9440 = vcombine.low %v9415, %v9423
        %v9441 = vcombine.high %v9415, %v9423
        %v9443 = vunpack.c.l.s4 1934713408
        %v9444 = vunpack.c.0.s8 %v9443
        %v9445 = vlaneseq
        %v9446 = vshrl.u32 %v9445, 7
        %v9447 = vsub.s32 %v9444, %v9446
        %v9448 = vrot.slane %v9440, %v9447
        %v9450 = vunpack.c.l.s4 1934713408
        %v9451 = vunpack.c.0.s8 %v9450
        %v9452 = vlaneseq
        %v9453 = vshrl.u32 %v9452, 7
        %v9454 = vsub.s32 %v9451, %v9453
        %v9455 = vrot.slane %v9441, %v9454
        %v9456 = vcombine.low %v9431, %v9439
        %v9457 = vcombine.high %v9431, %v9439
        %v9459 = vunpack.c.l.s4 1934713408
        %v9460 = vunpack.c.0.s8 %v9459
        %v9461 = vlaneseq
        %v9462 = vshrl.u32 %v9461, 7
        %v9463 = vsub.s32 %v9460, %v9462
        %v9464 = vrot.slane %v9456, %v9463
        %v9466 = vunpack.c.l.s4 1934713408
        %v9467 = vunpack.c.0.s8 %v9466
        %v9468 = vlaneseq
        %v9469 = vshrl.u32 %v9468, 7
        %v9470 = vsub.s32 %v9467, %v9469
        %v9471 = vrot.slane %v9457, %v9470
        %v9472 = vcombine.low %v9448, %v9464
        %v9473 = vcombine.high %v9448, %v9464
        %v9474 = vcombine.low %v9455, %v9471
        %v9475 = vcombine.high %v9455, %v9471
        %v9476 = vcombine.low %v9244, %v9251
        %v9478 = vunpack.c.l.s4 1983009808
        %v9479 = vunpack.c.0.s8 %v9478
        %v9480 = vlaneseq
        %v9481 = vshrl.u32 %v9480, 7
        %v9482 = vsub.s32 %v9479, %v9481
        %v9483 = vrot.slane %v9476, %v9482
        %v9484 = vcombine.low %v9268, %v9269
        %v9486 = vunpack.c.l.s4 1983009808
        %v9487 = vunpack.c.0.s8 %v9486
        %v9488 = vlaneseq
        %v9489 = vshrl.u32 %v9488, 7
        %v9490 = vsub.s32 %v9487, %v9489
        %v9491 = vrot.slane %v9484, %v9490
        %v9492 = vcombine.low %v9260, %v9267
        %v9494 = vunpack.c.l.s4 1983009808
        %v9495 = vunpack.c.0.s8 %v9494
        %v9496 = vlaneseq
        %v9497 = vshrl.u32 %v9496, 7
        %v9498 = vsub.s32 %v9495, %v9497
        %v9499 = vrot.slane %v9492, %v9498
        %v9500 = vcombine.low %v9270, %v9271
        %v9502 = vunpack.c.l.s4 1983009808
        %v9503 = vunpack.c.0.s8 %v9502
        %v9504 = vlaneseq
        %v9505 = vshrl.u32 %v9504, 7
        %v9506 = vsub.s32 %v9503, %v9505
        %v9507 = vrot.slane %v9500, %v9506
        %v9508 = vcombine.low %v9483, %v9491
        %v9509 = vcombine.high %v9483, %v9491
        %v9511 = vunpack.c.l.s4 1934713408
        %v9512 = vunpack.c.0.s8 %v9511
        %v9513 = vlaneseq
        %v9514 = vshrl.u32 %v9513, 7
        %v9515 = vsub.s32 %v9512, %v9514
        %v9516 = vrot.slane %v9508, %v9515
        %v9518 = vunpack.c.l.s4 1934713408
        %v9519 = vunpack.c.0.s8 %v9518
        %v9520 = vlaneseq
        %v9521 = vshrl.u32 %v9520, 7
        %v9522 = vsub.s32 %v9519, %v9521
        %v9523 = vrot.slane %v9509, %v9522
        %v9524 = vcombine.low %v9499, %v9507
        %v9525 = vcombine.high %v9499, %v9507
        %v9527 = vunpack.c.l.s4 1934713408
        %v9528 = vunpack.c.0.s8 %v9527
        %v9529 = vlaneseq
        %v9530 = vshrl.u32 %v9529, 7
        %v9531 = vsub.s32 %v9528, %v9530
        %v9532 = vrot.slane %v9524, %v9531
        %v9534 = vunpack.c.l.s4 1934713408
        %v9535 = vunpack.c.0.s8 %v9534
        %v9536 = vlaneseq
        %v9537 = vshrl.u32 %v9536, 7
        %v9538 = vsub.s32 %v9535, %v9537
        %v9539 = vrot.slane %v9525, %v9538
        %v9540 = vcombine.low %v9516, %v9532
        %v9541 = vcombine.high %v9516, %v9532
        %v9542 = vcombine.low %v9523, %v9539
        %v9543 = vcombine.high %v9523, %v9539
        %9548 = vrot.lane.b32.xlu0 %v9337, 16
        %v9549 = vpop.permute.xlu0 %9548
        %9550 = vrot.lane.b32.xlu0 %v9405, 16
        %v9551 = vpop.permute.xlu0 %9550
        %9552 = vrot.lane.b32.xlu0 %v9473, 16
        %v9553 = vpop.permute.xlu0 %9552
        %9554 = vrot.lane.b32.xlu0 %v9541, 16
        %v9555 = vpop.permute.xlu0 %9554
        %9564 = vrot.lane.b32.xlu0 %v9338, 32
        %v9565 = vpop.permute.xlu0 %9564
        %9566 = vrot.lane.b32.xlu0 %v9406, 32
        %v9567 = vpop.permute.xlu0 %9566
        %9568 = vrot.lane.b32.xlu0 %v9474, 32
        %v9569 = vpop.permute.xlu0 %9568
        %9570 = vrot.lane.b32.xlu0 %v9542, 32
        %v9571 = vpop.permute.xlu0 %9570
        %9580 = vrot.lane.b32.xlu0 %v9339, 48
        %v9581 = vpop.permute.xlu0 %9580
        %9582 = vrot.lane.b32.xlu0 %v9407, 48
        %v9583 = vpop.permute.xlu0 %9582
        %9584 = vrot.lane.b32.xlu0 %v9475, 48
        %v9585 = vpop.permute.xlu0 %9584
        %9586 = vrot.lane.b32.xlu0 %v9543, 48
        %v9587 = vpop.permute.xlu0 %9586
        %v9592 = vsel %vm4948, %v9336, %v9549
        %v9593 = vsel %vm4948, %v9404, %v9551
        %v9594 = vsel %vm4948, %v9472, %v9553
        %v9595 = vsel %vm4948, %v9540, %v9555
        %v9596 = vsel %vm422, %v9592, %v9565
        %v9597 = vsel %vm422, %v9593, %v9567
        %v9598 = vsel %vm422, %v9594, %v9569
        %v9599 = vsel %vm422, %v9595, %v9571
        %v9600 = vsel %vm5217, %v9596, %v9581
        %v9601 = vsel %vm5217, %v9597, %v9583
        %v9602 = vsel %vm5217, %v9598, %v9585
        %v9603 = vsel %vm5217, %v9599, %v9587
        %v9604 = vpack.c.bf16 %v9601, %v9600
        %v9605 = vpack.c.bf16 %v9603, %v9602
        %v9606 = vld [vmem:[%s3 + $0x2f0] sm:$0xff]
        %v9607 = vld [vmem:[%s3 + $0x300] sm:$0xff]
        %v9608 = vld [vmem:[%s3 + $0x310] sm:$0xff]
        %v9609 = vld [vmem:[%s3 + $0x320] sm:$0xff]
        %v9610 = vld [vmem:[%s3 + $0x330] sm:$0xff]
        %v9611 = vld [vmem:[%s3 + $0x340] sm:$0xff]
        %v9612 = vld [vmem:[%s3 + $0x350] sm:$0xff]
        %v9613 = vld [vmem:[%s3 + $0x360] sm:$0xff]
        %v9614 = vpack.c.bf16 %v9607, %v9606
        %v9615 = vpack.c.bf16 %v9609, %v9608
        %v9616 = vpack.c.bf16 %v9611, %v9610
        %v9617 = vpack.c.bf16 %v9613, %v9612
        %v9618 = vld [vmem:[%s3 + $0x370] ss:$0 sm:$0xff]
        %v9620 = vsel %vm5065, %v9604, 0
        %v9623 = vsel %vm5065, %v9605, 0
        %9625 = vmatprep.subr.bf16.mxu0 0
        %9626 = vmatpush1.bf16.msra.mxu0 %v9614
        %9627 = vmatprep.subr.bf16.mxu0 0
        %9628 = vmatpush1.bf16.msra.mxu0 %v9615
        %9629 = vmatprep.subr.bf16.mxu0 0
        %9630 = vmatpush1.bf16.msra.mxu0 %v9616
        %9631 = vmatprep.subr.bf16.mxu0 0
        %9632 = vmatpush1.bf16.msra.mxu0 %v9617
        %9633 = vmatprep.subr.bf16.mxu0 0
        %9634 = vmatpush1.bf16.msra.mxu0 0
        %9635 = vmatprep.subr.bf16.mxu0 0
        %9636 = vmatpush1.bf16.msra.mxu0 0
        %9637 = vmatprep.subr.bf16.mxu0 0
        %9638 = vmatpush1.bf16.msra.mxu0 0
        %9639 = vmatprep.subr.bf16.mxu0 0
        %9640 = vmatpush1.bf16.msra.mxu0 0
        %9641 = vmatprep.subr.bf16.mxu0 0
        %9642 = vmatpush1.bf16.msra.mxu0 0
        %9643 = vmatprep.subr.bf16.mxu0 0
        %9644 = vmatpush1.bf16.msra.mxu0 0
        %9645 = vmatprep.subr.bf16.mxu0 0
        %9646 = vmatpush1.bf16.msra.mxu0 0
        %9647 = vmatprep.subr.bf16.mxu0 0
        %9648 = vmatpush1.bf16.msra.mxu0 0
        %9649 = vmatprep.subr.bf16.mxu0 0
        %9650 = vmatpush1.bf16.msra.mxu0 0
        %9651 = vmatprep.subr.bf16.mxu0 0
        %9652 = vmatpush1.bf16.msra.mxu0 0
        %9653 = vmatprep.subr.bf16.mxu0 0
        %9654 = vmatpush1.bf16.msra.mxu0 0
        %9655 = vmatprep.subr.bf16.mxu0 0
        %9656 = vmatpush1.bf16.msra.mxu0 0
        %9657 = vmatprep.mubr.bf16.mxu0 0
        %9658 = vmatmul.mubr.bf16.gmra.mrb[0].mxu0 %v9620
        %v9659 = vpop.f32.mrb[0].mxu0
        %v9660 = vadd.f32 %v9618, %v9659
        %v9661 = vpop.f32.mrb[0].mxu0
        %v9662 = vpop.f32.mrb[0].mxu0
        %v9663 = vadd.f32 %v9618, %v9662
        %v9664 = vpop.f32.mrb[0].mxu0
        %9665 = vmatprep.mubr.bf16.mxu0 0
        %9666 = vmatmul.mubr.bf16.gmra.mrb[0].mxu0 %v9623
        %v9667 = vpop.f32.mrb[0].mxu0
        %v9668 = vadd.f32 %v9618, %v9667
        %v9669 = vpop.f32.mrb[0].mxu0
        %v9670 = vpop.f32.mrb[0].mxu0
        %v9671 = vadd.f32 %v9618, %v9670
        %v9672 = vpop.f32.mrb[0].mxu0
        %9673 = vdwg.mxu0
        %v9674 = vld [vmem:[%s3 + $0x380] ss:$0 sm:$0xff]
        %v9675 = vmul.f32 %v9674, %v9660
        %v9676 = vmul.f32 %v9674, %v9663
        %v9677 = vmul.f32 %v9674, %v9668
        %v9678 = vmul.f32 %v9674, %v9671
        %v9679 = vadd.f32 %v9675, %v5180
        %v9680 = vadd.f32 %v9676, %v5181
        %v9681 = vadd.f32 %v9677, %v5182
        %v9682 = vadd.f32 %v9678, %v5183
        %9683 = vst.msk [vmem:[%s247] sm:$0xff] %vm5217, %v9679
        %9684 = vst.msk [vmem:[%s247 + $0x8] sm:$0xff] %vm5217, %v9680
        %9685 = vst.msk [vmem:[%s247 + $0x10] sm:$0xff] %vm5217, %v9681
        %9686 = vst.msk [vmem:[%s247 + $0x18] sm:$0xff] %vm5217, %v9682
        %9687 = vst.msk [vmem:[%s254] sm:$0xff] %vm4948, %v5155
        %9688 = vst.msk [vmem:[%s254 + $0x8] sm:$0xff] %vm4948, %v5156
        %9689 = vst.msk [vmem:[%s254 + $0x10] sm:$0xff] %vm4948, %v5157
        %9690 = vst.msk [vmem:[%s254 + $0x18] sm:$0xff] %vm4948, %v5158
        %s9691 = sand.u32 %s130, 1
        %s9692 = scalar_lea.sflag [#allocation3], %s9691
        %s9693 = sand.u32 %s130, 1
        %s9694 = smul.addr %s9693, 32
        %s9695 = scalar_lea.vmem [#allocation2], %s9694
        %s9696 = sand.u32 %s156, 1
        %s9697 = scalar_lea.sflag [#allocation5], %s9696
        %s9698 = sand.u32 %s156, 1
        %s9699 = smul.addr %s9698, 32
        %s9700 = scalar_lea.vmem [#allocation4], %s9699
        // Predicated region
        $region37: #{positional_encoding_layer_forward.1} parent=35 // pred_check
          %p9701 = pneg %p140
        $region38: #{positional_encoding_layer_forward.1} parent=35 // pred_check_branch
          %9703 = sbr.rel (%p9701) target = $region40
        $region39: #{positional_encoding_layer_forward.1} parent=35 // pred_region
          %s9705 = ssub.s32 512, 512
          %9706 = vsyncadd %s9692, %s9705
          %s9707 = smul.addr %s23, 4
          %s9708 = smul.addr %s9707, 128
          %s9709 = scalar_lea.hbm %s4, %s9708
          %s9710 = sshll.u32 %s9695, 4
          %s9711 = int_to_ptr.vmem [resolvable:$true] %s9710
          %9716 = dma.vmem_to_hbm [thread:$0]  %s9711, 512, %s9709, %s9692, 128, 128, 8
        $region40: #{positional_encoding_layer_forward.1} parent=35 // pred_fallthru
          _
        // Predicated region
        $region41: #{positional_encoding_layer_forward.1} parent=35 // pred_check
          %p9717 = pneg %p166
        $region42: #{positional_encoding_layer_forward.1} parent=35 // pred_check_branch
          %9719 = sbr.rel (%p9717) target = $region44
        $region43: #{positional_encoding_layer_forward.1} parent=35 // pred_region
          %s9721 = ssub.s32 512, 512
          %9722 = vsyncadd %s9697, %s9721
          %s9723 = smul.addr %s23, 4
          %s9724 = smul.addr %s9723, 128
          %s9725 = scalar_lea.hbm %s5, %s9724
          %s9726 = sshll.u32 %s9700, 4
          %s9727 = int_to_ptr.vmem [resolvable:$true] %s9726
          %9732 = dma.vmem_to_hbm [thread:$0]  %s9727, 512, %s9725, %s9697, 128, 128, 8
        $region44: #{positional_encoding_layer_forward.1} parent=35 // pred_fallthru
          _
      $region36: #{positional_encoding_layer_forward.1} parent=5 // pred_fallthru
        _
      %p9733 = scmp.le.s32.totalorder 2, %s18
      // Predicated region
      $region45: #{positional_encoding_layer_forward.1} parent=5 // pred_check
        %p9734 = pneg %p9733
      $region46: #{positional_encoding_layer_forward.1} parent=5 // pred_check_branch
        %9736 = sbr.rel (%p9734) target = $region48
      $region47: #{positional_encoding_layer_forward.1} parent=5 // pred_region
        %s9737 = ssub.s32 %s18, 2
        // Predicated region
        $region49: #{positional_encoding_layer_forward.1} parent=47 // pred_check
          %p9738 = pneg %p146
        $region50: #{positional_encoding_layer_forward.1} parent=47 // pred_check_branch
          %9740 = sbr.rel (%p9738) target = $region52
        $region51: #{positional_encoding_layer_forward.1} parent=47 // pred_region
          %s9741 = sand.u32 %s131, 1
          %s9742 = scalar_lea.sflag [#allocation3], %s9741
          %s9743 = sand.u32 %s131, 1
          %s9744 = smul.addr %s9743, 32
          %s9745 = scalar_lea.vmem [#allocation2], %s9744
          %9746 = dma.done %s9742, 512
        $region52: #{positional_encoding_layer_forward.1} parent=47 // pred_fallthru
          _
        // Predicated region
        $region53: #{positional_encoding_layer_forward.1} parent=47 // pred_check
          %p9747 = pneg %p172
        $region54: #{positional_encoding_layer_forward.1} parent=47 // pred_check_branch
          %9749 = sbr.rel (%p9747) target = $region56
        $region55: #{positional_encoding_layer_forward.1} parent=47 // pred_region
          %s9750 = sand.u32 %s157, 1
          %s9751 = scalar_lea.sflag [#allocation5], %s9750
          %s9752 = sand.u32 %s157, 1
          %s9753 = smul.addr %s9752, 32
          %s9754 = scalar_lea.vmem [#allocation4], %s9753
          %9755 = dma.done %s9751, 512
        $region56: #{positional_encoding_layer_forward.1} parent=47 // pred_fallthru
          _
      $region48: #{positional_encoding_layer_forward.1} parent=5 // pred_fallthru
        _
    $region6: #{positional_encoding_layer_forward.1} parent=1 // loop_footer
      %s22 = sadd.s32 1, %s18
    $region7: #{positional_encoding_layer_forward.1} parent=1 // loop_footer_branch
      %17 = sbr.rel target = $region3
    $region8: #{positional_encoding_layer_forward.1} parent=1 // loop_exit
      _
    %9756 = vsyncpa [#allocation3], 1
    %s9757 = scalar_lea.sflag [#allocation3], 1
    %9758 = vsyncpa %s9757, 1
    %9759 = vsyncpa [#allocation5], 1
    %s9760 = scalar_lea.sflag [#allocation5], 1
    %9761 = vsyncpa %s9760, 1

</llo_original>
